<compile_context>
chip_gen: v7x
topology: tpu7x:2x2x1
jax: 0.10.0
libtpu: 0.0.40
codegen_flags: <defaults>
</compile_context>

<pallas_src>
import functools

import jax
import jax.numpy as jnp
from jax import lax
from jax.experimental import pallas as pl
from jax.experimental.pallas import tpu as pltpu

LANE = 128


# ----------------------------------------------------------------------------
# Pallas kernel: one image per grid step.
# ----------------------------------------------------------------------------
def _basic_block_kernel(x_ref, w1_ref, b1_ref, w2_ref, b2_ref, out_ref,
                        xpad_ref, mid_ref, *, H, W, C):
    # ---- zero the 1-wide halo borders of both scratch buffers --------------
    # (interior writes never touch the borders, but scratch persists across
    #  grid steps and megacore cores start at arbitrary program ids, so the
    #  cheap per-step re-zero is the safe choice.)
    for ref in (xpad_ref, mid_ref):
        z_row = jnp.zeros((1, W + 2, C), ref.dtype)
        z_col = jnp.zeros((H + 2, 1, C), ref.dtype)
        ref[0:1, :, :] = z_row
        ref[H + 1:H + 2, :, :] = z_row
        ref[:, 0:1, :] = z_col
        ref[:, W + 1:W + 2, :] = z_col

    # ---- stage the bf16 input into the padded scratch interior (no cast) ---
    xpad_ref[1:H + 1, 1:W + 1, :] = x_ref[...]              # (H, W, C) bf16

    # ---- 3x3 conv as 9 accumulated matmuls: (H*W, C) x (C, C) each ---------
    def conv3x3(src_ref, w_ref, b_ref):
        acc = None
        k = 0
        for dy in range(3):
            for dx in range(3):
                tap = src_ref[dy:dy + H, dx:dx + W, :].reshape(H * W, C)
                p = jnp.dot(tap, w_ref[k * C:(k + 1) * C, :],
                            preferred_element_type=jnp.float32)
                acc = p if acc is None else acc + p
                k += 1
        return acc + b_ref[...]                              # folded-BN bias

    # conv1 + bn1 + relu   (f32 elementwise: v5e has no bf16 VALU)
    t = jnp.maximum(conv3x3(xpad_ref, w1_ref, b1_ref), 0.0)  # (H*W, C) f32
    mid_ref[1:H + 1, 1:W + 1, :] = t.reshape(H, W, C).astype(mid_ref.dtype)

    # conv2 + bn2 + residual + relu
    o = conv3x3(mid_ref, w2_ref, b2_ref)
    # re-read the residual from the padded-input interior (short live range)
    res = xpad_ref[1:H + 1, 1:W + 1, :].reshape(H * W, C).astype(jnp.float32)
    o = jnp.maximum(o + res, 0.0)
    out_ref[...] = o.reshape(H, W, C).astype(out_ref.dtype)


def basic_block_pallas(x_nhwc, w1, b1, w2, b2, c_true):
    N, H, W, C = x_nhwc.shape
    assert C % LANE == 0, "channels must be padded to a multiple of 128"
    assert x_nhwc.dtype == jnp.bfloat16
    kernel = functools.partial(_basic_block_kernel, H=H, W=W, C=C)

    # Cost estimate from the TRUE channel count (padded zero channels are not
    # useful work); bf16 I/O for bytes_accessed.
    flops = int(4 * N * H * W * 9 * c_true * c_true)          # two 3x3 convs
    bytes_accessed = int(2 * N * H * W * C * 2                # in + out, bf16
                         + (w1.size + w2.size) * 2 + (b1.size + b2.size) * 4)

    return pl.pallas_call(
        kernel,
        out_shape=jax.ShapeDtypeStruct((N, H, W, C), jnp.bfloat16),
        grid=(N,),
        in_specs=[
            pl.BlockSpec((pl.Squeezed(), H, W, C), lambda n: (n, 0, 0, 0)),
            pl.BlockSpec(w1.shape, lambda n: (0, 0)),
            pl.BlockSpec(b1.shape, lambda n: (0, 0)),
            pl.BlockSpec(w2.shape, lambda n: (0, 0)),
            pl.BlockSpec(b2.shape, lambda n: (0, 0)),
        ],
        out_specs=pl.BlockSpec((pl.Squeezed(), H, W, C),
                               lambda n: (n, 0, 0, 0)),
        scratch_shapes=[
            pltpu.VMEM((H + 2, W + 2, C), jnp.bfloat16),   # padded input
            pltpu.VMEM((H + 2, W + 2, C), jnp.bfloat16),   # padded conv1 out
        ],
        compiler_params=pltpu.CompilerParams(
            dimension_semantics=("parallel",),
            vmem_limit_bytes=48 * 1024 * 1024),
        cost_estimate=pl.CostEstimate(flops=flops, transcendentals=0,
                                      bytes_accessed=bytes_accessed),
    )(x_nhwc, w1, b1, w2, b2)


# ----------------------------------------------------------------------------
# Parameter construction / preparation
# ----------------------------------------------------------------------------
def make_params(key, inplanes, planes):
    ks = jax.random.split(key, 4)

    def conv_w(k, shape):                      # PyTorch layout (out, in, kh, kw)
        return jax.random.normal(k, shape, jnp.float32) * 0.1

    w1_t = conv_w(ks[0], (planes, inplanes, 3, 3))
    w2_t = conv_w(ks[1], (planes, planes, 3, 3))

    def bn_params(k, c):
        k1, k2, k3, k4 = jax.random.split(k, 4)
        gamma = 1.0 + 0.1 * jax.random.normal(k1, (c,), jnp.float32)
        beta = 0.1 * jax.random.normal(k2, (c,), jnp.float32)
        mean = 0.1 * jax.random.normal(k3, (c,), jnp.float32)
        var = jnp.abs(jax.random.normal(k4, (c,), jnp.float32)) + 0.5
        return gamma, beta, mean, var

    return w1_t, bn_params(ks[2], planes), w2_t, bn_params(ks[3], planes)


def prepare_params(w1_t, bn1, w2_t, bn2, cpad, eps=1e-5):
    """Fold eval-mode BN scale into conv weights, pad channels to `cpad`
    (lane width only -- never pad beyond that just to widen MXU N),
    rearrange to (9*cpad, cpad) bf16 matmul layout, keep f32 bias."""
    def fold(w_t, bn):
        gamma, beta, mean, var = bn
        scale = gamma / jnp.sqrt(var + eps)
        bias = beta - mean * scale
        cout, cin = w_t.shape[0], w_t.shape[1]
        # (out, in, kh, kw) -> (kh, kw, in, out) -> (9, in, out)
        w = jnp.transpose(w_t, (2, 3, 1, 0)).reshape(9, cin, cout)
        w = w * scale[None, None, :]                       # fold BN scale
        w = jnp.pad(w, ((0, 0), (0, cpad - cin), (0, cpad - cout)))
        b = jnp.pad(bias, (0, cpad - cout))
        return (w.reshape(9 * cpad, cpad).astype(jnp.bfloat16),
                b[None, :].astype(jnp.float32))

    w1, b1 = fold(w1_t, bn1)
    w2, b2 = fold(w2_t, bn2)
    return w1, b1, w2, b2


# ----------------------------------------------------------------------------
# Pure-JAX reference (NCHW, matches the PyTorch module) for validation
# ----------------------------------------------------------------------------
def ref_forward(x_nchw, params, eps=1e-5):
    w1_t, bn1, w2_t, bn2 = params

    def conv(x, w):
        return lax.conv_general_dilated(
            x, w, (1, 1), ((1, 1), (1, 1)),
            dimension_numbers=("NCHW", "OIHW", "NCHW"))

    def bn_apply(x, bn):
        g, b, m, v = bn
        inv = (g / jnp.sqrt(v + eps))[None, :, None, None]
        return (x - m[None, :, None, None]) * inv + b[None, :, None, None]

    out = jax.nn.relu(bn_apply(conv(x_nchw, w1_t), bn1))
    out = bn_apply(conv(out, w2_t), bn2)
    return jax.nn.relu(out + x_nchw)


if __name__ == "__main__":
    key = jax.random.PRNGKey(0)
    kx, kp = jax.random.split(key)

    # small shapes consistent with the module: residual add requires
    # inplanes == planes (forward uses residual = x); stride=1, dilation=1.
    N, C, H, W = 2, 8, 16, 16
    x_nchw = jax.random.normal(kx, (N, C, H, W), jnp.float32)

    params = make_params(kp, inplanes=C, planes=C)
    w1_t, bn1, w2_t, bn2 = params

    cpad = ((C + LANE - 1) // LANE) * LANE                 # pad channels to 128
    w1, b1, w2, b2 = prepare_params(w1_t, bn1, w2_t, bn2, cpad)

    # NCHW -> NHWC, zero-pad channel (lane) dim, cast to bf16 outside the kernel
    x_nhwc = jnp.transpose(x_nchw, (0, 2, 3, 1))
    x_pad = jnp.pad(x_nhwc, ((0, 0), (0, 0), (0, 0), (0, cpad - C)))
    x_pad = x_pad.astype(jnp.bfloat16)

    out_nhwc = basic_block_pallas(x_pad, w1, b1, w2, b2, c_true=C)[..., :C]
    out_nchw = jnp.transpose(out_nhwc.astype(jnp.float32), (0, 3, 1, 2))
    out_nchw = jax.block_until_ready(out_nchw)

    ref = jax.block_until_ready(ref_forward(x_nchw, params))
    assert out_nchw.shape == ref.shape
    # bf16 I/O + bf16 MXU operands with f32 accumulation -> loosened tolerance
    err = float(jnp.max(jnp.abs(out_nchw - ref)))
    scale = float(jnp.max(jnp.abs(ref))) + 1e-6
    assert err / scale < 3e-2, f"mismatch vs reference: abs={err} rel={err/scale}"

    print("KERNEL_OK")
</pallas_src>

<mosaic_0001>
module attributes {stable_mosaic.version = 11 : i64} {
  func.func @_basic_block_kernel(%arg0: i32, %arg1: memref<1x16x16x128xbf16, #tpu.memory_space<vmem>>, %arg2: memref<1152x128xbf16, #tpu.memory_space<vmem>>, %arg3: memref<1x128xf32, #tpu.memory_space<vmem>>, %arg4: memref<1152x128xbf16, #tpu.memory_space<vmem>>, %arg5: memref<1x128xf32, #tpu.memory_space<vmem>>, %arg6: memref<1x16x16x128xbf16, #tpu.memory_space<vmem>>, %arg7: memref<18x18x128xbf16, #tpu.memory_space<vmem>>, %arg8: memref<18x18x128xbf16, #tpu.memory_space<vmem>>) attributes {dimension_semantics = [#tpu.dimension_semantics<parallel>], iteration_bounds = array<i64: 2>, scalar_prefetch = 0 : i64, scratch_operands = 2 : i64, tpu.core_type = #tpu.core_type<tc>, window_params = [{transform_indices = @transform_0, window_bounds = array<i64: 1, 16, 16, 128>}, {pipeline_mode = #tpu.pipeline_mode<synchronous>, transform_indices = @transform_1, window_bounds = array<i64: 1152, 128>}, {pipeline_mode = #tpu.pipeline_mode<synchronous>, transform_indices = @transform_2, window_bounds = array<i64: 1, 128>}, {pipeline_mode = #tpu.pipeline_mode<synchronous>, transform_indices = @transform_3, window_bounds = array<i64: 1152, 128>}, {pipeline_mode = #tpu.pipeline_mode<synchronous>, transform_indices = @transform_4, window_bounds = array<i64: 1, 128>}, {transform_indices = @transform_5, window_bounds = array<i64: 1, 16, 16, 128>}]} {
    %cst = arith.constant 0.000000e+00 : bf16
    %0 = vector.broadcast %cst : bf16 to vector<1x18x128xbf16>
    %cst_0 = arith.constant 0.000000e+00 : bf16
    %1 = vector.broadcast %cst_0 : bf16 to vector<18x1x128xbf16>
    %c0 = arith.constant 0 : index
    %c0_1 = arith.constant 0 : index
    %c0_2 = arith.constant 0 : index
    %2 = vector.load %arg7[%c0, %c0_1, %c0_2] : memref<18x18x128xbf16, #tpu.memory_space<vmem>>, vector<1x18x128xbf16>
    tpu.vector_store %arg7[%c0, %c0_1, %c0_2], %0 {strides = array<i32>} : memref<18x18x128xbf16, #tpu.memory_space<vmem>>, vector<1x18x128xbf16>,
    %c17 = arith.constant 17 : index
    %c0_3 = arith.constant 0 : index
    %c0_4 = arith.constant 0 : index
    %3 = vector.load %arg7[%c17, %c0_3, %c0_4] : memref<18x18x128xbf16, #tpu.memory_space<vmem>>, vector<1x18x128xbf16>
    tpu.vector_store %arg7[%c17, %c0_3, %c0_4], %0 {strides = array<i32>} : memref<18x18x128xbf16, #tpu.memory_space<vmem>>, vector<1x18x128xbf16>,
    %c0_5 = arith.constant 0 : index
    %c0_6 = arith.constant 0 : index
    %c0_7 = arith.constant 0 : index
    %4 = vector.load %arg7[%c0_5, %c0_6, %c0_7] : memref<18x18x128xbf16, #tpu.memory_space<vmem>>, vector<18x1x128xbf16>
    tpu.vector_store %arg7[%c0_5, %c0_6, %c0_7], %1 {strides = array<i32>} : memref<18x18x128xbf16, #tpu.memory_space<vmem>>, vector<18x1x128xbf16>,
    %c0_8 = arith.constant 0 : index
    %c17_9 = arith.constant 17 : index
    %c0_10 = arith.constant 0 : index
    %5 = vector.load %arg7[%c0_8, %c17_9, %c0_10] : memref<18x18x128xbf16, #tpu.memory_space<vmem>>, vector<18x1x128xbf16>
    tpu.vector_store %arg7[%c0_8, %c17_9, %c0_10], %1 {strides = array<i32>} : memref<18x18x128xbf16, #tpu.memory_space<vmem>>, vector<18x1x128xbf16>,
    %cst_11 = arith.constant 0.000000e+00 : bf16
    %6 = vector.broadcast %cst_11 : bf16 to vector<1x18x128xbf16>
    %cst_12 = arith.constant 0.000000e+00 : bf16
    %7 = vector.broadcast %cst_12 : bf16 to vector<18x1x128xbf16>
    %c0_13 = arith.constant 0 : index
    %c0_14 = arith.constant 0 : index
    %c0_15 = arith.constant 0 : index
    %8 = vector.load %arg8[%c0_13, %c0_14, %c0_15] : memref<18x18x128xbf16, #tpu.memory_space<vmem>>, vector<1x18x128xbf16>
    tpu.vector_store %arg8[%c0_13, %c0_14, %c0_15], %6 {strides = array<i32>} : memref<18x18x128xbf16, #tpu.memory_space<vmem>>, vector<1x18x128xbf16>,
    %c17_16 = arith.constant 17 : index
    %c0_17 = arith.constant 0 : index
    %c0_18 = arith.constant 0 : index
    %9 = vector.load %arg8[%c17_16, %c0_17, %c0_18] : memref<18x18x128xbf16, #tpu.memory_space<vmem>>, vector<1x18x128xbf16>
    tpu.vector_store %arg8[%c17_16, %c0_17, %c0_18], %6 {strides = array<i32>} : memref<18x18x128xbf16, #tpu.memory_space<vmem>>, vector<1x18x128xbf16>,
    %c0_19 = arith.constant 0 : index
    %c0_20 = arith.constant 0 : index
    %c0_21 = arith.constant 0 : index
    %10 = vector.load %arg8[%c0_19, %c0_20, %c0_21] : memref<18x18x128xbf16, #tpu.memory_space<vmem>>, vector<18x1x128xbf16>
    tpu.vector_store %arg8[%c0_19, %c0_20, %c0_21], %7 {strides = array<i32>} : memref<18x18x128xbf16, #tpu.memory_space<vmem>>, vector<18x1x128xbf16>,
    %c0_22 = arith.constant 0 : index
    %c17_23 = arith.constant 17 : index
    %c0_24 = arith.constant 0 : index
    %11 = vector.load %arg8[%c0_22, %c17_23, %c0_24] : memref<18x18x128xbf16, #tpu.memory_space<vmem>>, vector<18x1x128xbf16>
    tpu.vector_store %arg8[%c0_22, %c17_23, %c0_24], %7 {strides = array<i32>} : memref<18x18x128xbf16, #tpu.memory_space<vmem>>, vector<18x1x128xbf16>,
    %c0_25 = arith.constant 0 : index
    %c0_26 = arith.constant 0 : index
    %c0_27 = arith.constant 0 : index
    %c0_28 = arith.constant 0 : index
    %12 = vector.load %arg1[%c0_25, %c0_26, %c0_27, %c0_28] : memref<1x16x16x128xbf16, #tpu.memory_space<vmem>>, vector<1x16x16x128xbf16>
    %13 = vector.shape_cast %12 : vector<1x16x16x128xbf16> to vector<16x16x128xbf16>
    %c1 = arith.constant 1 : index
    %c1_29 = arith.constant 1 : index
    %c0_30 = arith.constant 0 : index
    %14 = vector.load %arg7[%c1, %c1_29, %c0_30] : memref<18x18x128xbf16, #tpu.memory_space<vmem>>, vector<16x16x128xbf16>
    tpu.vector_store %arg7[%c1, %c1_29, %c0_30], %13 {strides = array<i32>} : memref<18x18x128xbf16, #tpu.memory_space<vmem>>, vector<16x16x128xbf16>,
    %c0_31 = arith.constant 0 : index
    %c0_32 = arith.constant 0 : index
    %c0_33 = arith.constant 0 : index
    %15 = vector.load %arg7[%c0_31, %c0_32, %c0_33] : memref<18x18x128xbf16, #tpu.memory_space<vmem>>, vector<16x16x128xbf16>
    %16 = vector.shape_cast %15 : vector<16x16x128xbf16> to vector<256x128xbf16>
    %c0_34 = arith.constant 0 : index
    %c0_35 = arith.constant 0 : index
    %17 = vector.load %arg2[%c0_34, %c0_35] : memref<1152x128xbf16, #tpu.memory_space<vmem>>, vector<128x128xbf16>
    %cst_36 = arith.constant dense<0.000000e+00> : vector<256x128xf32>
    %18 = tpu.matmul %16, %17, %cst_36 {dimension_numbers = #tpu.dot_dimension_numbers<[1], [0], [0], [1], [0, 0, 1, 1], [], []>} : vector<256x128xbf16>, vector<128x128xbf16>, vector<256x128xf32> -> vector<256x128xf32>
    %c0_37 = arith.constant 0 : index
    %c1_38 = arith.constant 1 : index
    %c0_39 = arith.constant 0 : index
    %19 = vector.load %arg7[%c0_37, %c1_38, %c0_39] : memref<18x18x128xbf16, #tpu.memory_space<vmem>>, vector<16x16x128xbf16>
    %20 = vector.shape_cast %19 : vector<16x16x128xbf16> to vector<256x128xbf16>
    %c128 = arith.constant 128 : index
    %c0_40 = arith.constant 0 : index
    %21 = vector.load %arg2[%c128, %c0_40] : memref<1152x128xbf16, #tpu.memory_space<vmem>>, vector<128x128xbf16>
    %cst_41 = arith.constant dense<0.000000e+00> : vector<256x128xf32>
    %22 = tpu.matmul %20, %21, %cst_41 {dimension_numbers = #tpu.dot_dimension_numbers<[1], [0], [0], [1], [0, 0, 1, 1], [], []>} : vector<256x128xbf16>, vector<128x128xbf16>, vector<256x128xf32> -> vector<256x128xf32>
    %23 = arith.addf %18, %22 : vector<256x128xf32>
    %c0_42 = arith.constant 0 : index
    %c2 = arith.constant 2 : index
    %c0_43 = arith.constant 0 : index
    %24 = vector.load %arg7[%c0_42, %c2, %c0_43] : memref<18x18x128xbf16, #tpu.memory_space<vmem>>, vector<16x16x128xbf16>
    %25 = vector.shape_cast %24 : vector<16x16x128xbf16> to vector<256x128xbf16>
    %c256 = arith.constant 256 : index
    %c0_44 = arith.constant 0 : index
    %26 = vector.load %arg2[%c256, %c0_44] : memref<1152x128xbf16, #tpu.memory_space<vmem>>, vector<128x128xbf16>
    %cst_45 = arith.constant dense<0.000000e+00> : vector<256x128xf32>
    %27 = tpu.matmul %25, %26, %cst_45 {dimension_numbers = #tpu.dot_dimension_numbers<[1], [0], [0], [1], [0, 0, 1, 1], [], []>} : vector<256x128xbf16>, vector<128x128xbf16>, vector<256x128xf32> -> vector<256x128xf32>
    %28 = arith.addf %23, %27 : vector<256x128xf32>
    %c1_46 = arith.constant 1 : index
    %c0_47 = arith.constant 0 : index
    %c0_48 = arith.constant 0 : index
    %29 = vector.load %arg7[%c1_46, %c0_47, %c0_48] : memref<18x18x128xbf16, #tpu.memory_space<vmem>>, vector<16x16x128xbf16>
    %30 = vector.shape_cast %29 : vector<16x16x128xbf16> to vector<256x128xbf16>
    %c384 = arith.constant 384 : index
    %c0_49 = arith.constant 0 : index
    %31 = vector.load %arg2[%c384, %c0_49] : memref<1152x128xbf16, #tpu.memory_space<vmem>>, vector<128x128xbf16>
    %cst_50 = arith.constant dense<0.000000e+00> : vector<256x128xf32>
    %32 = tpu.matmul %30, %31, %cst_50 {dimension_numbers = #tpu.dot_dimension_numbers<[1], [0], [0], [1], [0, 0, 1, 1], [], []>} : vector<256x128xbf16>, vector<128x128xbf16>, vector<256x128xf32> -> vector<256x128xf32>
    %33 = arith.addf %28, %32 : vector<256x128xf32>
    %c1_51 = arith.constant 1 : index
    %c1_52 = arith.constant 1 : index
    %c0_53 = arith.constant 0 : index
    %34 = vector.load %arg7[%c1_51, %c1_52, %c0_53] : memref<18x18x128xbf16, #tpu.memory_space<vmem>>, vector<16x16x128xbf16>
    %35 = vector.shape_cast %34 : vector<16x16x128xbf16> to vector<256x128xbf16>
    %c512 = arith.constant 512 : index
    %c0_54 = arith.constant 0 : index
    %36 = vector.load %arg2[%c512, %c0_54] : memref<1152x128xbf16, #tpu.memory_space<vmem>>, vector<128x128xbf16>
    %cst_55 = arith.constant dense<0.000000e+00> : vector<256x128xf32>
    %37 = tpu.matmul %35, %36, %cst_55 {dimension_numbers = #tpu.dot_dimension_numbers<[1], [0], [0], [1], [0, 0, 1, 1], [], []>} : vector<256x128xbf16>, vector<128x128xbf16>, vector<256x128xf32> -> vector<256x128xf32>
    %38 = arith.addf %33, %37 : vector<256x128xf32>
    %c1_56 = arith.constant 1 : index
    %c2_57 = arith.constant 2 : index
    %c0_58 = arith.constant 0 : index
    %39 = vector.load %arg7[%c1_56, %c2_57, %c0_58] : memref<18x18x128xbf16, #tpu.memory_space<vmem>>, vector<16x16x128xbf16>
    %40 = vector.shape_cast %39 : vector<16x16x128xbf16> to vector<256x128xbf16>
    %c640 = arith.constant 640 : index
    %c0_59 = arith.constant 0 : index
    %41 = vector.load %arg2[%c640, %c0_59] : memref<1152x128xbf16, #tpu.memory_space<vmem>>, vector<128x128xbf16>
    %cst_60 = arith.constant dense<0.000000e+00> : vector<256x128xf32>
    %42 = tpu.matmul %40, %41, %cst_60 {dimension_numbers = #tpu.dot_dimension_numbers<[1], [0], [0], [1], [0, 0, 1, 1], [], []>} : vector<256x128xbf16>, vector<128x128xbf16>, vector<256x128xf32> -> vector<256x128xf32>
    %43 = arith.addf %38, %42 : vector<256x128xf32>
    %c2_61 = arith.constant 2 : index
    %c0_62 = arith.constant 0 : index
    %c0_63 = arith.constant 0 : index
    %44 = vector.load %arg7[%c2_61, %c0_62, %c0_63] : memref<18x18x128xbf16, #tpu.memory_space<vmem>>, vector<16x16x128xbf16>
    %45 = vector.shape_cast %44 : vector<16x16x128xbf16> to vector<256x128xbf16>
    %c768 = arith.constant 768 : index
    %c0_64 = arith.constant 0 : index
    %46 = vector.load %arg2[%c768, %c0_64] : memref<1152x128xbf16, #tpu.memory_space<vmem>>, vector<128x128xbf16>
    %cst_65 = arith.constant dense<0.000000e+00> : vector<256x128xf32>
    %47 = tpu.matmul %45, %46, %cst_65 {dimension_numbers = #tpu.dot_dimension_numbers<[1], [0], [0], [1], [0, 0, 1, 1], [], []>} : vector<256x128xbf16>, vector<128x128xbf16>, vector<256x128xf32> -> vector<256x128xf32>
    %48 = arith.addf %43, %47 : vector<256x128xf32>
    %c2_66 = arith.constant 2 : index
    %c1_67 = arith.constant 1 : index
    %c0_68 = arith.constant 0 : index
    %49 = vector.load %arg7[%c2_66, %c1_67, %c0_68] : memref<18x18x128xbf16, #tpu.memory_space<vmem>>, vector<16x16x128xbf16>
    %50 = vector.shape_cast %49 : vector<16x16x128xbf16> to vector<256x128xbf16>
    %c896 = arith.constant 896 : index
    %c0_69 = arith.constant 0 : index
    %51 = vector.load %arg2[%c896, %c0_69] : memref<1152x128xbf16, #tpu.memory_space<vmem>>, vector<128x128xbf16>
    %cst_70 = arith.constant dense<0.000000e+00> : vector<256x128xf32>
    %52 = tpu.matmul %50, %51, %cst_70 {dimension_numbers = #tpu.dot_dimension_numbers<[1], [0], [0], [1], [0, 0, 1, 1], [], []>} : vector<256x128xbf16>, vector<128x128xbf16>, vector<256x128xf32> -> vector<256x128xf32>
    %53 = arith.addf %48, %52 : vector<256x128xf32>
    %c2_71 = arith.constant 2 : index
    %c2_72 = arith.constant 2 : index
    %c0_73 = arith.constant 0 : index
    %54 = vector.load %arg7[%c2_71, %c2_72, %c0_73] : memref<18x18x128xbf16, #tpu.memory_space<vmem>>, vector<16x16x128xbf16>
    %55 = vector.shape_cast %54 : vector<16x16x128xbf16> to vector<256x128xbf16>
    %c1024 = arith.constant 1024 : index
    %c0_74 = arith.constant 0 : index
    %56 = vector.load %arg2[%c1024, %c0_74] : memref<1152x128xbf16, #tpu.memory_space<vmem>>, vector<128x128xbf16>
    %cst_75 = arith.constant dense<0.000000e+00> : vector<256x128xf32>
    %57 = tpu.matmul %55, %56, %cst_75 {dimension_numbers = #tpu.dot_dimension_numbers<[1], [0], [0], [1], [0, 0, 1, 1], [], []>} : vector<256x128xbf16>, vector<128x128xbf16>, vector<256x128xf32> -> vector<256x128xf32>
    %58 = arith.addf %53, %57 : vector<256x128xf32>
    %c0_76 = arith.constant 0 : index
    %c0_77 = arith.constant 0 : index
    %59 = vector.load %arg3[%c0_76, %c0_77] : memref<1x128xf32, #tpu.memory_space<vmem>>, vector<1x128xf32>
    %60 = vector.broadcast %59 : vector<1x128xf32> to vector<256x128xf32>
    %61 = arith.addf %58, %60 : vector<256x128xf32>
    %cst_78 = arith.constant 0.000000e+00 : f32
    %62 = vector.broadcast %cst_78 : f32 to vector<256x128xf32>
    %63 = arith.maximumf %61, %62 : vector<256x128xf32>
    %64 = vector.shape_cast %63 : vector<256x128xf32> to vector<16x16x128xf32>
    %65 = arith.truncf %64 : vector<16x16x128xf32> to vector<16x16x128xbf16>
    %c1_79 = arith.constant 1 : index
    %c1_80 = arith.constant 1 : index
    %c0_81 = arith.constant 0 : index
    %66 = vector.load %arg8[%c1_79, %c1_80, %c0_81] : memref<18x18x128xbf16, #tpu.memory_space<vmem>>, vector<16x16x128xbf16>
    tpu.vector_store %arg8[%c1_79, %c1_80, %c0_81], %65 {strides = array<i32>} : memref<18x18x128xbf16, #tpu.memory_space<vmem>>, vector<16x16x128xbf16>,
    %c0_82 = arith.constant 0 : index
    %c0_83 = arith.constant 0 : index
    %c0_84 = arith.constant 0 : index
    %67 = vector.load %arg8[%c0_82, %c0_83, %c0_84] : memref<18x18x128xbf16, #tpu.memory_space<vmem>>, vector<16x16x128xbf16>
    %68 = vector.shape_cast %67 : vector<16x16x128xbf16> to vector<256x128xbf16>
    %c0_85 = arith.constant 0 : index
    %c0_86 = arith.constant 0 : index
    %69 = vector.load %arg4[%c0_85, %c0_86] : memref<1152x128xbf16, #tpu.memory_space<vmem>>, vector<128x128xbf16>
    %cst_87 = arith.constant dense<0.000000e+00> : vector<256x128xf32>
    %70 = tpu.matmul %68, %69, %cst_87 {dimension_numbers = #tpu.dot_dimension_numbers<[1], [0], [0], [1], [0, 0, 1, 1], [], []>} : vector<256x128xbf16>, vector<128x128xbf16>, vector<256x128xf32> -> vector<256x128xf32>
    %c0_88 = arith.constant 0 : index
    %c1_89 = arith.constant 1 : index
    %c0_90 = arith.constant 0 : index
    %71 = vector.load %arg8[%c0_88, %c1_89, %c0_90] : memref<18x18x128xbf16, #tpu.memory_space<vmem>>, vector<16x16x128xbf16>
    %72 = vector.shape_cast %71 : vector<16x16x128xbf16> to vector<256x128xbf16>
    %c128_91 = arith.constant 128 : index
    %c0_92 = arith.constant 0 : index
    %73 = vector.load %arg4[%c128_91, %c0_92] : memref<1152x128xbf16, #tpu.memory_space<vmem>>, vector<128x128xbf16>
    %cst_93 = arith.constant dense<0.000000e+00> : vector<256x128xf32>
    %74 = tpu.matmul %72, %73, %cst_93 {dimension_numbers = #tpu.dot_dimension_numbers<[1], [0], [0], [1], [0, 0, 1, 1], [], []>} : vector<256x128xbf16>, vector<128x128xbf16>, vector<256x128xf32> -> vector<256x128xf32>
    %75 = arith.addf %70, %74 : vector<256x128xf32>
    %c0_94 = arith.constant 0 : index
    %c2_95 = arith.constant 2 : index
    %c0_96 = arith.constant 0 : index
    %76 = vector.load %arg8[%c0_94, %c2_95, %c0_96] : memref<18x18x128xbf16, #tpu.memory_space<vmem>>, vector<16x16x128xbf16>
    %77 = vector.shape_cast %76 : vector<16x16x128xbf16> to vector<256x128xbf16>
    %c256_97 = arith.constant 256 : index
    %c0_98 = arith.constant 0 : index
    %78 = vector.load %arg4[%c256_97, %c0_98] : memref<1152x128xbf16, #tpu.memory_space<vmem>>, vector<128x128xbf16>
    %cst_99 = arith.constant dense<0.000000e+00> : vector<256x128xf32>
    %79 = tpu.matmul %77, %78, %cst_99 {dimension_numbers = #tpu.dot_dimension_numbers<[1], [0], [0], [1], [0, 0, 1, 1], [], []>} : vector<256x128xbf16>, vector<128x128xbf16>, vector<256x128xf32> -> vector<256x128xf32>
    %80 = arith.addf %75, %79 : vector<256x128xf32>
    %c1_100 = arith.constant 1 : index
    %c0_101 = arith.constant 0 : index
    %c0_102 = arith.constant 0 : index
    %81 = vector.load %arg8[%c1_100, %c0_101, %c0_102] : memref<18x18x128xbf16, #tpu.memory_space<vmem>>, vector<16x16x128xbf16>
    %82 = vector.shape_cast %81 : vector<16x16x128xbf16> to vector<256x128xbf16>
    %c384_103 = arith.constant 384 : index
    %c0_104 = arith.constant 0 : index
    %83 = vector.load %arg4[%c384_103, %c0_104] : memref<1152x128xbf16, #tpu.memory_space<vmem>>, vector<128x128xbf16>
    %cst_105 = arith.constant dense<0.000000e+00> : vector<256x128xf32>
    %84 = tpu.matmul %82, %83, %cst_105 {dimension_numbers = #tpu.dot_dimension_numbers<[1], [0], [0], [1], [0, 0, 1, 1], [], []>} : vector<256x128xbf16>, vector<128x128xbf16>, vector<256x128xf32> -> vector<256x128xf32>
    %85 = arith.addf %80, %84 : vector<256x128xf32>
    %c1_106 = arith.constant 1 : index
    %c1_107 = arith.constant 1 : index
    %c0_108 = arith.constant 0 : index
    %86 = vector.load %arg8[%c1_106, %c1_107, %c0_108] : memref<18x18x128xbf16, #tpu.memory_space<vmem>>, vector<16x16x128xbf16>
    %87 = vector.shape_cast %86 : vector<16x16x128xbf16> to vector<256x128xbf16>
    %c512_109 = arith.constant 512 : index
    %c0_110 = arith.constant 0 : index
    %88 = vector.load %arg4[%c512_109, %c0_110] : memref<1152x128xbf16, #tpu.memory_space<vmem>>, vector<128x128xbf16>
    %cst_111 = arith.constant dense<0.000000e+00> : vector<256x128xf32>
    %89 = tpu.matmul %87, %88, %cst_111 {dimension_numbers = #tpu.dot_dimension_numbers<[1], [0], [0], [1], [0, 0, 1, 1], [], []>} : vector<256x128xbf16>, vector<128x128xbf16>, vector<256x128xf32> -> vector<256x128xf32>
    %90 = arith.addf %85, %89 : vector<256x128xf32>
    %c1_112 = arith.constant 1 : index
    %c2_113 = arith.constant 2 : index
    %c0_114 = arith.constant 0 : index
    %91 = vector.load %arg8[%c1_112, %c2_113, %c0_114] : memref<18x18x128xbf16, #tpu.memory_space<vmem>>, vector<16x16x128xbf16>
    %92 = vector.shape_cast %91 : vector<16x16x128xbf16> to vector<256x128xbf16>
    %c640_115 = arith.constant 640 : index
    %c0_116 = arith.constant 0 : index
    %93 = vector.load %arg4[%c640_115, %c0_116] : memref<1152x128xbf16, #tpu.memory_space<vmem>>, vector<128x128xbf16>
    %cst_117 = arith.constant dense<0.000000e+00> : vector<256x128xf32>
    %94 = tpu.matmul %92, %93, %cst_117 {dimension_numbers = #tpu.dot_dimension_numbers<[1], [0], [0], [1], [0, 0, 1, 1], [], []>} : vector<256x128xbf16>, vector<128x128xbf16>, vector<256x128xf32> -> vector<256x128xf32>
    %95 = arith.addf %90, %94 : vector<256x128xf32>
    %c2_118 = arith.constant 2 : index
    %c0_119 = arith.constant 0 : index
    %c0_120 = arith.constant 0 : index
    %96 = vector.load %arg8[%c2_118, %c0_119, %c0_120] : memref<18x18x128xbf16, #tpu.memory_space<vmem>>, vector<16x16x128xbf16>
    %97 = vector.shape_cast %96 : vector<16x16x128xbf16> to vector<256x128xbf16>
    %c768_121 = arith.constant 768 : index
    %c0_122 = arith.constant 0 : index
    %98 = vector.load %arg4[%c768_121, %c0_122] : memref<1152x128xbf16, #tpu.memory_space<vmem>>, vector<128x128xbf16>
    %cst_123 = arith.constant dense<0.000000e+00> : vector<256x128xf32>
    %99 = tpu.matmul %97, %98, %cst_123 {dimension_numbers = #tpu.dot_dimension_numbers<[1], [0], [0], [1], [0, 0, 1, 1], [], []>} : vector<256x128xbf16>, vector<128x128xbf16>, vector<256x128xf32> -> vector<256x128xf32>
    %100 = arith.addf %95, %99 : vector<256x128xf32>
    %c2_124 = arith.constant 2 : index
    %c1_125 = arith.constant 1 : index
    %c0_126 = arith.constant 0 : index
    %101 = vector.load %arg8[%c2_124, %c1_125, %c0_126] : memref<18x18x128xbf16, #tpu.memory_space<vmem>>, vector<16x16x128xbf16>
    %102 = vector.shape_cast %101 : vector<16x16x128xbf16> to vector<256x128xbf16>
    %c896_127 = arith.constant 896 : index
    %c0_128 = arith.constant 0 : index
    %103 = vector.load %arg4[%c896_127, %c0_128] : memref<1152x128xbf16, #tpu.memory_space<vmem>>, vector<128x128xbf16>
    %cst_129 = arith.constant dense<0.000000e+00> : vector<256x128xf32>
    %104 = tpu.matmul %102, %103, %cst_129 {dimension_numbers = #tpu.dot_dimension_numbers<[1], [0], [0], [1], [0, 0, 1, 1], [], []>} : vector<256x128xbf16>, vector<128x128xbf16>, vector<256x128xf32> -> vector<256x128xf32>
    %105 = arith.addf %100, %104 : vector<256x128xf32>
    %c2_130 = arith.constant 2 : index
    %c2_131 = arith.constant 2 : index
    %c0_132 = arith.constant 0 : index
    %106 = vector.load %arg8[%c2_130, %c2_131, %c0_132] : memref<18x18x128xbf16, #tpu.memory_space<vmem>>, vector<16x16x128xbf16>
    %107 = vector.shape_cast %106 : vector<16x16x128xbf16> to vector<256x128xbf16>
    %c1024_133 = arith.constant 1024 : index
    %c0_134 = arith.constant 0 : index
    %108 = vector.load %arg4[%c1024_133, %c0_134] : memref<1152x128xbf16, #tpu.memory_space<vmem>>, vector<128x128xbf16>
    %cst_135 = arith.constant dense<0.000000e+00> : vector<256x128xf32>
    %109 = tpu.matmul %107, %108, %cst_135 {dimension_numbers = #tpu.dot_dimension_numbers<[1], [0], [0], [1], [0, 0, 1, 1], [], []>} : vector<256x128xbf16>, vector<128x128xbf16>, vector<256x128xf32> -> vector<256x128xf32>
    %110 = arith.addf %105, %109 : vector<256x128xf32>
    %c0_136 = arith.constant 0 : index
    %c0_137 = arith.constant 0 : index
    %111 = vector.load %arg5[%c0_136, %c0_137] : memref<1x128xf32, #tpu.memory_space<vmem>>, vector<1x128xf32>
    %112 = vector.broadcast %111 : vector<1x128xf32> to vector<256x128xf32>
    %113 = arith.addf %110, %112 : vector<256x128xf32>
    %c1_138 = arith.constant 1 : index
    %c1_139 = arith.constant 1 : index
    %c0_140 = arith.constant 0 : index
    %114 = vector.load %arg7[%c1_138, %c1_139, %c0_140] : memref<18x18x128xbf16, #tpu.memory_space<vmem>>, vector<16x16x128xbf16>
    %115 = vector.shape_cast %114 : vector<16x16x128xbf16> to vector<256x128xbf16>
    %116 = arith.extf %115 : vector<256x128xbf16> to vector<256x128xf32>
    %117 = arith.addf %113, %116 : vector<256x128xf32>
    %cst_141 = arith.constant 0.000000e+00 : f32
    %118 = vector.broadcast %cst_141 : f32 to vector<256x128xf32>
    %119 = arith.maximumf %117, %118 : vector<256x128xf32>
    %120 = vector.shape_cast %119 : vector<256x128xf32> to vector<16x16x128xf32>
    %121 = arith.truncf %120 : vector<16x16x128xf32> to vector<16x16x128xbf16>
    %c0_142 = arith.constant 0 : index
    %c0_143 = arith.constant 0 : index
    %c0_144 = arith.constant 0 : index
    %c0_145 = arith.constant 0 : index
    %122 = vector.load %arg6[%c0_142, %c0_143, %c0_144, %c0_145] : memref<1x16x16x128xbf16, #tpu.memory_space<vmem>>, vector<1x16x16x128xbf16>
    %123 = vector.shape_cast %122 : vector<1x16x16x128xbf16> to vector<16x16x128xbf16>
    %124 = vector.shape_cast %121 : vector<16x16x128xbf16> to vector<1x16x16x128xbf16>
    tpu.vector_store %arg6[%c0_142, %c0_143, %c0_144, %c0_145], %124 {strides = array<i32>} : memref<1x16x16x128xbf16, #tpu.memory_space<vmem>>, vector<1x16x16x128xbf16>,
    return
  }
  func.func @transform_0(%arg0: i32) -> (i32, i32, i32, i32) {
    %c0_i32 = arith.constant 0 : i32
    %c0_i32_0 = arith.constant 0 : i32
    %c0_i32_1 = arith.constant 0 : i32
    %c0_i32_2 = arith.constant 0 : i32
    return %arg0, %c0_i32, %c0_i32_0, %c0_i32_1 : i32, i32, i32, i32
  }
  func.func @transform_1(%arg0: i32) -> (i32, i32) {
    %c0_i32 = arith.constant 0 : i32
    %c0_i32_0 = arith.constant 0 : i32
    %c0_i32_1 = arith.constant 0 : i32
    return %c0_i32, %c0_i32_0 : i32, i32
  }
  func.func @transform_2(%arg0: i32) -> (i32, i32) {
    %c0_i32 = arith.constant 0 : i32
    %c0_i32_0 = arith.constant 0 : i32
    %c0_i32_1 = arith.constant 0 : i32
    return %c0_i32, %c0_i32_0 : i32, i32
  }
  func.func @transform_3(%arg0: i32) -> (i32, i32) {
    %c0_i32 = arith.constant 0 : i32
    %c0_i32_0 = arith.constant 0 : i32
    %c0_i32_1 = arith.constant 0 : i32
    return %c0_i32, %c0_i32_0 : i32, i32
  }
  func.func @transform_4(%arg0: i32) -> (i32, i32) {
    %c0_i32 = arith.constant 0 : i32
    %c0_i32_0 = arith.constant 0 : i32
    %c0_i32_1 = arith.constant 0 : i32
    return %c0_i32, %c0_i32_0 : i32, i32
  }
  func.func @transform_5(%arg0: i32) -> (i32, i32, i32, i32) {
    %c0_i32 = arith.constant 0 : i32
    %c0_i32_0 = arith.constant 0 : i32
    %c0_i32_1 = arith.constant 0 : i32
    %c0_i32_2 = arith.constant 0 : i32
    return %arg0, %c0_i32, %c0_i32_0, %c0_i32_1 : i32, i32, i32, i32
  }
}

</mosaic_0001>

<llo_original>
// kernel: tpu_custom_call.1
$region0: #{tpu_custom_call.1}
  #allocation0 [shape = 'u32[]', space=smem, size = 0x4, offset = 0x4, fixed_abs, tag = 'smem constant byte address 0x4 - core index']
  #allocation1 [shape = 'u32[144,128]{1,0:T(1,128)}', space=vmem, size = 0x12000, scoped, tag = 'internal scratch']
  #allocation2 [shape = 'bf16[18,18,128]{2,1,0:T(8,128)(2,1)}', space=vmem, size = 0x1b000, scoped, tag = 'scratch operand']
  #allocation3 [shape = 'bf16[18,18,128]{2,1,0:T(8,128)(2,1)}', space=vmem, size = 0x1b000, scoped, tag = 'scratch operand']
  %s0 = inlined_call_operand.hbm [shape: bf16[2,16,16,128], index: 0, kind: input, shape index: {}]
  %s1 = inlined_call_operand.hbm [shape: bf16[1152,128], index: 1, kind: input, shape index: {}]
  %s2 = inlined_call_operand.vmem [shape: f32[1,128], index: 2, kind: input, shape index: {}]
  %s3 = inlined_call_operand.hbm [shape: bf16[1152,128], index: 3, kind: input, shape index: {}]
  %s4 = inlined_call_operand.vmem [shape: f32[1,128], index: 4, kind: input, shape index: {}]
  %s5 = inlined_call_operand.hbm [shape: bf16[2,16,16,128], index: 5, kind: output, shape index: {}]
  %s6 = sld [smem:[#allocation0]]
  $region65: #{tpu_custom_call.1} parent=0
    _
  %s8 = ssub.s32 1, %s6
  %s9 = scalar_select 0, %s8, %s6
  $region1: #{tpu_custom_call.1} parent=0
    #allocation4 [shape = 'u8[131072]{0}', space=vmem, size = 0x20000, scoped, tag = 'input window, operand 0']
    #allocation5 [shape = 's32[2]{0}', space=sflag, size = 0x8, scoped, tag = 'scoped memory for tpu_custom_call.1']
    #allocation6 [shape = 's32[2]{0}', space=sflag, size = 0x8, scoped, tag = 'scoped memory for tpu_custom_call.1']
    #allocation7 [shape = 'u8[294912]{0}', space=vmem, size = 0x48000, scoped, tag = 'input window, operand 1, single buffered']
    #allocation8 [shape = 's32[1]{0}', space=sflag, size = 0x4, scoped, tag = 'scoped memory for tpu_custom_call.1']
    #allocation9 [shape = 'u8[294912]{0}', space=vmem, size = 0x48000, scoped, tag = 'input window, operand 3, single buffered']
    #allocation10 [shape = 'u8[131072]{0}', space=vmem, size = 0x20000, scoped, tag = 'output window, operand 0']
    %10 = vsyncpa [#allocation5], 0
    %s11 = scalar_lea.sflag [#allocation5], 1
    %12 = vsyncpa %s11, 0
    %13 = vsyncpa [#allocation8], 0
    %14 = vsyncpa [#allocation6], 0
    %s15 = scalar_lea.sflag [#allocation6], 1
    %16 = vsyncpa %s15, 0
    loop: start=0, step=1, limit=4
    $region2: #{tpu_custom_call.1} parent=1 // loop_pre_header
      _
    $region3: #{tpu_custom_call.1} parent=1 // loop_header
      %s18 = sphi 0, %s22
      %p19 = scmp.ge.s32.totalorder %s18, 4
      %s28 = sphi 0, %s30
      %s31 = sphi 0, %s28
      %s32 = sphi 0, %s31
      %s48 = sphi 0, %s32
      %s52 = sphi 0, %s52
      %s54 = sphi 0, %s52
      %s55 = sphi 0, %s54
      %s69 = sphi 0, %s55
      %s73 = sphi 0, %s73
      %s75 = sphi 0, %s73
      %s76 = sphi 0, %s75
      %s90 = sphi 0, %s76
      %s94 = sphi 0, %s94
      %s96 = sphi 0, %s94
      %s97 = sphi 0, %s96
      %s111 = sphi 0, %s97
      %s115 = sphi 0, %s115
      %s117 = sphi 0, %s115
      %s118 = sphi 0, %s117
      %s132 = sphi 0, %s118
      %s138 = sphi 0, %s140
      %s141 = sphi 0, %s138
      %s142 = sphi 0, %s141
      %s158 = sphi 0, %s142
    $region4: #{tpu_custom_call.1} parent=1 // loop_header_branch
      %21 = sbr.rel (%p19) target = $region8
    $region5: #{tpu_custom_call.1} parent=1 // loop_body
      %s23 = ssub.s32 %s18, 1
      %s24 = ssub.s32 %s18, 2
      %s25 = sadd.s32 %s18, 1
      %s26 = ssub.s32 %s18, %s25
      %p27 = scmp.eq.s32.totalorder %s26, 0
      %s29 = sadd.s32 %s28, 1
      %s30 = scalar_select %p27, %s28, %s29
      %p33 = pneg %p27
      %p34 = scmp.eq.s32.totalorder %s18, 1
      %p35 = por %p33, %p34
      %p36 = scmp.ne.s32.totalorder %s28, %s31
      %p37 = scmp.eq.s32.totalorder %s18, 0
      %p38 = por %p36, %p37
      %p39 = scmp.ne.s32.totalorder %s28, %s31
      %p40 = scmp.eq.s32.totalorder %s23, 1
      %p41 = por %p39, %p40
      %p42 = scmp.ne.s32.totalorder %s31, %s32
      %p43 = scmp.eq.s32.totalorder %s23, 0
      %p44 = por %p42, %p43
      %p45 = scmp.ne.s32.totalorder %s31, %s32
      %p46 = scmp.eq.s32.totalorder %s24, 1
      %p47 = por %p45, %p46
      %p49 = scmp.ne.s32.totalorder %s32, %s48
      %p50 = scmp.eq.s32.totalorder %s24, 0
      %p51 = por %p49, %p50
      %s53 = sadd.s32 %s52, 1
      %p56 = scmp.eq.s32.totalorder %s18, 1
      %p57 = scmp.ne.s32.totalorder %s52, %s54
      %p58 = scmp.eq.s32.totalorder %s18, 0
      %p59 = por %p57, %p58
      %p60 = scmp.ne.s32.totalorder %s52, %s54
      %p61 = scmp.eq.s32.totalorder %s23, 1
      %p62 = por %p60, %p61
      %p63 = scmp.ne.s32.totalorder %s54, %s55
      %p64 = scmp.eq.s32.totalorder %s23, 0
      %p65 = por %p63, %p64
      %p66 = scmp.ne.s32.totalorder %s54, %s55
      %p67 = scmp.eq.s32.totalorder %s24, 1
      %p68 = por %p66, %p67
      %p70 = scmp.ne.s32.totalorder %s55, %s69
      %p71 = scmp.eq.s32.totalorder %s24, 0
      %p72 = por %p70, %p71
      %s74 = sadd.s32 %s73, 1
      %p77 = scmp.eq.s32.totalorder %s18, 1
      %p78 = scmp.ne.s32.totalorder %s73, %s75
      %p79 = scmp.eq.s32.totalorder %s18, 0
      %p80 = por %p78, %p79
      %p81 = scmp.ne.s32.totalorder %s73, %s75
      %p82 = scmp.eq.s32.totalorder %s23, 1
      %p83 = por %p81, %p82
      %p84 = scmp.ne.s32.totalorder %s75, %s76
      %p85 = scmp.eq.s32.totalorder %s23, 0
      %p86 = por %p84, %p85
      %p87 = scmp.ne.s32.totalorder %s75, %s76
      %p88 = scmp.eq.s32.totalorder %s24, 1
      %p89 = por %p87, %p88
      %p91 = scmp.ne.s32.totalorder %s76, %s90
      %p92 = scmp.eq.s32.totalorder %s24, 0
      %p93 = por %p91, %p92
      %s95 = sadd.s32 %s94, 1
      %p98 = scmp.eq.s32.totalorder %s18, 1
      %p99 = scmp.ne.s32.totalorder %s94, %s96
      %p100 = scmp.eq.s32.totalorder %s18, 0
      %p101 = por %p99, %p100
      %p102 = scmp.ne.s32.totalorder %s94, %s96
      %p103 = scmp.eq.s32.totalorder %s23, 1
      %p104 = por %p102, %p103
      %p105 = scmp.ne.s32.totalorder %s96, %s97
      %p106 = scmp.eq.s32.totalorder %s23, 0
      %p107 = por %p105, %p106
      %p108 = scmp.ne.s32.totalorder %s96, %s97
      %p109 = scmp.eq.s32.totalorder %s24, 1
      %p110 = por %p108, %p109
      %p112 = scmp.ne.s32.totalorder %s97, %s111
      %p113 = scmp.eq.s32.totalorder %s24, 0
      %p114 = por %p112, %p113
      %s116 = sadd.s32 %s115, 1
      %p119 = scmp.eq.s32.totalorder %s18, 1
      %p120 = scmp.ne.s32.totalorder %s115, %s117
      %p121 = scmp.eq.s32.totalorder %s18, 0
      %p122 = por %p120, %p121
      %p123 = scmp.ne.s32.totalorder %s115, %s117
      %p124 = scmp.eq.s32.totalorder %s23, 1
      %p125 = por %p123, %p124
      %p126 = scmp.ne.s32.totalorder %s117, %s118
      %p127 = scmp.eq.s32.totalorder %s23, 0
      %p128 = por %p126, %p127
      %p129 = scmp.ne.s32.totalorder %s117, %s118
      %p130 = scmp.eq.s32.totalorder %s24, 1
      %p131 = por %p129, %p130
      %p133 = scmp.ne.s32.totalorder %s118, %s132
      %p134 = scmp.eq.s32.totalorder %s24, 0
      %p135 = por %p133, %p134
      %s136 = ssub.s32 %s18, %s25
      %p137 = scmp.eq.s32.totalorder %s136, 0
      %s139 = sadd.s32 %s138, 1
      %s140 = scalar_select %p137, %s138, %s139
      %p143 = pneg %p137
      %p144 = scmp.eq.s32.totalorder %s18, 1
      %p145 = por %p143, %p144
      %p146 = scmp.ne.s32.totalorder %s138, %s141
      %p147 = scmp.eq.s32.totalorder %s18, 0
      %p148 = por %p146, %p147
      %p149 = scmp.ne.s32.totalorder %s138, %s141
      %p150 = scmp.eq.s32.totalorder %s23, 1
      %p151 = por %p149, %p150
      %p152 = scmp.ne.s32.totalorder %s141, %s142
      %p153 = scmp.eq.s32.totalorder %s23, 0
      %p154 = por %p152, %p153
      %p155 = scmp.ne.s32.totalorder %s141, %s142
      %p156 = scmp.eq.s32.totalorder %s24, 1
      %p157 = por %p155, %p156
      %p159 = scmp.ne.s32.totalorder %s142, %s158
      %p160 = scmp.eq.s32.totalorder %s24, 0
      %p161 = por %p159, %p160
      %p162 = scmp.le.s32.totalorder 1, %s18
      %p163 = scmp.lt.s32.totalorder %s18, 3
      %p164 = pnand %p162, %p163
      %p165 = pneg %p164
      // Predicated region
      $region9: #{tpu_custom_call.1} parent=5 // pred_check
        _
      $region10: #{tpu_custom_call.1} parent=5 // pred_check_branch
        %167 = sbr.rel (%p164) target = $region12
      $region11: #{tpu_custom_call.1} parent=5 // pred_region
        %s168 = ssub.s32 %s18, 1
        // Predicated region
        $region13: #{tpu_custom_call.1} parent=11 // pred_check
          %p169 = pneg %p65
        $region14: #{tpu_custom_call.1} parent=11 // pred_check_branch
          %171 = sbr.rel (%p169) target = $region16
        $region15: #{tpu_custom_call.1} parent=11 // pred_region
          %s173 = ssub.s32 9216, 9216
          %174 = vsyncadd [#allocation8], %s173
          %s175 = sshll.u32 [#allocation7], 4
          %s176 = int_to_ptr.vmem [resolvable:$true] %s175
          %181 = dma.hbm_to_vmem [thread:$0]  %s1, 9216, %s176, [#allocation8], 64, 64, 4
        $region16: #{tpu_custom_call.1} parent=11 // pred_fallthru
          _
        // Predicated region
        $region17: #{tpu_custom_call.1} parent=11 // pred_check
          %p182 = pneg %p86
        $region18: #{tpu_custom_call.1} parent=11 // pred_check_branch
          %184 = sbr.rel (%p182) target = $region20
        $region19: #{tpu_custom_call.1} parent=11 // pred_region
          _
        $region20: #{tpu_custom_call.1} parent=11 // pred_fallthru
          _
        // Predicated region
        $region21: #{tpu_custom_call.1} parent=11 // pred_check
          %p185 = pneg %p107
        $region22: #{tpu_custom_call.1} parent=11 // pred_check_branch
          %187 = sbr.rel (%p185) target = $region24
        $region23: #{tpu_custom_call.1} parent=11 // pred_region
          %s189 = ssub.s32 9216, 9216
          %190 = vsyncadd [#allocation8], %s189
          %s191 = sshll.u32 [#allocation9], 4
          %s192 = int_to_ptr.vmem [resolvable:$true] %s191
          %197 = dma.hbm_to_vmem [thread:$0]  %s3, 9216, %s192, [#allocation8], 64, 64, 4
        $region24: #{tpu_custom_call.1} parent=11 // pred_fallthru
          _
        // Predicated region
        $region25: #{tpu_custom_call.1} parent=11 // pred_check
          %p198 = pneg %p128
        $region26: #{tpu_custom_call.1} parent=11 // pred_check_branch
          %200 = sbr.rel (%p198) target = $region28
        $region27: #{tpu_custom_call.1} parent=11 // pred_region
          _
        $region28: #{tpu_custom_call.1} parent=11 // pred_fallthru
          _
      $region12: #{tpu_custom_call.1} parent=5 // pred_fallthru
        _
      %p201 = scmp.lt.s32.totalorder %s18, 2
      // Predicated region
      $region29: #{tpu_custom_call.1} parent=5 // pred_check
        %p202 = pneg %p201
      $region30: #{tpu_custom_call.1} parent=5 // pred_check_branch
        %204 = sbr.rel (%p202) target = $region32
      $region31: #{tpu_custom_call.1} parent=5 // pred_region
        // Predicated region
        $region33: #{tpu_custom_call.1} parent=31 // pred_check
          %p205 = pneg %p38
        $region34: #{tpu_custom_call.1} parent=31 // pred_check_branch
          %207 = sbr.rel (%p205) target = $region36
        $region35: #{tpu_custom_call.1} parent=31 // pred_region
          %s208 = sand.u32 %s28, 1
          %s209 = scalar_lea.sflag [#allocation5], %s208
          %s210 = sand.u32 %s28, 1
          %s211 = smul.addr %s210, 128
          %s212 = scalar_lea.vmem [#allocation4], %s211
          %s214 = ssub.s32 2048, 2048
          %215 = vsyncadd %s209, %s214
          %s216 = smul.addr %s18, 32
          %s217 = smul.addr %s216, 64
          %s218 = scalar_lea.hbm %s0, %s217
          %s219 = sshll.u32 %s212, 4
          %s220 = int_to_ptr.vmem [resolvable:$true] %s219
          %225 = dma.hbm_to_vmem [thread:$0]  %s218, 2048, %s220, %s209, 64, 64, 4
        $region36: #{tpu_custom_call.1} parent=31 // pred_fallthru
          _
      $region32: #{tpu_custom_call.1} parent=5 // pred_fallthru
        _
      %p226 = scmp.le.s32.totalorder 1, %s18
      %p227 = scmp.lt.s32.totalorder %s18, 3
      %p228 = pnand %p226, %p227
      %p229 = pneg %p228
      // Predicated region
      $region37: #{tpu_custom_call.1} parent=5 // pred_check
        _
      $region38: #{tpu_custom_call.1} parent=5 // pred_check_branch
        %231 = sbr.rel (%p228) target = $region40
      $region39: #{tpu_custom_call.1} parent=5 // pred_region
        %s232 = ssub.s32 %s18, 1
        %s233 = sand.u32 %s31, 1
        %s234 = scalar_lea.sflag [#allocation5], %s233
        %s235 = sand.u32 %s31, 1
        %s236 = smul.addr %s235, 128
        %s237 = scalar_lea.vmem [#allocation4], %s236
        // Predicated region
        $region41: #{tpu_custom_call.1} parent=39 // pred_check
          %p238 = pneg %p44
        $region42: #{tpu_custom_call.1} parent=39 // pred_check_branch
          %240 = sbr.rel (%p238) target = $region44
        $region43: #{tpu_custom_call.1} parent=39 // pred_region
          %241 = dma.done %s234, 2048
        $region44: #{tpu_custom_call.1} parent=39 // pred_fallthru
          _
        // Predicated region
        $region45: #{tpu_custom_call.1} parent=39 // pred_check
          %p242 = pneg %p65
        $region46: #{tpu_custom_call.1} parent=39 // pred_check_branch
          %244 = sbr.rel (%p242) target = $region48
        $region47: #{tpu_custom_call.1} parent=39 // pred_region
          %245 = dma.done [#allocation8], 9216
        $region48: #{tpu_custom_call.1} parent=39 // pred_fallthru
          _
        // Predicated region
        $region49: #{tpu_custom_call.1} parent=39 // pred_check
          %p246 = pneg %p107
        $region50: #{tpu_custom_call.1} parent=39 // pred_check_branch
          %248 = sbr.rel (%p246) target = $region52
        $region51: #{tpu_custom_call.1} parent=39 // pred_region
          %249 = dma.done [#allocation8], 9216
        $region52: #{tpu_custom_call.1} parent=39 // pred_fallthru
          _
        %s250 = sand.u32 %s31, 1
        %s251 = scalar_lea.sflag [#allocation5], %s250
        %s252 = sand.u32 %s31, 1
        %s253 = smul.addr %s252, 128
        %s254 = scalar_lea.vmem [#allocation4], %s253
        %p255 = pneg %p44
        %p256 = pneg %p41
        %p257 = pneg %p65
        %p258 = pneg %p62
        %p259 = pneg %p86
        %p260 = pneg %p83
        %p261 = pneg %p107
        %p262 = pneg %p104
        %p263 = pneg %p128
        %p264 = pneg %p125
        %p265 = pneg %p154
        %p266 = pneg %p151
        %s267 = sand.u32 %s141, 1
        %s268 = scalar_lea.sflag [#allocation6], %s267
        %s269 = sand.u32 %s141, 1
        %s270 = smul.addr %s269, 128
        %s271 = scalar_lea.vmem [#allocation10], %s270
        %273 = vst [vmem:[#allocation2] sm:$0xf] 0
        %274 = vst [vmem:[#allocation2 + $0x4] sm:$0xf] 0
        %275 = vst [vmem:[#allocation2 + $0x8] sm:$0x1] 0
        %s276 = scalar_lea.vmem [#allocation2], 204
        %277 = vst [vmem:[%s276] sm:$0xf] 0
        %278 = vst [vmem:[%s276 + $0x4] sm:$0xf] 0
        %279 = vst [vmem:[%s276 + $0x8] sm:$0x1] 0
        %vm280 = vcmask 1040384
        %vm281 = vsmask.f32 256
        %vm282 = vmand %vm280, %vm281
        %v283 = vld [vmem:[#allocation2] sm:$0x1]
        %v284 = vsel %vm282, 0, %v283
        %285 = vst [vmem:[#allocation2] sm:$0x1] %v284
        %v286 = vld [vmem:[#allocation2 + $0xc] sm:$0x1]
        %v287 = vsel %vm282, 0, %v286
        %288 = vst [vmem:[#allocation2 + $0xc] sm:$0x1] %v287
        %v289 = vld [vmem:[#allocation2 + $0x18] sm:$0x1]
        %v290 = vsel %vm282, 0, %v289
        %291 = vst [vmem:[#allocation2 + $0x18] sm:$0x1] %v290
        %v292 = vld [vmem:[#allocation2 + $0x24] sm:$0x1]
        %v293 = vsel %vm282, 0, %v292
        %294 = vst [vmem:[#allocation2 + $0x24] sm:$0x1] %v293
        %v295 = vld [vmem:[#allocation2 + $0x30] sm:$0x1]
        %v296 = vsel %vm282, 0, %v295
        %297 = vst [vmem:[#allocation2 + $0x30] sm:$0x1] %v296
        %v298 = vld [vmem:[#allocation2 + $0x3c] sm:$0x1]
        %v299 = vsel %vm282, 0, %v298
        %300 = vst [vmem:[#allocation2 + $0x3c] sm:$0x1] %v299
        %v301 = vld [vmem:[#allocation2 + $0x48] sm:$0x1]
        %v302 = vsel %vm282, 0, %v301
        %303 = vst [vmem:[#allocation2 + $0x48] sm:$0x1] %v302
        %v304 = vld [vmem:[#allocation2 + $0x54] sm:$0x1]
        %v305 = vsel %vm282, 0, %v304
        %306 = vst [vmem:[#allocation2 + $0x54] sm:$0x1] %v305
        %v307 = vld [vmem:[#allocation2 + $0x60] sm:$0x1]
        %v308 = vsel %vm282, 0, %v307
        %309 = vst [vmem:[#allocation2 + $0x60] sm:$0x1] %v308
        %v310 = vld [vmem:[#allocation2 + $0x6c] sm:$0x1]
        %v311 = vsel %vm282, 0, %v310
        %312 = vst [vmem:[#allocation2 + $0x6c] sm:$0x1] %v311
        %v313 = vld [vmem:[#allocation2 + $0x78] sm:$0x1]
        %v314 = vsel %vm282, 0, %v313
        %315 = vst [vmem:[#allocation2 + $0x78] sm:$0x1] %v314
        %v316 = vld [vmem:[#allocation2 + $0x84] sm:$0x1]
        %v317 = vsel %vm282, 0, %v316
        %318 = vst [vmem:[#allocation2 + $0x84] sm:$0x1] %v317
        %v319 = vld [vmem:[#allocation2 + $0x90] sm:$0x1]
        %v320 = vsel %vm282, 0, %v319
        %321 = vst [vmem:[#allocation2 + $0x90] sm:$0x1] %v320
        %v322 = vld [vmem:[#allocation2 + $0x9c] sm:$0x1]
        %v323 = vsel %vm282, 0, %v322
        %324 = vst [vmem:[#allocation2 + $0x9c] sm:$0x1] %v323
        %v325 = vld [vmem:[#allocation2 + $0xa8] sm:$0x1]
        %v326 = vsel %vm282, 0, %v325
        %327 = vst [vmem:[#allocation2 + $0xa8] sm:$0x1] %v326
        %v328 = vld [vmem:[#allocation2 + $0xb4] sm:$0x1]
        %v329 = vsel %vm282, 0, %v328
        %330 = vst [vmem:[#allocation2 + $0xb4] sm:$0x1] %v329
        %v331 = vld [vmem:[#allocation2 + $0xc0] sm:$0x1]
        %v332 = vsel %vm282, 0, %v331
        %333 = vst [vmem:[#allocation2 + $0xc0] sm:$0x1] %v332
        %v334 = vld [vmem:[#allocation2 + $0xcc] sm:$0x1]
        %v335 = vsel %vm282, 0, %v334
        %336 = vst [vmem:[#allocation2 + $0xcc] sm:$0x1] %v335
        %vm337 = vsmask.f32 7938
        %vm338 = vmand %vm280, %vm337
        %v339 = vld [vmem:[#allocation2 + $0x8] sm:$0x1]
        %v340 = vsel %vm338, 0, %v339
        %341 = vst [vmem:[#allocation2 + $0x8] sm:$0x1] %v340
        %v342 = vld [vmem:[#allocation2 + $0x14] sm:$0x1]
        %v343 = vsel %vm338, 0, %v342
        %344 = vst [vmem:[#allocation2 + $0x14] sm:$0x1] %v343
        %v345 = vld [vmem:[#allocation2 + $0x20] sm:$0x1]
        %v346 = vsel %vm338, 0, %v345
        %347 = vst [vmem:[#allocation2 + $0x20] sm:$0x1] %v346
        %v348 = vld [vmem:[#allocation2 + $0x2c] sm:$0x1]
        %v349 = vsel %vm338, 0, %v348
        %350 = vst [vmem:[#allocation2 + $0x2c] sm:$0x1] %v349
        %v351 = vld [vmem:[#allocation2 + $0x38] sm:$0x1]
        %v352 = vsel %vm338, 0, %v351
        %353 = vst [vmem:[#allocation2 + $0x38] sm:$0x1] %v352
        %v354 = vld [vmem:[#allocation2 + $0x44] sm:$0x1]
        %v355 = vsel %vm338, 0, %v354
        %356 = vst [vmem:[#allocation2 + $0x44] sm:$0x1] %v355
        %v357 = vld [vmem:[#allocation2 + $0x50] sm:$0x1]
        %v358 = vsel %vm338, 0, %v357
        %359 = vst [vmem:[#allocation2 + $0x50] sm:$0x1] %v358
        %v360 = vld [vmem:[#allocation2 + $0x5c] sm:$0x1]
        %v361 = vsel %vm338, 0, %v360
        %362 = vst [vmem:[#allocation2 + $0x5c] sm:$0x1] %v361
        %v363 = vld [vmem:[#allocation2 + $0x68] sm:$0x1]
        %v364 = vsel %vm338, 0, %v363
        %365 = vst [vmem:[#allocation2 + $0x68] sm:$0x1] %v364
        %v366 = vld [vmem:[#allocation2 + $0x74] sm:$0x1]
        %v367 = vsel %vm338, 0, %v366
        %368 = vst [vmem:[#allocation2 + $0x74] sm:$0x1] %v367
        %v369 = vld [vmem:[#allocation2 + $0x80] sm:$0x1]
        %v370 = vsel %vm338, 0, %v369
        %371 = vst [vmem:[#allocation2 + $0x80] sm:$0x1] %v370
        %v372 = vld [vmem:[#allocation2 + $0x8c] sm:$0x1]
        %v373 = vsel %vm338, 0, %v372
        %374 = vst [vmem:[#allocation2 + $0x8c] sm:$0x1] %v373
        %v375 = vld [vmem:[#allocation2 + $0x98] sm:$0x1]
        %v376 = vsel %vm338, 0, %v375
        %377 = vst [vmem:[#allocation2 + $0x98] sm:$0x1] %v376
        %v378 = vld [vmem:[#allocation2 + $0xa4] sm:$0x1]
        %v379 = vsel %vm338, 0, %v378
        %380 = vst [vmem:[#allocation2 + $0xa4] sm:$0x1] %v379
        %v381 = vld [vmem:[#allocation2 + $0xb0] sm:$0x1]
        %v382 = vsel %vm338, 0, %v381
        %383 = vst [vmem:[#allocation2 + $0xb0] sm:$0x1] %v382
        %v384 = vld [vmem:[#allocation2 + $0xbc] sm:$0x1]
        %v385 = vsel %vm338, 0, %v384
        %386 = vst [vmem:[#allocation2 + $0xbc] sm:$0x1] %v385
        %v387 = vld [vmem:[#allocation2 + $0xc8] sm:$0x1]
        %v388 = vsel %vm338, 0, %v387
        %389 = vst [vmem:[#allocation2 + $0xc8] sm:$0x1] %v388
        %v390 = vld [vmem:[#allocation2 + $0xd4] sm:$0x1]
        %v391 = vsel %vm338, 0, %v390
        %392 = vst [vmem:[#allocation2 + $0xd4] sm:$0x1] %v391
        %393 = vst [vmem:[#allocation3] sm:$0xf] 0
        %394 = vst [vmem:[#allocation3 + $0x4] sm:$0xf] 0
        %395 = vst [vmem:[#allocation3 + $0x8] sm:$0x1] 0
        %s396 = scalar_lea.vmem [#allocation3], 204
        %397 = vst [vmem:[%s396] sm:$0xf] 0
        %398 = vst [vmem:[%s396 + $0x4] sm:$0xf] 0
        %399 = vst [vmem:[%s396 + $0x8] sm:$0x1] 0
        %v400 = vld [vmem:[#allocation3] sm:$0x1]
        %v401 = vsel %vm282, 0, %v400
        %402 = vst [vmem:[#allocation3] sm:$0x1] %v401
        %v403 = vld [vmem:[#allocation3 + $0xc] sm:$0x1]
        %v404 = vsel %vm282, 0, %v403
        %405 = vst [vmem:[#allocation3 + $0xc] sm:$0x1] %v404
        %v406 = vld [vmem:[#allocation3 + $0x18] sm:$0x1]
        %v407 = vsel %vm282, 0, %v406
        %408 = vst [vmem:[#allocation3 + $0x18] sm:$0x1] %v407
        %v409 = vld [vmem:[#allocation3 + $0x24] sm:$0x1]
        %v410 = vsel %vm282, 0, %v409
        %411 = vst [vmem:[#allocation3 + $0x24] sm:$0x1] %v410
        %v412 = vld [vmem:[#allocation3 + $0x30] sm:$0x1]
        %v413 = vsel %vm282, 0, %v412
        %414 = vst [vmem:[#allocation3 + $0x30] sm:$0x1] %v413
        %v415 = vld [vmem:[#allocation3 + $0x3c] sm:$0x1]
        %v416 = vsel %vm282, 0, %v415
        %417 = vst [vmem:[#allocation3 + $0x3c] sm:$0x1] %v416
        %v418 = vld [vmem:[#allocation3 + $0x48] sm:$0x1]
        %v419 = vsel %vm282, 0, %v418
        %420 = vst [vmem:[#allocation3 + $0x48] sm:$0x1] %v419
        %v421 = vld [vmem:[#allocation3 + $0x54] sm:$0x1]
        %v422 = vsel %vm282, 0, %v421
        %423 = vst [vmem:[#allocation3 + $0x54] sm:$0x1] %v422
        %v424 = vld [vmem:[#allocation3 + $0x60] sm:$0x1]
        %v425 = vsel %vm282, 0, %v424
        %426 = vst [vmem:[#allocation3 + $0x60] sm:$0x1] %v425
        %v427 = vld [vmem:[#allocation3 + $0x6c] sm:$0x1]
        %v428 = vsel %vm282, 0, %v427
        %429 = vst [vmem:[#allocation3 + $0x6c] sm:$0x1] %v428
        %v430 = vld [vmem:[#allocation3 + $0x78] sm:$0x1]
        %v431 = vsel %vm282, 0, %v430
        %432 = vst [vmem:[#allocation3 + $0x78] sm:$0x1] %v431
        %v433 = vld [vmem:[#allocation3 + $0x84] sm:$0x1]
        %v434 = vsel %vm282, 0, %v433
        %435 = vst [vmem:[#allocation3 + $0x84] sm:$0x1] %v434
        %v436 = vld [vmem:[#allocation3 + $0x90] sm:$0x1]
        %v437 = vsel %vm282, 0, %v436
        %438 = vst [vmem:[#allocation3 + $0x90] sm:$0x1] %v437
        %v439 = vld [vmem:[#allocation3 + $0x9c] sm:$0x1]
        %v440 = vsel %vm282, 0, %v439
        %441 = vst [vmem:[#allocation3 + $0x9c] sm:$0x1] %v440
        %v442 = vld [vmem:[#allocation3 + $0xa8] sm:$0x1]
        %v443 = vsel %vm282, 0, %v442
        %444 = vst [vmem:[#allocation3 + $0xa8] sm:$0x1] %v443
        %v445 = vld [vmem:[#allocation3 + $0xb4] sm:$0x1]
        %v446 = vsel %vm282, 0, %v445
        %447 = vst [vmem:[#allocation3 + $0xb4] sm:$0x1] %v446
        %v448 = vld [vmem:[#allocation3 + $0xc0] sm:$0x1]
        %v449 = vsel %vm282, 0, %v448
        %450 = vst [vmem:[#allocation3 + $0xc0] sm:$0x1] %v449
        %v451 = vld [vmem:[#allocation3 + $0xcc] sm:$0x1]
        %v452 = vsel %vm282, 0, %v451
        %453 = vst [vmem:[#allocation3 + $0xcc] sm:$0x1] %v452
        %v454 = vld [vmem:[#allocation3 + $0x8] sm:$0x1]
        %v455 = vsel %vm338, 0, %v454
        %456 = vst [vmem:[#allocation3 + $0x8] sm:$0x1] %v455
        %v457 = vld [vmem:[#allocation3 + $0x14] sm:$0x1]
        %v458 = vsel %vm338, 0, %v457
        %459 = vst [vmem:[#allocation3 + $0x14] sm:$0x1] %v458
        %v460 = vld [vmem:[#allocation3 + $0x20] sm:$0x1]
        %v461 = vsel %vm338, 0, %v460
        %462 = vst [vmem:[#allocation3 + $0x20] sm:$0x1] %v461
        %v463 = vld [vmem:[#allocation3 + $0x2c] sm:$0x1]
        %v464 = vsel %vm338, 0, %v463
        %465 = vst [vmem:[#allocation3 + $0x2c] sm:$0x1] %v464
        %v466 = vld [vmem:[#allocation3 + $0x38] sm:$0x1]
        %v467 = vsel %vm338, 0, %v466
        %468 = vst [vmem:[#allocation3 + $0x38] sm:$0x1] %v467
        %v469 = vld [vmem:[#allocation3 + $0x44] sm:$0x1]
        %v470 = vsel %vm338, 0, %v469
        %471 = vst [vmem:[#allocation3 + $0x44] sm:$0x1] %v470
        %v472 = vld [vmem:[#allocation3 + $0x50] sm:$0x1]
        %v473 = vsel %vm338, 0, %v472
        %474 = vst [vmem:[#allocation3 + $0x50] sm:$0x1] %v473
        %v475 = vld [vmem:[#allocation3 + $0x5c] sm:$0x1]
        %v476 = vsel %vm338, 0, %v475
        %477 = vst [vmem:[#allocation3 + $0x5c] sm:$0x1] %v476
        %v478 = vld [vmem:[#allocation3 + $0x68] sm:$0x1]
        %v479 = vsel %vm338, 0, %v478
        %480 = vst [vmem:[#allocation3 + $0x68] sm:$0x1] %v479
        %v481 = vld [vmem:[#allocation3 + $0x74] sm:$0x1]
        %v482 = vsel %vm338, 0, %v481
        %483 = vst [vmem:[#allocation3 + $0x74] sm:$0x1] %v482
        %v484 = vld [vmem:[#allocation3 + $0x80] sm:$0x1]
        %v485 = vsel %vm338, 0, %v484
        %486 = vst [vmem:[#allocation3 + $0x80] sm:$0x1] %v485
        %v487 = vld [vmem:[#allocation3 + $0x8c] sm:$0x1]
        %v488 = vsel %vm338, 0, %v487
        %489 = vst [vmem:[#allocation3 + $0x8c] sm:$0x1] %v488
        %v490 = vld [vmem:[#allocation3 + $0x98] sm:$0x1]
        %v491 = vsel %vm338, 0, %v490
        %492 = vst [vmem:[#allocation3 + $0x98] sm:$0x1] %v491
        %v493 = vld [vmem:[#allocation3 + $0xa4] sm:$0x1]
        %v494 = vsel %vm338, 0, %v493
        %495 = vst [vmem:[#allocation3 + $0xa4] sm:$0x1] %v494
        %v496 = vld [vmem:[#allocation3 + $0xb0] sm:$0x1]
        %v497 = vsel %vm338, 0, %v496
        %498 = vst [vmem:[#allocation3 + $0xb0] sm:$0x1] %v497
        %v499 = vld [vmem:[#allocation3 + $0xbc] sm:$0x1]
        %v500 = vsel %vm338, 0, %v499
        %501 = vst [vmem:[#allocation3 + $0xbc] sm:$0x1] %v500
        %v502 = vld [vmem:[#allocation3 + $0xc8] sm:$0x1]
        %v503 = vsel %vm338, 0, %v502
        %504 = vst [vmem:[#allocation3 + $0xc8] sm:$0x1] %v503
        %v505 = vld [vmem:[#allocation3 + $0xd4] sm:$0x1]
        %v506 = vsel %vm338, 0, %v505
        %507 = vst [vmem:[#allocation3 + $0xd4] sm:$0x1] %v506
        %v508 = vld [vmem:[%s237] sm:$0xf]
        %v509 = vld [vmem:[%s237 + $0x4] sm:$0xf]
        %v510 = vld [vmem:[%s237 + $0x8] sm:$0xf]
        %v511 = vld [vmem:[%s237 + $0xc] sm:$0xf]
        %v512 = vld [vmem:[%s237 + $0x10] sm:$0xf]
        %v513 = vld [vmem:[%s237 + $0x14] sm:$0xf]
        %v514 = vld [vmem:[%s237 + $0x18] sm:$0xf]
        %v515 = vld [vmem:[%s237 + $0x1c] sm:$0xf]
        %v516 = vld [vmem:[%s237 + $0x20] sm:$0xf]
        %v517 = vld [vmem:[%s237 + $0x24] sm:$0xf]
        %v518 = vld [vmem:[%s237 + $0x28] sm:$0xf]
        %v519 = vld [vmem:[%s237 + $0x2c] sm:$0xf]
        %v520 = vld [vmem:[%s237 + $0x30] sm:$0xf]
        %v521 = vld [vmem:[%s237 + $0x34] sm:$0xf]
        %v522 = vld [vmem:[%s237 + $0x38] sm:$0xf]
        %v523 = vld [vmem:[%s237 + $0x3c] sm:$0xf]
        %v524 = vld [vmem:[%s237 + $0x40] sm:$0xf]
        %v525 = vld [vmem:[%s237 + $0x44] sm:$0xf]
        %v526 = vld [vmem:[%s237 + $0x48] sm:$0xf]
        %v527 = vld [vmem:[%s237 + $0x4c] sm:$0xf]
        %v528 = vld [vmem:[%s237 + $0x50] sm:$0xf]
        %v529 = vld [vmem:[%s237 + $0x54] sm:$0xf]
        %v530 = vld [vmem:[%s237 + $0x58] sm:$0xf]
        %v531 = vld [vmem:[%s237 + $0x5c] sm:$0xf]
        %v532 = vld [vmem:[%s237 + $0x60] sm:$0xf]
        %v533 = vld [vmem:[%s237 + $0x64] sm:$0xf]
        %v534 = vld [vmem:[%s237 + $0x68] sm:$0xf]
        %v535 = vld [vmem:[%s237 + $0x6c] sm:$0xf]
        %v536 = vld [vmem:[%s237 + $0x70] sm:$0xf]
        %v537 = vld [vmem:[%s237 + $0x74] sm:$0xf]
        %v538 = vld [vmem:[%s237 + $0x78] sm:$0xf]
        %v539 = vld [vmem:[%s237 + $0x7c] sm:$0xf]
        %vm540 = vsmask.f32 4368
        %vm541 = vmor %vm281, %vm540
        %v543 = vshrl.u32 %v508, 16
        %v545 = vrot.slane %v543, 7
        %v546 = vshll.u32 %v508, 16
        %v548 = vor.u32 %v545, %v546
        %v549 = vrot.slane %v545, 4
        %v551 = vshrl.u32 %v509, 16
        %v553 = vrot.slane %v551, 7
        %v554 = vshll.u32 %v509, 16
        %v556 = vor.u32 %v553, %v554
        %v557 = vsel %vm541, %v549, %v556
        %v558 = vrot.slane %v553, 4
        %v560 = vshrl.u32 %v510, 16
        %v562 = vrot.slane %v560, 7
        %v563 = vshll.u32 %v510, 16
        %v565 = vor.u32 %v562, %v563
        %v566 = vrot.slane %v562, 4
        %v568 = vshrl.u32 %v511, 16
        %v570 = vrot.slane %v568, 7
        %v571 = vshll.u32 %v511, 16
        %v573 = vor.u32 %v570, %v571
        %v574 = vsel %vm541, %v566, %v573
        %v575 = vrot.slane %v570, 4
        %v577 = vshrl.u32 %v512, 16
        %v579 = vrot.slane %v577, 7
        %v580 = vshll.u32 %v512, 16
        %v582 = vor.u32 %v579, %v580
        %v583 = vrot.slane %v579, 4
        %v585 = vshrl.u32 %v513, 16
        %v587 = vrot.slane %v585, 7
        %v588 = vshll.u32 %v513, 16
        %v590 = vor.u32 %v587, %v588
        %v591 = vsel %vm541, %v583, %v590
        %v592 = vrot.slane %v587, 4
        %v594 = vshrl.u32 %v514, 16
        %v596 = vrot.slane %v594, 7
        %v597 = vshll.u32 %v514, 16
        %v599 = vor.u32 %v596, %v597
        %v600 = vrot.slane %v596, 4
        %v602 = vshrl.u32 %v515, 16
        %v604 = vrot.slane %v602, 7
        %v605 = vshll.u32 %v515, 16
        %v607 = vor.u32 %v604, %v605
        %v608 = vsel %vm541, %v600, %v607
        %v609 = vrot.slane %v604, 4
        %v611 = vshrl.u32 %v516, 16
        %v613 = vrot.slane %v611, 7
        %v614 = vshll.u32 %v516, 16
        %v616 = vor.u32 %v613, %v614
        %v617 = vrot.slane %v613, 4
        %v619 = vshrl.u32 %v517, 16
        %v621 = vrot.slane %v619, 7
        %v622 = vshll.u32 %v517, 16
        %v624 = vor.u32 %v621, %v622
        %v625 = vsel %vm541, %v617, %v624
        %v626 = vrot.slane %v621, 4
        %v628 = vshrl.u32 %v518, 16
        %v630 = vrot.slane %v628, 7
        %v631 = vshll.u32 %v518, 16
        %v633 = vor.u32 %v630, %v631
        %v634 = vrot.slane %v630, 4
        %v636 = vshrl.u32 %v519, 16
        %v638 = vrot.slane %v636, 7
        %v639 = vshll.u32 %v519, 16
        %v641 = vor.u32 %v638, %v639
        %v642 = vsel %vm541, %v634, %v641
        %v643 = vrot.slane %v638, 4
        %v645 = vshrl.u32 %v520, 16
        %v647 = vrot.slane %v645, 7
        %v648 = vshll.u32 %v520, 16
        %v650 = vor.u32 %v647, %v648
        %v651 = vrot.slane %v647, 4
        %v653 = vshrl.u32 %v521, 16
        %v655 = vrot.slane %v653, 7
        %v656 = vshll.u32 %v521, 16
        %v658 = vor.u32 %v655, %v656
        %v659 = vsel %vm541, %v651, %v658
        %v660 = vrot.slane %v655, 4
        %v662 = vshrl.u32 %v522, 16
        %v664 = vrot.slane %v662, 7
        %v665 = vshll.u32 %v522, 16
        %v667 = vor.u32 %v664, %v665
        %v668 = vrot.slane %v664, 4
        %v670 = vshrl.u32 %v523, 16
        %v672 = vrot.slane %v670, 7
        %v673 = vshll.u32 %v523, 16
        %v675 = vor.u32 %v672, %v673
        %v676 = vsel %vm541, %v668, %v675
        %v677 = vrot.slane %v672, 4
        %v679 = vshrl.u32 %v524, 16
        %v681 = vrot.slane %v679, 7
        %v682 = vshll.u32 %v524, 16
        %v684 = vor.u32 %v681, %v682
        %v685 = vrot.slane %v681, 4
        %v687 = vshrl.u32 %v525, 16
        %v689 = vrot.slane %v687, 7
        %v690 = vshll.u32 %v525, 16
        %v692 = vor.u32 %v689, %v690
        %v693 = vsel %vm541, %v685, %v692
        %v694 = vrot.slane %v689, 4
        %v696 = vshrl.u32 %v526, 16
        %v698 = vrot.slane %v696, 7
        %v699 = vshll.u32 %v526, 16
        %v701 = vor.u32 %v698, %v699
        %v702 = vrot.slane %v698, 4
        %v704 = vshrl.u32 %v527, 16
        %v706 = vrot.slane %v704, 7
        %v707 = vshll.u32 %v527, 16
        %v709 = vor.u32 %v706, %v707
        %v710 = vsel %vm541, %v702, %v709
        %v711 = vrot.slane %v706, 4
        %v713 = vshrl.u32 %v528, 16
        %v715 = vrot.slane %v713, 7
        %v716 = vshll.u32 %v528, 16
        %v718 = vor.u32 %v715, %v716
        %v719 = vrot.slane %v715, 4
        %v721 = vshrl.u32 %v529, 16
        %v723 = vrot.slane %v721, 7
        %v724 = vshll.u32 %v529, 16
        %v726 = vor.u32 %v723, %v724
        %v727 = vsel %vm541, %v719, %v726
        %v728 = vrot.slane %v723, 4
        %v730 = vshrl.u32 %v530, 16
        %v732 = vrot.slane %v730, 7
        %v733 = vshll.u32 %v530, 16
        %v735 = vor.u32 %v732, %v733
        %v736 = vrot.slane %v732, 4
        %v738 = vshrl.u32 %v531, 16
        %v740 = vrot.slane %v738, 7
        %v741 = vshll.u32 %v531, 16
        %v743 = vor.u32 %v740, %v741
        %v744 = vsel %vm541, %v736, %v743
        %v745 = vrot.slane %v740, 4
        %v747 = vshrl.u32 %v532, 16
        %v749 = vrot.slane %v747, 7
        %v750 = vshll.u32 %v532, 16
        %v752 = vor.u32 %v749, %v750
        %v753 = vrot.slane %v749, 4
        %v755 = vshrl.u32 %v533, 16
        %v757 = vrot.slane %v755, 7
        %v758 = vshll.u32 %v533, 16
        %v760 = vor.u32 %v757, %v758
        %v761 = vsel %vm541, %v753, %v760
        %v762 = vrot.slane %v757, 4
        %v764 = vshrl.u32 %v534, 16
        %v766 = vrot.slane %v764, 7
        %v767 = vshll.u32 %v534, 16
        %v769 = vor.u32 %v766, %v767
        %v770 = vrot.slane %v766, 4
        %v772 = vshrl.u32 %v535, 16
        %v774 = vrot.slane %v772, 7
        %v775 = vshll.u32 %v535, 16
        %v777 = vor.u32 %v774, %v775
        %v778 = vsel %vm541, %v770, %v777
        %v779 = vrot.slane %v774, 4
        %v781 = vshrl.u32 %v536, 16
        %v783 = vrot.slane %v781, 7
        %v784 = vshll.u32 %v536, 16
        %v786 = vor.u32 %v783, %v784
        %v787 = vrot.slane %v783, 4
        %v789 = vshrl.u32 %v537, 16
        %v791 = vrot.slane %v789, 7
        %v792 = vshll.u32 %v537, 16
        %v794 = vor.u32 %v791, %v792
        %v795 = vsel %vm541, %v787, %v794
        %v796 = vrot.slane %v791, 4
        %v798 = vshrl.u32 %v538, 16
        %v800 = vrot.slane %v798, 7
        %v801 = vshll.u32 %v538, 16
        %v803 = vor.u32 %v800, %v801
        %v804 = vrot.slane %v800, 4
        %v806 = vshrl.u32 %v539, 16
        %v808 = vrot.slane %v806, 7
        %v809 = vshll.u32 %v539, 16
        %v811 = vor.u32 %v808, %v809
        %v812 = vsel %vm541, %v804, %v811
        %v813 = vrot.slane %v808, 4
        %s862 = scalar_lea.vmem [#allocation2], 12
        %vm863 = vcmask 1043456
        %vm864 = vmand %vm863, %vm337
        %v865 = vld [vmem:[%s862] sm:$0xf]
        %v866 = vsel %vm864, %v548, %v865
        %867 = vst [vmem:[%s862] sm:$0xf] %v866
        %868 = vst [vmem:[%s862 + $0x4] sm:$0xf] %v557
        %v869 = vld [vmem:[%s862 + $0x8] sm:$0x1]
        %v870 = vsel %vm282, %v558, %v869
        %871 = vst [vmem:[%s862 + $0x8] sm:$0x1] %v870
        %v872 = vld [vmem:[%s862 + $0xc] sm:$0xf]
        %v873 = vsel %vm864, %v565, %v872
        %874 = vst [vmem:[%s862 + $0xc] sm:$0xf] %v873
        %875 = vst [vmem:[%s862 + $0x10] sm:$0xf] %v574
        %v876 = vld [vmem:[%s862 + $0x14] sm:$0x1]
        %v877 = vsel %vm282, %v575, %v876
        %878 = vst [vmem:[%s862 + $0x14] sm:$0x1] %v877
        %v879 = vld [vmem:[%s862 + $0x18] sm:$0xf]
        %v880 = vsel %vm864, %v582, %v879
        %881 = vst [vmem:[%s862 + $0x18] sm:$0xf] %v880
        %882 = vst [vmem:[%s862 + $0x1c] sm:$0xf] %v591
        %v883 = vld [vmem:[%s862 + $0x20] sm:$0x1]
        %v884 = vsel %vm282, %v592, %v883
        %885 = vst [vmem:[%s862 + $0x20] sm:$0x1] %v884
        %v886 = vld [vmem:[%s862 + $0x24] sm:$0xf]
        %v887 = vsel %vm864, %v599, %v886
        %888 = vst [vmem:[%s862 + $0x24] sm:$0xf] %v887
        %889 = vst [vmem:[%s862 + $0x28] sm:$0xf] %v608
        %v890 = vld [vmem:[%s862 + $0x2c] sm:$0x1]
        %v891 = vsel %vm282, %v609, %v890
        %892 = vst [vmem:[%s862 + $0x2c] sm:$0x1] %v891
        %v893 = vld [vmem:[%s862 + $0x30] sm:$0xf]
        %v894 = vsel %vm864, %v616, %v893
        %895 = vst [vmem:[%s862 + $0x30] sm:$0xf] %v894
        %896 = vst [vmem:[%s862 + $0x34] sm:$0xf] %v625
        %v897 = vld [vmem:[%s862 + $0x38] sm:$0x1]
        %v898 = vsel %vm282, %v626, %v897
        %899 = vst [vmem:[%s862 + $0x38] sm:$0x1] %v898
        %v900 = vld [vmem:[%s862 + $0x3c] sm:$0xf]
        %v901 = vsel %vm864, %v633, %v900
        %902 = vst [vmem:[%s862 + $0x3c] sm:$0xf] %v901
        %903 = vst [vmem:[%s862 + $0x40] sm:$0xf] %v642
        %v904 = vld [vmem:[%s862 + $0x44] sm:$0x1]
        %v905 = vsel %vm282, %v643, %v904
        %906 = vst [vmem:[%s862 + $0x44] sm:$0x1] %v905
        %v907 = vld [vmem:[%s862 + $0x48] sm:$0xf]
        %v908 = vsel %vm864, %v650, %v907
        %909 = vst [vmem:[%s862 + $0x48] sm:$0xf] %v908
        %910 = vst [vmem:[%s862 + $0x4c] sm:$0xf] %v659
        %v911 = vld [vmem:[%s862 + $0x50] sm:$0x1]
        %v912 = vsel %vm282, %v660, %v911
        %913 = vst [vmem:[%s862 + $0x50] sm:$0x1] %v912
        %v914 = vld [vmem:[%s862 + $0x54] sm:$0xf]
        %v915 = vsel %vm864, %v667, %v914
        %916 = vst [vmem:[%s862 + $0x54] sm:$0xf] %v915
        %917 = vst [vmem:[%s862 + $0x58] sm:$0xf] %v676
        %v918 = vld [vmem:[%s862 + $0x5c] sm:$0x1]
        %v919 = vsel %vm282, %v677, %v918
        %920 = vst [vmem:[%s862 + $0x5c] sm:$0x1] %v919
        %v921 = vld [vmem:[%s862 + $0x60] sm:$0xf]
        %v922 = vsel %vm864, %v684, %v921
        %923 = vst [vmem:[%s862 + $0x60] sm:$0xf] %v922
        %924 = vst [vmem:[%s862 + $0x64] sm:$0xf] %v693
        %v925 = vld [vmem:[%s862 + $0x68] sm:$0x1]
        %v926 = vsel %vm282, %v694, %v925
        %927 = vst [vmem:[%s862 + $0x68] sm:$0x1] %v926
        %v928 = vld [vmem:[%s862 + $0x6c] sm:$0xf]
        %v929 = vsel %vm864, %v701, %v928
        %930 = vst [vmem:[%s862 + $0x6c] sm:$0xf] %v929
        %931 = vst [vmem:[%s862 + $0x70] sm:$0xf] %v710
        %v932 = vld [vmem:[%s862 + $0x74] sm:$0x1]
        %v933 = vsel %vm282, %v711, %v932
        %934 = vst [vmem:[%s862 + $0x74] sm:$0x1] %v933
        %v935 = vld [vmem:[%s862 + $0x78] sm:$0xf]
        %v936 = vsel %vm864, %v718, %v935
        %937 = vst [vmem:[%s862 + $0x78] sm:$0xf] %v936
        %938 = vst [vmem:[%s862 + $0x7c] sm:$0xf] %v727
        %v939 = vld [vmem:[%s862 + $0x80] sm:$0x1]
        %v940 = vsel %vm282, %v728, %v939
        %941 = vst [vmem:[%s862 + $0x80] sm:$0x1] %v940
        %v942 = vld [vmem:[%s862 + $0x84] sm:$0xf]
        %v943 = vsel %vm864, %v735, %v942
        %944 = vst [vmem:[%s862 + $0x84] sm:$0xf] %v943
        %945 = vst [vmem:[%s862 + $0x88] sm:$0xf] %v744
        %v946 = vld [vmem:[%s862 + $0x8c] sm:$0x1]
        %v947 = vsel %vm282, %v745, %v946
        %948 = vst [vmem:[%s862 + $0x8c] sm:$0x1] %v947
        %v949 = vld [vmem:[%s862 + $0x90] sm:$0xf]
        %v950 = vsel %vm864, %v752, %v949
        %951 = vst [vmem:[%s862 + $0x90] sm:$0xf] %v950
        %952 = vst [vmem:[%s862 + $0x94] sm:$0xf] %v761
        %v953 = vld [vmem:[%s862 + $0x98] sm:$0x1]
        %v954 = vsel %vm282, %v762, %v953
        %955 = vst [vmem:[%s862 + $0x98] sm:$0x1] %v954
        %v956 = vld [vmem:[%s862 + $0x9c] sm:$0xf]
        %v957 = vsel %vm864, %v769, %v956
        %958 = vst [vmem:[%s862 + $0x9c] sm:$0xf] %v957
        %959 = vst [vmem:[%s862 + $0xa0] sm:$0xf] %v778
        %v960 = vld [vmem:[%s862 + $0xa4] sm:$0x1]
        %v961 = vsel %vm282, %v779, %v960
        %962 = vst [vmem:[%s862 + $0xa4] sm:$0x1] %v961
        %v963 = vld [vmem:[%s862 + $0xa8] sm:$0xf]
        %v964 = vsel %vm864, %v786, %v963
        %965 = vst [vmem:[%s862 + $0xa8] sm:$0xf] %v964
        %966 = vst [vmem:[%s862 + $0xac] sm:$0xf] %v795
        %v967 = vld [vmem:[%s862 + $0xb0] sm:$0x1]
        %v968 = vsel %vm282, %v796, %v967
        %969 = vst [vmem:[%s862 + $0xb0] sm:$0x1] %v968
        %v970 = vld [vmem:[%s862 + $0xb4] sm:$0xf]
        %v971 = vsel %vm864, %v803, %v970
        %972 = vst [vmem:[%s862 + $0xb4] sm:$0xf] %v971
        %973 = vst [vmem:[%s862 + $0xb8] sm:$0xf] %v812
        %v974 = vld [vmem:[%s862 + $0xbc] sm:$0x1]
        %v975 = vsel %vm282, %v813, %v974
        %976 = vst [vmem:[%s862 + $0xbc] sm:$0x1] %v975
        %v977 = vld [vmem:[#allocation2] sm:$0xf]
        %v978 = vld [vmem:[#allocation2 + $0x4] sm:$0xf]
        %v979 = vld [vmem:[#allocation2 + $0xc] sm:$0xf]
        %v980 = vld [vmem:[#allocation2 + $0x10] sm:$0xf]
        %v981 = vld [vmem:[#allocation2 + $0x18] sm:$0xf]
        %v982 = vld [vmem:[#allocation2 + $0x1c] sm:$0xf]
        %v983 = vld [vmem:[#allocation2 + $0x24] sm:$0xf]
        %v984 = vld [vmem:[#allocation2 + $0x28] sm:$0xf]
        %v985 = vld [vmem:[#allocation2 + $0x30] sm:$0xf]
        %v986 = vld [vmem:[#allocation2 + $0x34] sm:$0xf]
        %v987 = vld [vmem:[#allocation2 + $0x3c] sm:$0xf]
        %v988 = vld [vmem:[#allocation2 + $0x40] sm:$0xf]
        %v989 = vld [vmem:[#allocation2 + $0x48] sm:$0xf]
        %v990 = vld [vmem:[#allocation2 + $0x4c] sm:$0xf]
        %v991 = vld [vmem:[#allocation2 + $0x54] sm:$0xf]
        %v992 = vld [vmem:[#allocation2 + $0x58] sm:$0xf]
        %v993 = vld [vmem:[#allocation2 + $0x60] sm:$0xf]
        %v994 = vld [vmem:[#allocation2 + $0x64] sm:$0xf]
        %v995 = vld [vmem:[#allocation2 + $0x6c] sm:$0xf]
        %v996 = vld [vmem:[#allocation2 + $0x70] sm:$0xf]
        %v997 = vld [vmem:[#allocation2 + $0x78] sm:$0xf]
        %v998 = vld [vmem:[#allocation2 + $0x7c] sm:$0xf]
        %v999 = vld [vmem:[#allocation2 + $0x84] sm:$0xf]
        %v1000 = vld [vmem:[#allocation2 + $0x88] sm:$0xf]
        %v1001 = vld [vmem:[#allocation2 + $0x90] sm:$0xf]
        %v1002 = vld [vmem:[#allocation2 + $0x94] sm:$0xf]
        %v1003 = vld [vmem:[#allocation2 + $0x9c] sm:$0xf]
        %v1004 = vld [vmem:[#allocation2 + $0xa0] sm:$0xf]
        %v1005 = vld [vmem:[#allocation2 + $0xa8] sm:$0xf]
        %v1006 = vld [vmem:[#allocation2 + $0xac] sm:$0xf]
        %v1007 = vld [vmem:[#allocation2 + $0xb4] sm:$0xf]
        %v1008 = vld [vmem:[#allocation2 + $0xb8] sm:$0xf]
        %v1009 = vld [vmem:[#allocation7] sm:$0xf]
        %v1010 = vld [vmem:[#allocation7 + $0x4] sm:$0xf]
        %v1011 = vld [vmem:[#allocation7 + $0x8] sm:$0xf]
        %v1012 = vld [vmem:[#allocation7 + $0xc] sm:$0xf]
        %v1013 = vld [vmem:[#allocation7 + $0x10] sm:$0xf]
        %v1014 = vld [vmem:[#allocation7 + $0x14] sm:$0xf]
        %v1015 = vld [vmem:[#allocation7 + $0x18] sm:$0xf]
        %v1016 = vld [vmem:[#allocation7 + $0x1c] sm:$0xf]
        %v1017 = vld [vmem:[#allocation7 + $0x20] sm:$0xf]
        %v1018 = vld [vmem:[#allocation7 + $0x24] sm:$0xf]
        %v1019 = vld [vmem:[#allocation7 + $0x28] sm:$0xf]
        %v1020 = vld [vmem:[#allocation7 + $0x2c] sm:$0xf]
        %v1021 = vld [vmem:[#allocation7 + $0x30] sm:$0xf]
        %v1022 = vld [vmem:[#allocation7 + $0x34] sm:$0xf]
        %v1023 = vld [vmem:[#allocation7 + $0x38] sm:$0xf]
        %v1024 = vld [vmem:[#allocation7 + $0x3c] sm:$0xf]
        %v1025 = vld [vmem:[#allocation2 + $0x8] sm:$0x1]
        %v1026 = vld [vmem:[#allocation2 + $0x14] sm:$0x1]
        %v1027 = vld [vmem:[#allocation2 + $0x20] sm:$0x1]
        %v1028 = vld [vmem:[#allocation2 + $0x2c] sm:$0x1]
        %v1029 = vld [vmem:[#allocation2 + $0x38] sm:$0x1]
        %v1030 = vld [vmem:[#allocation2 + $0x44] sm:$0x1]
        %v1031 = vld [vmem:[#allocation2 + $0x50] sm:$0x1]
        %v1032 = vld [vmem:[#allocation2 + $0x5c] sm:$0x1]
        %v1033 = vld [vmem:[#allocation2 + $0x68] sm:$0x1]
        %v1034 = vld [vmem:[#allocation2 + $0x74] sm:$0x1]
        %v1035 = vld [vmem:[#allocation2 + $0x80] sm:$0x1]
        %v1036 = vld [vmem:[#allocation2 + $0x8c] sm:$0x1]
        %v1037 = vld [vmem:[#allocation2 + $0x98] sm:$0x1]
        %v1038 = vld [vmem:[#allocation2 + $0xa4] sm:$0x1]
        %v1039 = vld [vmem:[#allocation2 + $0xb0] sm:$0x1]
        %v1040 = vld [vmem:[#allocation2 + $0xbc] sm:$0x1]
        %vm1041 = vsmask.f32 3328
        %vm1042 = vsmask.f32 7440
        %vm1043 = vmor %vm1041, %vm1042
        %v1045 = vshrl.u32 %v977, 16
        %v1047 = vrot.slane %v1045, 4
        %v1048 = vshll.u32 %v977, 16
        %v1050 = vrot.slane %v1048, 5
        %v1051 = vor.u32 %v1047, %v1050
        %v1052 = vrot.slane %v1051, 4
        %v1054 = vshll.u32 %v978, 16
        %v1056 = vrot.slane %v1054, 5
        %v1057 = vsel %vm1043, %v1052, %v1056
        %v1058 = vshrl.u32 %v978, 16
        %v1060 = vrot.slane %v1058, 4
        %v1061 = vor.u32 %v1060, %v1056
        %v1062 = vrot.slane %v1061, 4
        %v1064 = vshll.u32 %v1025, 16
        %v1066 = vrot.slane %v1064, 5
        %v1067 = vsel %vm1043, %v1062, %v1066
        %v1069 = vshrl.u32 %v979, 16
        %v1071 = vrot.slane %v1069, 4
        %v1072 = vshll.u32 %v979, 16
        %v1074 = vrot.slane %v1072, 5
        %v1075 = vor.u32 %v1071, %v1074
        %v1076 = vrot.slane %v1075, 4
        %v1078 = vshll.u32 %v980, 16
        %v1080 = vrot.slane %v1078, 5
        %v1081 = vsel %vm1043, %v1076, %v1080
        %v1082 = vshrl.u32 %v980, 16
        %v1084 = vrot.slane %v1082, 4
        %v1085 = vor.u32 %v1084, %v1080
        %v1086 = vrot.slane %v1085, 4
        %v1088 = vshll.u32 %v1026, 16
        %v1090 = vrot.slane %v1088, 5
        %v1091 = vsel %vm1043, %v1086, %v1090
        %v1093 = vshrl.u32 %v981, 16
        %v1095 = vrot.slane %v1093, 4
        %v1096 = vshll.u32 %v981, 16
        %v1098 = vrot.slane %v1096, 5
        %v1099 = vor.u32 %v1095, %v1098
        %v1100 = vrot.slane %v1099, 4
        %v1102 = vshll.u32 %v982, 16
        %v1104 = vrot.slane %v1102, 5
        %v1105 = vsel %vm1043, %v1100, %v1104
        %v1106 = vshrl.u32 %v982, 16
        %v1108 = vrot.slane %v1106, 4
        %v1109 = vor.u32 %v1108, %v1104
        %v1110 = vrot.slane %v1109, 4
        %v1112 = vshll.u32 %v1027, 16
        %v1114 = vrot.slane %v1112, 5
        %v1115 = vsel %vm1043, %v1110, %v1114
        %v1117 = vshrl.u32 %v983, 16
        %v1119 = vrot.slane %v1117, 4
        %v1120 = vshll.u32 %v983, 16
        %v1122 = vrot.slane %v1120, 5
        %v1123 = vor.u32 %v1119, %v1122
        %v1124 = vrot.slane %v1123, 4
        %v1126 = vshll.u32 %v984, 16
        %v1128 = vrot.slane %v1126, 5
        %v1129 = vsel %vm1043, %v1124, %v1128
        %v1130 = vshrl.u32 %v984, 16
        %v1132 = vrot.slane %v1130, 4
        %v1133 = vor.u32 %v1132, %v1128
        %v1134 = vrot.slane %v1133, 4
        %v1136 = vshll.u32 %v1028, 16
        %v1138 = vrot.slane %v1136, 5
        %v1139 = vsel %vm1043, %v1134, %v1138
        %v1141 = vshrl.u32 %v985, 16
        %v1143 = vrot.slane %v1141, 4
        %v1144 = vshll.u32 %v985, 16
        %v1146 = vrot.slane %v1144, 5
        %v1147 = vor.u32 %v1143, %v1146
        %v1148 = vrot.slane %v1147, 4
        %v1150 = vshll.u32 %v986, 16
        %v1152 = vrot.slane %v1150, 5
        %v1153 = vsel %vm1043, %v1148, %v1152
        %v1154 = vshrl.u32 %v986, 16
        %v1156 = vrot.slane %v1154, 4
        %v1157 = vor.u32 %v1156, %v1152
        %v1158 = vrot.slane %v1157, 4
        %v1160 = vshll.u32 %v1029, 16
        %v1162 = vrot.slane %v1160, 5
        %v1163 = vsel %vm1043, %v1158, %v1162
        %v1165 = vshrl.u32 %v987, 16
        %v1167 = vrot.slane %v1165, 4
        %v1168 = vshll.u32 %v987, 16
        %v1170 = vrot.slane %v1168, 5
        %v1171 = vor.u32 %v1167, %v1170
        %v1172 = vrot.slane %v1171, 4
        %v1174 = vshll.u32 %v988, 16
        %v1176 = vrot.slane %v1174, 5
        %v1177 = vsel %vm1043, %v1172, %v1176
        %v1178 = vshrl.u32 %v988, 16
        %v1180 = vrot.slane %v1178, 4
        %v1181 = vor.u32 %v1180, %v1176
        %v1182 = vrot.slane %v1181, 4
        %v1184 = vshll.u32 %v1030, 16
        %v1186 = vrot.slane %v1184, 5
        %v1187 = vsel %vm1043, %v1182, %v1186
        %v1189 = vshrl.u32 %v989, 16
        %v1191 = vrot.slane %v1189, 4
        %v1192 = vshll.u32 %v989, 16
        %v1194 = vrot.slane %v1192, 5
        %v1195 = vor.u32 %v1191, %v1194
        %v1196 = vrot.slane %v1195, 4
        %v1198 = vshll.u32 %v990, 16
        %v1200 = vrot.slane %v1198, 5
        %v1201 = vsel %vm1043, %v1196, %v1200
        %v1202 = vshrl.u32 %v990, 16
        %v1204 = vrot.slane %v1202, 4
        %v1205 = vor.u32 %v1204, %v1200
        %v1206 = vrot.slane %v1205, 4
        %v1208 = vshll.u32 %v1031, 16
        %v1210 = vrot.slane %v1208, 5
        %v1211 = vsel %vm1043, %v1206, %v1210
        %v1213 = vshrl.u32 %v991, 16
        %v1215 = vrot.slane %v1213, 4
        %v1216 = vshll.u32 %v991, 16
        %v1218 = vrot.slane %v1216, 5
        %v1219 = vor.u32 %v1215, %v1218
        %v1220 = vrot.slane %v1219, 4
        %v1222 = vshll.u32 %v992, 16
        %v1224 = vrot.slane %v1222, 5
        %v1225 = vsel %vm1043, %v1220, %v1224
        %v1226 = vshrl.u32 %v992, 16
        %v1228 = vrot.slane %v1226, 4
        %v1229 = vor.u32 %v1228, %v1224
        %v1230 = vrot.slane %v1229, 4
        %v1232 = vshll.u32 %v1032, 16
        %v1234 = vrot.slane %v1232, 5
        %v1235 = vsel %vm1043, %v1230, %v1234
        %v1237 = vshrl.u32 %v993, 16
        %v1239 = vrot.slane %v1237, 4
        %v1240 = vshll.u32 %v993, 16
        %v1242 = vrot.slane %v1240, 5
        %v1243 = vor.u32 %v1239, %v1242
        %v1244 = vrot.slane %v1243, 4
        %v1246 = vshll.u32 %v994, 16
        %v1248 = vrot.slane %v1246, 5
        %v1249 = vsel %vm1043, %v1244, %v1248
        %v1250 = vshrl.u32 %v994, 16
        %v1252 = vrot.slane %v1250, 4
        %v1253 = vor.u32 %v1252, %v1248
        %v1254 = vrot.slane %v1253, 4
        %v1256 = vshll.u32 %v1033, 16
        %v1258 = vrot.slane %v1256, 5
        %v1259 = vsel %vm1043, %v1254, %v1258
        %v1261 = vshrl.u32 %v995, 16
        %v1263 = vrot.slane %v1261, 4
        %v1264 = vshll.u32 %v995, 16
        %v1266 = vrot.slane %v1264, 5
        %v1267 = vor.u32 %v1263, %v1266
        %v1268 = vrot.slane %v1267, 4
        %v1270 = vshll.u32 %v996, 16
        %v1272 = vrot.slane %v1270, 5
        %v1273 = vsel %vm1043, %v1268, %v1272
        %v1274 = vshrl.u32 %v996, 16
        %v1276 = vrot.slane %v1274, 4
        %v1277 = vor.u32 %v1276, %v1272
        %v1278 = vrot.slane %v1277, 4
        %v1280 = vshll.u32 %v1034, 16
        %v1282 = vrot.slane %v1280, 5
        %v1283 = vsel %vm1043, %v1278, %v1282
        %v1285 = vshrl.u32 %v997, 16
        %v1287 = vrot.slane %v1285, 4
        %v1288 = vshll.u32 %v997, 16
        %v1290 = vrot.slane %v1288, 5
        %v1291 = vor.u32 %v1287, %v1290
        %v1292 = vrot.slane %v1291, 4
        %v1294 = vshll.u32 %v998, 16
        %v1296 = vrot.slane %v1294, 5
        %v1297 = vsel %vm1043, %v1292, %v1296
        %v1298 = vshrl.u32 %v998, 16
        %v1300 = vrot.slane %v1298, 4
        %v1301 = vor.u32 %v1300, %v1296
        %v1302 = vrot.slane %v1301, 4
        %v1304 = vshll.u32 %v1035, 16
        %v1306 = vrot.slane %v1304, 5
        %v1307 = vsel %vm1043, %v1302, %v1306
        %v1309 = vshrl.u32 %v999, 16
        %v1311 = vrot.slane %v1309, 4
        %v1312 = vshll.u32 %v999, 16
        %v1314 = vrot.slane %v1312, 5
        %v1315 = vor.u32 %v1311, %v1314
        %v1316 = vrot.slane %v1315, 4
        %v1318 = vshll.u32 %v1000, 16
        %v1320 = vrot.slane %v1318, 5
        %v1321 = vsel %vm1043, %v1316, %v1320
        %v1322 = vshrl.u32 %v1000, 16
        %v1324 = vrot.slane %v1322, 4
        %v1325 = vor.u32 %v1324, %v1320
        %v1326 = vrot.slane %v1325, 4
        %v1328 = vshll.u32 %v1036, 16
        %v1330 = vrot.slane %v1328, 5
        %v1331 = vsel %vm1043, %v1326, %v1330
        %v1333 = vshrl.u32 %v1001, 16
        %v1335 = vrot.slane %v1333, 4
        %v1336 = vshll.u32 %v1001, 16
        %v1338 = vrot.slane %v1336, 5
        %v1339 = vor.u32 %v1335, %v1338
        %v1340 = vrot.slane %v1339, 4
        %v1342 = vshll.u32 %v1002, 16
        %v1344 = vrot.slane %v1342, 5
        %v1345 = vsel %vm1043, %v1340, %v1344
        %v1346 = vshrl.u32 %v1002, 16
        %v1348 = vrot.slane %v1346, 4
        %v1349 = vor.u32 %v1348, %v1344
        %v1350 = vrot.slane %v1349, 4
        %v1352 = vshll.u32 %v1037, 16
        %v1354 = vrot.slane %v1352, 5
        %v1355 = vsel %vm1043, %v1350, %v1354
        %v1357 = vshrl.u32 %v1003, 16
        %v1359 = vrot.slane %v1357, 4
        %v1360 = vshll.u32 %v1003, 16
        %v1362 = vrot.slane %v1360, 5
        %v1363 = vor.u32 %v1359, %v1362
        %v1364 = vrot.slane %v1363, 4
        %v1366 = vshll.u32 %v1004, 16
        %v1368 = vrot.slane %v1366, 5
        %v1369 = vsel %vm1043, %v1364, %v1368
        %v1370 = vshrl.u32 %v1004, 16
        %v1372 = vrot.slane %v1370, 4
        %v1373 = vor.u32 %v1372, %v1368
        %v1374 = vrot.slane %v1373, 4
        %v1376 = vshll.u32 %v1038, 16
        %v1378 = vrot.slane %v1376, 5
        %v1379 = vsel %vm1043, %v1374, %v1378
        %v1381 = vshrl.u32 %v1005, 16
        %v1383 = vrot.slane %v1381, 4
        %v1384 = vshll.u32 %v1005, 16
        %v1386 = vrot.slane %v1384, 5
        %v1387 = vor.u32 %v1383, %v1386
        %v1388 = vrot.slane %v1387, 4
        %v1390 = vshll.u32 %v1006, 16
        %v1392 = vrot.slane %v1390, 5
        %v1393 = vsel %vm1043, %v1388, %v1392
        %v1394 = vshrl.u32 %v1006, 16
        %v1396 = vrot.slane %v1394, 4
        %v1397 = vor.u32 %v1396, %v1392
        %v1398 = vrot.slane %v1397, 4
        %v1400 = vshll.u32 %v1039, 16
        %v1402 = vrot.slane %v1400, 5
        %v1403 = vsel %vm1043, %v1398, %v1402
        %v1405 = vshrl.u32 %v1007, 16
        %v1407 = vrot.slane %v1405, 4
        %v1408 = vshll.u32 %v1007, 16
        %v1410 = vrot.slane %v1408, 5
        %v1411 = vor.u32 %v1407, %v1410
        %v1412 = vrot.slane %v1411, 4
        %v1414 = vshll.u32 %v1008, 16
        %v1416 = vrot.slane %v1414, 5
        %v1417 = vsel %vm1043, %v1412, %v1416
        %v1418 = vshrl.u32 %v1008, 16
        %v1420 = vrot.slane %v1418, 4
        %v1421 = vor.u32 %v1420, %v1416
        %v1422 = vrot.slane %v1421, 4
        %v1424 = vshll.u32 %v1040, 16
        %v1426 = vrot.slane %v1424, 5
        %v1427 = vsel %vm1043, %v1422, %v1426
        %v1428 = vld [vmem:[#allocation7 + $0x40] sm:$0xf]
        %v1429 = vld [vmem:[#allocation7 + $0x44] sm:$0xf]
        %v1430 = vld [vmem:[#allocation7 + $0x48] sm:$0xf]
        %v1431 = vld [vmem:[#allocation7 + $0x4c] sm:$0xf]
        %v1432 = vld [vmem:[#allocation7 + $0x50] sm:$0xf]
        %v1433 = vld [vmem:[#allocation7 + $0x54] sm:$0xf]
        %v1434 = vld [vmem:[#allocation7 + $0x58] sm:$0xf]
        %v1435 = vld [vmem:[#allocation7 + $0x5c] sm:$0xf]
        %v1436 = vld [vmem:[#allocation7 + $0x60] sm:$0xf]
        %v1437 = vld [vmem:[#allocation7 + $0x64] sm:$0xf]
        %v1438 = vld [vmem:[#allocation7 + $0x68] sm:$0xf]
        %v1439 = vld [vmem:[#allocation7 + $0x6c] sm:$0xf]
        %v1440 = vld [vmem:[#allocation7 + $0x70] sm:$0xf]
        %v1441 = vld [vmem:[#allocation7 + $0x74] sm:$0xf]
        %v1442 = vld [vmem:[#allocation7 + $0x78] sm:$0xf]
        %v1443 = vld [vmem:[#allocation7 + $0x7c] sm:$0xf]
        %v1444 = vunpack.c.l.b16 %v1057
        %v1445 = vunpack.c.l.b16 %v1067
        %v1446 = vunpack.c.l.b16 %v1081
        %v1447 = vunpack.c.l.b16 %v1091
        %v1448 = vunpack.c.l.b16 %v1105
        %v1449 = vunpack.c.l.b16 %v1115
        %v1450 = vunpack.c.l.b16 %v1129
        %v1451 = vunpack.c.l.b16 %v1139
        %v1452 = vunpack.c.l.b16 %v1153
        %v1453 = vunpack.c.l.b16 %v1163
        %v1454 = vunpack.c.l.b16 %v1177
        %v1455 = vunpack.c.l.b16 %v1187
        %v1456 = vunpack.c.l.b16 %v1201
        %v1457 = vunpack.c.l.b16 %v1211
        %v1458 = vunpack.c.l.b16 %v1225
        %v1459 = vunpack.c.l.b16 %v1235
        %v1460 = vunpack.c.l.b16 %v1249
        %v1461 = vunpack.c.l.b16 %v1259
        %v1462 = vunpack.c.l.b16 %v1273
        %v1463 = vunpack.c.l.b16 %v1283
        %v1464 = vunpack.c.l.b16 %v1297
        %v1465 = vunpack.c.l.b16 %v1307
        %v1466 = vunpack.c.l.b16 %v1321
        %v1467 = vunpack.c.l.b16 %v1331
        %v1468 = vunpack.c.l.b16 %v1345
        %v1469 = vunpack.c.l.b16 %v1355
        %v1470 = vunpack.c.l.b16 %v1369
        %v1471 = vunpack.c.l.b16 %v1379
        %v1472 = vunpack.c.l.b16 %v1393
        %v1473 = vunpack.c.l.b16 %v1403
        %v1474 = vunpack.c.l.b16 %v1417
        %v1475 = vunpack.c.l.b16 %v1427
        %v1476 = vpack.c.b16 %v1445, %v1444
        %v1477 = vpack.c.b16 %v1447, %v1446
        %v1478 = vpack.c.b16 %v1449, %v1448
        %v1479 = vpack.c.b16 %v1451, %v1450
        %v1480 = vpack.c.b16 %v1453, %v1452
        %v1481 = vpack.c.b16 %v1455, %v1454
        %v1482 = vpack.c.b16 %v1457, %v1456
        %v1483 = vpack.c.b16 %v1459, %v1458
        %v1484 = vpack.c.b16 %v1461, %v1460
        %v1485 = vpack.c.b16 %v1463, %v1462
        %v1486 = vpack.c.b16 %v1465, %v1464
        %v1487 = vpack.c.b16 %v1467, %v1466
        %v1488 = vpack.c.b16 %v1469, %v1468
        %v1489 = vpack.c.b16 %v1471, %v1470
        %v1490 = vpack.c.b16 %v1473, %v1472
        %v1491 = vpack.c.b16 %v1475, %v1474
        %v1524 = vunpack.c.l.b16 %v1428
        %v1525 = vunpack.c.l.b16 %v1429
        %v1526 = vunpack.c.l.b16 %v1430
        %v1527 = vunpack.c.l.b16 %v1431
        %v1528 = vunpack.c.l.b16 %v1432
        %v1529 = vunpack.c.l.b16 %v1433
        %v1530 = vunpack.c.l.b16 %v1434
        %v1531 = vunpack.c.l.b16 %v1435
        %v1532 = vunpack.c.l.b16 %v1436
        %v1533 = vunpack.c.l.b16 %v1437
        %v1534 = vunpack.c.l.b16 %v1438
        %v1535 = vunpack.c.l.b16 %v1439
        %v1536 = vunpack.c.l.b16 %v1440
        %v1537 = vunpack.c.l.b16 %v1441
        %v1538 = vunpack.c.l.b16 %v1442
        %v1539 = vunpack.c.l.b16 %v1443
        %v1540 = vpack.c.b16 %v1525, %v1524
        %v1541 = vpack.c.b16 %v1527, %v1526
        %v1542 = vpack.c.b16 %v1529, %v1528
        %v1543 = vpack.c.b16 %v1531, %v1530
        %v1544 = vpack.c.b16 %v1533, %v1532
        %v1545 = vpack.c.b16 %v1535, %v1534
        %v1546 = vpack.c.b16 %v1537, %v1536
        %v1547 = vpack.c.b16 %v1539, %v1538
        %1556 = vmatprep.subr.bf16.mxu0 0
        %1557 = vmatpush1.bf16.msra.mxu0 %v1540
        %1558 = vmatprep.subr.bf16.mxu0 0
        %1559 = vmatpush1.bf16.msra.mxu0 %v1541
        %1560 = vmatprep.subr.bf16.mxu0 0
        %1561 = vmatpush1.bf16.msra.mxu0 %v1542
        %1562 = vmatprep.subr.bf16.mxu0 0
        %1563 = vmatpush1.bf16.msra.mxu0 %v1543
        %1564 = vmatprep.subr.bf16.mxu0 0
        %1565 = vmatpush1.bf16.msra.mxu0 %v1544
        %1566 = vmatprep.subr.bf16.mxu0 0
        %1567 = vmatpush1.bf16.msra.mxu0 %v1545
        %1568 = vmatprep.subr.bf16.mxu0 0
        %1569 = vmatpush1.bf16.msra.mxu0 %v1546
        %1570 = vmatprep.subr.bf16.mxu0 0
        %1571 = vmatpush1.bf16.msra.mxu0 %v1547
        %1572 = vmatprep.subr.bf16.mxu0 0
        %1573 = vmatpush1.bf16.msra.mxu0 0
        %1574 = vmatprep.subr.bf16.mxu0 0
        %1575 = vmatpush1.bf16.msra.mxu0 0
        %1576 = vmatprep.subr.bf16.mxu0 0
        %1577 = vmatpush1.bf16.msra.mxu0 0
        %1578 = vmatprep.subr.bf16.mxu0 0
        %1579 = vmatpush1.bf16.msra.mxu0 0
        %1580 = vmatprep.subr.bf16.mxu0 0
        %1581 = vmatpush1.bf16.msra.mxu0 0
        %1582 = vmatprep.subr.bf16.mxu0 0
        %1583 = vmatpush1.bf16.msra.mxu0 0
        %1584 = vmatprep.subr.bf16.mxu0 0
        %1585 = vmatpush1.bf16.msra.mxu0 0
        %1586 = vmatprep.subr.bf16.mxu0 0
        %1587 = vmatpush1.bf16.msra.mxu0 0
        %1588 = vmatprep.mubr.bf16.mxu0 0
        %1589 = vmatmul.mubr.bf16.gmra.mrb[0].mxu0 %v1476
        %v1590 = vpop.f32.mrb[0].mxu0
        %v1591 = vadd.f32 0.0, %v1590
        %v1592 = vpop.f32.mrb[0].mxu0
        %v1593 = vpop.f32.mrb[0].mxu0
        %v1594 = vadd.f32 0.0, %v1593
        %v1595 = vpop.f32.mrb[0].mxu0
        %1596 = vmatprep.mubr.bf16.mxu0 0
        %1597 = vmatmul.mubr.bf16.gmra.mrb[0].mxu0 %v1477
        %v1598 = vpop.f32.mrb[0].mxu0
        %v1599 = vadd.f32 0.0, %v1598
        %v1600 = vpop.f32.mrb[0].mxu0
        %v1601 = vpop.f32.mrb[0].mxu0
        %v1602 = vadd.f32 0.0, %v1601
        %v1603 = vpop.f32.mrb[0].mxu0
        %1604 = vmatprep.mubr.bf16.mxu0 0
        %1605 = vmatmul.mubr.bf16.gmra.mrb[0].mxu0 %v1478
        %v1606 = vpop.f32.mrb[0].mxu0
        %v1607 = vadd.f32 0.0, %v1606
        %v1608 = vpop.f32.mrb[0].mxu0
        %v1609 = vpop.f32.mrb[0].mxu0
        %v1610 = vadd.f32 0.0, %v1609
        %v1611 = vpop.f32.mrb[0].mxu0
        %1612 = vmatprep.mubr.bf16.mxu0 0
        %1613 = vmatmul.mubr.bf16.gmra.mrb[0].mxu0 %v1479
        %v1614 = vpop.f32.mrb[0].mxu0
        %v1615 = vadd.f32 0.0, %v1614
        %v1616 = vpop.f32.mrb[0].mxu0
        %v1617 = vpop.f32.mrb[0].mxu0
        %v1618 = vadd.f32 0.0, %v1617
        %v1619 = vpop.f32.mrb[0].mxu0
        %1620 = vmatprep.mubr.bf16.mxu0 0
        %1621 = vmatmul.mubr.bf16.gmra.mrb[0].mxu0 %v1480
        %v1622 = vpop.f32.mrb[0].mxu0
        %v1623 = vadd.f32 0.0, %v1622
        %v1624 = vpop.f32.mrb[0].mxu0
        %v1625 = vpop.f32.mrb[0].mxu0
        %v1626 = vadd.f32 0.0, %v1625
        %v1627 = vpop.f32.mrb[0].mxu0
        %1628 = vmatprep.mubr.bf16.mxu0 0
        %1629 = vmatmul.mubr.bf16.gmra.mrb[0].mxu0 %v1481
        %v1630 = vpop.f32.mrb[0].mxu0
        %v1631 = vadd.f32 0.0, %v1630
        %v1632 = vpop.f32.mrb[0].mxu0
        %v1633 = vpop.f32.mrb[0].mxu0
        %v1634 = vadd.f32 0.0, %v1633
        %v1635 = vpop.f32.mrb[0].mxu0
        %1636 = vmatprep.mubr.bf16.mxu0 0
        %1637 = vmatmul.mubr.bf16.gmra.mrb[0].mxu0 %v1482
        %v1638 = vpop.f32.mrb[0].mxu0
        %v1639 = vadd.f32 0.0, %v1638
        %v1640 = vpop.f32.mrb[0].mxu0
        %v1641 = vpop.f32.mrb[0].mxu0
        %v1642 = vadd.f32 0.0, %v1641
        %v1643 = vpop.f32.mrb[0].mxu0
        %1644 = vmatprep.mubr.bf16.mxu0 0
        %1645 = vmatmul.mubr.bf16.gmra.mrb[0].mxu0 %v1483
        %v1646 = vpop.f32.mrb[0].mxu0
        %v1647 = vadd.f32 0.0, %v1646
        %v1648 = vpop.f32.mrb[0].mxu0
        %v1649 = vpop.f32.mrb[0].mxu0
        %v1650 = vadd.f32 0.0, %v1649
        %v1651 = vpop.f32.mrb[0].mxu0
        %1652 = vmatprep.mubr.bf16.mxu0 0
        %1653 = vmatmul.mubr.bf16.gmra.mrb[0].mxu0 %v1484
        %v1654 = vpop.f32.mrb[0].mxu0
        %v1655 = vadd.f32 0.0, %v1654
        %v1656 = vpop.f32.mrb[0].mxu0
        %v1657 = vpop.f32.mrb[0].mxu0
        %v1658 = vadd.f32 0.0, %v1657
        %v1659 = vpop.f32.mrb[0].mxu0
        %1660 = vmatprep.mubr.bf16.mxu0 0
        %1661 = vmatmul.mubr.bf16.gmra.mrb[0].mxu0 %v1485
        %v1662 = vpop.f32.mrb[0].mxu0
        %v1663 = vadd.f32 0.0, %v1662
        %v1664 = vpop.f32.mrb[0].mxu0
        %v1665 = vpop.f32.mrb[0].mxu0
        %v1666 = vadd.f32 0.0, %v1665
        %v1667 = vpop.f32.mrb[0].mxu0
        %1668 = vmatprep.mubr.bf16.mxu0 0
        %1669 = vmatmul.mubr.bf16.gmra.mrb[0].mxu0 %v1486
        %v1670 = vpop.f32.mrb[0].mxu0
        %v1671 = vadd.f32 0.0, %v1670
        %v1672 = vpop.f32.mrb[0].mxu0
        %v1673 = vpop.f32.mrb[0].mxu0
        %v1674 = vadd.f32 0.0, %v1673
        %v1675 = vpop.f32.mrb[0].mxu0
        %1676 = vmatprep.mubr.bf16.mxu0 0
        %1677 = vmatmul.mubr.bf16.gmra.mrb[0].mxu0 %v1487
        %v1678 = vpop.f32.mrb[0].mxu0
        %v1679 = vadd.f32 0.0, %v1678
        %v1680 = vpop.f32.mrb[0].mxu0
        %v1681 = vpop.f32.mrb[0].mxu0
        %v1682 = vadd.f32 0.0, %v1681
        %v1683 = vpop.f32.mrb[0].mxu0
        %1684 = vmatprep.mubr.bf16.mxu0 0
        %1685 = vmatmul.mubr.bf16.gmra.mrb[0].mxu0 %v1488
        %v1686 = vpop.f32.mrb[0].mxu0
        %v1687 = vadd.f32 0.0, %v1686
        %v1688 = vpop.f32.mrb[0].mxu0
        %v1689 = vpop.f32.mrb[0].mxu0
        %v1690 = vadd.f32 0.0, %v1689
        %v1691 = vpop.f32.mrb[0].mxu0
        %1692 = vmatprep.mubr.bf16.mxu0 0
        %1693 = vmatmul.mubr.bf16.gmra.mrb[0].mxu0 %v1489
        %v1694 = vpop.f32.mrb[0].mxu0
        %v1695 = vadd.f32 0.0, %v1694
        %v1696 = vpop.f32.mrb[0].mxu0
        %v1697 = vpop.f32.mrb[0].mxu0
        %v1698 = vadd.f32 0.0, %v1697
        %v1699 = vpop.f32.mrb[0].mxu0
        %1700 = vmatprep.mubr.bf16.mxu0 0
        %1701 = vmatmul.mubr.bf16.gmra.mrb[0].mxu0 %v1490
        %v1702 = vpop.f32.mrb[0].mxu0
        %v1703 = vadd.f32 0.0, %v1702
        %v1704 = vpop.f32.mrb[0].mxu0
        %v1705 = vpop.f32.mrb[0].mxu0
        %v1706 = vadd.f32 0.0, %v1705
        %v1707 = vpop.f32.mrb[0].mxu0
        %1708 = vmatprep.mubr.bf16.mxu0 0
        %1709 = vmatmul.mubr.bf16.gmra.mrb[0].mxu0 %v1491
        %v1710 = vpop.f32.mrb[0].mxu0
        %v1711 = vadd.f32 0.0, %v1710
        %v1712 = vpop.f32.mrb[0].mxu0
        %v1713 = vpop.f32.mrb[0].mxu0
        %v1714 = vadd.f32 0.0, %v1713
        %v1715 = vpop.f32.mrb[0].mxu0
        %1716 = vdwg.mxu0
        %v1749 = vunpack.c.l.b16 %v977
        %v1750 = vunpack.c.l.b16 %v978
        %v1751 = vunpack.c.l.b16 %v979
        %v1752 = vunpack.c.l.b16 %v980
        %v1753 = vunpack.c.l.b16 %v981
        %v1754 = vunpack.c.l.b16 %v982
        %v1755 = vunpack.c.l.b16 %v983
        %v1756 = vunpack.c.l.b16 %v984
        %v1757 = vunpack.c.l.b16 %v985
        %v1758 = vunpack.c.l.b16 %v986
        %v1759 = vunpack.c.l.b16 %v987
        %v1760 = vunpack.c.l.b16 %v988
        %v1761 = vunpack.c.l.b16 %v989
        %v1762 = vunpack.c.l.b16 %v990
        %v1763 = vunpack.c.l.b16 %v991
        %v1764 = vunpack.c.l.b16 %v992
        %v1765 = vunpack.c.l.b16 %v993
        %v1766 = vunpack.c.l.b16 %v994
        %v1767 = vunpack.c.l.b16 %v995
        %v1768 = vunpack.c.l.b16 %v996
        %v1769 = vunpack.c.l.b16 %v997
        %v1770 = vunpack.c.l.b16 %v998
        %v1771 = vunpack.c.l.b16 %v999
        %v1772 = vunpack.c.l.b16 %v1000
        %v1773 = vunpack.c.l.b16 %v1001
        %v1774 = vunpack.c.l.b16 %v1002
        %v1775 = vunpack.c.l.b16 %v1003
        %v1776 = vunpack.c.l.b16 %v1004
        %v1777 = vunpack.c.l.b16 %v1005
        %v1778 = vunpack.c.l.b16 %v1006
        %v1779 = vunpack.c.l.b16 %v1007
        %v1780 = vunpack.c.l.b16 %v1008
        %v1781 = vpack.c.b16 %v1750, %v1749
        %v1782 = vpack.c.b16 %v1752, %v1751
        %v1783 = vpack.c.b16 %v1754, %v1753
        %v1784 = vpack.c.b16 %v1756, %v1755
        %v1785 = vpack.c.b16 %v1758, %v1757
        %v1786 = vpack.c.b16 %v1760, %v1759
        %v1787 = vpack.c.b16 %v1762, %v1761
        %v1788 = vpack.c.b16 %v1764, %v1763
        %v1789 = vpack.c.b16 %v1766, %v1765
        %v1790 = vpack.c.b16 %v1768, %v1767
        %v1791 = vpack.c.b16 %v1770, %v1769
        %v1792 = vpack.c.b16 %v1772, %v1771
        %v1793 = vpack.c.b16 %v1774, %v1773
        %v1794 = vpack.c.b16 %v1776, %v1775
        %v1795 = vpack.c.b16 %v1778, %v1777
        %v1796 = vpack.c.b16 %v1780, %v1779
        %v1829 = vunpack.c.l.b16 %v1009
        %v1830 = vunpack.c.l.b16 %v1010
        %v1831 = vunpack.c.l.b16 %v1011
        %v1832 = vunpack.c.l.b16 %v1012
        %v1833 = vunpack.c.l.b16 %v1013
        %v1834 = vunpack.c.l.b16 %v1014
        %v1835 = vunpack.c.l.b16 %v1015
        %v1836 = vunpack.c.l.b16 %v1016
        %v1837 = vunpack.c.l.b16 %v1017
        %v1838 = vunpack.c.l.b16 %v1018
        %v1839 = vunpack.c.l.b16 %v1019
        %v1840 = vunpack.c.l.b16 %v1020
        %v1841 = vunpack.c.l.b16 %v1021
        %v1842 = vunpack.c.l.b16 %v1022
        %v1843 = vunpack.c.l.b16 %v1023
        %v1844 = vunpack.c.l.b16 %v1024
        %v1845 = vpack.c.b16 %v1830, %v1829
        %v1846 = vpack.c.b16 %v1832, %v1831
        %v1847 = vpack.c.b16 %v1834, %v1833
        %v1848 = vpack.c.b16 %v1836, %v1835
        %v1849 = vpack.c.b16 %v1838, %v1837
        %v1850 = vpack.c.b16 %v1840, %v1839
        %v1851 = vpack.c.b16 %v1842, %v1841
        %v1852 = vpack.c.b16 %v1844, %v1843
        %1861 = vmatprep.subr.bf16.mxu0 0
        %1862 = vmatpush1.bf16.msra.mxu0 %v1845
        %1863 = vmatprep.subr.bf16.mxu0 0
        %1864 = vmatpush1.bf16.msra.mxu0 %v1846
        %1865 = vmatprep.subr.bf16.mxu0 0
        %1866 = vmatpush1.bf16.msra.mxu0 %v1847
        %1867 = vmatprep.subr.bf16.mxu0 0
        %1868 = vmatpush1.bf16.msra.mxu0 %v1848
        %1869 = vmatprep.subr.bf16.mxu0 0
        %1870 = vmatpush1.bf16.msra.mxu0 %v1849
        %1871 = vmatprep.subr.bf16.mxu0 0
        %1872 = vmatpush1.bf16.msra.mxu0 %v1850
        %1873 = vmatprep.subr.bf16.mxu0 0
        %1874 = vmatpush1.bf16.msra.mxu0 %v1851
        %1875 = vmatprep.subr.bf16.mxu0 0
        %1876 = vmatpush1.bf16.msra.mxu0 %v1852
        %1877 = vmatprep.subr.bf16.mxu0 0
        %1878 = vmatpush1.bf16.msra.mxu0 0
        %1879 = vmatprep.subr.bf16.mxu0 0
        %1880 = vmatpush1.bf16.msra.mxu0 0
        %1881 = vmatprep.subr.bf16.mxu0 0
        %1882 = vmatpush1.bf16.msra.mxu0 0
        %1883 = vmatprep.subr.bf16.mxu0 0
        %1884 = vmatpush1.bf16.msra.mxu0 0
        %1885 = vmatprep.subr.bf16.mxu0 0
        %1886 = vmatpush1.bf16.msra.mxu0 0
        %1887 = vmatprep.subr.bf16.mxu0 0
        %1888 = vmatpush1.bf16.msra.mxu0 0
        %1889 = vmatprep.subr.bf16.mxu0 0
        %1890 = vmatpush1.bf16.msra.mxu0 0
        %1891 = vmatprep.subr.bf16.mxu0 0
        %1892 = vmatpush1.bf16.msra.mxu0 0
        %1893 = vmatprep.mubr.bf16.mxu0 0
        %1894 = vmatmul.mubr.bf16.gmra.mrb[0].mxu0 %v1781
        %v1895 = vpop.f32.mrb[0].mxu0
        %v1896 = vadd.f32 %v1591, %v1895
        %v1897 = vpop.f32.mrb[0].mxu0
        %v1898 = vpop.f32.mrb[0].mxu0
        %v1899 = vadd.f32 %v1594, %v1898
        %v1900 = vpop.f32.mrb[0].mxu0
        %1901 = vmatprep.mubr.bf16.mxu0 0
        %1902 = vmatmul.mubr.bf16.gmra.mrb[0].mxu0 %v1782
        %v1903 = vpop.f32.mrb[0].mxu0
        %v1904 = vadd.f32 %v1599, %v1903
        %v1905 = vpop.f32.mrb[0].mxu0
        %v1906 = vpop.f32.mrb[0].mxu0
        %v1907 = vadd.f32 %v1602, %v1906
        %v1908 = vpop.f32.mrb[0].mxu0
        %1909 = vmatprep.mubr.bf16.mxu0 0
        %1910 = vmatmul.mubr.bf16.gmra.mrb[0].mxu0 %v1783
        %v1911 = vpop.f32.mrb[0].mxu0
        %v1912 = vadd.f32 %v1607, %v1911
        %v1913 = vpop.f32.mrb[0].mxu0
        %v1914 = vpop.f32.mrb[0].mxu0
        %v1915 = vadd.f32 %v1610, %v1914
        %v1916 = vpop.f32.mrb[0].mxu0
        %1917 = vmatprep.mubr.bf16.mxu0 0
        %1918 = vmatmul.mubr.bf16.gmra.mrb[0].mxu0 %v1784
        %v1919 = vpop.f32.mrb[0].mxu0
        %v1920 = vadd.f32 %v1615, %v1919
        %v1921 = vpop.f32.mrb[0].mxu0
        %v1922 = vpop.f32.mrb[0].mxu0
        %v1923 = vadd.f32 %v1618, %v1922
        %v1924 = vpop.f32.mrb[0].mxu0
        %1925 = vmatprep.mubr.bf16.mxu0 0
        %1926 = vmatmul.mubr.bf16.gmra.mrb[0].mxu0 %v1785
        %v1927 = vpop.f32.mrb[0].mxu0
        %v1928 = vadd.f32 %v1623, %v1927
        %v1929 = vpop.f32.mrb[0].mxu0
        %v1930 = vpop.f32.mrb[0].mxu0
        %v1931 = vadd.f32 %v1626, %v1930
        %v1932 = vpop.f32.mrb[0].mxu0
        %1933 = vmatprep.mubr.bf16.mxu0 0
        %1934 = vmatmul.mubr.bf16.gmra.mrb[0].mxu0 %v1786
        %v1935 = vpop.f32.mrb[0].mxu0
        %v1936 = vadd.f32 %v1631, %v1935
        %v1937 = vpop.f32.mrb[0].mxu0
        %v1938 = vpop.f32.mrb[0].mxu0
        %v1939 = vadd.f32 %v1634, %v1938
        %v1940 = vpop.f32.mrb[0].mxu0
        %1941 = vmatprep.mubr.bf16.mxu0 0
        %1942 = vmatmul.mubr.bf16.gmra.mrb[0].mxu0 %v1787
        %v1943 = vpop.f32.mrb[0].mxu0
        %v1944 = vadd.f32 %v1639, %v1943
        %v1945 = vpop.f32.mrb[0].mxu0
        %v1946 = vpop.f32.mrb[0].mxu0
        %v1947 = vadd.f32 %v1642, %v1946
        %v1948 = vpop.f32.mrb[0].mxu0
        %1949 = vmatprep.mubr.bf16.mxu0 0
        %1950 = vmatmul.mubr.bf16.gmra.mrb[0].mxu0 %v1788
        %v1951 = vpop.f32.mrb[0].mxu0
        %v1952 = vadd.f32 %v1647, %v1951
        %v1953 = vpop.f32.mrb[0].mxu0
        %v1954 = vpop.f32.mrb[0].mxu0
        %v1955 = vadd.f32 %v1650, %v1954
        %v1956 = vpop.f32.mrb[0].mxu0
        %1957 = vmatprep.mubr.bf16.mxu0 0
        %1958 = vmatmul.mubr.bf16.gmra.mrb[0].mxu0 %v1789
        %v1959 = vpop.f32.mrb[0].mxu0
        %v1960 = vadd.f32 %v1655, %v1959
        %v1961 = vpop.f32.mrb[0].mxu0
        %v1962 = vpop.f32.mrb[0].mxu0
        %v1963 = vadd.f32 %v1658, %v1962
        %v1964 = vpop.f32.mrb[0].mxu0
        %1965 = vmatprep.mubr.bf16.mxu0 0
        %1966 = vmatmul.mubr.bf16.gmra.mrb[0].mxu0 %v1790
        %v1967 = vpop.f32.mrb[0].mxu0
        %v1968 = vadd.f32 %v1663, %v1967
        %v1969 = vpop.f32.mrb[0].mxu0
        %v1970 = vpop.f32.mrb[0].mxu0
        %v1971 = vadd.f32 %v1666, %v1970
        %v1972 = vpop.f32.mrb[0].mxu0
        %1973 = vmatprep.mubr.bf16.mxu0 0
        %1974 = vmatmul.mubr.bf16.gmra.mrb[0].mxu0 %v1791
        %v1975 = vpop.f32.mrb[0].mxu0
        %v1976 = vadd.f32 %v1671, %v1975
        %v1977 = vpop.f32.mrb[0].mxu0
        %v1978 = vpop.f32.mrb[0].mxu0
        %v1979 = vadd.f32 %v1674, %v1978
        %v1980 = vpop.f32.mrb[0].mxu0
        %1981 = vmatprep.mubr.bf16.mxu0 0
        %1982 = vmatmul.mubr.bf16.gmra.mrb[0].mxu0 %v1792
        %v1983 = vpop.f32.mrb[0].mxu0
        %v1984 = vadd.f32 %v1679, %v1983
        %v1985 = vpop.f32.mrb[0].mxu0
        %v1986 = vpop.f32.mrb[0].mxu0
        %v1987 = vadd.f32 %v1682, %v1986
        %v1988 = vpop.f32.mrb[0].mxu0
        %1989 = vmatprep.mubr.bf16.mxu0 0
        %1990 = vmatmul.mubr.bf16.gmra.mrb[0].mxu0 %v1793
        %v1991 = vpop.f32.mrb[0].mxu0
        %v1992 = vadd.f32 %v1687, %v1991
        %v1993 = vpop.f32.mrb[0].mxu0
        %v1994 = vpop.f32.mrb[0].mxu0
        %v1995 = vadd.f32 %v1690, %v1994
        %v1996 = vpop.f32.mrb[0].mxu0
        %1997 = vmatprep.mubr.bf16.mxu0 0
        %1998 = vmatmul.mubr.bf16.gmra.mrb[0].mxu0 %v1794
        %v1999 = vpop.f32.mrb[0].mxu0
        %v2000 = vadd.f32 %v1695, %v1999
        %v2001 = vpop.f32.mrb[0].mxu0
        %v2002 = vpop.f32.mrb[0].mxu0
        %v2003 = vadd.f32 %v1698, %v2002
        %v2004 = vpop.f32.mrb[0].mxu0
        %2005 = vmatprep.mubr.bf16.mxu0 0
        %2006 = vmatmul.mubr.bf16.gmra.mrb[0].mxu0 %v1795
        %v2007 = vpop.f32.mrb[0].mxu0
        %v2008 = vadd.f32 %v1703, %v2007
        %v2009 = vpop.f32.mrb[0].mxu0
        %v2010 = vpop.f32.mrb[0].mxu0
        %v2011 = vadd.f32 %v1706, %v2010
        %v2012 = vpop.f32.mrb[0].mxu0
        %2013 = vmatprep.mubr.bf16.mxu0 0
        %2014 = vmatmul.mubr.bf16.gmra.mrb[0].mxu0 %v1796
        %v2015 = vpop.f32.mrb[0].mxu0
        %v2016 = vadd.f32 %v1711, %v2015
        %v2017 = vpop.f32.mrb[0].mxu0
        %v2018 = vpop.f32.mrb[0].mxu0
        %v2019 = vadd.f32 %v1714, %v2018
        %v2020 = vpop.f32.mrb[0].mxu0
        %2021 = vdwg.mxu0
        %v2022 = vld [vmem:[#allocation2] sm:$0xe]
        %v2023 = vld [vmem:[#allocation2 + $0xc] sm:$0xe]
        %v2024 = vld [vmem:[#allocation2 + $0x18] sm:$0xe]
        %v2025 = vld [vmem:[#allocation2 + $0x24] sm:$0xe]
        %v2026 = vld [vmem:[#allocation2 + $0x30] sm:$0xe]
        %v2027 = vld [vmem:[#allocation2 + $0x3c] sm:$0xe]
        %v2028 = vld [vmem:[#allocation2 + $0x48] sm:$0xe]
        %v2029 = vld [vmem:[#allocation2 + $0x54] sm:$0xe]
        %v2030 = vld [vmem:[#allocation2 + $0x60] sm:$0xe]
        %v2031 = vld [vmem:[#allocation2 + $0x6c] sm:$0xe]
        %v2032 = vld [vmem:[#allocation2 + $0x78] sm:$0xe]
        %v2033 = vld [vmem:[#allocation2 + $0x84] sm:$0xe]
        %v2034 = vld [vmem:[#allocation2 + $0x90] sm:$0xe]
        %v2035 = vld [vmem:[#allocation2 + $0x9c] sm:$0xe]
        %v2036 = vld [vmem:[#allocation2 + $0xa8] sm:$0xe]
        %v2037 = vld [vmem:[#allocation2 + $0xb4] sm:$0xe]
        %vm2070 = vcmask 1042432
        %vm2071 = vcmask 1046532
        %vm2072 = vmor %vm2070, %vm2071
        %v2073 = vrot.slane %v2022, 5
        %v2074 = vrot.slane %v2073, 4
        %v2075 = vrot.slane %v978, 5
        %v2076 = vsel %vm2072, %v2074, %v2075
        %v2077 = vrot.slane %v2075, 4
        %v2078 = vrot.slane %v1025, 5
        %v2079 = vsel %vm2072, %v2077, %v2078
        %v2080 = vrot.slane %v2023, 5
        %v2081 = vrot.slane %v2080, 4
        %v2082 = vrot.slane %v980, 5
        %v2083 = vsel %vm2072, %v2081, %v2082
        %v2084 = vrot.slane %v2082, 4
        %v2085 = vrot.slane %v1026, 5
        %v2086 = vsel %vm2072, %v2084, %v2085
        %v2087 = vrot.slane %v2024, 5
        %v2088 = vrot.slane %v2087, 4
        %v2089 = vrot.slane %v982, 5
        %v2090 = vsel %vm2072, %v2088, %v2089
        %v2091 = vrot.slane %v2089, 4
        %v2092 = vrot.slane %v1027, 5
        %v2093 = vsel %vm2072, %v2091, %v2092
        %v2094 = vrot.slane %v2025, 5
        %v2095 = vrot.slane %v2094, 4
        %v2096 = vrot.slane %v984, 5
        %v2097 = vsel %vm2072, %v2095, %v2096
        %v2098 = vrot.slane %v2096, 4
        %v2099 = vrot.slane %v1028, 5
        %v2100 = vsel %vm2072, %v2098, %v2099
        %v2101 = vrot.slane %v2026, 5
        %v2102 = vrot.slane %v2101, 4
        %v2103 = vrot.slane %v986, 5
        %v2104 = vsel %vm2072, %v2102, %v2103
        %v2105 = vrot.slane %v2103, 4
        %v2106 = vrot.slane %v1029, 5
        %v2107 = vsel %vm2072, %v2105, %v2106
        %v2108 = vrot.slane %v2027, 5
        %v2109 = vrot.slane %v2108, 4
        %v2110 = vrot.slane %v988, 5
        %v2111 = vsel %vm2072, %v2109, %v2110
        %v2112 = vrot.slane %v2110, 4
        %v2113 = vrot.slane %v1030, 5
        %v2114 = vsel %vm2072, %v2112, %v2113
        %v2115 = vrot.slane %v2028, 5
        %v2116 = vrot.slane %v2115, 4
        %v2117 = vrot.slane %v990, 5
        %v2118 = vsel %vm2072, %v2116, %v2117
        %v2119 = vrot.slane %v2117, 4
        %v2120 = vrot.slane %v1031, 5
        %v2121 = vsel %vm2072, %v2119, %v2120
        %v2122 = vrot.slane %v2029, 5
        %v2123 = vrot.slane %v2122, 4
        %v2124 = vrot.slane %v992, 5
        %v2125 = vsel %vm2072, %v2123, %v2124
        %v2126 = vrot.slane %v2124, 4
        %v2127 = vrot.slane %v1032, 5
        %v2128 = vsel %vm2072, %v2126, %v2127
        %v2129 = vrot.slane %v2030, 5
        %v2130 = vrot.slane %v2129, 4
        %v2131 = vrot.slane %v994, 5
        %v2132 = vsel %vm2072, %v2130, %v2131
        %v2133 = vrot.slane %v2131, 4
        %v2134 = vrot.slane %v1033, 5
        %v2135 = vsel %vm2072, %v2133, %v2134
        %v2136 = vrot.slane %v2031, 5
        %v2137 = vrot.slane %v2136, 4
        %v2138 = vrot.slane %v996, 5
        %v2139 = vsel %vm2072, %v2137, %v2138
        %v2140 = vrot.slane %v2138, 4
        %v2141 = vrot.slane %v1034, 5
        %v2142 = vsel %vm2072, %v2140, %v2141
        %v2143 = vrot.slane %v2032, 5
        %v2144 = vrot.slane %v2143, 4
        %v2145 = vrot.slane %v998, 5
        %v2146 = vsel %vm2072, %v2144, %v2145
        %v2147 = vrot.slane %v2145, 4
        %v2148 = vrot.slane %v1035, 5
        %v2149 = vsel %vm2072, %v2147, %v2148
        %v2150 = vrot.slane %v2033, 5
        %v2151 = vrot.slane %v2150, 4
        %v2152 = vrot.slane %v1000, 5
        %v2153 = vsel %vm2072, %v2151, %v2152
        %v2154 = vrot.slane %v2152, 4
        %v2155 = vrot.slane %v1036, 5
        %v2156 = vsel %vm2072, %v2154, %v2155
        %v2157 = vrot.slane %v2034, 5
        %v2158 = vrot.slane %v2157, 4
        %v2159 = vrot.slane %v1002, 5
        %v2160 = vsel %vm2072, %v2158, %v2159
        %v2161 = vrot.slane %v2159, 4
        %v2162 = vrot.slane %v1037, 5
        %v2163 = vsel %vm2072, %v2161, %v2162
        %v2164 = vrot.slane %v2035, 5
        %v2165 = vrot.slane %v2164, 4
        %v2166 = vrot.slane %v1004, 5
        %v2167 = vsel %vm2072, %v2165, %v2166
        %v2168 = vrot.slane %v2166, 4
        %v2169 = vrot.slane %v1038, 5
        %v2170 = vsel %vm2072, %v2168, %v2169
        %v2171 = vrot.slane %v2036, 5
        %v2172 = vrot.slane %v2171, 4
        %v2173 = vrot.slane %v1006, 5
        %v2174 = vsel %vm2072, %v2172, %v2173
        %v2175 = vrot.slane %v2173, 4
        %v2176 = vrot.slane %v1039, 5
        %v2177 = vsel %vm2072, %v2175, %v2176
        %v2178 = vrot.slane %v2037, 5
        %v2179 = vrot.slane %v2178, 4
        %v2180 = vrot.slane %v1008, 5
        %v2181 = vsel %vm2072, %v2179, %v2180
        %v2182 = vrot.slane %v2180, 4
        %v2183 = vrot.slane %v1040, 5
        %v2184 = vsel %vm2072, %v2182, %v2183
        %v2185 = vld [vmem:[#allocation7 + $0x80] sm:$0xf]
        %v2186 = vld [vmem:[#allocation7 + $0x84] sm:$0xf]
        %v2187 = vld [vmem:[#allocation7 + $0x88] sm:$0xf]
        %v2188 = vld [vmem:[#allocation7 + $0x8c] sm:$0xf]
        %v2189 = vld [vmem:[#allocation7 + $0x90] sm:$0xf]
        %v2190 = vld [vmem:[#allocation7 + $0x94] sm:$0xf]
        %v2191 = vld [vmem:[#allocation7 + $0x98] sm:$0xf]
        %v2192 = vld [vmem:[#allocation7 + $0x9c] sm:$0xf]
        %v2193 = vld [vmem:[#allocation7 + $0xa0] sm:$0xf]
        %v2194 = vld [vmem:[#allocation7 + $0xa4] sm:$0xf]
        %v2195 = vld [vmem:[#allocation7 + $0xa8] sm:$0xf]
        %v2196 = vld [vmem:[#allocation7 + $0xac] sm:$0xf]
        %v2197 = vld [vmem:[#allocation7 + $0xb0] sm:$0xf]
        %v2198 = vld [vmem:[#allocation7 + $0xb4] sm:$0xf]
        %v2199 = vld [vmem:[#allocation7 + $0xb8] sm:$0xf]
        %v2200 = vld [vmem:[#allocation7 + $0xbc] sm:$0xf]
        %v2201 = vunpack.c.l.b16 %v2076
        %v2202 = vunpack.c.l.b16 %v2079
        %v2203 = vunpack.c.l.b16 %v2083
        %v2204 = vunpack.c.l.b16 %v2086
        %v2205 = vunpack.c.l.b16 %v2090
        %v2206 = vunpack.c.l.b16 %v2093
        %v2207 = vunpack.c.l.b16 %v2097
        %v2208 = vunpack.c.l.b16 %v2100
        %v2209 = vunpack.c.l.b16 %v2104
        %v2210 = vunpack.c.l.b16 %v2107
        %v2211 = vunpack.c.l.b16 %v2111
        %v2212 = vunpack.c.l.b16 %v2114
        %v2213 = vunpack.c.l.b16 %v2118
        %v2214 = vunpack.c.l.b16 %v2121
        %v2215 = vunpack.c.l.b16 %v2125
        %v2216 = vunpack.c.l.b16 %v2128
        %v2217 = vunpack.c.l.b16 %v2132
        %v2218 = vunpack.c.l.b16 %v2135
        %v2219 = vunpack.c.l.b16 %v2139
        %v2220 = vunpack.c.l.b16 %v2142
        %v2221 = vunpack.c.l.b16 %v2146
        %v2222 = vunpack.c.l.b16 %v2149
        %v2223 = vunpack.c.l.b16 %v2153
        %v2224 = vunpack.c.l.b16 %v2156
        %v2225 = vunpack.c.l.b16 %v2160
        %v2226 = vunpack.c.l.b16 %v2163
        %v2227 = vunpack.c.l.b16 %v2167
        %v2228 = vunpack.c.l.b16 %v2170
        %v2229 = vunpack.c.l.b16 %v2174
        %v2230 = vunpack.c.l.b16 %v2177
        %v2231 = vunpack.c.l.b16 %v2181
        %v2232 = vunpack.c.l.b16 %v2184
        %v2233 = vpack.c.b16 %v2202, %v2201
        %v2234 = vpack.c.b16 %v2204, %v2203
        %v2235 = vpack.c.b16 %v2206, %v2205
        %v2236 = vpack.c.b16 %v2208, %v2207
        %v2237 = vpack.c.b16 %v2210, %v2209
        %v2238 = vpack.c.b16 %v2212, %v2211
        %v2239 = vpack.c.b16 %v2214, %v2213
        %v2240 = vpack.c.b16 %v2216, %v2215
        %v2241 = vpack.c.b16 %v2218, %v2217
        %v2242 = vpack.c.b16 %v2220, %v2219
        %v2243 = vpack.c.b16 %v2222, %v2221
        %v2244 = vpack.c.b16 %v2224, %v2223
        %v2245 = vpack.c.b16 %v2226, %v2225
        %v2246 = vpack.c.b16 %v2228, %v2227
        %v2247 = vpack.c.b16 %v2230, %v2229
        %v2248 = vpack.c.b16 %v2232, %v2231
        %v2281 = vunpack.c.l.b16 %v2185
        %v2282 = vunpack.c.l.b16 %v2186
        %v2283 = vunpack.c.l.b16 %v2187
        %v2284 = vunpack.c.l.b16 %v2188
        %v2285 = vunpack.c.l.b16 %v2189
        %v2286 = vunpack.c.l.b16 %v2190
        %v2287 = vunpack.c.l.b16 %v2191
        %v2288 = vunpack.c.l.b16 %v2192
        %v2289 = vunpack.c.l.b16 %v2193
        %v2290 = vunpack.c.l.b16 %v2194
        %v2291 = vunpack.c.l.b16 %v2195
        %v2292 = vunpack.c.l.b16 %v2196
        %v2293 = vunpack.c.l.b16 %v2197
        %v2294 = vunpack.c.l.b16 %v2198
        %v2295 = vunpack.c.l.b16 %v2199
        %v2296 = vunpack.c.l.b16 %v2200
        %v2297 = vpack.c.b16 %v2282, %v2281
        %v2298 = vpack.c.b16 %v2284, %v2283
        %v2299 = vpack.c.b16 %v2286, %v2285
        %v2300 = vpack.c.b16 %v2288, %v2287
        %v2301 = vpack.c.b16 %v2290, %v2289
        %v2302 = vpack.c.b16 %v2292, %v2291
        %v2303 = vpack.c.b16 %v2294, %v2293
        %v2304 = vpack.c.b16 %v2296, %v2295
        %2313 = vmatprep.subr.bf16.mxu0 0
        %2314 = vmatpush1.bf16.msra.mxu0 %v2297
        %2315 = vmatprep.subr.bf16.mxu0 0
        %2316 = vmatpush1.bf16.msra.mxu0 %v2298
        %2317 = vmatprep.subr.bf16.mxu0 0
        %2318 = vmatpush1.bf16.msra.mxu0 %v2299
        %2319 = vmatprep.subr.bf16.mxu0 0
        %2320 = vmatpush1.bf16.msra.mxu0 %v2300
        %2321 = vmatprep.subr.bf16.mxu0 0
        %2322 = vmatpush1.bf16.msra.mxu0 %v2301
        %2323 = vmatprep.subr.bf16.mxu0 0
        %2324 = vmatpush1.bf16.msra.mxu0 %v2302
        %2325 = vmatprep.subr.bf16.mxu0 0
        %2326 = vmatpush1.bf16.msra.mxu0 %v2303
        %2327 = vmatprep.subr.bf16.mxu0 0
        %2328 = vmatpush1.bf16.msra.mxu0 %v2304
        %2329 = vmatprep.subr.bf16.mxu0 0
        %2330 = vmatpush1.bf16.msra.mxu0 0
        %2331 = vmatprep.subr.bf16.mxu0 0
        %2332 = vmatpush1.bf16.msra.mxu0 0
        %2333 = vmatprep.subr.bf16.mxu0 0
        %2334 = vmatpush1.bf16.msra.mxu0 0
        %2335 = vmatprep.subr.bf16.mxu0 0
        %2336 = vmatpush1.bf16.msra.mxu0 0
        %2337 = vmatprep.subr.bf16.mxu0 0
        %2338 = vmatpush1.bf16.msra.mxu0 0
        %2339 = vmatprep.subr.bf16.mxu0 0
        %2340 = vmatpush1.bf16.msra.mxu0 0
        %2341 = vmatprep.subr.bf16.mxu0 0
        %2342 = vmatpush1.bf16.msra.mxu0 0
        %2343 = vmatprep.subr.bf16.mxu0 0
        %2344 = vmatpush1.bf16.msra.mxu0 0
        %2345 = vmatprep.mubr.bf16.mxu0 0
        %2346 = vmatmul.mubr.bf16.gmra.mrb[0].mxu0 %v2233
        %v2347 = vpop.f32.mrb[0].mxu0
        %v2348 = vadd.f32 0.0, %v2347
        %v2349 = vpop.f32.mrb[0].mxu0
        %v2350 = vpop.f32.mrb[0].mxu0
        %v2351 = vadd.f32 0.0, %v2350
        %v2352 = vpop.f32.mrb[0].mxu0
        %2353 = vmatprep.mubr.bf16.mxu0 0
        %2354 = vmatmul.mubr.bf16.gmra.mrb[0].mxu0 %v2234
        %v2355 = vpop.f32.mrb[0].mxu0
        %v2356 = vadd.f32 0.0, %v2355
        %v2357 = vpop.f32.mrb[0].mxu0
        %v2358 = vpop.f32.mrb[0].mxu0
        %v2359 = vadd.f32 0.0, %v2358
        %v2360 = vpop.f32.mrb[0].mxu0
        %2361 = vmatprep.mubr.bf16.mxu0 0
        %2362 = vmatmul.mubr.bf16.gmra.mrb[0].mxu0 %v2235
        %v2363 = vpop.f32.mrb[0].mxu0
        %v2364 = vadd.f32 0.0, %v2363
        %v2365 = vpop.f32.mrb[0].mxu0
        %v2366 = vpop.f32.mrb[0].mxu0
        %v2367 = vadd.f32 0.0, %v2366
        %v2368 = vpop.f32.mrb[0].mxu0
        %2369 = vmatprep.mubr.bf16.mxu0 0
        %2370 = vmatmul.mubr.bf16.gmra.mrb[0].mxu0 %v2236
        %v2371 = vpop.f32.mrb[0].mxu0
        %v2372 = vadd.f32 0.0, %v2371
        %v2373 = vpop.f32.mrb[0].mxu0
        %v2374 = vpop.f32.mrb[0].mxu0
        %v2375 = vadd.f32 0.0, %v2374
        %v2376 = vpop.f32.mrb[0].mxu0
        %2377 = vmatprep.mubr.bf16.mxu0 0
        %2378 = vmatmul.mubr.bf16.gmra.mrb[0].mxu0 %v2237
        %v2379 = vpop.f32.mrb[0].mxu0
        %v2380 = vadd.f32 0.0, %v2379
        %v2381 = vpop.f32.mrb[0].mxu0
        %v2382 = vpop.f32.mrb[0].mxu0
        %v2383 = vadd.f32 0.0, %v2382
        %v2384 = vpop.f32.mrb[0].mxu0
        %2385 = vmatprep.mubr.bf16.mxu0 0
        %2386 = vmatmul.mubr.bf16.gmra.mrb[0].mxu0 %v2238
        %v2387 = vpop.f32.mrb[0].mxu0
        %v2388 = vadd.f32 0.0, %v2387
        %v2389 = vpop.f32.mrb[0].mxu0
        %v2390 = vpop.f32.mrb[0].mxu0
        %v2391 = vadd.f32 0.0, %v2390
        %v2392 = vpop.f32.mrb[0].mxu0
        %2393 = vmatprep.mubr.bf16.mxu0 0
        %2394 = vmatmul.mubr.bf16.gmra.mrb[0].mxu0 %v2239
        %v2395 = vpop.f32.mrb[0].mxu0
        %v2396 = vadd.f32 0.0, %v2395
        %v2397 = vpop.f32.mrb[0].mxu0
        %v2398 = vpop.f32.mrb[0].mxu0
        %v2399 = vadd.f32 0.0, %v2398
        %v2400 = vpop.f32.mrb[0].mxu0
        %2401 = vmatprep.mubr.bf16.mxu0 0
        %2402 = vmatmul.mubr.bf16.gmra.mrb[0].mxu0 %v2240
        %v2403 = vpop.f32.mrb[0].mxu0
        %v2404 = vadd.f32 0.0, %v2403
        %v2405 = vpop.f32.mrb[0].mxu0
        %v2406 = vpop.f32.mrb[0].mxu0
        %v2407 = vadd.f32 0.0, %v2406
        %v2408 = vpop.f32.mrb[0].mxu0
        %2409 = vmatprep.mubr.bf16.mxu0 0
        %2410 = vmatmul.mubr.bf16.gmra.mrb[0].mxu0 %v2241
        %v2411 = vpop.f32.mrb[0].mxu0
        %v2412 = vadd.f32 0.0, %v2411
        %v2413 = vpop.f32.mrb[0].mxu0
        %v2414 = vpop.f32.mrb[0].mxu0
        %v2415 = vadd.f32 0.0, %v2414
        %v2416 = vpop.f32.mrb[0].mxu0
        %2417 = vmatprep.mubr.bf16.mxu0 0
        %2418 = vmatmul.mubr.bf16.gmra.mrb[0].mxu0 %v2242
        %v2419 = vpop.f32.mrb[0].mxu0
        %v2420 = vadd.f32 0.0, %v2419
        %v2421 = vpop.f32.mrb[0].mxu0
        %v2422 = vpop.f32.mrb[0].mxu0
        %v2423 = vadd.f32 0.0, %v2422
        %v2424 = vpop.f32.mrb[0].mxu0
        %2425 = vmatprep.mubr.bf16.mxu0 0
        %2426 = vmatmul.mubr.bf16.gmra.mrb[0].mxu0 %v2243
        %v2427 = vpop.f32.mrb[0].mxu0
        %v2428 = vadd.f32 0.0, %v2427
        %v2429 = vpop.f32.mrb[0].mxu0
        %v2430 = vpop.f32.mrb[0].mxu0
        %v2431 = vadd.f32 0.0, %v2430
        %v2432 = vpop.f32.mrb[0].mxu0
        %2433 = vmatprep.mubr.bf16.mxu0 0
        %2434 = vmatmul.mubr.bf16.gmra.mrb[0].mxu0 %v2244
        %v2435 = vpop.f32.mrb[0].mxu0
        %v2436 = vadd.f32 0.0, %v2435
        %v2437 = vpop.f32.mrb[0].mxu0
        %v2438 = vpop.f32.mrb[0].mxu0
        %v2439 = vadd.f32 0.0, %v2438
        %v2440 = vpop.f32.mrb[0].mxu0
        %2441 = vmatprep.mubr.bf16.mxu0 0
        %2442 = vmatmul.mubr.bf16.gmra.mrb[0].mxu0 %v2245
        %v2443 = vpop.f32.mrb[0].mxu0
        %v2444 = vadd.f32 0.0, %v2443
        %v2445 = vpop.f32.mrb[0].mxu0
        %v2446 = vpop.f32.mrb[0].mxu0
        %v2447 = vadd.f32 0.0, %v2446
        %v2448 = vpop.f32.mrb[0].mxu0
        %2449 = vmatprep.mubr.bf16.mxu0 0
        %2450 = vmatmul.mubr.bf16.gmra.mrb[0].mxu0 %v2246
        %v2451 = vpop.f32.mrb[0].mxu0
        %v2452 = vadd.f32 0.0, %v2451
        %v2453 = vpop.f32.mrb[0].mxu0
        %v2454 = vpop.f32.mrb[0].mxu0
        %v2455 = vadd.f32 0.0, %v2454
        %v2456 = vpop.f32.mrb[0].mxu0
        %2457 = vmatprep.mubr.bf16.mxu0 0
        %2458 = vmatmul.mubr.bf16.gmra.mrb[0].mxu0 %v2247
        %v2459 = vpop.f32.mrb[0].mxu0
        %v2460 = vadd.f32 0.0, %v2459
        %v2461 = vpop.f32.mrb[0].mxu0
        %v2462 = vpop.f32.mrb[0].mxu0
        %v2463 = vadd.f32 0.0, %v2462
        %v2464 = vpop.f32.mrb[0].mxu0
        %2465 = vmatprep.mubr.bf16.mxu0 0
        %2466 = vmatmul.mubr.bf16.gmra.mrb[0].mxu0 %v2248
        %v2467 = vpop.f32.mrb[0].mxu0
        %v2468 = vadd.f32 0.0, %v2467
        %v2469 = vpop.f32.mrb[0].mxu0
        %v2470 = vpop.f32.mrb[0].mxu0
        %v2471 = vadd.f32 0.0, %v2470
        %v2472 = vpop.f32.mrb[0].mxu0
        %2473 = vdwg.mxu0
        %v2474 = vadd.f32 %v1896, %v2348
        %v2475 = vadd.f32 %v1899, %v2351
        %v2476 = vadd.f32 %v1904, %v2356
        %v2477 = vadd.f32 %v1907, %v2359
        %v2478 = vadd.f32 %v1912, %v2364
        %v2479 = vadd.f32 %v1915, %v2367
        %v2480 = vadd.f32 %v1920, %v2372
        %v2481 = vadd.f32 %v1923, %v2375
        %v2482 = vadd.f32 %v1928, %v2380
        %v2483 = vadd.f32 %v1931, %v2383
        %v2484 = vadd.f32 %v1936, %v2388
        %v2485 = vadd.f32 %v1939, %v2391
        %v2486 = vadd.f32 %v1944, %v2396
        %v2487 = vadd.f32 %v1947, %v2399
        %v2488 = vadd.f32 %v1952, %v2404
        %v2489 = vadd.f32 %v1955, %v2407
        %v2490 = vadd.f32 %v1960, %v2412
        %v2491 = vadd.f32 %v1963, %v2415
        %v2492 = vadd.f32 %v1968, %v2420
        %v2493 = vadd.f32 %v1971, %v2423
        %v2494 = vadd.f32 %v1976, %v2428
        %v2495 = vadd.f32 %v1979, %v2431
        %v2496 = vadd.f32 %v1984, %v2436
        %v2497 = vadd.f32 %v1987, %v2439
        %v2498 = vadd.f32 %v1992, %v2444
        %v2499 = vadd.f32 %v1995, %v2447
        %v2500 = vadd.f32 %v2000, %v2452
        %v2501 = vadd.f32 %v2003, %v2455
        %v2502 = vadd.f32 %v2008, %v2460
        %v2503 = vadd.f32 %v2011, %v2463
        %v2504 = vadd.f32 %v2016, %v2468
        %v2505 = vadd.f32 %v2019, %v2471
        %v2506 = vld [vmem:[%s862] sm:$0xf]
        %v2507 = vld [vmem:[%s862 + $0x4] sm:$0xf]
        %v2508 = vld [vmem:[%s862 + $0xc] sm:$0xf]
        %v2509 = vld [vmem:[%s862 + $0x10] sm:$0xf]
        %v2510 = vld [vmem:[%s862 + $0x18] sm:$0xf]
        %v2511 = vld [vmem:[%s862 + $0x1c] sm:$0xf]
        %v2512 = vld [vmem:[%s862 + $0x24] sm:$0xf]
        %v2513 = vld [vmem:[%s862 + $0x28] sm:$0xf]
        %v2514 = vld [vmem:[%s862 + $0x30] sm:$0xf]
        %v2515 = vld [vmem:[%s862 + $0x34] sm:$0xf]
        %v2516 = vld [vmem:[%s862 + $0x3c] sm:$0xf]
        %v2517 = vld [vmem:[%s862 + $0x40] sm:$0xf]
        %v2518 = vld [vmem:[%s862 + $0x48] sm:$0xf]
        %v2519 = vld [vmem:[%s862 + $0x4c] sm:$0xf]
        %v2520 = vld [vmem:[%s862 + $0x54] sm:$0xf]
        %v2521 = vld [vmem:[%s862 + $0x58] sm:$0xf]
        %v2522 = vld [vmem:[%s862 + $0x60] sm:$0xf]
        %v2523 = vld [vmem:[%s862 + $0x64] sm:$0xf]
        %v2524 = vld [vmem:[%s862 + $0x6c] sm:$0xf]
        %v2525 = vld [vmem:[%s862 + $0x70] sm:$0xf]
        %v2526 = vld [vmem:[%s862 + $0x78] sm:$0xf]
        %v2527 = vld [vmem:[%s862 + $0x7c] sm:$0xf]
        %v2528 = vld [vmem:[%s862 + $0x84] sm:$0xf]
        %v2529 = vld [vmem:[%s862 + $0x88] sm:$0xf]
        %v2530 = vld [vmem:[%s862 + $0x90] sm:$0xf]
        %v2531 = vld [vmem:[%s862 + $0x94] sm:$0xf]
        %v2532 = vld [vmem:[%s862 + $0x9c] sm:$0xf]
        %v2533 = vld [vmem:[%s862 + $0xa0] sm:$0xf]
        %v2534 = vld [vmem:[%s862 + $0xa8] sm:$0xf]
        %v2535 = vld [vmem:[%s862 + $0xac] sm:$0xf]
        %v2536 = vld [vmem:[%s862 + $0xb4] sm:$0xf]
        %v2537 = vld [vmem:[%s862 + $0xb8] sm:$0xf]
        %v2538 = vld [vmem:[#allocation7 + $0xc0] sm:$0xf]
        %v2539 = vld [vmem:[#allocation7 + $0xc4] sm:$0xf]
        %v2540 = vld [vmem:[#allocation7 + $0xc8] sm:$0xf]
        %v2541 = vld [vmem:[#allocation7 + $0xcc] sm:$0xf]
        %v2542 = vld [vmem:[#allocation7 + $0xd0] sm:$0xf]
        %v2543 = vld [vmem:[#allocation7 + $0xd4] sm:$0xf]
        %v2544 = vld [vmem:[#allocation7 + $0xd8] sm:$0xf]
        %v2545 = vld [vmem:[#allocation7 + $0xdc] sm:$0xf]
        %v2546 = vld [vmem:[#allocation7 + $0xe0] sm:$0xf]
        %v2547 = vld [vmem:[#allocation7 + $0xe4] sm:$0xf]
        %v2548 = vld [vmem:[#allocation7 + $0xe8] sm:$0xf]
        %v2549 = vld [vmem:[#allocation7 + $0xec] sm:$0xf]
        %v2550 = vld [vmem:[#allocation7 + $0xf0] sm:$0xf]
        %v2551 = vld [vmem:[#allocation7 + $0xf4] sm:$0xf]
        %v2552 = vld [vmem:[#allocation7 + $0xf8] sm:$0xf]
        %v2553 = vld [vmem:[#allocation7 + $0xfc] sm:$0xf]
        %v2586 = vunpack.c.l.b16 %v2506
        %v2587 = vunpack.c.l.b16 %v2507
        %v2588 = vunpack.c.l.b16 %v2508
        %v2589 = vunpack.c.l.b16 %v2509
        %v2590 = vunpack.c.l.b16 %v2510
        %v2591 = vunpack.c.l.b16 %v2511
        %v2592 = vunpack.c.l.b16 %v2512
        %v2593 = vunpack.c.l.b16 %v2513
        %v2594 = vunpack.c.l.b16 %v2514
        %v2595 = vunpack.c.l.b16 %v2515
        %v2596 = vunpack.c.l.b16 %v2516
        %v2597 = vunpack.c.l.b16 %v2517
        %v2598 = vunpack.c.l.b16 %v2518
        %v2599 = vunpack.c.l.b16 %v2519
        %v2600 = vunpack.c.l.b16 %v2520
        %v2601 = vunpack.c.l.b16 %v2521
        %v2602 = vunpack.c.l.b16 %v2522
        %v2603 = vunpack.c.l.b16 %v2523
        %v2604 = vunpack.c.l.b16 %v2524
        %v2605 = vunpack.c.l.b16 %v2525
        %v2606 = vunpack.c.l.b16 %v2526
        %v2607 = vunpack.c.l.b16 %v2527
        %v2608 = vunpack.c.l.b16 %v2528
        %v2609 = vunpack.c.l.b16 %v2529
        %v2610 = vunpack.c.l.b16 %v2530
        %v2611 = vunpack.c.l.b16 %v2531
        %v2612 = vunpack.c.l.b16 %v2532
        %v2613 = vunpack.c.l.b16 %v2533
        %v2614 = vunpack.c.l.b16 %v2534
        %v2615 = vunpack.c.l.b16 %v2535
        %v2616 = vunpack.c.l.b16 %v2536
        %v2617 = vunpack.c.l.b16 %v2537
        %v2618 = vpack.c.b16 %v2587, %v2586
        %v2619 = vpack.c.b16 %v2589, %v2588
        %v2620 = vpack.c.b16 %v2591, %v2590
        %v2621 = vpack.c.b16 %v2593, %v2592
        %v2622 = vpack.c.b16 %v2595, %v2594
        %v2623 = vpack.c.b16 %v2597, %v2596
        %v2624 = vpack.c.b16 %v2599, %v2598
        %v2625 = vpack.c.b16 %v2601, %v2600
        %v2626 = vpack.c.b16 %v2603, %v2602
        %v2627 = vpack.c.b16 %v2605, %v2604
        %v2628 = vpack.c.b16 %v2607, %v2606
        %v2629 = vpack.c.b16 %v2609, %v2608
        %v2630 = vpack.c.b16 %v2611, %v2610
        %v2631 = vpack.c.b16 %v2613, %v2612
        %v2632 = vpack.c.b16 %v2615, %v2614
        %v2633 = vpack.c.b16 %v2617, %v2616
        %v2666 = vunpack.c.l.b16 %v2538
        %v2667 = vunpack.c.l.b16 %v2539
        %v2668 = vunpack.c.l.b16 %v2540
        %v2669 = vunpack.c.l.b16 %v2541
        %v2670 = vunpack.c.l.b16 %v2542
        %v2671 = vunpack.c.l.b16 %v2543
        %v2672 = vunpack.c.l.b16 %v2544
        %v2673 = vunpack.c.l.b16 %v2545
        %v2674 = vunpack.c.l.b16 %v2546
        %v2675 = vunpack.c.l.b16 %v2547
        %v2676 = vunpack.c.l.b16 %v2548
        %v2677 = vunpack.c.l.b16 %v2549
        %v2678 = vunpack.c.l.b16 %v2550
        %v2679 = vunpack.c.l.b16 %v2551
        %v2680 = vunpack.c.l.b16 %v2552
        %v2681 = vunpack.c.l.b16 %v2553
        %v2682 = vpack.c.b16 %v2667, %v2666
        %v2683 = vpack.c.b16 %v2669, %v2668
        %v2684 = vpack.c.b16 %v2671, %v2670
        %v2685 = vpack.c.b16 %v2673, %v2672
        %v2686 = vpack.c.b16 %v2675, %v2674
        %v2687 = vpack.c.b16 %v2677, %v2676
        %v2688 = vpack.c.b16 %v2679, %v2678
        %v2689 = vpack.c.b16 %v2681, %v2680
        %2698 = vmatprep.subr.bf16.mxu0 0
        %2699 = vmatpush1.bf16.msra.mxu0 %v2682
        %2700 = vmatprep.subr.bf16.mxu0 0
        %2701 = vmatpush1.bf16.msra.mxu0 %v2683
        %2702 = vmatprep.subr.bf16.mxu0 0
        %2703 = vmatpush1.bf16.msra.mxu0 %v2684
        %2704 = vmatprep.subr.bf16.mxu0 0
        %2705 = vmatpush1.bf16.msra.mxu0 %v2685
        %2706 = vmatprep.subr.bf16.mxu0 0
        %2707 = vmatpush1.bf16.msra.mxu0 %v2686
        %2708 = vmatprep.subr.bf16.mxu0 0
        %2709 = vmatpush1.bf16.msra.mxu0 %v2687
        %2710 = vmatprep.subr.bf16.mxu0 0
        %2711 = vmatpush1.bf16.msra.mxu0 %v2688
        %2712 = vmatprep.subr.bf16.mxu0 0
        %2713 = vmatpush1.bf16.msra.mxu0 %v2689
        %2714 = vmatprep.subr.bf16.mxu0 0
        %2715 = vmatpush1.bf16.msra.mxu0 0
        %2716 = vmatprep.subr.bf16.mxu0 0
        %2717 = vmatpush1.bf16.msra.mxu0 0
        %2718 = vmatprep.subr.bf16.mxu0 0
        %2719 = vmatpush1.bf16.msra.mxu0 0
        %2720 = vmatprep.subr.bf16.mxu0 0
        %2721 = vmatpush1.bf16.msra.mxu0 0
        %2722 = vmatprep.subr.bf16.mxu0 0
        %2723 = vmatpush1.bf16.msra.mxu0 0
        %2724 = vmatprep.subr.bf16.mxu0 0
        %2725 = vmatpush1.bf16.msra.mxu0 0
        %2726 = vmatprep.subr.bf16.mxu0 0
        %2727 = vmatpush1.bf16.msra.mxu0 0
        %2728 = vmatprep.subr.bf16.mxu0 0
        %2729 = vmatpush1.bf16.msra.mxu0 0
        %2730 = vmatprep.mubr.bf16.mxu0 0
        %2731 = vmatmul.mubr.bf16.gmra.mrb[0].mxu0 %v2618
        %v2732 = vpop.f32.mrb[0].mxu0
        %v2733 = vadd.f32 0.0, %v2732
        %v2734 = vpop.f32.mrb[0].mxu0
        %v2735 = vpop.f32.mrb[0].mxu0
        %v2736 = vadd.f32 0.0, %v2735
        %v2737 = vpop.f32.mrb[0].mxu0
        %2738 = vmatprep.mubr.bf16.mxu0 0
        %2739 = vmatmul.mubr.bf16.gmra.mrb[0].mxu0 %v2619
        %v2740 = vpop.f32.mrb[0].mxu0
        %v2741 = vadd.f32 0.0, %v2740
        %v2742 = vpop.f32.mrb[0].mxu0
        %v2743 = vpop.f32.mrb[0].mxu0
        %v2744 = vadd.f32 0.0, %v2743
        %v2745 = vpop.f32.mrb[0].mxu0
        %2746 = vmatprep.mubr.bf16.mxu0 0
        %2747 = vmatmul.mubr.bf16.gmra.mrb[0].mxu0 %v2620
        %v2748 = vpop.f32.mrb[0].mxu0
        %v2749 = vadd.f32 0.0, %v2748
        %v2750 = vpop.f32.mrb[0].mxu0
        %v2751 = vpop.f32.mrb[0].mxu0
        %v2752 = vadd.f32 0.0, %v2751
        %v2753 = vpop.f32.mrb[0].mxu0
        %2754 = vmatprep.mubr.bf16.mxu0 0
        %2755 = vmatmul.mubr.bf16.gmra.mrb[0].mxu0 %v2621
        %v2756 = vpop.f32.mrb[0].mxu0
        %v2757 = vadd.f32 0.0, %v2756
        %v2758 = vpop.f32.mrb[0].mxu0
        %v2759 = vpop.f32.mrb[0].mxu0
        %v2760 = vadd.f32 0.0, %v2759
        %v2761 = vpop.f32.mrb[0].mxu0
        %2762 = vmatprep.mubr.bf16.mxu0 0
        %2763 = vmatmul.mubr.bf16.gmra.mrb[0].mxu0 %v2622
        %v2764 = vpop.f32.mrb[0].mxu0
        %v2765 = vadd.f32 0.0, %v2764
        %v2766 = vpop.f32.mrb[0].mxu0
        %v2767 = vpop.f32.mrb[0].mxu0
        %v2768 = vadd.f32 0.0, %v2767
        %v2769 = vpop.f32.mrb[0].mxu0
        %2770 = vmatprep.mubr.bf16.mxu0 0
        %2771 = vmatmul.mubr.bf16.gmra.mrb[0].mxu0 %v2623
        %v2772 = vpop.f32.mrb[0].mxu0
        %v2773 = vadd.f32 0.0, %v2772
        %v2774 = vpop.f32.mrb[0].mxu0
        %v2775 = vpop.f32.mrb[0].mxu0
        %v2776 = vadd.f32 0.0, %v2775
        %v2777 = vpop.f32.mrb[0].mxu0
        %2778 = vmatprep.mubr.bf16.mxu0 0
        %2779 = vmatmul.mubr.bf16.gmra.mrb[0].mxu0 %v2624
        %v2780 = vpop.f32.mrb[0].mxu0
        %v2781 = vadd.f32 0.0, %v2780
        %v2782 = vpop.f32.mrb[0].mxu0
        %v2783 = vpop.f32.mrb[0].mxu0
        %v2784 = vadd.f32 0.0, %v2783
        %v2785 = vpop.f32.mrb[0].mxu0
        %2786 = vmatprep.mubr.bf16.mxu0 0
        %2787 = vmatmul.mubr.bf16.gmra.mrb[0].mxu0 %v2625
        %v2788 = vpop.f32.mrb[0].mxu0
        %v2789 = vadd.f32 0.0, %v2788
        %v2790 = vpop.f32.mrb[0].mxu0
        %v2791 = vpop.f32.mrb[0].mxu0
        %v2792 = vadd.f32 0.0, %v2791
        %v2793 = vpop.f32.mrb[0].mxu0
        %2794 = vmatprep.mubr.bf16.mxu0 0
        %2795 = vmatmul.mubr.bf16.gmra.mrb[0].mxu0 %v2626
        %v2796 = vpop.f32.mrb[0].mxu0
        %v2797 = vadd.f32 0.0, %v2796
        %v2798 = vpop.f32.mrb[0].mxu0
        %v2799 = vpop.f32.mrb[0].mxu0
        %v2800 = vadd.f32 0.0, %v2799
        %v2801 = vpop.f32.mrb[0].mxu0
        %2802 = vmatprep.mubr.bf16.mxu0 0
        %2803 = vmatmul.mubr.bf16.gmra.mrb[0].mxu0 %v2627
        %v2804 = vpop.f32.mrb[0].mxu0
        %v2805 = vadd.f32 0.0, %v2804
        %v2806 = vpop.f32.mrb[0].mxu0
        %v2807 = vpop.f32.mrb[0].mxu0
        %v2808 = vadd.f32 0.0, %v2807
        %v2809 = vpop.f32.mrb[0].mxu0
        %2810 = vmatprep.mubr.bf16.mxu0 0
        %2811 = vmatmul.mubr.bf16.gmra.mrb[0].mxu0 %v2628
        %v2812 = vpop.f32.mrb[0].mxu0
        %v2813 = vadd.f32 0.0, %v2812
        %v2814 = vpop.f32.mrb[0].mxu0
        %v2815 = vpop.f32.mrb[0].mxu0
        %v2816 = vadd.f32 0.0, %v2815
        %v2817 = vpop.f32.mrb[0].mxu0
        %2818 = vmatprep.mubr.bf16.mxu0 0
        %2819 = vmatmul.mubr.bf16.gmra.mrb[0].mxu0 %v2629
        %v2820 = vpop.f32.mrb[0].mxu0
        %v2821 = vadd.f32 0.0, %v2820
        %v2822 = vpop.f32.mrb[0].mxu0
        %v2823 = vpop.f32.mrb[0].mxu0
        %v2824 = vadd.f32 0.0, %v2823
        %v2825 = vpop.f32.mrb[0].mxu0
        %2826 = vmatprep.mubr.bf16.mxu0 0
        %2827 = vmatmul.mubr.bf16.gmra.mrb[0].mxu0 %v2630
        %v2828 = vpop.f32.mrb[0].mxu0
        %v2829 = vadd.f32 0.0, %v2828
        %v2830 = vpop.f32.mrb[0].mxu0
        %v2831 = vpop.f32.mrb[0].mxu0
        %v2832 = vadd.f32 0.0, %v2831
        %v2833 = vpop.f32.mrb[0].mxu0
        %2834 = vmatprep.mubr.bf16.mxu0 0
        %2835 = vmatmul.mubr.bf16.gmra.mrb[0].mxu0 %v2631
        %v2836 = vpop.f32.mrb[0].mxu0
        %v2837 = vadd.f32 0.0, %v2836
        %v2838 = vpop.f32.mrb[0].mxu0
        %v2839 = vpop.f32.mrb[0].mxu0
        %v2840 = vadd.f32 0.0, %v2839
        %v2841 = vpop.f32.mrb[0].mxu0
        %2842 = vmatprep.mubr.bf16.mxu0 0
        %2843 = vmatmul.mubr.bf16.gmra.mrb[0].mxu0 %v2632
        %v2844 = vpop.f32.mrb[0].mxu0
        %v2845 = vadd.f32 0.0, %v2844
        %v2846 = vpop.f32.mrb[0].mxu0
        %v2847 = vpop.f32.mrb[0].mxu0
        %v2848 = vadd.f32 0.0, %v2847
        %v2849 = vpop.f32.mrb[0].mxu0
        %2850 = vmatprep.mubr.bf16.mxu0 0
        %2851 = vmatmul.mubr.bf16.gmra.mrb[0].mxu0 %v2633
        %v2852 = vpop.f32.mrb[0].mxu0
        %v2853 = vadd.f32 0.0, %v2852
        %v2854 = vpop.f32.mrb[0].mxu0
        %v2855 = vpop.f32.mrb[0].mxu0
        %v2856 = vadd.f32 0.0, %v2855
        %v2857 = vpop.f32.mrb[0].mxu0
        %2858 = vdwg.mxu0
        %v2859 = vadd.f32 %v2474, %v2733
        %v2860 = vadd.f32 %v2475, %v2736
        %v2861 = vadd.f32 %v2476, %v2741
        %v2862 = vadd.f32 %v2477, %v2744
        %v2863 = vadd.f32 %v2478, %v2749
        %v2864 = vadd.f32 %v2479, %v2752
        %v2865 = vadd.f32 %v2480, %v2757
        %v2866 = vadd.f32 %v2481, %v2760
        %v2867 = vadd.f32 %v2482, %v2765
        %v2868 = vadd.f32 %v2483, %v2768
        %v2869 = vadd.f32 %v2484, %v2773
        %v2870 = vadd.f32 %v2485, %v2776
        %v2871 = vadd.f32 %v2486, %v2781
        %v2872 = vadd.f32 %v2487, %v2784
        %v2873 = vadd.f32 %v2488, %v2789
        %v2874 = vadd.f32 %v2489, %v2792
        %v2875 = vadd.f32 %v2490, %v2797
        %v2876 = vadd.f32 %v2491, %v2800
        %v2877 = vadd.f32 %v2492, %v2805
        %v2878 = vadd.f32 %v2493, %v2808
        %v2879 = vadd.f32 %v2494, %v2813
        %v2880 = vadd.f32 %v2495, %v2816
        %v2881 = vadd.f32 %v2496, %v2821
        %v2882 = vadd.f32 %v2497, %v2824
        %v2883 = vadd.f32 %v2498, %v2829
        %v2884 = vadd.f32 %v2499, %v2832
        %v2885 = vadd.f32 %v2500, %v2837
        %v2886 = vadd.f32 %v2501, %v2840
        %v2887 = vadd.f32 %v2502, %v2845
        %v2888 = vadd.f32 %v2503, %v2848
        %v2889 = vadd.f32 %v2504, %v2853
        %v2890 = vadd.f32 %v2505, %v2856
        %v2891 = vld [vmem:[%s862] sm:$0xf]
        %v2892 = vld [vmem:[%s862 + $0x4] sm:$0xf]
        %v2893 = vld [vmem:[%s862 + $0x8] sm:$0x1]
        %v2894 = vld [vmem:[%s862 + $0xc] sm:$0xf]
        %v2895 = vld [vmem:[%s862 + $0x10] sm:$0xf]
        %v2896 = vld [vmem:[%s862 + $0x14] sm:$0x1]
        %v2897 = vld [vmem:[%s862 + $0x18] sm:$0xf]
        %v2898 = vld [vmem:[%s862 + $0x1c] sm:$0xf]
        %v2899 = vld [vmem:[%s862 + $0x20] sm:$0x1]
        %v2900 = vld [vmem:[%s862 + $0x24] sm:$0xf]
        %v2901 = vld [vmem:[%s862 + $0x28] sm:$0xf]
        %v2902 = vld [vmem:[%s862 + $0x2c] sm:$0x1]
        %v2903 = vld [vmem:[%s862 + $0x30] sm:$0xf]
        %v2904 = vld [vmem:[%s862 + $0x34] sm:$0xf]
        %v2905 = vld [vmem:[%s862 + $0x38] sm:$0x1]
        %v2906 = vld [vmem:[%s862 + $0x3c] sm:$0xf]
        %v2907 = vld [vmem:[%s862 + $0x40] sm:$0xf]
        %v2908 = vld [vmem:[%s862 + $0x44] sm:$0x1]
        %v2909 = vld [vmem:[%s862 + $0x48] sm:$0xf]
        %v2910 = vld [vmem:[%s862 + $0x4c] sm:$0xf]
        %v2911 = vld [vmem:[%s862 + $0x50] sm:$0x1]
        %v2912 = vld [vmem:[%s862 + $0x54] sm:$0xf]
        %v2913 = vld [vmem:[%s862 + $0x58] sm:$0xf]
        %v2914 = vld [vmem:[%s862 + $0x5c] sm:$0x1]
        %v2915 = vld [vmem:[%s862 + $0x60] sm:$0xf]
        %v2916 = vld [vmem:[%s862 + $0x64] sm:$0xf]
        %v2917 = vld [vmem:[%s862 + $0x68] sm:$0x1]
        %v2918 = vld [vmem:[%s862 + $0x6c] sm:$0xf]
        %v2919 = vld [vmem:[%s862 + $0x70] sm:$0xf]
        %v2920 = vld [vmem:[%s862 + $0x74] sm:$0x1]
        %v2921 = vld [vmem:[%s862 + $0x78] sm:$0xf]
        %v2922 = vld [vmem:[%s862 + $0x7c] sm:$0xf]
        %v2923 = vld [vmem:[%s862 + $0x80] sm:$0x1]
        %v2924 = vld [vmem:[%s862 + $0x84] sm:$0xf]
        %v2925 = vld [vmem:[%s862 + $0x88] sm:$0xf]
        %v2926 = vld [vmem:[%s862 + $0x8c] sm:$0x1]
        %v2927 = vld [vmem:[%s862 + $0x90] sm:$0xf]
        %v2928 = vld [vmem:[%s862 + $0x94] sm:$0xf]
        %v2929 = vld [vmem:[%s862 + $0x98] sm:$0x1]
        %v2930 = vld [vmem:[%s862 + $0x9c] sm:$0xf]
        %v2931 = vld [vmem:[%s862 + $0xa0] sm:$0xf]
        %v2932 = vld [vmem:[%s862 + $0xa4] sm:$0x1]
        %v2933 = vld [vmem:[%s862 + $0xa8] sm:$0xf]
        %v2934 = vld [vmem:[%s862 + $0xac] sm:$0xf]
        %v2935 = vld [vmem:[%s862 + $0xb0] sm:$0x1]
        %v2936 = vld [vmem:[%s862 + $0xb4] sm:$0xf]
        %v2937 = vld [vmem:[%s862 + $0xb8] sm:$0xf]
        %v2938 = vld [vmem:[%s862 + $0xbc] sm:$0x1]
        %v2940 = vshrl.u32 %v2891, 16
        %v2942 = vrot.slane %v2940, 4
        %v2943 = vshll.u32 %v2891, 16
        %v2945 = vrot.slane %v2943, 5
        %v2946 = vor.u32 %v2942, %v2945
        %v2947 = vrot.slane %v2946, 4
        %v2949 = vshll.u32 %v2892, 16
        %v2951 = vrot.slane %v2949, 5
        %v2952 = vsel %vm1043, %v2947, %v2951
        %v2953 = vshrl.u32 %v2892, 16
        %v2955 = vrot.slane %v2953, 4
        %v2956 = vor.u32 %v2955, %v2951
        %v2957 = vrot.slane %v2956, 4
        %v2959 = vshll.u32 %v2893, 16
        %v2961 = vrot.slane %v2959, 5
        %v2962 = vsel %vm1043, %v2957, %v2961
        %v2964 = vshrl.u32 %v2894, 16
        %v2966 = vrot.slane %v2964, 4
        %v2967 = vshll.u32 %v2894, 16
        %v2969 = vrot.slane %v2967, 5
        %v2970 = vor.u32 %v2966, %v2969
        %v2971 = vrot.slane %v2970, 4
        %v2973 = vshll.u32 %v2895, 16
        %v2975 = vrot.slane %v2973, 5
        %v2976 = vsel %vm1043, %v2971, %v2975
        %v2977 = vshrl.u32 %v2895, 16
        %v2979 = vrot.slane %v2977, 4
        %v2980 = vor.u32 %v2979, %v2975
        %v2981 = vrot.slane %v2980, 4
        %v2983 = vshll.u32 %v2896, 16
        %v2985 = vrot.slane %v2983, 5
        %v2986 = vsel %vm1043, %v2981, %v2985
        %v2988 = vshrl.u32 %v2897, 16
        %v2990 = vrot.slane %v2988, 4
        %v2991 = vshll.u32 %v2897, 16
        %v2993 = vrot.slane %v2991, 5
        %v2994 = vor.u32 %v2990, %v2993
        %v2995 = vrot.slane %v2994, 4
        %v2997 = vshll.u32 %v2898, 16
        %v2999 = vrot.slane %v2997, 5
        %v3000 = vsel %vm1043, %v2995, %v2999
        %v3001 = vshrl.u32 %v2898, 16
        %v3003 = vrot.slane %v3001, 4
        %v3004 = vor.u32 %v3003, %v2999
        %v3005 = vrot.slane %v3004, 4
        %v3007 = vshll.u32 %v2899, 16
        %v3009 = vrot.slane %v3007, 5
        %v3010 = vsel %vm1043, %v3005, %v3009
        %v3012 = vshrl.u32 %v2900, 16
        %v3014 = vrot.slane %v3012, 4
        %v3015 = vshll.u32 %v2900, 16
        %v3017 = vrot.slane %v3015, 5
        %v3018 = vor.u32 %v3014, %v3017
        %v3019 = vrot.slane %v3018, 4
        %v3021 = vshll.u32 %v2901, 16
        %v3023 = vrot.slane %v3021, 5
        %v3024 = vsel %vm1043, %v3019, %v3023
        %v3025 = vshrl.u32 %v2901, 16
        %v3027 = vrot.slane %v3025, 4
        %v3028 = vor.u32 %v3027, %v3023
        %v3029 = vrot.slane %v3028, 4
        %v3031 = vshll.u32 %v2902, 16
        %v3033 = vrot.slane %v3031, 5
        %v3034 = vsel %vm1043, %v3029, %v3033
        %v3036 = vshrl.u32 %v2903, 16
        %v3038 = vrot.slane %v3036, 4
        %v3039 = vshll.u32 %v2903, 16
        %v3041 = vrot.slane %v3039, 5
        %v3042 = vor.u32 %v3038, %v3041
        %v3043 = vrot.slane %v3042, 4
        %v3045 = vshll.u32 %v2904, 16
        %v3047 = vrot.slane %v3045, 5
        %v3048 = vsel %vm1043, %v3043, %v3047
        %v3049 = vshrl.u32 %v2904, 16
        %v3051 = vrot.slane %v3049, 4
        %v3052 = vor.u32 %v3051, %v3047
        %v3053 = vrot.slane %v3052, 4
        %v3055 = vshll.u32 %v2905, 16
        %v3057 = vrot.slane %v3055, 5
        %v3058 = vsel %vm1043, %v3053, %v3057
        %v3060 = vshrl.u32 %v2906, 16
        %v3062 = vrot.slane %v3060, 4
        %v3063 = vshll.u32 %v2906, 16
        %v3065 = vrot.slane %v3063, 5
        %v3066 = vor.u32 %v3062, %v3065
        %v3067 = vrot.slane %v3066, 4
        %v3069 = vshll.u32 %v2907, 16
        %v3071 = vrot.slane %v3069, 5
        %v3072 = vsel %vm1043, %v3067, %v3071
        %v3073 = vshrl.u32 %v2907, 16
        %v3075 = vrot.slane %v3073, 4
        %v3076 = vor.u32 %v3075, %v3071
        %v3077 = vrot.slane %v3076, 4
        %v3079 = vshll.u32 %v2908, 16
        %v3081 = vrot.slane %v3079, 5
        %v3082 = vsel %vm1043, %v3077, %v3081
        %v3084 = vshrl.u32 %v2909, 16
        %v3086 = vrot.slane %v3084, 4
        %v3087 = vshll.u32 %v2909, 16
        %v3089 = vrot.slane %v3087, 5
        %v3090 = vor.u32 %v3086, %v3089
        %v3091 = vrot.slane %v3090, 4
        %v3093 = vshll.u32 %v2910, 16
        %v3095 = vrot.slane %v3093, 5
        %v3096 = vsel %vm1043, %v3091, %v3095
        %v3097 = vshrl.u32 %v2910, 16
        %v3099 = vrot.slane %v3097, 4
        %v3100 = vor.u32 %v3099, %v3095
        %v3101 = vrot.slane %v3100, 4
        %v3103 = vshll.u32 %v2911, 16
        %v3105 = vrot.slane %v3103, 5
        %v3106 = vsel %vm1043, %v3101, %v3105
        %v3108 = vshrl.u32 %v2912, 16
        %v3110 = vrot.slane %v3108, 4
        %v3111 = vshll.u32 %v2912, 16
        %v3113 = vrot.slane %v3111, 5
        %v3114 = vor.u32 %v3110, %v3113
        %v3115 = vrot.slane %v3114, 4
        %v3117 = vshll.u32 %v2913, 16
        %v3119 = vrot.slane %v3117, 5
        %v3120 = vsel %vm1043, %v3115, %v3119
        %v3121 = vshrl.u32 %v2913, 16
        %v3123 = vrot.slane %v3121, 4
        %v3124 = vor.u32 %v3123, %v3119
        %v3125 = vrot.slane %v3124, 4
        %v3127 = vshll.u32 %v2914, 16
        %v3129 = vrot.slane %v3127, 5
        %v3130 = vsel %vm1043, %v3125, %v3129
        %v3132 = vshrl.u32 %v2915, 16
        %v3134 = vrot.slane %v3132, 4
        %v3135 = vshll.u32 %v2915, 16
        %v3137 = vrot.slane %v3135, 5
        %v3138 = vor.u32 %v3134, %v3137
        %v3139 = vrot.slane %v3138, 4
        %v3141 = vshll.u32 %v2916, 16
        %v3143 = vrot.slane %v3141, 5
        %v3144 = vsel %vm1043, %v3139, %v3143
        %v3145 = vshrl.u32 %v2916, 16
        %v3147 = vrot.slane %v3145, 4
        %v3148 = vor.u32 %v3147, %v3143
        %v3149 = vrot.slane %v3148, 4
        %v3151 = vshll.u32 %v2917, 16
        %v3153 = vrot.slane %v3151, 5
        %v3154 = vsel %vm1043, %v3149, %v3153
        %v3156 = vshrl.u32 %v2918, 16
        %v3158 = vrot.slane %v3156, 4
        %v3159 = vshll.u32 %v2918, 16
        %v3161 = vrot.slane %v3159, 5
        %v3162 = vor.u32 %v3158, %v3161
        %v3163 = vrot.slane %v3162, 4
        %v3165 = vshll.u32 %v2919, 16
        %v3167 = vrot.slane %v3165, 5
        %v3168 = vsel %vm1043, %v3163, %v3167
        %v3169 = vshrl.u32 %v2919, 16
        %v3171 = vrot.slane %v3169, 4
        %v3172 = vor.u32 %v3171, %v3167
        %v3173 = vrot.slane %v3172, 4
        %v3175 = vshll.u32 %v2920, 16
        %v3177 = vrot.slane %v3175, 5
        %v3178 = vsel %vm1043, %v3173, %v3177
        %v3180 = vshrl.u32 %v2921, 16
        %v3182 = vrot.slane %v3180, 4
        %v3183 = vshll.u32 %v2921, 16
        %v3185 = vrot.slane %v3183, 5
        %v3186 = vor.u32 %v3182, %v3185
        %v3187 = vrot.slane %v3186, 4
        %v3189 = vshll.u32 %v2922, 16
        %v3191 = vrot.slane %v3189, 5
        %v3192 = vsel %vm1043, %v3187, %v3191
        %v3193 = vshrl.u32 %v2922, 16
        %v3195 = vrot.slane %v3193, 4
        %v3196 = vor.u32 %v3195, %v3191
        %v3197 = vrot.slane %v3196, 4
        %v3199 = vshll.u32 %v2923, 16
        %v3201 = vrot.slane %v3199, 5
        %v3202 = vsel %vm1043, %v3197, %v3201
        %v3204 = vshrl.u32 %v2924, 16
        %v3206 = vrot.slane %v3204, 4
        %v3207 = vshll.u32 %v2924, 16
        %v3209 = vrot.slane %v3207, 5
        %v3210 = vor.u32 %v3206, %v3209
        %v3211 = vrot.slane %v3210, 4
        %v3213 = vshll.u32 %v2925, 16
        %v3215 = vrot.slane %v3213, 5
        %v3216 = vsel %vm1043, %v3211, %v3215
        %v3217 = vshrl.u32 %v2925, 16
        %v3219 = vrot.slane %v3217, 4
        %v3220 = vor.u32 %v3219, %v3215
        %v3221 = vrot.slane %v3220, 4
        %v3223 = vshll.u32 %v2926, 16
        %v3225 = vrot.slane %v3223, 5
        %v3226 = vsel %vm1043, %v3221, %v3225
        %v3228 = vshrl.u32 %v2927, 16
        %v3230 = vrot.slane %v3228, 4
        %v3231 = vshll.u32 %v2927, 16
        %v3233 = vrot.slane %v3231, 5
        %v3234 = vor.u32 %v3230, %v3233
        %v3235 = vrot.slane %v3234, 4
        %v3237 = vshll.u32 %v2928, 16
        %v3239 = vrot.slane %v3237, 5
        %v3240 = vsel %vm1043, %v3235, %v3239
        %v3241 = vshrl.u32 %v2928, 16
        %v3243 = vrot.slane %v3241, 4
        %v3244 = vor.u32 %v3243, %v3239
        %v3245 = vrot.slane %v3244, 4
        %v3247 = vshll.u32 %v2929, 16
        %v3249 = vrot.slane %v3247, 5
        %v3250 = vsel %vm1043, %v3245, %v3249
        %v3252 = vshrl.u32 %v2930, 16
        %v3254 = vrot.slane %v3252, 4
        %v3255 = vshll.u32 %v2930, 16
        %v3257 = vrot.slane %v3255, 5
        %v3258 = vor.u32 %v3254, %v3257
        %v3259 = vrot.slane %v3258, 4
        %v3261 = vshll.u32 %v2931, 16
        %v3263 = vrot.slane %v3261, 5
        %v3264 = vsel %vm1043, %v3259, %v3263
        %v3265 = vshrl.u32 %v2931, 16
        %v3267 = vrot.slane %v3265, 4
        %v3268 = vor.u32 %v3267, %v3263
        %v3269 = vrot.slane %v3268, 4
        %v3271 = vshll.u32 %v2932, 16
        %v3273 = vrot.slane %v3271, 5
        %v3274 = vsel %vm1043, %v3269, %v3273
        %v3276 = vshrl.u32 %v2933, 16
        %v3278 = vrot.slane %v3276, 4
        %v3279 = vshll.u32 %v2933, 16
        %v3281 = vrot.slane %v3279, 5
        %v3282 = vor.u32 %v3278, %v3281
        %v3283 = vrot.slane %v3282, 4
        %v3285 = vshll.u32 %v2934, 16
        %v3287 = vrot.slane %v3285, 5
        %v3288 = vsel %vm1043, %v3283, %v3287
        %v3289 = vshrl.u32 %v2934, 16
        %v3291 = vrot.slane %v3289, 4
        %v3292 = vor.u32 %v3291, %v3287
        %v3293 = vrot.slane %v3292, 4
        %v3295 = vshll.u32 %v2935, 16
        %v3297 = vrot.slane %v3295, 5
        %v3298 = vsel %vm1043, %v3293, %v3297
        %v3300 = vshrl.u32 %v2936, 16
        %v3302 = vrot.slane %v3300, 4
        %v3303 = vshll.u32 %v2936, 16
        %v3305 = vrot.slane %v3303, 5
        %v3306 = vor.u32 %v3302, %v3305
        %v3307 = vrot.slane %v3306, 4
        %v3309 = vshll.u32 %v2937, 16
        %v3311 = vrot.slane %v3309, 5
        %v3312 = vsel %vm1043, %v3307, %v3311
        %v3313 = vshrl.u32 %v2937, 16
        %v3315 = vrot.slane %v3313, 4
        %v3316 = vor.u32 %v3315, %v3311
        %v3317 = vrot.slane %v3316, 4
        %v3319 = vshll.u32 %v2938, 16
        %v3321 = vrot.slane %v3319, 5
        %v3322 = vsel %vm1043, %v3317, %v3321
        %v3323 = vld [vmem:[#allocation7 + $0x100] sm:$0xf]
        %v3324 = vld [vmem:[#allocation7 + $0x104] sm:$0xf]
        %v3325 = vld [vmem:[#allocation7 + $0x108] sm:$0xf]
        %v3326 = vld [vmem:[#allocation7 + $0x10c] sm:$0xf]
        %v3327 = vld [vmem:[#allocation7 + $0x110] sm:$0xf]
        %v3328 = vld [vmem:[#allocation7 + $0x114] sm:$0xf]
        %v3329 = vld [vmem:[#allocation7 + $0x118] sm:$0xf]
        %v3330 = vld [vmem:[#allocation7 + $0x11c] sm:$0xf]
        %v3331 = vld [vmem:[#allocation7 + $0x120] sm:$0xf]
        %v3332 = vld [vmem:[#allocation7 + $0x124] sm:$0xf]
        %v3333 = vld [vmem:[#allocation7 + $0x128] sm:$0xf]
        %v3334 = vld [vmem:[#allocation7 + $0x12c] sm:$0xf]
        %v3335 = vld [vmem:[#allocation7 + $0x130] sm:$0xf]
        %v3336 = vld [vmem:[#allocation7 + $0x134] sm:$0xf]
        %v3337 = vld [vmem:[#allocation7 + $0x138] sm:$0xf]
        %v3338 = vld [vmem:[#allocation7 + $0x13c] sm:$0xf]
        %v3339 = vunpack.c.l.b16 %v2952
        %v3340 = vunpack.c.l.b16 %v2962
        %v3341 = vunpack.c.l.b16 %v2976
        %v3342 = vunpack.c.l.b16 %v2986
        %v3343 = vunpack.c.l.b16 %v3000
        %v3344 = vunpack.c.l.b16 %v3010
        %v3345 = vunpack.c.l.b16 %v3024
        %v3346 = vunpack.c.l.b16 %v3034
        %v3347 = vunpack.c.l.b16 %v3048
        %v3348 = vunpack.c.l.b16 %v3058
        %v3349 = vunpack.c.l.b16 %v3072
        %v3350 = vunpack.c.l.b16 %v3082
        %v3351 = vunpack.c.l.b16 %v3096
        %v3352 = vunpack.c.l.b16 %v3106
        %v3353 = vunpack.c.l.b16 %v3120
        %v3354 = vunpack.c.l.b16 %v3130
        %v3355 = vunpack.c.l.b16 %v3144
        %v3356 = vunpack.c.l.b16 %v3154
        %v3357 = vunpack.c.l.b16 %v3168
        %v3358 = vunpack.c.l.b16 %v3178
        %v3359 = vunpack.c.l.b16 %v3192
        %v3360 = vunpack.c.l.b16 %v3202
        %v3361 = vunpack.c.l.b16 %v3216
        %v3362 = vunpack.c.l.b16 %v3226
        %v3363 = vunpack.c.l.b16 %v3240
        %v3364 = vunpack.c.l.b16 %v3250
        %v3365 = vunpack.c.l.b16 %v3264
        %v3366 = vunpack.c.l.b16 %v3274
        %v3367 = vunpack.c.l.b16 %v3288
        %v3368 = vunpack.c.l.b16 %v3298
        %v3369 = vunpack.c.l.b16 %v3312
        %v3370 = vunpack.c.l.b16 %v3322
        %v3371 = vpack.c.b16 %v3340, %v3339
        %v3372 = vpack.c.b16 %v3342, %v3341
        %v3373 = vpack.c.b16 %v3344, %v3343
        %v3374 = vpack.c.b16 %v3346, %v3345
        %v3375 = vpack.c.b16 %v3348, %v3347
        %v3376 = vpack.c.b16 %v3350, %v3349
        %v3377 = vpack.c.b16 %v3352, %v3351
        %v3378 = vpack.c.b16 %v3354, %v3353
        %v3379 = vpack.c.b16 %v3356, %v3355
        %v3380 = vpack.c.b16 %v3358, %v3357
        %v3381 = vpack.c.b16 %v3360, %v3359
        %v3382 = vpack.c.b16 %v3362, %v3361
        %v3383 = vpack.c.b16 %v3364, %v3363
        %v3384 = vpack.c.b16 %v3366, %v3365
        %v3385 = vpack.c.b16 %v3368, %v3367
        %v3386 = vpack.c.b16 %v3370, %v3369
        %v3419 = vunpack.c.l.b16 %v3323
        %v3420 = vunpack.c.l.b16 %v3324
        %v3421 = vunpack.c.l.b16 %v3325
        %v3422 = vunpack.c.l.b16 %v3326
        %v3423 = vunpack.c.l.b16 %v3327
        %v3424 = vunpack.c.l.b16 %v3328
        %v3425 = vunpack.c.l.b16 %v3329
        %v3426 = vunpack.c.l.b16 %v3330
        %v3427 = vunpack.c.l.b16 %v3331
        %v3428 = vunpack.c.l.b16 %v3332
        %v3429 = vunpack.c.l.b16 %v3333
        %v3430 = vunpack.c.l.b16 %v3334
        %v3431 = vunpack.c.l.b16 %v3335
        %v3432 = vunpack.c.l.b16 %v3336
        %v3433 = vunpack.c.l.b16 %v3337
        %v3434 = vunpack.c.l.b16 %v3338
        %v3435 = vpack.c.b16 %v3420, %v3419
        %v3436 = vpack.c.b16 %v3422, %v3421
        %v3437 = vpack.c.b16 %v3424, %v3423
        %v3438 = vpack.c.b16 %v3426, %v3425
        %v3439 = vpack.c.b16 %v3428, %v3427
        %v3440 = vpack.c.b16 %v3430, %v3429
        %v3441 = vpack.c.b16 %v3432, %v3431
        %v3442 = vpack.c.b16 %v3434, %v3433
        %3451 = vmatprep.subr.bf16.mxu0 0
        %3452 = vmatpush1.bf16.msra.mxu0 %v3435
        %3453 = vmatprep.subr.bf16.mxu0 0
        %3454 = vmatpush1.bf16.msra.mxu0 %v3436
        %3455 = vmatprep.subr.bf16.mxu0 0
        %3456 = vmatpush1.bf16.msra.mxu0 %v3437
        %3457 = vmatprep.subr.bf16.mxu0 0
        %3458 = vmatpush1.bf16.msra.mxu0 %v3438
        %3459 = vmatprep.subr.bf16.mxu0 0
        %3460 = vmatpush1.bf16.msra.mxu0 %v3439
        %3461 = vmatprep.subr.bf16.mxu0 0
        %3462 = vmatpush1.bf16.msra.mxu0 %v3440
        %3463 = vmatprep.subr.bf16.mxu0 0
        %3464 = vmatpush1.bf16.msra.mxu0 %v3441
        %3465 = vmatprep.subr.bf16.mxu0 0
        %3466 = vmatpush1.bf16.msra.mxu0 %v3442
        %3467 = vmatprep.subr.bf16.mxu0 0
        %3468 = vmatpush1.bf16.msra.mxu0 0
        %3469 = vmatprep.subr.bf16.mxu0 0
        %3470 = vmatpush1.bf16.msra.mxu0 0
        %3471 = vmatprep.subr.bf16.mxu0 0
        %3472 = vmatpush1.bf16.msra.mxu0 0
        %3473 = vmatprep.subr.bf16.mxu0 0
        %3474 = vmatpush1.bf16.msra.mxu0 0
        %3475 = vmatprep.subr.bf16.mxu0 0
        %3476 = vmatpush1.bf16.msra.mxu0 0
        %3477 = vmatprep.subr.bf16.mxu0 0
        %3478 = vmatpush1.bf16.msra.mxu0 0
        %3479 = vmatprep.subr.bf16.mxu0 0
        %3480 = vmatpush1.bf16.msra.mxu0 0
        %3481 = vmatprep.subr.bf16.mxu0 0
        %3482 = vmatpush1.bf16.msra.mxu0 0
        %3483 = vmatprep.mubr.bf16.mxu0 0
        %3484 = vmatmul.mubr.bf16.gmra.mrb[0].mxu0 %v3371
        %v3485 = vpop.f32.mrb[0].mxu0
        %v3486 = vadd.f32 0.0, %v3485
        %v3487 = vpop.f32.mrb[0].mxu0
        %v3488 = vpop.f32.mrb[0].mxu0
        %v3489 = vadd.f32 0.0, %v3488
        %v3490 = vpop.f32.mrb[0].mxu0
        %3491 = vmatprep.mubr.bf16.mxu0 0
        %3492 = vmatmul.mubr.bf16.gmra.mrb[0].mxu0 %v3372
        %v3493 = vpop.f32.mrb[0].mxu0
        %v3494 = vadd.f32 0.0, %v3493
        %v3495 = vpop.f32.mrb[0].mxu0
        %v3496 = vpop.f32.mrb[0].mxu0
        %v3497 = vadd.f32 0.0, %v3496
        %v3498 = vpop.f32.mrb[0].mxu0
        %3499 = vmatprep.mubr.bf16.mxu0 0
        %3500 = vmatmul.mubr.bf16.gmra.mrb[0].mxu0 %v3373
        %v3501 = vpop.f32.mrb[0].mxu0
        %v3502 = vadd.f32 0.0, %v3501
        %v3503 = vpop.f32.mrb[0].mxu0
        %v3504 = vpop.f32.mrb[0].mxu0
        %v3505 = vadd.f32 0.0, %v3504
        %v3506 = vpop.f32.mrb[0].mxu0
        %3507 = vmatprep.mubr.bf16.mxu0 0
        %3508 = vmatmul.mubr.bf16.gmra.mrb[0].mxu0 %v3374
        %v3509 = vpop.f32.mrb[0].mxu0
        %v3510 = vadd.f32 0.0, %v3509
        %v3511 = vpop.f32.mrb[0].mxu0
        %v3512 = vpop.f32.mrb[0].mxu0
        %v3513 = vadd.f32 0.0, %v3512
        %v3514 = vpop.f32.mrb[0].mxu0
        %3515 = vmatprep.mubr.bf16.mxu0 0
        %3516 = vmatmul.mubr.bf16.gmra.mrb[0].mxu0 %v3375
        %v3517 = vpop.f32.mrb[0].mxu0
        %v3518 = vadd.f32 0.0, %v3517
        %v3519 = vpop.f32.mrb[0].mxu0
        %v3520 = vpop.f32.mrb[0].mxu0
        %v3521 = vadd.f32 0.0, %v3520
        %v3522 = vpop.f32.mrb[0].mxu0
        %3523 = vmatprep.mubr.bf16.mxu0 0
        %3524 = vmatmul.mubr.bf16.gmra.mrb[0].mxu0 %v3376
        %v3525 = vpop.f32.mrb[0].mxu0
        %v3526 = vadd.f32 0.0, %v3525
        %v3527 = vpop.f32.mrb[0].mxu0
        %v3528 = vpop.f32.mrb[0].mxu0
        %v3529 = vadd.f32 0.0, %v3528
        %v3530 = vpop.f32.mrb[0].mxu0
        %3531 = vmatprep.mubr.bf16.mxu0 0
        %3532 = vmatmul.mubr.bf16.gmra.mrb[0].mxu0 %v3377
        %v3533 = vpop.f32.mrb[0].mxu0
        %v3534 = vadd.f32 0.0, %v3533
        %v3535 = vpop.f32.mrb[0].mxu0
        %v3536 = vpop.f32.mrb[0].mxu0
        %v3537 = vadd.f32 0.0, %v3536
        %v3538 = vpop.f32.mrb[0].mxu0
        %3539 = vmatprep.mubr.bf16.mxu0 0
        %3540 = vmatmul.mubr.bf16.gmra.mrb[0].mxu0 %v3378
        %v3541 = vpop.f32.mrb[0].mxu0
        %v3542 = vadd.f32 0.0, %v3541
        %v3543 = vpop.f32.mrb[0].mxu0
        %v3544 = vpop.f32.mrb[0].mxu0
        %v3545 = vadd.f32 0.0, %v3544
        %v3546 = vpop.f32.mrb[0].mxu0
        %3547 = vmatprep.mubr.bf16.mxu0 0
        %3548 = vmatmul.mubr.bf16.gmra.mrb[0].mxu0 %v3379
        %v3549 = vpop.f32.mrb[0].mxu0
        %v3550 = vadd.f32 0.0, %v3549
        %v3551 = vpop.f32.mrb[0].mxu0
        %v3552 = vpop.f32.mrb[0].mxu0
        %v3553 = vadd.f32 0.0, %v3552
        %v3554 = vpop.f32.mrb[0].mxu0
        %3555 = vmatprep.mubr.bf16.mxu0 0
        %3556 = vmatmul.mubr.bf16.gmra.mrb[0].mxu0 %v3380
        %v3557 = vpop.f32.mrb[0].mxu0
        %v3558 = vadd.f32 0.0, %v3557
        %v3559 = vpop.f32.mrb[0].mxu0
        %v3560 = vpop.f32.mrb[0].mxu0
        %v3561 = vadd.f32 0.0, %v3560
        %v3562 = vpop.f32.mrb[0].mxu0
        %3563 = vmatprep.mubr.bf16.mxu0 0
        %3564 = vmatmul.mubr.bf16.gmra.mrb[0].mxu0 %v3381
        %v3565 = vpop.f32.mrb[0].mxu0
        %v3566 = vadd.f32 0.0, %v3565
        %v3567 = vpop.f32.mrb[0].mxu0
        %v3568 = vpop.f32.mrb[0].mxu0
        %v3569 = vadd.f32 0.0, %v3568
        %v3570 = vpop.f32.mrb[0].mxu0
        %3571 = vmatprep.mubr.bf16.mxu0 0
        %3572 = vmatmul.mubr.bf16.gmra.mrb[0].mxu0 %v3382
        %v3573 = vpop.f32.mrb[0].mxu0
        %v3574 = vadd.f32 0.0, %v3573
        %v3575 = vpop.f32.mrb[0].mxu0
        %v3576 = vpop.f32.mrb[0].mxu0
        %v3577 = vadd.f32 0.0, %v3576
        %v3578 = vpop.f32.mrb[0].mxu0
        %3579 = vmatprep.mubr.bf16.mxu0 0
        %3580 = vmatmul.mubr.bf16.gmra.mrb[0].mxu0 %v3383
        %v3581 = vpop.f32.mrb[0].mxu0
        %v3582 = vadd.f32 0.0, %v3581
        %v3583 = vpop.f32.mrb[0].mxu0
        %v3584 = vpop.f32.mrb[0].mxu0
        %v3585 = vadd.f32 0.0, %v3584
        %v3586 = vpop.f32.mrb[0].mxu0
        %3587 = vmatprep.mubr.bf16.mxu0 0
        %3588 = vmatmul.mubr.bf16.gmra.mrb[0].mxu0 %v3384
        %v3589 = vpop.f32.mrb[0].mxu0
        %v3590 = vadd.f32 0.0, %v3589
        %v3591 = vpop.f32.mrb[0].mxu0
        %v3592 = vpop.f32.mrb[0].mxu0
        %v3593 = vadd.f32 0.0, %v3592
        %v3594 = vpop.f32.mrb[0].mxu0
        %3595 = vmatprep.mubr.bf16.mxu0 0
        %3596 = vmatmul.mubr.bf16.gmra.mrb[0].mxu0 %v3385
        %v3597 = vpop.f32.mrb[0].mxu0
        %v3598 = vadd.f32 0.0, %v3597
        %v3599 = vpop.f32.mrb[0].mxu0
        %v3600 = vpop.f32.mrb[0].mxu0
        %v3601 = vadd.f32 0.0, %v3600
        %v3602 = vpop.f32.mrb[0].mxu0
        %3603 = vmatprep.mubr.bf16.mxu0 0
        %3604 = vmatmul.mubr.bf16.gmra.mrb[0].mxu0 %v3386
        %v3605 = vpop.f32.mrb[0].mxu0
        %v3606 = vadd.f32 0.0, %v3605
        %v3607 = vpop.f32.mrb[0].mxu0
        %v3608 = vpop.f32.mrb[0].mxu0
        %v3609 = vadd.f32 0.0, %v3608
        %v3610 = vpop.f32.mrb[0].mxu0
        %3611 = vdwg.mxu0
        %v3612 = vadd.f32 %v2859, %v3486
        %v3613 = vadd.f32 %v2860, %v3489
        %v3614 = vadd.f32 %v2861, %v3494
        %v3615 = vadd.f32 %v2862, %v3497
        %v3616 = vadd.f32 %v2863, %v3502
        %v3617 = vadd.f32 %v2864, %v3505
        %v3618 = vadd.f32 %v2865, %v3510
        %v3619 = vadd.f32 %v2866, %v3513
        %v3620 = vadd.f32 %v2867, %v3518
        %v3621 = vadd.f32 %v2868, %v3521
        %v3622 = vadd.f32 %v2869, %v3526
        %v3623 = vadd.f32 %v2870, %v3529
        %v3624 = vadd.f32 %v2871, %v3534
        %v3625 = vadd.f32 %v2872, %v3537
        %v3626 = vadd.f32 %v2873, %v3542
        %v3627 = vadd.f32 %v2874, %v3545
        %v3628 = vadd.f32 %v2875, %v3550
        %v3629 = vadd.f32 %v2876, %v3553
        %v3630 = vadd.f32 %v2877, %v3558
        %v3631 = vadd.f32 %v2878, %v3561
        %v3632 = vadd.f32 %v2879, %v3566
        %v3633 = vadd.f32 %v2880, %v3569
        %v3634 = vadd.f32 %v2881, %v3574
        %v3635 = vadd.f32 %v2882, %v3577
        %v3636 = vadd.f32 %v2883, %v3582
        %v3637 = vadd.f32 %v2884, %v3585
        %v3638 = vadd.f32 %v2885, %v3590
        %v3639 = vadd.f32 %v2886, %v3593
        %v3640 = vadd.f32 %v2887, %v3598
        %v3641 = vadd.f32 %v2888, %v3601
        %v3642 = vadd.f32 %v2889, %v3606
        %v3643 = vadd.f32 %v2890, %v3609
        %v3644 = vld [vmem:[%s862] sm:$0xe]
        %v3645 = vld [vmem:[%s862 + $0xc] sm:$0xe]
        %v3646 = vld [vmem:[%s862 + $0x18] sm:$0xe]
        %v3647 = vld [vmem:[%s862 + $0x24] sm:$0xe]
        %v3648 = vld [vmem:[%s862 + $0x30] sm:$0xe]
        %v3649 = vld [vmem:[%s862 + $0x3c] sm:$0xe]
        %v3650 = vld [vmem:[%s862 + $0x48] sm:$0xe]
        %v3651 = vld [vmem:[%s862 + $0x54] sm:$0xe]
        %v3652 = vld [vmem:[%s862 + $0x60] sm:$0xe]
        %v3653 = vld [vmem:[%s862 + $0x6c] sm:$0xe]
        %v3654 = vld [vmem:[%s862 + $0x78] sm:$0xe]
        %v3655 = vld [vmem:[%s862 + $0x84] sm:$0xe]
        %v3656 = vld [vmem:[%s862 + $0x90] sm:$0xe]
        %v3657 = vld [vmem:[%s862 + $0x9c] sm:$0xe]
        %v3658 = vld [vmem:[%s862 + $0xa8] sm:$0xe]
        %v3659 = vld [vmem:[%s862 + $0xb4] sm:$0xe]
        %v3708 = vrot.slane %v3644, 5
        %v3709 = vrot.slane %v3708, 4
        %v3710 = vrot.slane %v2892, 5
        %v3711 = vsel %vm2072, %v3709, %v3710
        %v3712 = vrot.slane %v3710, 4
        %v3713 = vrot.slane %v2893, 5
        %v3714 = vsel %vm2072, %v3712, %v3713
        %v3715 = vrot.slane %v3645, 5
        %v3716 = vrot.slane %v3715, 4
        %v3717 = vrot.slane %v2895, 5
        %v3718 = vsel %vm2072, %v3716, %v3717
        %v3719 = vrot.slane %v3717, 4
        %v3720 = vrot.slane %v2896, 5
        %v3721 = vsel %vm2072, %v3719, %v3720
        %v3722 = vrot.slane %v3646, 5
        %v3723 = vrot.slane %v3722, 4
        %v3724 = vrot.slane %v2898, 5
        %v3725 = vsel %vm2072, %v3723, %v3724
        %v3726 = vrot.slane %v3724, 4
        %v3727 = vrot.slane %v2899, 5
        %v3728 = vsel %vm2072, %v3726, %v3727
        %v3729 = vrot.slane %v3647, 5
        %v3730 = vrot.slane %v3729, 4
        %v3731 = vrot.slane %v2901, 5
        %v3732 = vsel %vm2072, %v3730, %v3731
        %v3733 = vrot.slane %v3731, 4
        %v3734 = vrot.slane %v2902, 5
        %v3735 = vsel %vm2072, %v3733, %v3734
        %v3736 = vrot.slane %v3648, 5
        %v3737 = vrot.slane %v3736, 4
        %v3738 = vrot.slane %v2904, 5
        %v3739 = vsel %vm2072, %v3737, %v3738
        %v3740 = vrot.slane %v3738, 4
        %v3741 = vrot.slane %v2905, 5
        %v3742 = vsel %vm2072, %v3740, %v3741
        %v3743 = vrot.slane %v3649, 5
        %v3744 = vrot.slane %v3743, 4
        %v3745 = vrot.slane %v2907, 5
        %v3746 = vsel %vm2072, %v3744, %v3745
        %v3747 = vrot.slane %v3745, 4
        %v3748 = vrot.slane %v2908, 5
        %v3749 = vsel %vm2072, %v3747, %v3748
        %v3750 = vrot.slane %v3650, 5
        %v3751 = vrot.slane %v3750, 4
        %v3752 = vrot.slane %v2910, 5
        %v3753 = vsel %vm2072, %v3751, %v3752
        %v3754 = vrot.slane %v3752, 4
        %v3755 = vrot.slane %v2911, 5
        %v3756 = vsel %vm2072, %v3754, %v3755
        %v3757 = vrot.slane %v3651, 5
        %v3758 = vrot.slane %v3757, 4
        %v3759 = vrot.slane %v2913, 5
        %v3760 = vsel %vm2072, %v3758, %v3759
        %v3761 = vrot.slane %v3759, 4
        %v3762 = vrot.slane %v2914, 5
        %v3763 = vsel %vm2072, %v3761, %v3762
        %v3764 = vrot.slane %v3652, 5
        %v3765 = vrot.slane %v3764, 4
        %v3766 = vrot.slane %v2916, 5
        %v3767 = vsel %vm2072, %v3765, %v3766
        %v3768 = vrot.slane %v3766, 4
        %v3769 = vrot.slane %v2917, 5
        %v3770 = vsel %vm2072, %v3768, %v3769
        %v3771 = vrot.slane %v3653, 5
        %v3772 = vrot.slane %v3771, 4
        %v3773 = vrot.slane %v2919, 5
        %v3774 = vsel %vm2072, %v3772, %v3773
        %v3775 = vrot.slane %v3773, 4
        %v3776 = vrot.slane %v2920, 5
        %v3777 = vsel %vm2072, %v3775, %v3776
        %v3778 = vrot.slane %v3654, 5
        %v3779 = vrot.slane %v3778, 4
        %v3780 = vrot.slane %v2922, 5
        %v3781 = vsel %vm2072, %v3779, %v3780
        %v3782 = vrot.slane %v3780, 4
        %v3783 = vrot.slane %v2923, 5
        %v3784 = vsel %vm2072, %v3782, %v3783
        %v3785 = vrot.slane %v3655, 5
        %v3786 = vrot.slane %v3785, 4
        %v3787 = vrot.slane %v2925, 5
        %v3788 = vsel %vm2072, %v3786, %v3787
        %v3789 = vrot.slane %v3787, 4
        %v3790 = vrot.slane %v2926, 5
        %v3791 = vsel %vm2072, %v3789, %v3790
        %v3792 = vrot.slane %v3656, 5
        %v3793 = vrot.slane %v3792, 4
        %v3794 = vrot.slane %v2928, 5
        %v3795 = vsel %vm2072, %v3793, %v3794
        %v3796 = vrot.slane %v3794, 4
        %v3797 = vrot.slane %v2929, 5
        %v3798 = vsel %vm2072, %v3796, %v3797
        %v3799 = vrot.slane %v3657, 5
        %v3800 = vrot.slane %v3799, 4
        %v3801 = vrot.slane %v2931, 5
        %v3802 = vsel %vm2072, %v3800, %v3801
        %v3803 = vrot.slane %v3801, 4
        %v3804 = vrot.slane %v2932, 5
        %v3805 = vsel %vm2072, %v3803, %v3804
        %v3806 = vrot.slane %v3658, 5
        %v3807 = vrot.slane %v3806, 4
        %v3808 = vrot.slane %v2934, 5
        %v3809 = vsel %vm2072, %v3807, %v3808
        %v3810 = vrot.slane %v3808, 4
        %v3811 = vrot.slane %v2935, 5
        %v3812 = vsel %vm2072, %v3810, %v3811
        %v3813 = vrot.slane %v3659, 5
        %v3814 = vrot.slane %v3813, 4
        %v3815 = vrot.slane %v2937, 5
        %v3816 = vsel %vm2072, %v3814, %v3815
        %v3817 = vrot.slane %v3815, 4
        %v3818 = vrot.slane %v2938, 5
        %v3819 = vsel %vm2072, %v3817, %v3818
        %v3820 = vld [vmem:[#allocation7 + $0x140] sm:$0xf]
        %v3821 = vld [vmem:[#allocation7 + $0x144] sm:$0xf]
        %v3822 = vld [vmem:[#allocation7 + $0x148] sm:$0xf]
        %v3823 = vld [vmem:[#allocation7 + $0x14c] sm:$0xf]
        %v3824 = vld [vmem:[#allocation7 + $0x150] sm:$0xf]
        %v3825 = vld [vmem:[#allocation7 + $0x154] sm:$0xf]
        %v3826 = vld [vmem:[#allocation7 + $0x158] sm:$0xf]
        %v3827 = vld [vmem:[#allocation7 + $0x15c] sm:$0xf]
        %v3828 = vld [vmem:[#allocation7 + $0x160] sm:$0xf]
        %v3829 = vld [vmem:[#allocation7 + $0x164] sm:$0xf]
        %v3830 = vld [vmem:[#allocation7 + $0x168] sm:$0xf]
        %v3831 = vld [vmem:[#allocation7 + $0x16c] sm:$0xf]
        %v3832 = vld [vmem:[#allocation7 + $0x170] sm:$0xf]
        %v3833 = vld [vmem:[#allocation7 + $0x174] sm:$0xf]
        %v3834 = vld [vmem:[#allocation7 + $0x178] sm:$0xf]
        %v3835 = vld [vmem:[#allocation7 + $0x17c] sm:$0xf]
        %v3836 = vunpack.c.l.b16 %v3711
        %v3837 = vunpack.c.l.b16 %v3714
        %v3838 = vunpack.c.l.b16 %v3718
        %v3839 = vunpack.c.l.b16 %v3721
        %v3840 = vunpack.c.l.b16 %v3725
        %v3841 = vunpack.c.l.b16 %v3728
        %v3842 = vunpack.c.l.b16 %v3732
        %v3843 = vunpack.c.l.b16 %v3735
        %v3844 = vunpack.c.l.b16 %v3739
        %v3845 = vunpack.c.l.b16 %v3742
        %v3846 = vunpack.c.l.b16 %v3746
        %v3847 = vunpack.c.l.b16 %v3749
        %v3848 = vunpack.c.l.b16 %v3753
        %v3849 = vunpack.c.l.b16 %v3756
        %v3850 = vunpack.c.l.b16 %v3760
        %v3851 = vunpack.c.l.b16 %v3763
        %v3852 = vunpack.c.l.b16 %v3767
        %v3853 = vunpack.c.l.b16 %v3770
        %v3854 = vunpack.c.l.b16 %v3774
        %v3855 = vunpack.c.l.b16 %v3777
        %v3856 = vunpack.c.l.b16 %v3781
        %v3857 = vunpack.c.l.b16 %v3784
        %v3858 = vunpack.c.l.b16 %v3788
        %v3859 = vunpack.c.l.b16 %v3791
        %v3860 = vunpack.c.l.b16 %v3795
        %v3861 = vunpack.c.l.b16 %v3798
        %v3862 = vunpack.c.l.b16 %v3802
        %v3863 = vunpack.c.l.b16 %v3805
        %v3864 = vunpack.c.l.b16 %v3809
        %v3865 = vunpack.c.l.b16 %v3812
        %v3866 = vunpack.c.l.b16 %v3816
        %v3867 = vunpack.c.l.b16 %v3819
        %v3868 = vpack.c.b16 %v3837, %v3836
        %v3869 = vpack.c.b16 %v3839, %v3838
        %v3870 = vpack.c.b16 %v3841, %v3840
        %v3871 = vpack.c.b16 %v3843, %v3842
        %v3872 = vpack.c.b16 %v3845, %v3844
        %v3873 = vpack.c.b16 %v3847, %v3846
        %v3874 = vpack.c.b16 %v3849, %v3848
        %v3875 = vpack.c.b16 %v3851, %v3850
        %v3876 = vpack.c.b16 %v3853, %v3852
        %v3877 = vpack.c.b16 %v3855, %v3854
        %v3878 = vpack.c.b16 %v3857, %v3856
        %v3879 = vpack.c.b16 %v3859, %v3858
        %v3880 = vpack.c.b16 %v3861, %v3860
        %v3881 = vpack.c.b16 %v3863, %v3862
        %v3882 = vpack.c.b16 %v3865, %v3864
        %v3883 = vpack.c.b16 %v3867, %v3866
        %v3916 = vunpack.c.l.b16 %v3820
        %v3917 = vunpack.c.l.b16 %v3821
        %v3918 = vunpack.c.l.b16 %v3822
        %v3919 = vunpack.c.l.b16 %v3823
        %v3920 = vunpack.c.l.b16 %v3824
        %v3921 = vunpack.c.l.b16 %v3825
        %v3922 = vunpack.c.l.b16 %v3826
        %v3923 = vunpack.c.l.b16 %v3827
        %v3924 = vunpack.c.l.b16 %v3828
        %v3925 = vunpack.c.l.b16 %v3829
        %v3926 = vunpack.c.l.b16 %v3830
        %v3927 = vunpack.c.l.b16 %v3831
        %v3928 = vunpack.c.l.b16 %v3832
        %v3929 = vunpack.c.l.b16 %v3833
        %v3930 = vunpack.c.l.b16 %v3834
        %v3931 = vunpack.c.l.b16 %v3835
        %v3932 = vpack.c.b16 %v3917, %v3916
        %v3933 = vpack.c.b16 %v3919, %v3918
        %v3934 = vpack.c.b16 %v3921, %v3920
        %v3935 = vpack.c.b16 %v3923, %v3922
        %v3936 = vpack.c.b16 %v3925, %v3924
        %v3937 = vpack.c.b16 %v3927, %v3926
        %v3938 = vpack.c.b16 %v3929, %v3928
        %v3939 = vpack.c.b16 %v3931, %v3930
        %3948 = vmatprep.subr.bf16.mxu0 0
        %3949 = vmatpush1.bf16.msra.mxu0 %v3932
        %3950 = vmatprep.subr.bf16.mxu0 0
        %3951 = vmatpush1.bf16.msra.mxu0 %v3933
        %3952 = vmatprep.subr.bf16.mxu0 0
        %3953 = vmatpush1.bf16.msra.mxu0 %v3934
        %3954 = vmatprep.subr.bf16.mxu0 0
        %3955 = vmatpush1.bf16.msra.mxu0 %v3935
        %3956 = vmatprep.subr.bf16.mxu0 0
        %3957 = vmatpush1.bf16.msra.mxu0 %v3936
        %3958 = vmatprep.subr.bf16.mxu0 0
        %3959 = vmatpush1.bf16.msra.mxu0 %v3937
        %3960 = vmatprep.subr.bf16.mxu0 0
        %3961 = vmatpush1.bf16.msra.mxu0 %v3938
        %3962 = vmatprep.subr.bf16.mxu0 0
        %3963 = vmatpush1.bf16.msra.mxu0 %v3939
        %3964 = vmatprep.subr.bf16.mxu0 0
        %3965 = vmatpush1.bf16.msra.mxu0 0
        %3966 = vmatprep.subr.bf16.mxu0 0
        %3967 = vmatpush1.bf16.msra.mxu0 0
        %3968 = vmatprep.subr.bf16.mxu0 0
        %3969 = vmatpush1.bf16.msra.mxu0 0
        %3970 = vmatprep.subr.bf16.mxu0 0
        %3971 = vmatpush1.bf16.msra.mxu0 0
        %3972 = vmatprep.subr.bf16.mxu0 0
        %3973 = vmatpush1.bf16.msra.mxu0 0
        %3974 = vmatprep.subr.bf16.mxu0 0
        %3975 = vmatpush1.bf16.msra.mxu0 0
        %3976 = vmatprep.subr.bf16.mxu0 0
        %3977 = vmatpush1.bf16.msra.mxu0 0
        %3978 = vmatprep.subr.bf16.mxu0 0
        %3979 = vmatpush1.bf16.msra.mxu0 0
        %3980 = vmatprep.mubr.bf16.mxu0 0
        %3981 = vmatmul.mubr.bf16.gmra.mrb[0].mxu0 %v3868
        %v3982 = vpop.f32.mrb[0].mxu0
        %v3983 = vadd.f32 0.0, %v3982
        %v3984 = vpop.f32.mrb[0].mxu0
        %v3985 = vpop.f32.mrb[0].mxu0
        %v3986 = vadd.f32 0.0, %v3985
        %v3987 = vpop.f32.mrb[0].mxu0
        %3988 = vmatprep.mubr.bf16.mxu0 0
        %3989 = vmatmul.mubr.bf16.gmra.mrb[0].mxu0 %v3869
        %v3990 = vpop.f32.mrb[0].mxu0
        %v3991 = vadd.f32 0.0, %v3990
        %v3992 = vpop.f32.mrb[0].mxu0
        %v3993 = vpop.f32.mrb[0].mxu0
        %v3994 = vadd.f32 0.0, %v3993
        %v3995 = vpop.f32.mrb[0].mxu0
        %3996 = vmatprep.mubr.bf16.mxu0 0
        %3997 = vmatmul.mubr.bf16.gmra.mrb[0].mxu0 %v3870
        %v3998 = vpop.f32.mrb[0].mxu0
        %v3999 = vadd.f32 0.0, %v3998
        %v4000 = vpop.f32.mrb[0].mxu0
        %v4001 = vpop.f32.mrb[0].mxu0
        %v4002 = vadd.f32 0.0, %v4001
        %v4003 = vpop.f32.mrb[0].mxu0
        %4004 = vmatprep.mubr.bf16.mxu0 0
        %4005 = vmatmul.mubr.bf16.gmra.mrb[0].mxu0 %v3871
        %v4006 = vpop.f32.mrb[0].mxu0
        %v4007 = vadd.f32 0.0, %v4006
        %v4008 = vpop.f32.mrb[0].mxu0
        %v4009 = vpop.f32.mrb[0].mxu0
        %v4010 = vadd.f32 0.0, %v4009
        %v4011 = vpop.f32.mrb[0].mxu0
        %4012 = vmatprep.mubr.bf16.mxu0 0
        %4013 = vmatmul.mubr.bf16.gmra.mrb[0].mxu0 %v3872
        %v4014 = vpop.f32.mrb[0].mxu0
        %v4015 = vadd.f32 0.0, %v4014
        %v4016 = vpop.f32.mrb[0].mxu0
        %v4017 = vpop.f32.mrb[0].mxu0
        %v4018 = vadd.f32 0.0, %v4017
        %v4019 = vpop.f32.mrb[0].mxu0
        %4020 = vmatprep.mubr.bf16.mxu0 0
        %4021 = vmatmul.mubr.bf16.gmra.mrb[0].mxu0 %v3873
        %v4022 = vpop.f32.mrb[0].mxu0
        %v4023 = vadd.f32 0.0, %v4022
        %v4024 = vpop.f32.mrb[0].mxu0
        %v4025 = vpop.f32.mrb[0].mxu0
        %v4026 = vadd.f32 0.0, %v4025
        %v4027 = vpop.f32.mrb[0].mxu0
        %4028 = vmatprep.mubr.bf16.mxu0 0
        %4029 = vmatmul.mubr.bf16.gmra.mrb[0].mxu0 %v3874
        %v4030 = vpop.f32.mrb[0].mxu0
        %v4031 = vadd.f32 0.0, %v4030
        %v4032 = vpop.f32.mrb[0].mxu0
        %v4033 = vpop.f32.mrb[0].mxu0
        %v4034 = vadd.f32 0.0, %v4033
        %v4035 = vpop.f32.mrb[0].mxu0
        %4036 = vmatprep.mubr.bf16.mxu0 0
        %4037 = vmatmul.mubr.bf16.gmra.mrb[0].mxu0 %v3875
        %v4038 = vpop.f32.mrb[0].mxu0
        %v4039 = vadd.f32 0.0, %v4038
        %v4040 = vpop.f32.mrb[0].mxu0
        %v4041 = vpop.f32.mrb[0].mxu0
        %v4042 = vadd.f32 0.0, %v4041
        %v4043 = vpop.f32.mrb[0].mxu0
        %4044 = vmatprep.mubr.bf16.mxu0 0
        %4045 = vmatmul.mubr.bf16.gmra.mrb[0].mxu0 %v3876
        %v4046 = vpop.f32.mrb[0].mxu0
        %v4047 = vadd.f32 0.0, %v4046
        %v4048 = vpop.f32.mrb[0].mxu0
        %v4049 = vpop.f32.mrb[0].mxu0
        %v4050 = vadd.f32 0.0, %v4049
        %v4051 = vpop.f32.mrb[0].mxu0
        %4052 = vmatprep.mubr.bf16.mxu0 0
        %4053 = vmatmul.mubr.bf16.gmra.mrb[0].mxu0 %v3877
        %v4054 = vpop.f32.mrb[0].mxu0
        %v4055 = vadd.f32 0.0, %v4054
        %v4056 = vpop.f32.mrb[0].mxu0
        %v4057 = vpop.f32.mrb[0].mxu0
        %v4058 = vadd.f32 0.0, %v4057
        %v4059 = vpop.f32.mrb[0].mxu0
        %4060 = vmatprep.mubr.bf16.mxu0 0
        %4061 = vmatmul.mubr.bf16.gmra.mrb[0].mxu0 %v3878
        %v4062 = vpop.f32.mrb[0].mxu0
        %v4063 = vadd.f32 0.0, %v4062
        %v4064 = vpop.f32.mrb[0].mxu0
        %v4065 = vpop.f32.mrb[0].mxu0
        %v4066 = vadd.f32 0.0, %v4065
        %v4067 = vpop.f32.mrb[0].mxu0
        %4068 = vmatprep.mubr.bf16.mxu0 0
        %4069 = vmatmul.mubr.bf16.gmra.mrb[0].mxu0 %v3879
        %v4070 = vpop.f32.mrb[0].mxu0
        %v4071 = vadd.f32 0.0, %v4070
        %v4072 = vpop.f32.mrb[0].mxu0
        %v4073 = vpop.f32.mrb[0].mxu0
        %v4074 = vadd.f32 0.0, %v4073
        %v4075 = vpop.f32.mrb[0].mxu0
        %4076 = vmatprep.mubr.bf16.mxu0 0
        %4077 = vmatmul.mubr.bf16.gmra.mrb[0].mxu0 %v3880
        %v4078 = vpop.f32.mrb[0].mxu0
        %v4079 = vadd.f32 0.0, %v4078
        %v4080 = vpop.f32.mrb[0].mxu0
        %v4081 = vpop.f32.mrb[0].mxu0
        %v4082 = vadd.f32 0.0, %v4081
        %v4083 = vpop.f32.mrb[0].mxu0
        %4084 = vmatprep.mubr.bf16.mxu0 0
        %4085 = vmatmul.mubr.bf16.gmra.mrb[0].mxu0 %v3881
        %v4086 = vpop.f32.mrb[0].mxu0
        %v4087 = vadd.f32 0.0, %v4086
        %v4088 = vpop.f32.mrb[0].mxu0
        %v4089 = vpop.f32.mrb[0].mxu0
        %v4090 = vadd.f32 0.0, %v4089
        %v4091 = vpop.f32.mrb[0].mxu0
        %4092 = vmatprep.mubr.bf16.mxu0 0
        %4093 = vmatmul.mubr.bf16.gmra.mrb[0].mxu0 %v3882
        %v4094 = vpop.f32.mrb[0].mxu0
        %v4095 = vadd.f32 0.0, %v4094
        %v4096 = vpop.f32.mrb[0].mxu0
        %v4097 = vpop.f32.mrb[0].mxu0
        %v4098 = vadd.f32 0.0, %v4097
        %v4099 = vpop.f32.mrb[0].mxu0
        %4100 = vmatprep.mubr.bf16.mxu0 0
        %4101 = vmatmul.mubr.bf16.gmra.mrb[0].mxu0 %v3883
        %v4102 = vpop.f32.mrb[0].mxu0
        %v4103 = vadd.f32 0.0, %v4102
        %v4104 = vpop.f32.mrb[0].mxu0
        %v4105 = vpop.f32.mrb[0].mxu0
        %v4106 = vadd.f32 0.0, %v4105
        %v4107 = vpop.f32.mrb[0].mxu0
        %4108 = vdwg.mxu0
        %v4109 = vadd.f32 %v3612, %v3983
        %v4110 = vadd.f32 %v3613, %v3986
        %v4111 = vadd.f32 %v3614, %v3991
        %v4112 = vadd.f32 %v3615, %v3994
        %v4113 = vadd.f32 %v3616, %v3999
        %v4114 = vadd.f32 %v3617, %v4002
        %v4115 = vadd.f32 %v3618, %v4007
        %v4116 = vadd.f32 %v3619, %v4010
        %v4117 = vadd.f32 %v3620, %v4015
        %v4118 = vadd.f32 %v3621, %v4018
        %v4119 = vadd.f32 %v3622, %v4023
        %v4120 = vadd.f32 %v3623, %v4026
        %v4121 = vadd.f32 %v3624, %v4031
        %v4122 = vadd.f32 %v3625, %v4034
        %v4123 = vadd.f32 %v3626, %v4039
        %v4124 = vadd.f32 %v3627, %v4042
        %v4125 = vadd.f32 %v3628, %v4047
        %v4126 = vadd.f32 %v3629, %v4050
        %v4127 = vadd.f32 %v3630, %v4055
        %v4128 = vadd.f32 %v3631, %v4058
        %v4129 = vadd.f32 %v3632, %v4063
        %v4130 = vadd.f32 %v3633, %v4066
        %v4131 = vadd.f32 %v3634, %v4071
        %v4132 = vadd.f32 %v3635, %v4074
        %v4133 = vadd.f32 %v3636, %v4079
        %v4134 = vadd.f32 %v3637, %v4082
        %v4135 = vadd.f32 %v3638, %v4087
        %v4136 = vadd.f32 %v3639, %v4090
        %v4137 = vadd.f32 %v3640, %v4095
        %v4138 = vadd.f32 %v3641, %v4098
        %v4139 = vadd.f32 %v3642, %v4103
        %v4140 = vadd.f32 %v3643, %v4106
        %s4141 = scalar_lea.vmem [#allocation2], 24
        %v4142 = vld [vmem:[%s4141] sm:$0xf]
        %v4143 = vld [vmem:[%s4141 + $0x4] sm:$0xf]
        %v4144 = vld [vmem:[%s4141 + $0xc] sm:$0xf]
        %v4145 = vld [vmem:[%s4141 + $0x10] sm:$0xf]
        %v4146 = vld [vmem:[%s4141 + $0x18] sm:$0xf]
        %v4147 = vld [vmem:[%s4141 + $0x1c] sm:$0xf]
        %v4148 = vld [vmem:[%s4141 + $0x24] sm:$0xf]
        %v4149 = vld [vmem:[%s4141 + $0x28] sm:$0xf]
        %v4150 = vld [vmem:[%s4141 + $0x30] sm:$0xf]
        %v4151 = vld [vmem:[%s4141 + $0x34] sm:$0xf]
        %v4152 = vld [vmem:[%s4141 + $0x3c] sm:$0xf]
        %v4153 = vld [vmem:[%s4141 + $0x40] sm:$0xf]
        %v4154 = vld [vmem:[%s4141 + $0x48] sm:$0xf]
        %v4155 = vld [vmem:[%s4141 + $0x4c] sm:$0xf]
        %v4156 = vld [vmem:[%s4141 + $0x54] sm:$0xf]
        %v4157 = vld [vmem:[%s4141 + $0x58] sm:$0xf]
        %v4158 = vld [vmem:[%s4141 + $0x60] sm:$0xf]
        %v4159 = vld [vmem:[%s4141 + $0x64] sm:$0xf]
        %v4160 = vld [vmem:[%s4141 + $0x6c] sm:$0xf]
        %v4161 = vld [vmem:[%s4141 + $0x70] sm:$0xf]
        %v4162 = vld [vmem:[%s4141 + $0x78] sm:$0xf]
        %v4163 = vld [vmem:[%s4141 + $0x7c] sm:$0xf]
        %v4164 = vld [vmem:[%s4141 + $0x84] sm:$0xf]
        %v4165 = vld [vmem:[%s4141 + $0x88] sm:$0xf]
        %v4166 = vld [vmem:[%s4141 + $0x90] sm:$0xf]
        %v4167 = vld [vmem:[%s4141 + $0x94] sm:$0xf]
        %v4168 = vld [vmem:[%s4141 + $0x9c] sm:$0xf]
        %v4169 = vld [vmem:[%s4141 + $0xa0] sm:$0xf]
        %v4170 = vld [vmem:[%s4141 + $0xa8] sm:$0xf]
        %v4171 = vld [vmem:[%s4141 + $0xac] sm:$0xf]
        %v4172 = vld [vmem:[%s4141 + $0xb4] sm:$0xf]
        %v4173 = vld [vmem:[%s4141 + $0xb8] sm:$0xf]
        %v4174 = vld [vmem:[#allocation7 + $0x180] sm:$0xf]
        %v4175 = vld [vmem:[#allocation7 + $0x184] sm:$0xf]
        %v4176 = vld [vmem:[#allocation7 + $0x188] sm:$0xf]
        %v4177 = vld [vmem:[#allocation7 + $0x18c] sm:$0xf]
        %v4178 = vld [vmem:[#allocation7 + $0x190] sm:$0xf]
        %v4179 = vld [vmem:[#allocation7 + $0x194] sm:$0xf]
        %v4180 = vld [vmem:[#allocation7 + $0x198] sm:$0xf]
        %v4181 = vld [vmem:[#allocation7 + $0x19c] sm:$0xf]
        %v4182 = vld [vmem:[#allocation7 + $0x1a0] sm:$0xf]
        %v4183 = vld [vmem:[#allocation7 + $0x1a4] sm:$0xf]
        %v4184 = vld [vmem:[#allocation7 + $0x1a8] sm:$0xf]
        %v4185 = vld [vmem:[#allocation7 + $0x1ac] sm:$0xf]
        %v4186 = vld [vmem:[#allocation7 + $0x1b0] sm:$0xf]
        %v4187 = vld [vmem:[#allocation7 + $0x1b4] sm:$0xf]
        %v4188 = vld [vmem:[#allocation7 + $0x1b8] sm:$0xf]
        %v4189 = vld [vmem:[#allocation7 + $0x1bc] sm:$0xf]
        %v4222 = vunpack.c.l.b16 %v4142
        %v4223 = vunpack.c.l.b16 %v4143
        %v4224 = vunpack.c.l.b16 %v4144
        %v4225 = vunpack.c.l.b16 %v4145
        %v4226 = vunpack.c.l.b16 %v4146
        %v4227 = vunpack.c.l.b16 %v4147
        %v4228 = vunpack.c.l.b16 %v4148
        %v4229 = vunpack.c.l.b16 %v4149
        %v4230 = vunpack.c.l.b16 %v4150
        %v4231 = vunpack.c.l.b16 %v4151
        %v4232 = vunpack.c.l.b16 %v4152
        %v4233 = vunpack.c.l.b16 %v4153
        %v4234 = vunpack.c.l.b16 %v4154
        %v4235 = vunpack.c.l.b16 %v4155
        %v4236 = vunpack.c.l.b16 %v4156
        %v4237 = vunpack.c.l.b16 %v4157
        %v4238 = vunpack.c.l.b16 %v4158
        %v4239 = vunpack.c.l.b16 %v4159
        %v4240 = vunpack.c.l.b16 %v4160
        %v4241 = vunpack.c.l.b16 %v4161
        %v4242 = vunpack.c.l.b16 %v4162
        %v4243 = vunpack.c.l.b16 %v4163
        %v4244 = vunpack.c.l.b16 %v4164
        %v4245 = vunpack.c.l.b16 %v4165
        %v4246 = vunpack.c.l.b16 %v4166
        %v4247 = vunpack.c.l.b16 %v4167
        %v4248 = vunpack.c.l.b16 %v4168
        %v4249 = vunpack.c.l.b16 %v4169
        %v4250 = vunpack.c.l.b16 %v4170
        %v4251 = vunpack.c.l.b16 %v4171
        %v4252 = vunpack.c.l.b16 %v4172
        %v4253 = vunpack.c.l.b16 %v4173
        %v4254 = vpack.c.b16 %v4223, %v4222
        %v4255 = vpack.c.b16 %v4225, %v4224
        %v4256 = vpack.c.b16 %v4227, %v4226
        %v4257 = vpack.c.b16 %v4229, %v4228
        %v4258 = vpack.c.b16 %v4231, %v4230
        %v4259 = vpack.c.b16 %v4233, %v4232
        %v4260 = vpack.c.b16 %v4235, %v4234
        %v4261 = vpack.c.b16 %v4237, %v4236
        %v4262 = vpack.c.b16 %v4239, %v4238
        %v4263 = vpack.c.b16 %v4241, %v4240
        %v4264 = vpack.c.b16 %v4243, %v4242
        %v4265 = vpack.c.b16 %v4245, %v4244
        %v4266 = vpack.c.b16 %v4247, %v4246
        %v4267 = vpack.c.b16 %v4249, %v4248
        %v4268 = vpack.c.b16 %v4251, %v4250
        %v4269 = vpack.c.b16 %v4253, %v4252
        %v4302 = vunpack.c.l.b16 %v4174
        %v4303 = vunpack.c.l.b16 %v4175
        %v4304 = vunpack.c.l.b16 %v4176
        %v4305 = vunpack.c.l.b16 %v4177
        %v4306 = vunpack.c.l.b16 %v4178
        %v4307 = vunpack.c.l.b16 %v4179
        %v4308 = vunpack.c.l.b16 %v4180
        %v4309 = vunpack.c.l.b16 %v4181
        %v4310 = vunpack.c.l.b16 %v4182
        %v4311 = vunpack.c.l.b16 %v4183
        %v4312 = vunpack.c.l.b16 %v4184
        %v4313 = vunpack.c.l.b16 %v4185
        %v4314 = vunpack.c.l.b16 %v4186
        %v4315 = vunpack.c.l.b16 %v4187
        %v4316 = vunpack.c.l.b16 %v4188
        %v4317 = vunpack.c.l.b16 %v4189
        %v4318 = vpack.c.b16 %v4303, %v4302
        %v4319 = vpack.c.b16 %v4305, %v4304
        %v4320 = vpack.c.b16 %v4307, %v4306
        %v4321 = vpack.c.b16 %v4309, %v4308
        %v4322 = vpack.c.b16 %v4311, %v4310
        %v4323 = vpack.c.b16 %v4313, %v4312
        %v4324 = vpack.c.b16 %v4315, %v4314
        %v4325 = vpack.c.b16 %v4317, %v4316
        %4334 = vmatprep.subr.bf16.mxu0 0
        %4335 = vmatpush1.bf16.msra.mxu0 %v4318
        %4336 = vmatprep.subr.bf16.mxu0 0
        %4337 = vmatpush1.bf16.msra.mxu0 %v4319
        %4338 = vmatprep.subr.bf16.mxu0 0
        %4339 = vmatpush1.bf16.msra.mxu0 %v4320
        %4340 = vmatprep.subr.bf16.mxu0 0
        %4341 = vmatpush1.bf16.msra.mxu0 %v4321
        %4342 = vmatprep.subr.bf16.mxu0 0
        %4343 = vmatpush1.bf16.msra.mxu0 %v4322
        %4344 = vmatprep.subr.bf16.mxu0 0
        %4345 = vmatpush1.bf16.msra.mxu0 %v4323
        %4346 = vmatprep.subr.bf16.mxu0 0
        %4347 = vmatpush1.bf16.msra.mxu0 %v4324
        %4348 = vmatprep.subr.bf16.mxu0 0
        %4349 = vmatpush1.bf16.msra.mxu0 %v4325
        %4350 = vmatprep.subr.bf16.mxu0 0
        %4351 = vmatpush1.bf16.msra.mxu0 0
        %4352 = vmatprep.subr.bf16.mxu0 0
        %4353 = vmatpush1.bf16.msra.mxu0 0
        %4354 = vmatprep.subr.bf16.mxu0 0
        %4355 = vmatpush1.bf16.msra.mxu0 0
        %4356 = vmatprep.subr.bf16.mxu0 0
        %4357 = vmatpush1.bf16.msra.mxu0 0
        %4358 = vmatprep.subr.bf16.mxu0 0
        %4359 = vmatpush1.bf16.msra.mxu0 0
        %4360 = vmatprep.subr.bf16.mxu0 0
        %4361 = vmatpush1.bf16.msra.mxu0 0
        %4362 = vmatprep.subr.bf16.mxu0 0
        %4363 = vmatpush1.bf16.msra.mxu0 0
        %4364 = vmatprep.subr.bf16.mxu0 0
        %4365 = vmatpush1.bf16.msra.mxu0 0
        %4366 = vmatprep.mubr.bf16.mxu0 0
        %4367 = vmatmul.mubr.bf16.gmra.mrb[0].mxu0 %v4254
        %v4368 = vpop.f32.mrb[0].mxu0
        %v4369 = vadd.f32 0.0, %v4368
        %v4370 = vpop.f32.mrb[0].mxu0
        %v4371 = vpop.f32.mrb[0].mxu0
        %v4372 = vadd.f32 0.0, %v4371
        %v4373 = vpop.f32.mrb[0].mxu0
        %4374 = vmatprep.mubr.bf16.mxu0 0
        %4375 = vmatmul.mubr.bf16.gmra.mrb[0].mxu0 %v4255
        %v4376 = vpop.f32.mrb[0].mxu0
        %v4377 = vadd.f32 0.0, %v4376
        %v4378 = vpop.f32.mrb[0].mxu0
        %v4379 = vpop.f32.mrb[0].mxu0
        %v4380 = vadd.f32 0.0, %v4379
        %v4381 = vpop.f32.mrb[0].mxu0
        %4382 = vmatprep.mubr.bf16.mxu0 0
        %4383 = vmatmul.mubr.bf16.gmra.mrb[0].mxu0 %v4256
        %v4384 = vpop.f32.mrb[0].mxu0
        %v4385 = vadd.f32 0.0, %v4384
        %v4386 = vpop.f32.mrb[0].mxu0
        %v4387 = vpop.f32.mrb[0].mxu0
        %v4388 = vadd.f32 0.0, %v4387
        %v4389 = vpop.f32.mrb[0].mxu0
        %4390 = vmatprep.mubr.bf16.mxu0 0
        %4391 = vmatmul.mubr.bf16.gmra.mrb[0].mxu0 %v4257
        %v4392 = vpop.f32.mrb[0].mxu0
        %v4393 = vadd.f32 0.0, %v4392
        %v4394 = vpop.f32.mrb[0].mxu0
        %v4395 = vpop.f32.mrb[0].mxu0
        %v4396 = vadd.f32 0.0, %v4395
        %v4397 = vpop.f32.mrb[0].mxu0
        %4398 = vmatprep.mubr.bf16.mxu0 0
        %4399 = vmatmul.mubr.bf16.gmra.mrb[0].mxu0 %v4258
        %v4400 = vpop.f32.mrb[0].mxu0
        %v4401 = vadd.f32 0.0, %v4400
        %v4402 = vpop.f32.mrb[0].mxu0
        %v4403 = vpop.f32.mrb[0].mxu0
        %v4404 = vadd.f32 0.0, %v4403
        %v4405 = vpop.f32.mrb[0].mxu0
        %4406 = vmatprep.mubr.bf16.mxu0 0
        %4407 = vmatmul.mubr.bf16.gmra.mrb[0].mxu0 %v4259
        %v4408 = vpop.f32.mrb[0].mxu0
        %v4409 = vadd.f32 0.0, %v4408
        %v4410 = vpop.f32.mrb[0].mxu0
        %v4411 = vpop.f32.mrb[0].mxu0
        %v4412 = vadd.f32 0.0, %v4411
        %v4413 = vpop.f32.mrb[0].mxu0
        %4414 = vmatprep.mubr.bf16.mxu0 0
        %4415 = vmatmul.mubr.bf16.gmra.mrb[0].mxu0 %v4260
        %v4416 = vpop.f32.mrb[0].mxu0
        %v4417 = vadd.f32 0.0, %v4416
        %v4418 = vpop.f32.mrb[0].mxu0
        %v4419 = vpop.f32.mrb[0].mxu0
        %v4420 = vadd.f32 0.0, %v4419
        %v4421 = vpop.f32.mrb[0].mxu0
        %4422 = vmatprep.mubr.bf16.mxu0 0
        %4423 = vmatmul.mubr.bf16.gmra.mrb[0].mxu0 %v4261
        %v4424 = vpop.f32.mrb[0].mxu0
        %v4425 = vadd.f32 0.0, %v4424
        %v4426 = vpop.f32.mrb[0].mxu0
        %v4427 = vpop.f32.mrb[0].mxu0
        %v4428 = vadd.f32 0.0, %v4427
        %v4429 = vpop.f32.mrb[0].mxu0
        %4430 = vmatprep.mubr.bf16.mxu0 0
        %4431 = vmatmul.mubr.bf16.gmra.mrb[0].mxu0 %v4262
        %v4432 = vpop.f32.mrb[0].mxu0
        %v4433 = vadd.f32 0.0, %v4432
        %v4434 = vpop.f32.mrb[0].mxu0
        %v4435 = vpop.f32.mrb[0].mxu0
        %v4436 = vadd.f32 0.0, %v4435
        %v4437 = vpop.f32.mrb[0].mxu0
        %4438 = vmatprep.mubr.bf16.mxu0 0
        %4439 = vmatmul.mubr.bf16.gmra.mrb[0].mxu0 %v4263
        %v4440 = vpop.f32.mrb[0].mxu0
        %v4441 = vadd.f32 0.0, %v4440
        %v4442 = vpop.f32.mrb[0].mxu0
        %v4443 = vpop.f32.mrb[0].mxu0
        %v4444 = vadd.f32 0.0, %v4443
        %v4445 = vpop.f32.mrb[0].mxu0
        %4446 = vmatprep.mubr.bf16.mxu0 0
        %4447 = vmatmul.mubr.bf16.gmra.mrb[0].mxu0 %v4264
        %v4448 = vpop.f32.mrb[0].mxu0
        %v4449 = vadd.f32 0.0, %v4448
        %v4450 = vpop.f32.mrb[0].mxu0
        %v4451 = vpop.f32.mrb[0].mxu0
        %v4452 = vadd.f32 0.0, %v4451
        %v4453 = vpop.f32.mrb[0].mxu0
        %4454 = vmatprep.mubr.bf16.mxu0 0
        %4455 = vmatmul.mubr.bf16.gmra.mrb[0].mxu0 %v4265
        %v4456 = vpop.f32.mrb[0].mxu0
        %v4457 = vadd.f32 0.0, %v4456
        %v4458 = vpop.f32.mrb[0].mxu0
        %v4459 = vpop.f32.mrb[0].mxu0
        %v4460 = vadd.f32 0.0, %v4459
        %v4461 = vpop.f32.mrb[0].mxu0
        %4462 = vmatprep.mubr.bf16.mxu0 0
        %4463 = vmatmul.mubr.bf16.gmra.mrb[0].mxu0 %v4266
        %v4464 = vpop.f32.mrb[0].mxu0
        %v4465 = vadd.f32 0.0, %v4464
        %v4466 = vpop.f32.mrb[0].mxu0
        %v4467 = vpop.f32.mrb[0].mxu0
        %v4468 = vadd.f32 0.0, %v4467
        %v4469 = vpop.f32.mrb[0].mxu0
        %4470 = vmatprep.mubr.bf16.mxu0 0
        %4471 = vmatmul.mubr.bf16.gmra.mrb[0].mxu0 %v4267
        %v4472 = vpop.f32.mrb[0].mxu0
        %v4473 = vadd.f32 0.0, %v4472
        %v4474 = vpop.f32.mrb[0].mxu0
        %v4475 = vpop.f32.mrb[0].mxu0
        %v4476 = vadd.f32 0.0, %v4475
        %v4477 = vpop.f32.mrb[0].mxu0
        %4478 = vmatprep.mubr.bf16.mxu0 0
        %4479 = vmatmul.mubr.bf16.gmra.mrb[0].mxu0 %v4268
        %v4480 = vpop.f32.mrb[0].mxu0
        %v4481 = vadd.f32 0.0, %v4480
        %v4482 = vpop.f32.mrb[0].mxu0
        %v4483 = vpop.f32.mrb[0].mxu0
        %v4484 = vadd.f32 0.0, %v4483
        %v4485 = vpop.f32.mrb[0].mxu0
        %4486 = vmatprep.mubr.bf16.mxu0 0
        %4487 = vmatmul.mubr.bf16.gmra.mrb[0].mxu0 %v4269
        %v4488 = vpop.f32.mrb[0].mxu0
        %v4489 = vadd.f32 0.0, %v4488
        %v4490 = vpop.f32.mrb[0].mxu0
        %v4491 = vpop.f32.mrb[0].mxu0
        %v4492 = vadd.f32 0.0, %v4491
        %v4493 = vpop.f32.mrb[0].mxu0
        %4494 = vdwg.mxu0
        %v4495 = vadd.f32 %v4109, %v4369
        %v4496 = vadd.f32 %v4110, %v4372
        %v4497 = vadd.f32 %v4111, %v4377
        %v4498 = vadd.f32 %v4112, %v4380
        %v4499 = vadd.f32 %v4113, %v4385
        %v4500 = vadd.f32 %v4114, %v4388
        %v4501 = vadd.f32 %v4115, %v4393
        %v4502 = vadd.f32 %v4116, %v4396
        %v4503 = vadd.f32 %v4117, %v4401
        %v4504 = vadd.f32 %v4118, %v4404
        %v4505 = vadd.f32 %v4119, %v4409
        %v4506 = vadd.f32 %v4120, %v4412
        %v4507 = vadd.f32 %v4121, %v4417
        %v4508 = vadd.f32 %v4122, %v4420
        %v4509 = vadd.f32 %v4123, %v4425
        %v4510 = vadd.f32 %v4124, %v4428
        %v4511 = vadd.f32 %v4125, %v4433
        %v4512 = vadd.f32 %v4126, %v4436
        %v4513 = vadd.f32 %v4127, %v4441
        %v4514 = vadd.f32 %v4128, %v4444
        %v4515 = vadd.f32 %v4129, %v4449
        %v4516 = vadd.f32 %v4130, %v4452
        %v4517 = vadd.f32 %v4131, %v4457
        %v4518 = vadd.f32 %v4132, %v4460
        %v4519 = vadd.f32 %v4133, %v4465
        %v4520 = vadd.f32 %v4134, %v4468
        %v4521 = vadd.f32 %v4135, %v4473
        %v4522 = vadd.f32 %v4136, %v4476
        %v4523 = vadd.f32 %v4137, %v4481
        %v4524 = vadd.f32 %v4138, %v4484
        %v4525 = vadd.f32 %v4139, %v4489
        %v4526 = vadd.f32 %v4140, %v4492
        %v4527 = vld [vmem:[%s4141] sm:$0xf]
        %v4528 = vld [vmem:[%s4141 + $0x4] sm:$0xf]
        %v4529 = vld [vmem:[%s4141 + $0x8] sm:$0x1]
        %v4530 = vld [vmem:[%s4141 + $0xc] sm:$0xf]
        %v4531 = vld [vmem:[%s4141 + $0x10] sm:$0xf]
        %v4532 = vld [vmem:[%s4141 + $0x14] sm:$0x1]
        %v4533 = vld [vmem:[%s4141 + $0x18] sm:$0xf]
        %v4534 = vld [vmem:[%s4141 + $0x1c] sm:$0xf]
        %v4535 = vld [vmem:[%s4141 + $0x20] sm:$0x1]
        %v4536 = vld [vmem:[%s4141 + $0x24] sm:$0xf]
        %v4537 = vld [vmem:[%s4141 + $0x28] sm:$0xf]
        %v4538 = vld [vmem:[%s4141 + $0x2c] sm:$0x1]
        %v4539 = vld [vmem:[%s4141 + $0x30] sm:$0xf]
        %v4540 = vld [vmem:[%s4141 + $0x34] sm:$0xf]
        %v4541 = vld [vmem:[%s4141 + $0x38] sm:$0x1]
        %v4542 = vld [vmem:[%s4141 + $0x3c] sm:$0xf]
        %v4543 = vld [vmem:[%s4141 + $0x40] sm:$0xf]
        %v4544 = vld [vmem:[%s4141 + $0x44] sm:$0x1]
        %v4545 = vld [vmem:[%s4141 + $0x48] sm:$0xf]
        %v4546 = vld [vmem:[%s4141 + $0x4c] sm:$0xf]
        %v4547 = vld [vmem:[%s4141 + $0x50] sm:$0x1]
        %v4548 = vld [vmem:[%s4141 + $0x54] sm:$0xf]
        %v4549 = vld [vmem:[%s4141 + $0x58] sm:$0xf]
        %v4550 = vld [vmem:[%s4141 + $0x5c] sm:$0x1]
        %v4551 = vld [vmem:[%s4141 + $0x60] sm:$0xf]
        %v4552 = vld [vmem:[%s4141 + $0x64] sm:$0xf]
        %v4553 = vld [vmem:[%s4141 + $0x68] sm:$0x1]
        %v4554 = vld [vmem:[%s4141 + $0x6c] sm:$0xf]
        %v4555 = vld [vmem:[%s4141 + $0x70] sm:$0xf]
        %v4556 = vld [vmem:[%s4141 + $0x74] sm:$0x1]
        %v4557 = vld [vmem:[%s4141 + $0x78] sm:$0xf]
        %v4558 = vld [vmem:[%s4141 + $0x7c] sm:$0xf]
        %v4559 = vld [vmem:[%s4141 + $0x80] sm:$0x1]
        %v4560 = vld [vmem:[%s4141 + $0x84] sm:$0xf]
        %v4561 = vld [vmem:[%s4141 + $0x88] sm:$0xf]
        %v4562 = vld [vmem:[%s4141 + $0x8c] sm:$0x1]
        %v4563 = vld [vmem:[%s4141 + $0x90] sm:$0xf]
        %v4564 = vld [vmem:[%s4141 + $0x94] sm:$0xf]
        %v4565 = vld [vmem:[%s4141 + $0x98] sm:$0x1]
        %v4566 = vld [vmem:[%s4141 + $0x9c] sm:$0xf]
        %v4567 = vld [vmem:[%s4141 + $0xa0] sm:$0xf]
        %v4568 = vld [vmem:[%s4141 + $0xa4] sm:$0x1]
        %v4569 = vld [vmem:[%s4141 + $0xa8] sm:$0xf]
        %v4570 = vld [vmem:[%s4141 + $0xac] sm:$0xf]
        %v4571 = vld [vmem:[%s4141 + $0xb0] sm:$0x1]
        %v4572 = vld [vmem:[%s4141 + $0xb4] sm:$0xf]
        %v4573 = vld [vmem:[%s4141 + $0xb8] sm:$0xf]
        %v4574 = vld [vmem:[%s4141 + $0xbc] sm:$0x1]
        %v4576 = vshrl.u32 %v4527, 16
        %v4578 = vrot.slane %v4576, 4
        %v4579 = vshll.u32 %v4527, 16
        %v4581 = vrot.slane %v4579, 5
        %v4582 = vor.u32 %v4578, %v4581
        %v4583 = vrot.slane %v4582, 4
        %v4585 = vshll.u32 %v4528, 16
        %v4587 = vrot.slane %v4585, 5
        %v4588 = vsel %vm1043, %v4583, %v4587
        %v4589 = vshrl.u32 %v4528, 16
        %v4591 = vrot.slane %v4589, 4
        %v4592 = vor.u32 %v4591, %v4587
        %v4593 = vrot.slane %v4592, 4
        %v4595 = vshll.u32 %v4529, 16
        %v4597 = vrot.slane %v4595, 5
        %v4598 = vsel %vm1043, %v4593, %v4597
        %v4600 = vshrl.u32 %v4530, 16
        %v4602 = vrot.slane %v4600, 4
        %v4603 = vshll.u32 %v4530, 16
        %v4605 = vrot.slane %v4603, 5
        %v4606 = vor.u32 %v4602, %v4605
        %v4607 = vrot.slane %v4606, 4
        %v4609 = vshll.u32 %v4531, 16
        %v4611 = vrot.slane %v4609, 5
        %v4612 = vsel %vm1043, %v4607, %v4611
        %v4613 = vshrl.u32 %v4531, 16
        %v4615 = vrot.slane %v4613, 4
        %v4616 = vor.u32 %v4615, %v4611
        %v4617 = vrot.slane %v4616, 4
        %v4619 = vshll.u32 %v4532, 16
        %v4621 = vrot.slane %v4619, 5
        %v4622 = vsel %vm1043, %v4617, %v4621
        %v4624 = vshrl.u32 %v4533, 16
        %v4626 = vrot.slane %v4624, 4
        %v4627 = vshll.u32 %v4533, 16
        %v4629 = vrot.slane %v4627, 5
        %v4630 = vor.u32 %v4626, %v4629
        %v4631 = vrot.slane %v4630, 4
        %v4633 = vshll.u32 %v4534, 16
        %v4635 = vrot.slane %v4633, 5
        %v4636 = vsel %vm1043, %v4631, %v4635
        %v4637 = vshrl.u32 %v4534, 16
        %v4639 = vrot.slane %v4637, 4
        %v4640 = vor.u32 %v4639, %v4635
        %v4641 = vrot.slane %v4640, 4
        %v4643 = vshll.u32 %v4535, 16
        %v4645 = vrot.slane %v4643, 5
        %v4646 = vsel %vm1043, %v4641, %v4645
        %v4648 = vshrl.u32 %v4536, 16
        %v4650 = vrot.slane %v4648, 4
        %v4651 = vshll.u32 %v4536, 16
        %v4653 = vrot.slane %v4651, 5
        %v4654 = vor.u32 %v4650, %v4653
        %v4655 = vrot.slane %v4654, 4
        %v4657 = vshll.u32 %v4537, 16
        %v4659 = vrot.slane %v4657, 5
        %v4660 = vsel %vm1043, %v4655, %v4659
        %v4661 = vshrl.u32 %v4537, 16
        %v4663 = vrot.slane %v4661, 4
        %v4664 = vor.u32 %v4663, %v4659
        %v4665 = vrot.slane %v4664, 4
        %v4667 = vshll.u32 %v4538, 16
        %v4669 = vrot.slane %v4667, 5
        %v4670 = vsel %vm1043, %v4665, %v4669
        %v4672 = vshrl.u32 %v4539, 16
        %v4674 = vrot.slane %v4672, 4
        %v4675 = vshll.u32 %v4539, 16
        %v4677 = vrot.slane %v4675, 5
        %v4678 = vor.u32 %v4674, %v4677
        %v4679 = vrot.slane %v4678, 4
        %v4681 = vshll.u32 %v4540, 16
        %v4683 = vrot.slane %v4681, 5
        %v4684 = vsel %vm1043, %v4679, %v4683
        %v4685 = vshrl.u32 %v4540, 16
        %v4687 = vrot.slane %v4685, 4
        %v4688 = vor.u32 %v4687, %v4683
        %v4689 = vrot.slane %v4688, 4
        %v4691 = vshll.u32 %v4541, 16
        %v4693 = vrot.slane %v4691, 5
        %v4694 = vsel %vm1043, %v4689, %v4693
        %v4696 = vshrl.u32 %v4542, 16
        %v4698 = vrot.slane %v4696, 4
        %v4699 = vshll.u32 %v4542, 16
        %v4701 = vrot.slane %v4699, 5
        %v4702 = vor.u32 %v4698, %v4701
        %v4703 = vrot.slane %v4702, 4
        %v4705 = vshll.u32 %v4543, 16
        %v4707 = vrot.slane %v4705, 5
        %v4708 = vsel %vm1043, %v4703, %v4707
        %v4709 = vshrl.u32 %v4543, 16
        %v4711 = vrot.slane %v4709, 4
        %v4712 = vor.u32 %v4711, %v4707
        %v4713 = vrot.slane %v4712, 4
        %v4715 = vshll.u32 %v4544, 16
        %v4717 = vrot.slane %v4715, 5
        %v4718 = vsel %vm1043, %v4713, %v4717
        %v4720 = vshrl.u32 %v4545, 16
        %v4722 = vrot.slane %v4720, 4
        %v4723 = vshll.u32 %v4545, 16
        %v4725 = vrot.slane %v4723, 5
        %v4726 = vor.u32 %v4722, %v4725
        %v4727 = vrot.slane %v4726, 4
        %v4729 = vshll.u32 %v4546, 16
        %v4731 = vrot.slane %v4729, 5
        %v4732 = vsel %vm1043, %v4727, %v4731
        %v4733 = vshrl.u32 %v4546, 16
        %v4735 = vrot.slane %v4733, 4
        %v4736 = vor.u32 %v4735, %v4731
        %v4737 = vrot.slane %v4736, 4
        %v4739 = vshll.u32 %v4547, 16
        %v4741 = vrot.slane %v4739, 5
        %v4742 = vsel %vm1043, %v4737, %v4741
        %v4744 = vshrl.u32 %v4548, 16
        %v4746 = vrot.slane %v4744, 4
        %v4747 = vshll.u32 %v4548, 16
        %v4749 = vrot.slane %v4747, 5
        %v4750 = vor.u32 %v4746, %v4749
        %v4751 = vrot.slane %v4750, 4
        %v4753 = vshll.u32 %v4549, 16
        %v4755 = vrot.slane %v4753, 5
        %v4756 = vsel %vm1043, %v4751, %v4755
        %v4757 = vshrl.u32 %v4549, 16
        %v4759 = vrot.slane %v4757, 4
        %v4760 = vor.u32 %v4759, %v4755
        %v4761 = vrot.slane %v4760, 4
        %v4763 = vshll.u32 %v4550, 16
        %v4765 = vrot.slane %v4763, 5
        %v4766 = vsel %vm1043, %v4761, %v4765
        %v4768 = vshrl.u32 %v4551, 16
        %v4770 = vrot.slane %v4768, 4
        %v4771 = vshll.u32 %v4551, 16
        %v4773 = vrot.slane %v4771, 5
        %v4774 = vor.u32 %v4770, %v4773
        %v4775 = vrot.slane %v4774, 4
        %v4777 = vshll.u32 %v4552, 16
        %v4779 = vrot.slane %v4777, 5
        %v4780 = vsel %vm1043, %v4775, %v4779
        %v4781 = vshrl.u32 %v4552, 16
        %v4783 = vrot.slane %v4781, 4
        %v4784 = vor.u32 %v4783, %v4779
        %v4785 = vrot.slane %v4784, 4
        %v4787 = vshll.u32 %v4553, 16
        %v4789 = vrot.slane %v4787, 5
        %v4790 = vsel %vm1043, %v4785, %v4789
        %v4792 = vshrl.u32 %v4554, 16
        %v4794 = vrot.slane %v4792, 4
        %v4795 = vshll.u32 %v4554, 16
        %v4797 = vrot.slane %v4795, 5
        %v4798 = vor.u32 %v4794, %v4797
        %v4799 = vrot.slane %v4798, 4
        %v4801 = vshll.u32 %v4555, 16
        %v4803 = vrot.slane %v4801, 5
        %v4804 = vsel %vm1043, %v4799, %v4803
        %v4805 = vshrl.u32 %v4555, 16
        %v4807 = vrot.slane %v4805, 4
        %v4808 = vor.u32 %v4807, %v4803
        %v4809 = vrot.slane %v4808, 4
        %v4811 = vshll.u32 %v4556, 16
        %v4813 = vrot.slane %v4811, 5
        %v4814 = vsel %vm1043, %v4809, %v4813
        %v4816 = vshrl.u32 %v4557, 16
        %v4818 = vrot.slane %v4816, 4
        %v4819 = vshll.u32 %v4557, 16
        %v4821 = vrot.slane %v4819, 5
        %v4822 = vor.u32 %v4818, %v4821
        %v4823 = vrot.slane %v4822, 4
        %v4825 = vshll.u32 %v4558, 16
        %v4827 = vrot.slane %v4825, 5
        %v4828 = vsel %vm1043, %v4823, %v4827
        %v4829 = vshrl.u32 %v4558, 16
        %v4831 = vrot.slane %v4829, 4
        %v4832 = vor.u32 %v4831, %v4827
        %v4833 = vrot.slane %v4832, 4
        %v4835 = vshll.u32 %v4559, 16
        %v4837 = vrot.slane %v4835, 5
        %v4838 = vsel %vm1043, %v4833, %v4837
        %v4840 = vshrl.u32 %v4560, 16
        %v4842 = vrot.slane %v4840, 4
        %v4843 = vshll.u32 %v4560, 16
        %v4845 = vrot.slane %v4843, 5
        %v4846 = vor.u32 %v4842, %v4845
        %v4847 = vrot.slane %v4846, 4
        %v4849 = vshll.u32 %v4561, 16
        %v4851 = vrot.slane %v4849, 5
        %v4852 = vsel %vm1043, %v4847, %v4851
        %v4853 = vshrl.u32 %v4561, 16
        %v4855 = vrot.slane %v4853, 4
        %v4856 = vor.u32 %v4855, %v4851
        %v4857 = vrot.slane %v4856, 4
        %v4859 = vshll.u32 %v4562, 16
        %v4861 = vrot.slane %v4859, 5
        %v4862 = vsel %vm1043, %v4857, %v4861
        %v4864 = vshrl.u32 %v4563, 16
        %v4866 = vrot.slane %v4864, 4
        %v4867 = vshll.u32 %v4563, 16
        %v4869 = vrot.slane %v4867, 5
        %v4870 = vor.u32 %v4866, %v4869
        %v4871 = vrot.slane %v4870, 4
        %v4873 = vshll.u32 %v4564, 16
        %v4875 = vrot.slane %v4873, 5
        %v4876 = vsel %vm1043, %v4871, %v4875
        %v4877 = vshrl.u32 %v4564, 16
        %v4879 = vrot.slane %v4877, 4
        %v4880 = vor.u32 %v4879, %v4875
        %v4881 = vrot.slane %v4880, 4
        %v4883 = vshll.u32 %v4565, 16
        %v4885 = vrot.slane %v4883, 5
        %v4886 = vsel %vm1043, %v4881, %v4885
        %v4888 = vshrl.u32 %v4566, 16
        %v4890 = vrot.slane %v4888, 4
        %v4891 = vshll.u32 %v4566, 16
        %v4893 = vrot.slane %v4891, 5
        %v4894 = vor.u32 %v4890, %v4893
        %v4895 = vrot.slane %v4894, 4
        %v4897 = vshll.u32 %v4567, 16
        %v4899 = vrot.slane %v4897, 5
        %v4900 = vsel %vm1043, %v4895, %v4899
        %v4901 = vshrl.u32 %v4567, 16
        %v4903 = vrot.slane %v4901, 4
        %v4904 = vor.u32 %v4903, %v4899
        %v4905 = vrot.slane %v4904, 4
        %v4907 = vshll.u32 %v4568, 16
        %v4909 = vrot.slane %v4907, 5
        %v4910 = vsel %vm1043, %v4905, %v4909
        %v4912 = vshrl.u32 %v4569, 16
        %v4914 = vrot.slane %v4912, 4
        %v4915 = vshll.u32 %v4569, 16
        %v4917 = vrot.slane %v4915, 5
        %v4918 = vor.u32 %v4914, %v4917
        %v4919 = vrot.slane %v4918, 4
        %v4921 = vshll.u32 %v4570, 16
        %v4923 = vrot.slane %v4921, 5
        %v4924 = vsel %vm1043, %v4919, %v4923
        %v4925 = vshrl.u32 %v4570, 16
        %v4927 = vrot.slane %v4925, 4
        %v4928 = vor.u32 %v4927, %v4923
        %v4929 = vrot.slane %v4928, 4
        %v4931 = vshll.u32 %v4571, 16
        %v4933 = vrot.slane %v4931, 5
        %v4934 = vsel %vm1043, %v4929, %v4933
        %v4936 = vshrl.u32 %v4572, 16
        %v4938 = vrot.slane %v4936, 4
        %v4939 = vshll.u32 %v4572, 16
        %v4941 = vrot.slane %v4939, 5
        %v4942 = vor.u32 %v4938, %v4941
        %v4943 = vrot.slane %v4942, 4
        %v4945 = vshll.u32 %v4573, 16
        %v4947 = vrot.slane %v4945, 5
        %v4948 = vsel %vm1043, %v4943, %v4947
        %v4949 = vshrl.u32 %v4573, 16
        %v4951 = vrot.slane %v4949, 4
        %v4952 = vor.u32 %v4951, %v4947
        %v4953 = vrot.slane %v4952, 4
        %v4955 = vshll.u32 %v4574, 16
        %v4957 = vrot.slane %v4955, 5
        %v4958 = vsel %vm1043, %v4953, %v4957
        %v4959 = vld [vmem:[#allocation7 + $0x1c0] sm:$0xf]
        %v4960 = vld [vmem:[#allocation7 + $0x1c4] sm:$0xf]
        %v4961 = vld [vmem:[#allocation7 + $0x1c8] sm:$0xf]
        %v4962 = vld [vmem:[#allocation7 + $0x1cc] sm:$0xf]
        %v4963 = vld [vmem:[#allocation7 + $0x1d0] sm:$0xf]
        %v4964 = vld [vmem:[#allocation7 + $0x1d4] sm:$0xf]
        %v4965 = vld [vmem:[#allocation7 + $0x1d8] sm:$0xf]
        %v4966 = vld [vmem:[#allocation7 + $0x1dc] sm:$0xf]
        %v4967 = vld [vmem:[#allocation7 + $0x1e0] sm:$0xf]
        %v4968 = vld [vmem:[#allocation7 + $0x1e4] sm:$0xf]
        %v4969 = vld [vmem:[#allocation7 + $0x1e8] sm:$0xf]
        %v4970 = vld [vmem:[#allocation7 + $0x1ec] sm:$0xf]
        %v4971 = vld [vmem:[#allocation7 + $0x1f0] sm:$0xf]
        %v4972 = vld [vmem:[#allocation7 + $0x1f4] sm:$0xf]
        %v4973 = vld [vmem:[#allocation7 + $0x1f8] sm:$0xf]
        %v4974 = vld [vmem:[#allocation7 + $0x1fc] sm:$0xf]
        %v4975 = vunpack.c.l.b16 %v4588
        %v4976 = vunpack.c.l.b16 %v4598
        %v4977 = vunpack.c.l.b16 %v4612
        %v4978 = vunpack.c.l.b16 %v4622
        %v4979 = vunpack.c.l.b16 %v4636
        %v4980 = vunpack.c.l.b16 %v4646
        %v4981 = vunpack.c.l.b16 %v4660
        %v4982 = vunpack.c.l.b16 %v4670
        %v4983 = vunpack.c.l.b16 %v4684
        %v4984 = vunpack.c.l.b16 %v4694
        %v4985 = vunpack.c.l.b16 %v4708
        %v4986 = vunpack.c.l.b16 %v4718
        %v4987 = vunpack.c.l.b16 %v4732
        %v4988 = vunpack.c.l.b16 %v4742
        %v4989 = vunpack.c.l.b16 %v4756
        %v4990 = vunpack.c.l.b16 %v4766
        %v4991 = vunpack.c.l.b16 %v4780
        %v4992 = vunpack.c.l.b16 %v4790
        %v4993 = vunpack.c.l.b16 %v4804
        %v4994 = vunpack.c.l.b16 %v4814
        %v4995 = vunpack.c.l.b16 %v4828
        %v4996 = vunpack.c.l.b16 %v4838
        %v4997 = vunpack.c.l.b16 %v4852
        %v4998 = vunpack.c.l.b16 %v4862
        %v4999 = vunpack.c.l.b16 %v4876
        %v5000 = vunpack.c.l.b16 %v4886
        %v5001 = vunpack.c.l.b16 %v4900
        %v5002 = vunpack.c.l.b16 %v4910
        %v5003 = vunpack.c.l.b16 %v4924
        %v5004 = vunpack.c.l.b16 %v4934
        %v5005 = vunpack.c.l.b16 %v4948
        %v5006 = vunpack.c.l.b16 %v4958
        %v5007 = vpack.c.b16 %v4976, %v4975
        %v5008 = vpack.c.b16 %v4978, %v4977
        %v5009 = vpack.c.b16 %v4980, %v4979
        %v5010 = vpack.c.b16 %v4982, %v4981
        %v5011 = vpack.c.b16 %v4984, %v4983
        %v5012 = vpack.c.b16 %v4986, %v4985
        %v5013 = vpack.c.b16 %v4988, %v4987
        %v5014 = vpack.c.b16 %v4990, %v4989
        %v5015 = vpack.c.b16 %v4992, %v4991
        %v5016 = vpack.c.b16 %v4994, %v4993
        %v5017 = vpack.c.b16 %v4996, %v4995
        %v5018 = vpack.c.b16 %v4998, %v4997
        %v5019 = vpack.c.b16 %v5000, %v4999
        %v5020 = vpack.c.b16 %v5002, %v5001
        %v5021 = vpack.c.b16 %v5004, %v5003
        %v5022 = vpack.c.b16 %v5006, %v5005
        %v5055 = vunpack.c.l.b16 %v4959
        %v5056 = vunpack.c.l.b16 %v4960
        %v5057 = vunpack.c.l.b16 %v4961
        %v5058 = vunpack.c.l.b16 %v4962
        %v5059 = vunpack.c.l.b16 %v4963
        %v5060 = vunpack.c.l.b16 %v4964
        %v5061 = vunpack.c.l.b16 %v4965
        %v5062 = vunpack.c.l.b16 %v4966
        %v5063 = vunpack.c.l.b16 %v4967
        %v5064 = vunpack.c.l.b16 %v4968
        %v5065 = vunpack.c.l.b16 %v4969
        %v5066 = vunpack.c.l.b16 %v4970
        %v5067 = vunpack.c.l.b16 %v4971
        %v5068 = vunpack.c.l.b16 %v4972
        %v5069 = vunpack.c.l.b16 %v4973
        %v5070 = vunpack.c.l.b16 %v4974
        %v5071 = vpack.c.b16 %v5056, %v5055
        %v5072 = vpack.c.b16 %v5058, %v5057
        %v5073 = vpack.c.b16 %v5060, %v5059
        %v5074 = vpack.c.b16 %v5062, %v5061
        %v5075 = vpack.c.b16 %v5064, %v5063
        %v5076 = vpack.c.b16 %v5066, %v5065
        %v5077 = vpack.c.b16 %v5068, %v5067
        %v5078 = vpack.c.b16 %v5070, %v5069
        %5087 = vmatprep.subr.bf16.mxu0 0
        %5088 = vmatpush1.bf16.msra.mxu0 %v5071
        %5089 = vmatprep.subr.bf16.mxu0 0
        %5090 = vmatpush1.bf16.msra.mxu0 %v5072
        %5091 = vmatprep.subr.bf16.mxu0 0
        %5092 = vmatpush1.bf16.msra.mxu0 %v5073
        %5093 = vmatprep.subr.bf16.mxu0 0
        %5094 = vmatpush1.bf16.msra.mxu0 %v5074
        %5095 = vmatprep.subr.bf16.mxu0 0
        %5096 = vmatpush1.bf16.msra.mxu0 %v5075
        %5097 = vmatprep.subr.bf16.mxu0 0
        %5098 = vmatpush1.bf16.msra.mxu0 %v5076
        %5099 = vmatprep.subr.bf16.mxu0 0
        %5100 = vmatpush1.bf16.msra.mxu0 %v5077
        %5101 = vmatprep.subr.bf16.mxu0 0
        %5102 = vmatpush1.bf16.msra.mxu0 %v5078
        %5103 = vmatprep.subr.bf16.mxu0 0
        %5104 = vmatpush1.bf16.msra.mxu0 0
        %5105 = vmatprep.subr.bf16.mxu0 0
        %5106 = vmatpush1.bf16.msra.mxu0 0
        %5107 = vmatprep.subr.bf16.mxu0 0
        %5108 = vmatpush1.bf16.msra.mxu0 0
        %5109 = vmatprep.subr.bf16.mxu0 0
        %5110 = vmatpush1.bf16.msra.mxu0 0
        %5111 = vmatprep.subr.bf16.mxu0 0
        %5112 = vmatpush1.bf16.msra.mxu0 0
        %5113 = vmatprep.subr.bf16.mxu0 0
        %5114 = vmatpush1.bf16.msra.mxu0 0
        %5115 = vmatprep.subr.bf16.mxu0 0
        %5116 = vmatpush1.bf16.msra.mxu0 0
        %5117 = vmatprep.subr.bf16.mxu0 0
        %5118 = vmatpush1.bf16.msra.mxu0 0
        %5119 = vmatprep.mubr.bf16.mxu0 0
        %5120 = vmatmul.mubr.bf16.gmra.mrb[0].mxu0 %v5007
        %v5121 = vpop.f32.mrb[0].mxu0
        %v5122 = vadd.f32 0.0, %v5121
        %v5123 = vpop.f32.mrb[0].mxu0
        %v5124 = vpop.f32.mrb[0].mxu0
        %v5125 = vadd.f32 0.0, %v5124
        %v5126 = vpop.f32.mrb[0].mxu0
        %5127 = vmatprep.mubr.bf16.mxu0 0
        %5128 = vmatmul.mubr.bf16.gmra.mrb[0].mxu0 %v5008
        %v5129 = vpop.f32.mrb[0].mxu0
        %v5130 = vadd.f32 0.0, %v5129
        %v5131 = vpop.f32.mrb[0].mxu0
        %v5132 = vpop.f32.mrb[0].mxu0
        %v5133 = vadd.f32 0.0, %v5132
        %v5134 = vpop.f32.mrb[0].mxu0
        %5135 = vmatprep.mubr.bf16.mxu0 0
        %5136 = vmatmul.mubr.bf16.gmra.mrb[0].mxu0 %v5009
        %v5137 = vpop.f32.mrb[0].mxu0
        %v5138 = vadd.f32 0.0, %v5137
        %v5139 = vpop.f32.mrb[0].mxu0
        %v5140 = vpop.f32.mrb[0].mxu0
        %v5141 = vadd.f32 0.0, %v5140
        %v5142 = vpop.f32.mrb[0].mxu0
        %5143 = vmatprep.mubr.bf16.mxu0 0
        %5144 = vmatmul.mubr.bf16.gmra.mrb[0].mxu0 %v5010
        %v5145 = vpop.f32.mrb[0].mxu0
        %v5146 = vadd.f32 0.0, %v5145
        %v5147 = vpop.f32.mrb[0].mxu0
        %v5148 = vpop.f32.mrb[0].mxu0
        %v5149 = vadd.f32 0.0, %v5148
        %v5150 = vpop.f32.mrb[0].mxu0
        %5151 = vmatprep.mubr.bf16.mxu0 0
        %5152 = vmatmul.mubr.bf16.gmra.mrb[0].mxu0 %v5011
        %v5153 = vpop.f32.mrb[0].mxu0
        %v5154 = vadd.f32 0.0, %v5153
        %v5155 = vpop.f32.mrb[0].mxu0
        %v5156 = vpop.f32.mrb[0].mxu0
        %v5157 = vadd.f32 0.0, %v5156
        %v5158 = vpop.f32.mrb[0].mxu0
        %5159 = vmatprep.mubr.bf16.mxu0 0
        %5160 = vmatmul.mubr.bf16.gmra.mrb[0].mxu0 %v5012
        %v5161 = vpop.f32.mrb[0].mxu0
        %v5162 = vadd.f32 0.0, %v5161
        %v5163 = vpop.f32.mrb[0].mxu0
        %v5164 = vpop.f32.mrb[0].mxu0
        %v5165 = vadd.f32 0.0, %v5164
        %v5166 = vpop.f32.mrb[0].mxu0
        %5167 = vmatprep.mubr.bf16.mxu0 0
        %5168 = vmatmul.mubr.bf16.gmra.mrb[0].mxu0 %v5013
        %v5169 = vpop.f32.mrb[0].mxu0
        %v5170 = vadd.f32 0.0, %v5169
        %v5171 = vpop.f32.mrb[0].mxu0
        %v5172 = vpop.f32.mrb[0].mxu0
        %v5173 = vadd.f32 0.0, %v5172
        %v5174 = vpop.f32.mrb[0].mxu0
        %5175 = vmatprep.mubr.bf16.mxu0 0
        %5176 = vmatmul.mubr.bf16.gmra.mrb[0].mxu0 %v5014
        %v5177 = vpop.f32.mrb[0].mxu0
        %v5178 = vadd.f32 0.0, %v5177
        %v5179 = vpop.f32.mrb[0].mxu0
        %v5180 = vpop.f32.mrb[0].mxu0
        %v5181 = vadd.f32 0.0, %v5180
        %v5182 = vpop.f32.mrb[0].mxu0
        %5183 = vmatprep.mubr.bf16.mxu0 0
        %5184 = vmatmul.mubr.bf16.gmra.mrb[0].mxu0 %v5015
        %v5185 = vpop.f32.mrb[0].mxu0
        %v5186 = vadd.f32 0.0, %v5185
        %v5187 = vpop.f32.mrb[0].mxu0
        %v5188 = vpop.f32.mrb[0].mxu0
        %v5189 = vadd.f32 0.0, %v5188
        %v5190 = vpop.f32.mrb[0].mxu0
        %5191 = vmatprep.mubr.bf16.mxu0 0
        %5192 = vmatmul.mubr.bf16.gmra.mrb[0].mxu0 %v5016
        %v5193 = vpop.f32.mrb[0].mxu0
        %v5194 = vadd.f32 0.0, %v5193
        %v5195 = vpop.f32.mrb[0].mxu0
        %v5196 = vpop.f32.mrb[0].mxu0
        %v5197 = vadd.f32 0.0, %v5196
        %v5198 = vpop.f32.mrb[0].mxu0
        %5199 = vmatprep.mubr.bf16.mxu0 0
        %5200 = vmatmul.mubr.bf16.gmra.mrb[0].mxu0 %v5017
        %v5201 = vpop.f32.mrb[0].mxu0
        %v5202 = vadd.f32 0.0, %v5201
        %v5203 = vpop.f32.mrb[0].mxu0
        %v5204 = vpop.f32.mrb[0].mxu0
        %v5205 = vadd.f32 0.0, %v5204
        %v5206 = vpop.f32.mrb[0].mxu0
        %5207 = vmatprep.mubr.bf16.mxu0 0
        %5208 = vmatmul.mubr.bf16.gmra.mrb[0].mxu0 %v5018
        %v5209 = vpop.f32.mrb[0].mxu0
        %v5210 = vadd.f32 0.0, %v5209
        %v5211 = vpop.f32.mrb[0].mxu0
        %v5212 = vpop.f32.mrb[0].mxu0
        %v5213 = vadd.f32 0.0, %v5212
        %v5214 = vpop.f32.mrb[0].mxu0
        %5215 = vmatprep.mubr.bf16.mxu0 0
        %5216 = vmatmul.mubr.bf16.gmra.mrb[0].mxu0 %v5019
        %v5217 = vpop.f32.mrb[0].mxu0
        %v5218 = vadd.f32 0.0, %v5217
        %v5219 = vpop.f32.mrb[0].mxu0
        %v5220 = vpop.f32.mrb[0].mxu0
        %v5221 = vadd.f32 0.0, %v5220
        %v5222 = vpop.f32.mrb[0].mxu0
        %5223 = vmatprep.mubr.bf16.mxu0 0
        %5224 = vmatmul.mubr.bf16.gmra.mrb[0].mxu0 %v5020
        %v5225 = vpop.f32.mrb[0].mxu0
        %v5226 = vadd.f32 0.0, %v5225
        %v5227 = vpop.f32.mrb[0].mxu0
        %v5228 = vpop.f32.mrb[0].mxu0
        %v5229 = vadd.f32 0.0, %v5228
        %v5230 = vpop.f32.mrb[0].mxu0
        %5231 = vmatprep.mubr.bf16.mxu0 0
        %5232 = vmatmul.mubr.bf16.gmra.mrb[0].mxu0 %v5021
        %v5233 = vpop.f32.mrb[0].mxu0
        %v5234 = vadd.f32 0.0, %v5233
        %v5235 = vpop.f32.mrb[0].mxu0
        %v5236 = vpop.f32.mrb[0].mxu0
        %v5237 = vadd.f32 0.0, %v5236
        %v5238 = vpop.f32.mrb[0].mxu0
        %5239 = vmatprep.mubr.bf16.mxu0 0
        %5240 = vmatmul.mubr.bf16.gmra.mrb[0].mxu0 %v5022
        %v5241 = vpop.f32.mrb[0].mxu0
        %v5242 = vadd.f32 0.0, %v5241
        %v5243 = vpop.f32.mrb[0].mxu0
        %v5244 = vpop.f32.mrb[0].mxu0
        %v5245 = vadd.f32 0.0, %v5244
        %v5246 = vpop.f32.mrb[0].mxu0
        %5247 = vdwg.mxu0
        %v5248 = vadd.f32 %v4495, %v5122
        %v5249 = vadd.f32 %v4496, %v5125
        %v5250 = vadd.f32 %v4497, %v5130
        %v5251 = vadd.f32 %v4498, %v5133
        %v5252 = vadd.f32 %v4499, %v5138
        %v5253 = vadd.f32 %v4500, %v5141
        %v5254 = vadd.f32 %v4501, %v5146
        %v5255 = vadd.f32 %v4502, %v5149
        %v5256 = vadd.f32 %v4503, %v5154
        %v5257 = vadd.f32 %v4504, %v5157
        %v5258 = vadd.f32 %v4505, %v5162
        %v5259 = vadd.f32 %v4506, %v5165
        %v5260 = vadd.f32 %v4507, %v5170
        %v5261 = vadd.f32 %v4508, %v5173
        %v5262 = vadd.f32 %v4509, %v5178
        %v5263 = vadd.f32 %v4510, %v5181
        %v5264 = vadd.f32 %v4511, %v5186
        %v5265 = vadd.f32 %v4512, %v5189
        %v5266 = vadd.f32 %v4513, %v5194
        %v5267 = vadd.f32 %v4514, %v5197
        %v5268 = vadd.f32 %v4515, %v5202
        %v5269 = vadd.f32 %v4516, %v5205
        %v5270 = vadd.f32 %v4517, %v5210
        %v5271 = vadd.f32 %v4518, %v5213
        %v5272 = vadd.f32 %v4519, %v5218
        %v5273 = vadd.f32 %v4520, %v5221
        %v5274 = vadd.f32 %v4521, %v5226
        %v5275 = vadd.f32 %v4522, %v5229
        %v5276 = vadd.f32 %v4523, %v5234
        %v5277 = vadd.f32 %v4524, %v5237
        %v5278 = vadd.f32 %v4525, %v5242
        %v5279 = vadd.f32 %v4526, %v5245
        %v5280 = vld [vmem:[%s4141] sm:$0xe]
        %v5281 = vld [vmem:[%s4141 + $0xc] sm:$0xe]
        %v5282 = vld [vmem:[%s4141 + $0x18] sm:$0xe]
        %v5283 = vld [vmem:[%s4141 + $0x24] sm:$0xe]
        %v5284 = vld [vmem:[%s4141 + $0x30] sm:$0xe]
        %v5285 = vld [vmem:[%s4141 + $0x3c] sm:$0xe]
        %v5286 = vld [vmem:[%s4141 + $0x48] sm:$0xe]
        %v5287 = vld [vmem:[%s4141 + $0x54] sm:$0xe]
        %v5288 = vld [vmem:[%s4141 + $0x60] sm:$0xe]
        %v5289 = vld [vmem:[%s4141 + $0x6c] sm:$0xe]
        %v5290 = vld [vmem:[%s4141 + $0x78] sm:$0xe]
        %v5291 = vld [vmem:[%s4141 + $0x84] sm:$0xe]
        %v5292 = vld [vmem:[%s4141 + $0x90] sm:$0xe]
        %v5293 = vld [vmem:[%s4141 + $0x9c] sm:$0xe]
        %v5294 = vld [vmem:[%s4141 + $0xa8] sm:$0xe]
        %v5295 = vld [vmem:[%s4141 + $0xb4] sm:$0xe]
        %v5344 = vrot.slane %v5280, 5
        %v5345 = vrot.slane %v5344, 4
        %v5346 = vrot.slane %v4528, 5
        %v5347 = vsel %vm2072, %v5345, %v5346
        %v5348 = vrot.slane %v5346, 4
        %v5349 = vrot.slane %v4529, 5
        %v5350 = vsel %vm2072, %v5348, %v5349
        %v5351 = vrot.slane %v5281, 5
        %v5352 = vrot.slane %v5351, 4
        %v5353 = vrot.slane %v4531, 5
        %v5354 = vsel %vm2072, %v5352, %v5353
        %v5355 = vrot.slane %v5353, 4
        %v5356 = vrot.slane %v4532, 5
        %v5357 = vsel %vm2072, %v5355, %v5356
        %v5358 = vrot.slane %v5282, 5
        %v5359 = vrot.slane %v5358, 4
        %v5360 = vrot.slane %v4534, 5
        %v5361 = vsel %vm2072, %v5359, %v5360
        %v5362 = vrot.slane %v5360, 4
        %v5363 = vrot.slane %v4535, 5
        %v5364 = vsel %vm2072, %v5362, %v5363
        %v5365 = vrot.slane %v5283, 5
        %v5366 = vrot.slane %v5365, 4
        %v5367 = vrot.slane %v4537, 5
        %v5368 = vsel %vm2072, %v5366, %v5367
        %v5369 = vrot.slane %v5367, 4
        %v5370 = vrot.slane %v4538, 5
        %v5371 = vsel %vm2072, %v5369, %v5370
        %v5372 = vrot.slane %v5284, 5
        %v5373 = vrot.slane %v5372, 4
        %v5374 = vrot.slane %v4540, 5
        %v5375 = vsel %vm2072, %v5373, %v5374
        %v5376 = vrot.slane %v5374, 4
        %v5377 = vrot.slane %v4541, 5
        %v5378 = vsel %vm2072, %v5376, %v5377
        %v5379 = vrot.slane %v5285, 5
        %v5380 = vrot.slane %v5379, 4
        %v5381 = vrot.slane %v4543, 5
        %v5382 = vsel %vm2072, %v5380, %v5381
        %v5383 = vrot.slane %v5381, 4
        %v5384 = vrot.slane %v4544, 5
        %v5385 = vsel %vm2072, %v5383, %v5384
        %v5386 = vrot.slane %v5286, 5
        %v5387 = vrot.slane %v5386, 4
        %v5388 = vrot.slane %v4546, 5
        %v5389 = vsel %vm2072, %v5387, %v5388
        %v5390 = vrot.slane %v5388, 4
        %v5391 = vrot.slane %v4547, 5
        %v5392 = vsel %vm2072, %v5390, %v5391
        %v5393 = vrot.slane %v5287, 5
        %v5394 = vrot.slane %v5393, 4
        %v5395 = vrot.slane %v4549, 5
        %v5396 = vsel %vm2072, %v5394, %v5395
        %v5397 = vrot.slane %v5395, 4
        %v5398 = vrot.slane %v4550, 5
        %v5399 = vsel %vm2072, %v5397, %v5398
        %v5400 = vrot.slane %v5288, 5
        %v5401 = vrot.slane %v5400, 4
        %v5402 = vrot.slane %v4552, 5
        %v5403 = vsel %vm2072, %v5401, %v5402
        %v5404 = vrot.slane %v5402, 4
        %v5405 = vrot.slane %v4553, 5
        %v5406 = vsel %vm2072, %v5404, %v5405
        %v5407 = vrot.slane %v5289, 5
        %v5408 = vrot.slane %v5407, 4
        %v5409 = vrot.slane %v4555, 5
        %v5410 = vsel %vm2072, %v5408, %v5409
        %v5411 = vrot.slane %v5409, 4
        %v5412 = vrot.slane %v4556, 5
        %v5413 = vsel %vm2072, %v5411, %v5412
        %v5414 = vrot.slane %v5290, 5
        %v5415 = vrot.slane %v5414, 4
        %v5416 = vrot.slane %v4558, 5
        %v5417 = vsel %vm2072, %v5415, %v5416
        %v5418 = vrot.slane %v5416, 4
        %v5419 = vrot.slane %v4559, 5
        %v5420 = vsel %vm2072, %v5418, %v5419
        %v5421 = vrot.slane %v5291, 5
        %v5422 = vrot.slane %v5421, 4
        %v5423 = vrot.slane %v4561, 5
        %v5424 = vsel %vm2072, %v5422, %v5423
        %v5425 = vrot.slane %v5423, 4
        %v5426 = vrot.slane %v4562, 5
        %v5427 = vsel %vm2072, %v5425, %v5426
        %v5428 = vrot.slane %v5292, 5
        %v5429 = vrot.slane %v5428, 4
        %v5430 = vrot.slane %v4564, 5
        %v5431 = vsel %vm2072, %v5429, %v5430
        %v5432 = vrot.slane %v5430, 4
        %v5433 = vrot.slane %v4565, 5
        %v5434 = vsel %vm2072, %v5432, %v5433
        %v5435 = vrot.slane %v5293, 5
        %v5436 = vrot.slane %v5435, 4
        %v5437 = vrot.slane %v4567, 5
        %v5438 = vsel %vm2072, %v5436, %v5437
        %v5439 = vrot.slane %v5437, 4
        %v5440 = vrot.slane %v4568, 5
        %v5441 = vsel %vm2072, %v5439, %v5440
        %v5442 = vrot.slane %v5294, 5
        %v5443 = vrot.slane %v5442, 4
        %v5444 = vrot.slane %v4570, 5
        %v5445 = vsel %vm2072, %v5443, %v5444
        %v5446 = vrot.slane %v5444, 4
        %v5447 = vrot.slane %v4571, 5
        %v5448 = vsel %vm2072, %v5446, %v5447
        %v5449 = vrot.slane %v5295, 5
        %v5450 = vrot.slane %v5449, 4
        %v5451 = vrot.slane %v4573, 5
        %v5452 = vsel %vm2072, %v5450, %v5451
        %v5453 = vrot.slane %v5451, 4
        %v5454 = vrot.slane %v4574, 5
        %v5455 = vsel %vm2072, %v5453, %v5454
        %v5456 = vld [vmem:[#allocation7 + $0x200] sm:$0xf]
        %v5457 = vld [vmem:[#allocation7 + $0x204] sm:$0xf]
        %v5458 = vld [vmem:[#allocation7 + $0x208] sm:$0xf]
        %v5459 = vld [vmem:[#allocation7 + $0x20c] sm:$0xf]
        %v5460 = vld [vmem:[#allocation7 + $0x210] sm:$0xf]
        %v5461 = vld [vmem:[#allocation7 + $0x214] sm:$0xf]
        %v5462 = vld [vmem:[#allocation7 + $0x218] sm:$0xf]
        %v5463 = vld [vmem:[#allocation7 + $0x21c] sm:$0xf]
        %v5464 = vld [vmem:[#allocation7 + $0x220] sm:$0xf]
        %v5465 = vld [vmem:[#allocation7 + $0x224] sm:$0xf]
        %v5466 = vld [vmem:[#allocation7 + $0x228] sm:$0xf]
        %v5467 = vld [vmem:[#allocation7 + $0x22c] sm:$0xf]
        %v5468 = vld [vmem:[#allocation7 + $0x230] sm:$0xf]
        %v5469 = vld [vmem:[#allocation7 + $0x234] sm:$0xf]
        %v5470 = vld [vmem:[#allocation7 + $0x238] sm:$0xf]
        %v5471 = vld [vmem:[#allocation7 + $0x23c] sm:$0xf]
        %v5472 = vunpack.c.l.b16 %v5347
        %v5473 = vunpack.c.l.b16 %v5350
        %v5474 = vunpack.c.l.b16 %v5354
        %v5475 = vunpack.c.l.b16 %v5357
        %v5476 = vunpack.c.l.b16 %v5361
        %v5477 = vunpack.c.l.b16 %v5364
        %v5478 = vunpack.c.l.b16 %v5368
        %v5479 = vunpack.c.l.b16 %v5371
        %v5480 = vunpack.c.l.b16 %v5375
        %v5481 = vunpack.c.l.b16 %v5378
        %v5482 = vunpack.c.l.b16 %v5382
        %v5483 = vunpack.c.l.b16 %v5385
        %v5484 = vunpack.c.l.b16 %v5389
        %v5485 = vunpack.c.l.b16 %v5392
        %v5486 = vunpack.c.l.b16 %v5396
        %v5487 = vunpack.c.l.b16 %v5399
        %v5488 = vunpack.c.l.b16 %v5403
        %v5489 = vunpack.c.l.b16 %v5406
        %v5490 = vunpack.c.l.b16 %v5410
        %v5491 = vunpack.c.l.b16 %v5413
        %v5492 = vunpack.c.l.b16 %v5417
        %v5493 = vunpack.c.l.b16 %v5420
        %v5494 = vunpack.c.l.b16 %v5424
        %v5495 = vunpack.c.l.b16 %v5427
        %v5496 = vunpack.c.l.b16 %v5431
        %v5497 = vunpack.c.l.b16 %v5434
        %v5498 = vunpack.c.l.b16 %v5438
        %v5499 = vunpack.c.l.b16 %v5441
        %v5500 = vunpack.c.l.b16 %v5445
        %v5501 = vunpack.c.l.b16 %v5448
        %v5502 = vunpack.c.l.b16 %v5452
        %v5503 = vunpack.c.l.b16 %v5455
        %v5504 = vpack.c.b16 %v5473, %v5472
        %v5505 = vpack.c.b16 %v5475, %v5474
        %v5506 = vpack.c.b16 %v5477, %v5476
        %v5507 = vpack.c.b16 %v5479, %v5478
        %v5508 = vpack.c.b16 %v5481, %v5480
        %v5509 = vpack.c.b16 %v5483, %v5482
        %v5510 = vpack.c.b16 %v5485, %v5484
        %v5511 = vpack.c.b16 %v5487, %v5486
        %v5512 = vpack.c.b16 %v5489, %v5488
        %v5513 = vpack.c.b16 %v5491, %v5490
        %v5514 = vpack.c.b16 %v5493, %v5492
        %v5515 = vpack.c.b16 %v5495, %v5494
        %v5516 = vpack.c.b16 %v5497, %v5496
        %v5517 = vpack.c.b16 %v5499, %v5498
        %v5518 = vpack.c.b16 %v5501, %v5500
        %v5519 = vpack.c.b16 %v5503, %v5502
        %v5552 = vunpack.c.l.b16 %v5456
        %v5553 = vunpack.c.l.b16 %v5457
        %v5554 = vunpack.c.l.b16 %v5458
        %v5555 = vunpack.c.l.b16 %v5459
        %v5556 = vunpack.c.l.b16 %v5460
        %v5557 = vunpack.c.l.b16 %v5461
        %v5558 = vunpack.c.l.b16 %v5462
        %v5559 = vunpack.c.l.b16 %v5463
        %v5560 = vunpack.c.l.b16 %v5464
        %v5561 = vunpack.c.l.b16 %v5465
        %v5562 = vunpack.c.l.b16 %v5466
        %v5563 = vunpack.c.l.b16 %v5467
        %v5564 = vunpack.c.l.b16 %v5468
        %v5565 = vunpack.c.l.b16 %v5469
        %v5566 = vunpack.c.l.b16 %v5470
        %v5567 = vunpack.c.l.b16 %v5471
        %v5568 = vpack.c.b16 %v5553, %v5552
        %v5569 = vpack.c.b16 %v5555, %v5554
        %v5570 = vpack.c.b16 %v5557, %v5556
        %v5571 = vpack.c.b16 %v5559, %v5558
        %v5572 = vpack.c.b16 %v5561, %v5560
        %v5573 = vpack.c.b16 %v5563, %v5562
        %v5574 = vpack.c.b16 %v5565, %v5564
        %v5575 = vpack.c.b16 %v5567, %v5566
        %5584 = vmatprep.subr.bf16.mxu0 0
        %5585 = vmatpush1.bf16.msra.mxu0 %v5568
        %5586 = vmatprep.subr.bf16.mxu0 0
        %5587 = vmatpush1.bf16.msra.mxu0 %v5569
        %5588 = vmatprep.subr.bf16.mxu0 0
        %5589 = vmatpush1.bf16.msra.mxu0 %v5570
        %5590 = vmatprep.subr.bf16.mxu0 0
        %5591 = vmatpush1.bf16.msra.mxu0 %v5571
        %5592 = vmatprep.subr.bf16.mxu0 0
        %5593 = vmatpush1.bf16.msra.mxu0 %v5572
        %5594 = vmatprep.subr.bf16.mxu0 0
        %5595 = vmatpush1.bf16.msra.mxu0 %v5573
        %5596 = vmatprep.subr.bf16.mxu0 0
        %5597 = vmatpush1.bf16.msra.mxu0 %v5574
        %5598 = vmatprep.subr.bf16.mxu0 0
        %5599 = vmatpush1.bf16.msra.mxu0 %v5575
        %5600 = vmatprep.subr.bf16.mxu0 0
        %5601 = vmatpush1.bf16.msra.mxu0 0
        %5602 = vmatprep.subr.bf16.mxu0 0
        %5603 = vmatpush1.bf16.msra.mxu0 0
        %5604 = vmatprep.subr.bf16.mxu0 0
        %5605 = vmatpush1.bf16.msra.mxu0 0
        %5606 = vmatprep.subr.bf16.mxu0 0
        %5607 = vmatpush1.bf16.msra.mxu0 0
        %5608 = vmatprep.subr.bf16.mxu0 0
        %5609 = vmatpush1.bf16.msra.mxu0 0
        %5610 = vmatprep.subr.bf16.mxu0 0
        %5611 = vmatpush1.bf16.msra.mxu0 0
        %5612 = vmatprep.subr.bf16.mxu0 0
        %5613 = vmatpush1.bf16.msra.mxu0 0
        %5614 = vmatprep.subr.bf16.mxu0 0
        %5615 = vmatpush1.bf16.msra.mxu0 0
        %5616 = vmatprep.mubr.bf16.mxu0 0
        %5617 = vmatmul.mubr.bf16.gmra.mrb[0].mxu0 %v5504
        %v5618 = vpop.f32.mrb[0].mxu0
        %v5619 = vadd.f32 0.0, %v5618
        %v5620 = vpop.f32.mrb[0].mxu0
        %v5621 = vpop.f32.mrb[0].mxu0
        %v5622 = vadd.f32 0.0, %v5621
        %v5623 = vpop.f32.mrb[0].mxu0
        %5624 = vmatprep.mubr.bf16.mxu0 0
        %5625 = vmatmul.mubr.bf16.gmra.mrb[0].mxu0 %v5505
        %v5626 = vpop.f32.mrb[0].mxu0
        %v5627 = vadd.f32 0.0, %v5626
        %v5628 = vpop.f32.mrb[0].mxu0
        %v5629 = vpop.f32.mrb[0].mxu0
        %v5630 = vadd.f32 0.0, %v5629
        %v5631 = vpop.f32.mrb[0].mxu0
        %5632 = vmatprep.mubr.bf16.mxu0 0
        %5633 = vmatmul.mubr.bf16.gmra.mrb[0].mxu0 %v5506
        %v5634 = vpop.f32.mrb[0].mxu0
        %v5635 = vadd.f32 0.0, %v5634
        %v5636 = vpop.f32.mrb[0].mxu0
        %v5637 = vpop.f32.mrb[0].mxu0
        %v5638 = vadd.f32 0.0, %v5637
        %v5639 = vpop.f32.mrb[0].mxu0
        %5640 = vmatprep.mubr.bf16.mxu0 0
        %5641 = vmatmul.mubr.bf16.gmra.mrb[0].mxu0 %v5507
        %v5642 = vpop.f32.mrb[0].mxu0
        %v5643 = vadd.f32 0.0, %v5642
        %v5644 = vpop.f32.mrb[0].mxu0
        %v5645 = vpop.f32.mrb[0].mxu0
        %v5646 = vadd.f32 0.0, %v5645
        %v5647 = vpop.f32.mrb[0].mxu0
        %5648 = vmatprep.mubr.bf16.mxu0 0
        %5649 = vmatmul.mubr.bf16.gmra.mrb[0].mxu0 %v5508
        %v5650 = vpop.f32.mrb[0].mxu0
        %v5651 = vadd.f32 0.0, %v5650
        %v5652 = vpop.f32.mrb[0].mxu0
        %v5653 = vpop.f32.mrb[0].mxu0
        %v5654 = vadd.f32 0.0, %v5653
        %v5655 = vpop.f32.mrb[0].mxu0
        %5656 = vmatprep.mubr.bf16.mxu0 0
        %5657 = vmatmul.mubr.bf16.gmra.mrb[0].mxu0 %v5509
        %v5658 = vpop.f32.mrb[0].mxu0
        %v5659 = vadd.f32 0.0, %v5658
        %v5660 = vpop.f32.mrb[0].mxu0
        %v5661 = vpop.f32.mrb[0].mxu0
        %v5662 = vadd.f32 0.0, %v5661
        %v5663 = vpop.f32.mrb[0].mxu0
        %5664 = vmatprep.mubr.bf16.mxu0 0
        %5665 = vmatmul.mubr.bf16.gmra.mrb[0].mxu0 %v5510
        %v5666 = vpop.f32.mrb[0].mxu0
        %v5667 = vadd.f32 0.0, %v5666
        %v5668 = vpop.f32.mrb[0].mxu0
        %v5669 = vpop.f32.mrb[0].mxu0
        %v5670 = vadd.f32 0.0, %v5669
        %v5671 = vpop.f32.mrb[0].mxu0
        %5672 = vmatprep.mubr.bf16.mxu0 0
        %5673 = vmatmul.mubr.bf16.gmra.mrb[0].mxu0 %v5511
        %v5674 = vpop.f32.mrb[0].mxu0
        %v5675 = vadd.f32 0.0, %v5674
        %v5676 = vpop.f32.mrb[0].mxu0
        %v5677 = vpop.f32.mrb[0].mxu0
        %v5678 = vadd.f32 0.0, %v5677
        %v5679 = vpop.f32.mrb[0].mxu0
        %5680 = vmatprep.mubr.bf16.mxu0 0
        %5681 = vmatmul.mubr.bf16.gmra.mrb[0].mxu0 %v5512
        %v5682 = vpop.f32.mrb[0].mxu0
        %v5683 = vadd.f32 0.0, %v5682
        %v5684 = vpop.f32.mrb[0].mxu0
        %v5685 = vpop.f32.mrb[0].mxu0
        %v5686 = vadd.f32 0.0, %v5685
        %v5687 = vpop.f32.mrb[0].mxu0
        %5688 = vmatprep.mubr.bf16.mxu0 0
        %5689 = vmatmul.mubr.bf16.gmra.mrb[0].mxu0 %v5513
        %v5690 = vpop.f32.mrb[0].mxu0
        %v5691 = vadd.f32 0.0, %v5690
        %v5692 = vpop.f32.mrb[0].mxu0
        %v5693 = vpop.f32.mrb[0].mxu0
        %v5694 = vadd.f32 0.0, %v5693
        %v5695 = vpop.f32.mrb[0].mxu0
        %5696 = vmatprep.mubr.bf16.mxu0 0
        %5697 = vmatmul.mubr.bf16.gmra.mrb[0].mxu0 %v5514
        %v5698 = vpop.f32.mrb[0].mxu0
        %v5699 = vadd.f32 0.0, %v5698
        %v5700 = vpop.f32.mrb[0].mxu0
        %v5701 = vpop.f32.mrb[0].mxu0
        %v5702 = vadd.f32 0.0, %v5701
        %v5703 = vpop.f32.mrb[0].mxu0
        %5704 = vmatprep.mubr.bf16.mxu0 0
        %5705 = vmatmul.mubr.bf16.gmra.mrb[0].mxu0 %v5515
        %v5706 = vpop.f32.mrb[0].mxu0
        %v5707 = vadd.f32 0.0, %v5706
        %v5708 = vpop.f32.mrb[0].mxu0
        %v5709 = vpop.f32.mrb[0].mxu0
        %v5710 = vadd.f32 0.0, %v5709
        %v5711 = vpop.f32.mrb[0].mxu0
        %5712 = vmatprep.mubr.bf16.mxu0 0
        %5713 = vmatmul.mubr.bf16.gmra.mrb[0].mxu0 %v5516
        %v5714 = vpop.f32.mrb[0].mxu0
        %v5715 = vadd.f32 0.0, %v5714
        %v5716 = vpop.f32.mrb[0].mxu0
        %v5717 = vpop.f32.mrb[0].mxu0
        %v5718 = vadd.f32 0.0, %v5717
        %v5719 = vpop.f32.mrb[0].mxu0
        %5720 = vmatprep.mubr.bf16.mxu0 0
        %5721 = vmatmul.mubr.bf16.gmra.mrb[0].mxu0 %v5517
        %v5722 = vpop.f32.mrb[0].mxu0
        %v5723 = vadd.f32 0.0, %v5722
        %v5724 = vpop.f32.mrb[0].mxu0
        %v5725 = vpop.f32.mrb[0].mxu0
        %v5726 = vadd.f32 0.0, %v5725
        %v5727 = vpop.f32.mrb[0].mxu0
        %5728 = vmatprep.mubr.bf16.mxu0 0
        %5729 = vmatmul.mubr.bf16.gmra.mrb[0].mxu0 %v5518
        %v5730 = vpop.f32.mrb[0].mxu0
        %v5731 = vadd.f32 0.0, %v5730
        %v5732 = vpop.f32.mrb[0].mxu0
        %v5733 = vpop.f32.mrb[0].mxu0
        %v5734 = vadd.f32 0.0, %v5733
        %v5735 = vpop.f32.mrb[0].mxu0
        %5736 = vmatprep.mubr.bf16.mxu0 0
        %5737 = vmatmul.mubr.bf16.gmra.mrb[0].mxu0 %v5519
        %v5738 = vpop.f32.mrb[0].mxu0
        %v5739 = vadd.f32 0.0, %v5738
        %v5740 = vpop.f32.mrb[0].mxu0
        %v5741 = vpop.f32.mrb[0].mxu0
        %v5742 = vadd.f32 0.0, %v5741
        %v5743 = vpop.f32.mrb[0].mxu0
        %5744 = vdwg.mxu0
        %v5745 = vadd.f32 %v5248, %v5619
        %v5746 = vadd.f32 %v5249, %v5622
        %v5747 = vadd.f32 %v5250, %v5627
        %v5748 = vadd.f32 %v5251, %v5630
        %v5749 = vadd.f32 %v5252, %v5635
        %v5750 = vadd.f32 %v5253, %v5638
        %v5751 = vadd.f32 %v5254, %v5643
        %v5752 = vadd.f32 %v5255, %v5646
        %v5753 = vadd.f32 %v5256, %v5651
        %v5754 = vadd.f32 %v5257, %v5654
        %v5755 = vadd.f32 %v5258, %v5659
        %v5756 = vadd.f32 %v5259, %v5662
        %v5757 = vadd.f32 %v5260, %v5667
        %v5758 = vadd.f32 %v5261, %v5670
        %v5759 = vadd.f32 %v5262, %v5675
        %v5760 = vadd.f32 %v5263, %v5678
        %v5761 = vadd.f32 %v5264, %v5683
        %v5762 = vadd.f32 %v5265, %v5686
        %v5763 = vadd.f32 %v5266, %v5691
        %v5764 = vadd.f32 %v5267, %v5694
        %v5765 = vadd.f32 %v5268, %v5699
        %v5766 = vadd.f32 %v5269, %v5702
        %v5767 = vadd.f32 %v5270, %v5707
        %v5768 = vadd.f32 %v5271, %v5710
        %v5769 = vadd.f32 %v5272, %v5715
        %v5770 = vadd.f32 %v5273, %v5718
        %v5771 = vadd.f32 %v5274, %v5723
        %v5772 = vadd.f32 %v5275, %v5726
        %v5773 = vadd.f32 %v5276, %v5731
        %v5774 = vadd.f32 %v5277, %v5734
        %v5775 = vadd.f32 %v5278, %v5739
        %v5776 = vadd.f32 %v5279, %v5742
        %v5777 = vld [vmem:[%s2] sm:$0x1]
        %v5779 = vlaneseq
        %v5780 = vshrl.u32 %v5779, 7
        %v5781 = vsub.s32 0, %v5780
        %v5782 = vrot.slane %v5777, %v5781
        %v5784 = vadd.f32 %v5745, %v5782
        %v5785 = vadd.f32 %v5746, %v5782
        %v5786 = vadd.f32 %v5747, %v5782
        %v5787 = vadd.f32 %v5748, %v5782
        %v5788 = vadd.f32 %v5749, %v5782
        %v5789 = vadd.f32 %v5750, %v5782
        %v5790 = vadd.f32 %v5751, %v5782
        %v5791 = vadd.f32 %v5752, %v5782
        %v5792 = vadd.f32 %v5753, %v5782
        %v5793 = vadd.f32 %v5754, %v5782
        %v5794 = vadd.f32 %v5755, %v5782
        %v5795 = vadd.f32 %v5756, %v5782
        %v5796 = vadd.f32 %v5757, %v5782
        %v5797 = vadd.f32 %v5758, %v5782
        %v5798 = vadd.f32 %v5759, %v5782
        %v5799 = vadd.f32 %v5760, %v5782
        %v5800 = vadd.f32 %v5761, %v5782
        %v5801 = vadd.f32 %v5762, %v5782
        %v5802 = vadd.f32 %v5763, %v5782
        %v5803 = vadd.f32 %v5764, %v5782
        %v5804 = vadd.f32 %v5765, %v5782
        %v5805 = vadd.f32 %v5766, %v5782
        %v5806 = vadd.f32 %v5767, %v5782
        %v5807 = vadd.f32 %v5768, %v5782
        %v5808 = vadd.f32 %v5769, %v5782
        %v5809 = vadd.f32 %v5770, %v5782
        %v5810 = vadd.f32 %v5771, %v5782
        %v5811 = vadd.f32 %v5772, %v5782
        %v5812 = vadd.f32 %v5773, %v5782
        %v5813 = vadd.f32 %v5774, %v5782
        %v5814 = vadd.f32 %v5775, %v5782
        %v5815 = vadd.f32 %v5776, %v5782
        %v5816 = vmax.f32 %v5784, 0.0
        %v5817 = vmax.f32 %v5785, 0.0
        %v5818 = vmax.f32 %v5786, 0.0
        %v5819 = vmax.f32 %v5787, 0.0
        %v5820 = vmax.f32 %v5788, 0.0
        %v5821 = vmax.f32 %v5789, 0.0
        %v5822 = vmax.f32 %v5790, 0.0
        %v5823 = vmax.f32 %v5791, 0.0
        %v5824 = vmax.f32 %v5792, 0.0
        %v5825 = vmax.f32 %v5793, 0.0
        %v5826 = vmax.f32 %v5794, 0.0
        %v5827 = vmax.f32 %v5795, 0.0
        %v5828 = vmax.f32 %v5796, 0.0
        %v5829 = vmax.f32 %v5797, 0.0
        %v5830 = vmax.f32 %v5798, 0.0
        %v5831 = vmax.f32 %v5799, 0.0
        %v5832 = vmax.f32 %v5800, 0.0
        %v5833 = vmax.f32 %v5801, 0.0
        %v5834 = vmax.f32 %v5802, 0.0
        %v5835 = vmax.f32 %v5803, 0.0
        %v5836 = vmax.f32 %v5804, 0.0
        %v5837 = vmax.f32 %v5805, 0.0
        %v5838 = vmax.f32 %v5806, 0.0
        %v5839 = vmax.f32 %v5807, 0.0
        %v5840 = vmax.f32 %v5808, 0.0
        %v5841 = vmax.f32 %v5809, 0.0
        %v5842 = vmax.f32 %v5810, 0.0
        %v5843 = vmax.f32 %v5811, 0.0
        %v5844 = vmax.f32 %v5812, 0.0
        %v5845 = vmax.f32 %v5813, 0.0
        %v5846 = vmax.f32 %v5814, 0.0
        %v5847 = vmax.f32 %v5815, 0.0
        %v5848 = vpack.c.bf16 %v5817, %v5816
        %v5849 = vpack.c.bf16 %v5819, %v5818
        %v5850 = vpack.c.bf16 %v5821, %v5820
        %v5851 = vpack.c.bf16 %v5823, %v5822
        %v5852 = vpack.c.bf16 %v5825, %v5824
        %v5853 = vpack.c.bf16 %v5827, %v5826
        %v5854 = vpack.c.bf16 %v5829, %v5828
        %v5855 = vpack.c.bf16 %v5831, %v5830
        %v5856 = vpack.c.bf16 %v5833, %v5832
        %v5857 = vpack.c.bf16 %v5835, %v5834
        %v5858 = vpack.c.bf16 %v5837, %v5836
        %v5859 = vpack.c.bf16 %v5839, %v5838
        %v5860 = vpack.c.bf16 %v5841, %v5840
        %v5861 = vpack.c.bf16 %v5843, %v5842
        %v5862 = vpack.c.bf16 %v5845, %v5844
        %v5863 = vpack.c.bf16 %v5847, %v5846
        %v5880 = vunpack.c.l.b16 %v5848
        %v5881 = vunpack.c.h.b16 %v5848
        %v5882 = vunpack.c.l.b16 %v5849
        %v5883 = vunpack.c.h.b16 %v5849
        %v5884 = vunpack.c.l.b16 %v5850
        %v5885 = vunpack.c.h.b16 %v5850
        %v5886 = vunpack.c.l.b16 %v5851
        %v5887 = vunpack.c.h.b16 %v5851
        %v5888 = vunpack.c.l.b16 %v5852
        %v5889 = vunpack.c.h.b16 %v5852
        %v5890 = vunpack.c.l.b16 %v5853
        %v5891 = vunpack.c.h.b16 %v5853
        %v5892 = vunpack.c.l.b16 %v5854
        %v5893 = vunpack.c.h.b16 %v5854
        %v5894 = vunpack.c.l.b16 %v5855
        %v5895 = vunpack.c.h.b16 %v5855
        %v5896 = vunpack.c.l.b16 %v5856
        %v5897 = vunpack.c.h.b16 %v5856
        %v5898 = vunpack.c.l.b16 %v5857
        %v5899 = vunpack.c.h.b16 %v5857
        %v5900 = vunpack.c.l.b16 %v5858
        %v5901 = vunpack.c.h.b16 %v5858
        %v5902 = vunpack.c.l.b16 %v5859
        %v5903 = vunpack.c.h.b16 %v5859
        %v5904 = vunpack.c.l.b16 %v5860
        %v5905 = vunpack.c.h.b16 %v5860
        %v5906 = vunpack.c.l.b16 %v5861
        %v5907 = vunpack.c.h.b16 %v5861
        %v5908 = vunpack.c.l.b16 %v5862
        %v5909 = vunpack.c.h.b16 %v5862
        %v5910 = vunpack.c.l.b16 %v5863
        %v5911 = vunpack.c.h.b16 %v5863
        %v5912 = vpack.c.b16 %v5880, %v5880
        %v5913 = vpack.c.b16 %v5881, %v5881
        %v5914 = vpack.c.b16 %v5882, %v5882
        %v5915 = vpack.c.b16 %v5883, %v5883
        %v5916 = vpack.c.b16 %v5884, %v5884
        %v5917 = vpack.c.b16 %v5885, %v5885
        %v5918 = vpack.c.b16 %v5886, %v5886
        %v5919 = vpack.c.b16 %v5887, %v5887
        %v5920 = vpack.c.b16 %v5888, %v5888
        %v5921 = vpack.c.b16 %v5889, %v5889
        %v5922 = vpack.c.b16 %v5890, %v5890
        %v5923 = vpack.c.b16 %v5891, %v5891
        %v5924 = vpack.c.b16 %v5892, %v5892
        %v5925 = vpack.c.b16 %v5893, %v5893
        %v5926 = vpack.c.b16 %v5894, %v5894
        %v5927 = vpack.c.b16 %v5895, %v5895
        %v5928 = vpack.c.b16 %v5896, %v5896
        %v5929 = vpack.c.b16 %v5897, %v5897
        %v5930 = vpack.c.b16 %v5898, %v5898
        %v5931 = vpack.c.b16 %v5899, %v5899
        %v5932 = vpack.c.b16 %v5900, %v5900
        %v5933 = vpack.c.b16 %v5901, %v5901
        %v5934 = vpack.c.b16 %v5902, %v5902
        %v5935 = vpack.c.b16 %v5903, %v5903
        %v5936 = vpack.c.b16 %v5904, %v5904
        %v5937 = vpack.c.b16 %v5905, %v5905
        %v5938 = vpack.c.b16 %v5906, %v5906
        %v5939 = vpack.c.b16 %v5907, %v5907
        %v5940 = vpack.c.b16 %v5908, %v5908
        %v5941 = vpack.c.b16 %v5909, %v5909
        %v5942 = vpack.c.b16 %v5910, %v5910
        %v5943 = vpack.c.b16 %v5911, %v5911
        %v5945 = vshrl.u32 %v5912, 16
        %v5947 = vrot.slane %v5945, 7
        %v5948 = vshll.u32 %v5912, 16
        %v5950 = vor.u32 %v5947, %v5948
        %v5951 = vrot.slane %v5947, 4
        %v5953 = vshrl.u32 %v5913, 16
        %v5955 = vrot.slane %v5953, 7
        %v5956 = vshll.u32 %v5913, 16
        %v5958 = vor.u32 %v5955, %v5956
        %v5959 = vsel %vm541, %v5951, %v5958
        %v5960 = vrot.slane %v5955, 4
        %v5962 = vshrl.u32 %v5914, 16
        %v5964 = vrot.slane %v5962, 7
        %v5965 = vshll.u32 %v5914, 16
        %v5967 = vor.u32 %v5964, %v5965
        %v5968 = vrot.slane %v5964, 4
        %v5970 = vshrl.u32 %v5915, 16
        %v5972 = vrot.slane %v5970, 7
        %v5973 = vshll.u32 %v5915, 16
        %v5975 = vor.u32 %v5972, %v5973
        %v5976 = vsel %vm541, %v5968, %v5975
        %v5977 = vrot.slane %v5972, 4
        %v5979 = vshrl.u32 %v5916, 16
        %v5981 = vrot.slane %v5979, 7
        %v5982 = vshll.u32 %v5916, 16
        %v5984 = vor.u32 %v5981, %v5982
        %v5985 = vrot.slane %v5981, 4
        %v5987 = vshrl.u32 %v5917, 16
        %v5989 = vrot.slane %v5987, 7
        %v5990 = vshll.u32 %v5917, 16
        %v5992 = vor.u32 %v5989, %v5990
        %v5993 = vsel %vm541, %v5985, %v5992
        %v5994 = vrot.slane %v5989, 4
        %v5996 = vshrl.u32 %v5918, 16
        %v5998 = vrot.slane %v5996, 7
        %v5999 = vshll.u32 %v5918, 16
        %v6001 = vor.u32 %v5998, %v5999
        %v6002 = vrot.slane %v5998, 4
        %v6004 = vshrl.u32 %v5919, 16
        %v6006 = vrot.slane %v6004, 7
        %v6007 = vshll.u32 %v5919, 16
        %v6009 = vor.u32 %v6006, %v6007
        %v6010 = vsel %vm541, %v6002, %v6009
        %v6011 = vrot.slane %v6006, 4
        %v6013 = vshrl.u32 %v5920, 16
        %v6015 = vrot.slane %v6013, 7
        %v6016 = vshll.u32 %v5920, 16
        %v6018 = vor.u32 %v6015, %v6016
        %v6019 = vrot.slane %v6015, 4
        %v6021 = vshrl.u32 %v5921, 16
        %v6023 = vrot.slane %v6021, 7
        %v6024 = vshll.u32 %v5921, 16
        %v6026 = vor.u32 %v6023, %v6024
        %v6027 = vsel %vm541, %v6019, %v6026
        %v6028 = vrot.slane %v6023, 4
        %v6030 = vshrl.u32 %v5922, 16
        %v6032 = vrot.slane %v6030, 7
        %v6033 = vshll.u32 %v5922, 16
        %v6035 = vor.u32 %v6032, %v6033
        %v6036 = vrot.slane %v6032, 4
        %v6038 = vshrl.u32 %v5923, 16
        %v6040 = vrot.slane %v6038, 7
        %v6041 = vshll.u32 %v5923, 16
        %v6043 = vor.u32 %v6040, %v6041
        %v6044 = vsel %vm541, %v6036, %v6043
        %v6045 = vrot.slane %v6040, 4
        %v6047 = vshrl.u32 %v5924, 16
        %v6049 = vrot.slane %v6047, 7
        %v6050 = vshll.u32 %v5924, 16
        %v6052 = vor.u32 %v6049, %v6050
        %v6053 = vrot.slane %v6049, 4
        %v6055 = vshrl.u32 %v5925, 16
        %v6057 = vrot.slane %v6055, 7
        %v6058 = vshll.u32 %v5925, 16
        %v6060 = vor.u32 %v6057, %v6058
        %v6061 = vsel %vm541, %v6053, %v6060
        %v6062 = vrot.slane %v6057, 4
        %v6064 = vshrl.u32 %v5926, 16
        %v6066 = vrot.slane %v6064, 7
        %v6067 = vshll.u32 %v5926, 16
        %v6069 = vor.u32 %v6066, %v6067
        %v6070 = vrot.slane %v6066, 4
        %v6072 = vshrl.u32 %v5927, 16
        %v6074 = vrot.slane %v6072, 7
        %v6075 = vshll.u32 %v5927, 16
        %v6077 = vor.u32 %v6074, %v6075
        %v6078 = vsel %vm541, %v6070, %v6077
        %v6079 = vrot.slane %v6074, 4
        %v6081 = vshrl.u32 %v5928, 16
        %v6083 = vrot.slane %v6081, 7
        %v6084 = vshll.u32 %v5928, 16
        %v6086 = vor.u32 %v6083, %v6084
        %v6087 = vrot.slane %v6083, 4
        %v6089 = vshrl.u32 %v5929, 16
        %v6091 = vrot.slane %v6089, 7
        %v6092 = vshll.u32 %v5929, 16
        %v6094 = vor.u32 %v6091, %v6092
        %v6095 = vsel %vm541, %v6087, %v6094
        %v6096 = vrot.slane %v6091, 4
        %v6098 = vshrl.u32 %v5930, 16
        %v6100 = vrot.slane %v6098, 7
        %v6101 = vshll.u32 %v5930, 16
        %v6103 = vor.u32 %v6100, %v6101
        %v6104 = vrot.slane %v6100, 4
        %v6106 = vshrl.u32 %v5931, 16
        %v6108 = vrot.slane %v6106, 7
        %v6109 = vshll.u32 %v5931, 16
        %v6111 = vor.u32 %v6108, %v6109
        %v6112 = vsel %vm541, %v6104, %v6111
        %v6113 = vrot.slane %v6108, 4
        %v6115 = vshrl.u32 %v5932, 16
        %v6117 = vrot.slane %v6115, 7
        %v6118 = vshll.u32 %v5932, 16
        %v6120 = vor.u32 %v6117, %v6118
        %v6121 = vrot.slane %v6117, 4
        %v6123 = vshrl.u32 %v5933, 16
        %v6125 = vrot.slane %v6123, 7
        %v6126 = vshll.u32 %v5933, 16
        %v6128 = vor.u32 %v6125, %v6126
        %v6129 = vsel %vm541, %v6121, %v6128
        %v6130 = vrot.slane %v6125, 4
        %v6132 = vshrl.u32 %v5934, 16
        %v6134 = vrot.slane %v6132, 7
        %v6135 = vshll.u32 %v5934, 16
        %v6137 = vor.u32 %v6134, %v6135
        %v6138 = vrot.slane %v6134, 4
        %v6140 = vshrl.u32 %v5935, 16
        %v6142 = vrot.slane %v6140, 7
        %v6143 = vshll.u32 %v5935, 16
        %v6145 = vor.u32 %v6142, %v6143
        %v6146 = vsel %vm541, %v6138, %v6145
        %v6147 = vrot.slane %v6142, 4
        %v6149 = vshrl.u32 %v5936, 16
        %v6151 = vrot.slane %v6149, 7
        %v6152 = vshll.u32 %v5936, 16
        %v6154 = vor.u32 %v6151, %v6152
        %v6155 = vrot.slane %v6151, 4
        %v6157 = vshrl.u32 %v5937, 16
        %v6159 = vrot.slane %v6157, 7
        %v6160 = vshll.u32 %v5937, 16
        %v6162 = vor.u32 %v6159, %v6160
        %v6163 = vsel %vm541, %v6155, %v6162
        %v6164 = vrot.slane %v6159, 4
        %v6166 = vshrl.u32 %v5938, 16
        %v6168 = vrot.slane %v6166, 7
        %v6169 = vshll.u32 %v5938, 16
        %v6171 = vor.u32 %v6168, %v6169
        %v6172 = vrot.slane %v6168, 4
        %v6174 = vshrl.u32 %v5939, 16
        %v6176 = vrot.slane %v6174, 7
        %v6177 = vshll.u32 %v5939, 16
        %v6179 = vor.u32 %v6176, %v6177
        %v6180 = vsel %vm541, %v6172, %v6179
        %v6181 = vrot.slane %v6176, 4
        %v6183 = vshrl.u32 %v5940, 16
        %v6185 = vrot.slane %v6183, 7
        %v6186 = vshll.u32 %v5940, 16
        %v6188 = vor.u32 %v6185, %v6186
        %v6189 = vrot.slane %v6185, 4
        %v6191 = vshrl.u32 %v5941, 16
        %v6193 = vrot.slane %v6191, 7
        %v6194 = vshll.u32 %v5941, 16
        %v6196 = vor.u32 %v6193, %v6194
        %v6197 = vsel %vm541, %v6189, %v6196
        %v6198 = vrot.slane %v6193, 4
        %v6200 = vshrl.u32 %v5942, 16
        %v6202 = vrot.slane %v6200, 7
        %v6203 = vshll.u32 %v5942, 16
        %v6205 = vor.u32 %v6202, %v6203
        %v6206 = vrot.slane %v6202, 4
        %v6208 = vshrl.u32 %v5943, 16
        %v6210 = vrot.slane %v6208, 7
        %v6211 = vshll.u32 %v5943, 16
        %v6213 = vor.u32 %v6210, %v6211
        %v6214 = vsel %vm541, %v6206, %v6213
        %v6215 = vrot.slane %v6210, 4
        %s6264 = scalar_lea.vmem [#allocation3], 12
        %v6265 = vld [vmem:[%s6264] sm:$0xf]
        %v6266 = vsel %vm864, %v5950, %v6265
        %6267 = vst [vmem:[%s6264] sm:$0xf] %v6266
        %6268 = vst [vmem:[%s6264 + $0x4] sm:$0xf] %v5959
        %v6269 = vld [vmem:[%s6264 + $0x8] sm:$0x1]
        %v6270 = vsel %vm282, %v5960, %v6269
        %6271 = vst [vmem:[%s6264 + $0x8] sm:$0x1] %v6270
        %v6272 = vld [vmem:[%s6264 + $0xc] sm:$0xf]
        %v6273 = vsel %vm864, %v5967, %v6272
        %6274 = vst [vmem:[%s6264 + $0xc] sm:$0xf] %v6273
        %6275 = vst [vmem:[%s6264 + $0x10] sm:$0xf] %v5976
        %v6276 = vld [vmem:[%s6264 + $0x14] sm:$0x1]
        %v6277 = vsel %vm282, %v5977, %v6276
        %6278 = vst [vmem:[%s6264 + $0x14] sm:$0x1] %v6277
        %v6279 = vld [vmem:[%s6264 + $0x18] sm:$0xf]
        %v6280 = vsel %vm864, %v5984, %v6279
        %6281 = vst [vmem:[%s6264 + $0x18] sm:$0xf] %v6280
        %6282 = vst [vmem:[%s6264 + $0x1c] sm:$0xf] %v5993
        %v6283 = vld [vmem:[%s6264 + $0x20] sm:$0x1]
        %v6284 = vsel %vm282, %v5994, %v6283
        %6285 = vst [vmem:[%s6264 + $0x20] sm:$0x1] %v6284
        %v6286 = vld [vmem:[%s6264 + $0x24] sm:$0xf]
        %v6287 = vsel %vm864, %v6001, %v6286
        %6288 = vst [vmem:[%s6264 + $0x24] sm:$0xf] %v6287
        %6289 = vst [vmem:[%s6264 + $0x28] sm:$0xf] %v6010
        %v6290 = vld [vmem:[%s6264 + $0x2c] sm:$0x1]
        %v6291 = vsel %vm282, %v6011, %v6290
        %6292 = vst [vmem:[%s6264 + $0x2c] sm:$0x1] %v6291
        %v6293 = vld [vmem:[%s6264 + $0x30] sm:$0xf]
        %v6294 = vsel %vm864, %v6018, %v6293
        %6295 = vst [vmem:[%s6264 + $0x30] sm:$0xf] %v6294
        %6296 = vst [vmem:[%s6264 + $0x34] sm:$0xf] %v6027
        %v6297 = vld [vmem:[%s6264 + $0x38] sm:$0x1]
        %v6298 = vsel %vm282, %v6028, %v6297
        %6299 = vst [vmem:[%s6264 + $0x38] sm:$0x1] %v6298
        %v6300 = vld [vmem:[%s6264 + $0x3c] sm:$0xf]
        %v6301 = vsel %vm864, %v6035, %v6300
        %6302 = vst [vmem:[%s6264 + $0x3c] sm:$0xf] %v6301
        %6303 = vst [vmem:[%s6264 + $0x40] sm:$0xf] %v6044
        %v6304 = vld [vmem:[%s6264 + $0x44] sm:$0x1]
        %v6305 = vsel %vm282, %v6045, %v6304
        %6306 = vst [vmem:[%s6264 + $0x44] sm:$0x1] %v6305
        %v6307 = vld [vmem:[%s6264 + $0x48] sm:$0xf]
        %v6308 = vsel %vm864, %v6052, %v6307
        %6309 = vst [vmem:[%s6264 + $0x48] sm:$0xf] %v6308
        %6310 = vst [vmem:[%s6264 + $0x4c] sm:$0xf] %v6061
        %v6311 = vld [vmem:[%s6264 + $0x50] sm:$0x1]
        %v6312 = vsel %vm282, %v6062, %v6311
        %6313 = vst [vmem:[%s6264 + $0x50] sm:$0x1] %v6312
        %v6314 = vld [vmem:[%s6264 + $0x54] sm:$0xf]
        %v6315 = vsel %vm864, %v6069, %v6314
        %6316 = vst [vmem:[%s6264 + $0x54] sm:$0xf] %v6315
        %6317 = vst [vmem:[%s6264 + $0x58] sm:$0xf] %v6078
        %v6318 = vld [vmem:[%s6264 + $0x5c] sm:$0x1]
        %v6319 = vsel %vm282, %v6079, %v6318
        %6320 = vst [vmem:[%s6264 + $0x5c] sm:$0x1] %v6319
        %v6321 = vld [vmem:[%s6264 + $0x60] sm:$0xf]
        %v6322 = vsel %vm864, %v6086, %v6321
        %6323 = vst [vmem:[%s6264 + $0x60] sm:$0xf] %v6322
        %6324 = vst [vmem:[%s6264 + $0x64] sm:$0xf] %v6095
        %v6325 = vld [vmem:[%s6264 + $0x68] sm:$0x1]
        %v6326 = vsel %vm282, %v6096, %v6325
        %6327 = vst [vmem:[%s6264 + $0x68] sm:$0x1] %v6326
        %v6328 = vld [vmem:[%s6264 + $0x6c] sm:$0xf]
        %v6329 = vsel %vm864, %v6103, %v6328
        %6330 = vst [vmem:[%s6264 + $0x6c] sm:$0xf] %v6329
        %6331 = vst [vmem:[%s6264 + $0x70] sm:$0xf] %v6112
        %v6332 = vld [vmem:[%s6264 + $0x74] sm:$0x1]
        %v6333 = vsel %vm282, %v6113, %v6332
        %6334 = vst [vmem:[%s6264 + $0x74] sm:$0x1] %v6333
        %v6335 = vld [vmem:[%s6264 + $0x78] sm:$0xf]
        %v6336 = vsel %vm864, %v6120, %v6335
        %6337 = vst [vmem:[%s6264 + $0x78] sm:$0xf] %v6336
        %6338 = vst [vmem:[%s6264 + $0x7c] sm:$0xf] %v6129
        %v6339 = vld [vmem:[%s6264 + $0x80] sm:$0x1]
        %v6340 = vsel %vm282, %v6130, %v6339
        %6341 = vst [vmem:[%s6264 + $0x80] sm:$0x1] %v6340
        %v6342 = vld [vmem:[%s6264 + $0x84] sm:$0xf]
        %v6343 = vsel %vm864, %v6137, %v6342
        %6344 = vst [vmem:[%s6264 + $0x84] sm:$0xf] %v6343
        %6345 = vst [vmem:[%s6264 + $0x88] sm:$0xf] %v6146
        %v6346 = vld [vmem:[%s6264 + $0x8c] sm:$0x1]
        %v6347 = vsel %vm282, %v6147, %v6346
        %6348 = vst [vmem:[%s6264 + $0x8c] sm:$0x1] %v6347
        %v6349 = vld [vmem:[%s6264 + $0x90] sm:$0xf]
        %v6350 = vsel %vm864, %v6154, %v6349
        %6351 = vst [vmem:[%s6264 + $0x90] sm:$0xf] %v6350
        %6352 = vst [vmem:[%s6264 + $0x94] sm:$0xf] %v6163
        %v6353 = vld [vmem:[%s6264 + $0x98] sm:$0x1]
        %v6354 = vsel %vm282, %v6164, %v6353
        %6355 = vst [vmem:[%s6264 + $0x98] sm:$0x1] %v6354
        %v6356 = vld [vmem:[%s6264 + $0x9c] sm:$0xf]
        %v6357 = vsel %vm864, %v6171, %v6356
        %6358 = vst [vmem:[%s6264 + $0x9c] sm:$0xf] %v6357
        %6359 = vst [vmem:[%s6264 + $0xa0] sm:$0xf] %v6180
        %v6360 = vld [vmem:[%s6264 + $0xa4] sm:$0x1]
        %v6361 = vsel %vm282, %v6181, %v6360
        %6362 = vst [vmem:[%s6264 + $0xa4] sm:$0x1] %v6361
        %v6363 = vld [vmem:[%s6264 + $0xa8] sm:$0xf]
        %v6364 = vsel %vm864, %v6188, %v6363
        %6365 = vst [vmem:[%s6264 + $0xa8] sm:$0xf] %v6364
        %6366 = vst [vmem:[%s6264 + $0xac] sm:$0xf] %v6197
        %v6367 = vld [vmem:[%s6264 + $0xb0] sm:$0x1]
        %v6368 = vsel %vm282, %v6198, %v6367
        %6369 = vst [vmem:[%s6264 + $0xb0] sm:$0x1] %v6368
        %v6370 = vld [vmem:[%s6264 + $0xb4] sm:$0xf]
        %v6371 = vsel %vm864, %v6205, %v6370
        %6372 = vst [vmem:[%s6264 + $0xb4] sm:$0xf] %v6371
        %6373 = vst [vmem:[%s6264 + $0xb8] sm:$0xf] %v6214
        %v6374 = vld [vmem:[%s6264 + $0xbc] sm:$0x1]
        %v6375 = vsel %vm282, %v6215, %v6374
        %6376 = vst [vmem:[%s6264 + $0xbc] sm:$0x1] %v6375
        %v6377 = vld [vmem:[#allocation3] sm:$0xf]
        %v6378 = vld [vmem:[#allocation3 + $0x4] sm:$0xf]
        %v6379 = vld [vmem:[#allocation3 + $0xc] sm:$0xf]
        %v6380 = vld [vmem:[#allocation3 + $0x10] sm:$0xf]
        %v6381 = vld [vmem:[#allocation3 + $0x18] sm:$0xf]
        %v6382 = vld [vmem:[#allocation3 + $0x1c] sm:$0xf]
        %v6383 = vld [vmem:[#allocation3 + $0x24] sm:$0xf]
        %v6384 = vld [vmem:[#allocation3 + $0x28] sm:$0xf]
        %v6385 = vld [vmem:[#allocation3 + $0x30] sm:$0xf]
        %v6386 = vld [vmem:[#allocation3 + $0x34] sm:$0xf]
        %v6387 = vld [vmem:[#allocation3 + $0x3c] sm:$0xf]
        %v6388 = vld [vmem:[#allocation3 + $0x40] sm:$0xf]
        %v6389 = vld [vmem:[#allocation3 + $0x48] sm:$0xf]
        %v6390 = vld [vmem:[#allocation3 + $0x4c] sm:$0xf]
        %v6391 = vld [vmem:[#allocation3 + $0x54] sm:$0xf]
        %v6392 = vld [vmem:[#allocation3 + $0x58] sm:$0xf]
        %v6393 = vld [vmem:[#allocation3 + $0x60] sm:$0xf]
        %v6394 = vld [vmem:[#allocation3 + $0x64] sm:$0xf]
        %v6395 = vld [vmem:[#allocation3 + $0x6c] sm:$0xf]
        %v6396 = vld [vmem:[#allocation3 + $0x70] sm:$0xf]
        %v6397 = vld [vmem:[#allocation3 + $0x78] sm:$0xf]
        %v6398 = vld [vmem:[#allocation3 + $0x7c] sm:$0xf]
        %v6399 = vld [vmem:[#allocation3 + $0x84] sm:$0xf]
        %v6400 = vld [vmem:[#allocation3 + $0x88] sm:$0xf]
        %v6401 = vld [vmem:[#allocation3 + $0x90] sm:$0xf]
        %v6402 = vld [vmem:[#allocation3 + $0x94] sm:$0xf]
        %v6403 = vld [vmem:[#allocation3 + $0x9c] sm:$0xf]
        %v6404 = vld [vmem:[#allocation3 + $0xa0] sm:$0xf]
        %v6405 = vld [vmem:[#allocation3 + $0xa8] sm:$0xf]
        %v6406 = vld [vmem:[#allocation3 + $0xac] sm:$0xf]
        %v6407 = vld [vmem:[#allocation3 + $0xb4] sm:$0xf]
        %v6408 = vld [vmem:[#allocation3 + $0xb8] sm:$0xf]
        %v6409 = vld [vmem:[#allocation9] sm:$0xf]
        %v6410 = vld [vmem:[#allocation9 + $0x4] sm:$0xf]
        %v6411 = vld [vmem:[#allocation9 + $0x8] sm:$0xf]
        %v6412 = vld [vmem:[#allocation9 + $0xc] sm:$0xf]
        %v6413 = vld [vmem:[#allocation9 + $0x10] sm:$0xf]
        %v6414 = vld [vmem:[#allocation9 + $0x14] sm:$0xf]
        %v6415 = vld [vmem:[#allocation9 + $0x18] sm:$0xf]
        %v6416 = vld [vmem:[#allocation9 + $0x1c] sm:$0xf]
        %v6417 = vld [vmem:[#allocation9 + $0x20] sm:$0xf]
        %v6418 = vld [vmem:[#allocation9 + $0x24] sm:$0xf]
        %v6419 = vld [vmem:[#allocation9 + $0x28] sm:$0xf]
        %v6420 = vld [vmem:[#allocation9 + $0x2c] sm:$0xf]
        %v6421 = vld [vmem:[#allocation9 + $0x30] sm:$0xf]
        %v6422 = vld [vmem:[#allocation9 + $0x34] sm:$0xf]
        %v6423 = vld [vmem:[#allocation9 + $0x38] sm:$0xf]
        %v6424 = vld [vmem:[#allocation9 + $0x3c] sm:$0xf]
        %v6425 = vld [vmem:[#allocation3 + $0x8] sm:$0x1]
        %v6426 = vld [vmem:[#allocation3 + $0x14] sm:$0x1]
        %v6427 = vld [vmem:[#allocation3 + $0x20] sm:$0x1]
        %v6428 = vld [vmem:[#allocation3 + $0x2c] sm:$0x1]
        %v6429 = vld [vmem:[#allocation3 + $0x38] sm:$0x1]
        %v6430 = vld [vmem:[#allocation3 + $0x44] sm:$0x1]
        %v6431 = vld [vmem:[#allocation3 + $0x50] sm:$0x1]
        %v6432 = vld [vmem:[#allocation3 + $0x5c] sm:$0x1]
        %v6433 = vld [vmem:[#allocation3 + $0x68] sm:$0x1]
        %v6434 = vld [vmem:[#allocation3 + $0x74] sm:$0x1]
        %v6435 = vld [vmem:[#allocation3 + $0x80] sm:$0x1]
        %v6436 = vld [vmem:[#allocation3 + $0x8c] sm:$0x1]
        %v6437 = vld [vmem:[#allocation3 + $0x98] sm:$0x1]
        %v6438 = vld [vmem:[#allocation3 + $0xa4] sm:$0x1]
        %v6439 = vld [vmem:[#allocation3 + $0xb0] sm:$0x1]
        %v6440 = vld [vmem:[#allocation3 + $0xbc] sm:$0x1]
        %v6442 = vshrl.u32 %v6377, 16
        %v6444 = vrot.slane %v6442, 4
        %v6445 = vshll.u32 %v6377, 16
        %v6447 = vrot.slane %v6445, 5
        %v6448 = vor.u32 %v6444, %v6447
        %v6449 = vrot.slane %v6448, 4
        %v6451 = vshll.u32 %v6378, 16
        %v6453 = vrot.slane %v6451, 5
        %v6454 = vsel %vm1043, %v6449, %v6453
        %v6455 = vshrl.u32 %v6378, 16
        %v6457 = vrot.slane %v6455, 4
        %v6458 = vor.u32 %v6457, %v6453
        %v6459 = vrot.slane %v6458, 4
        %v6461 = vshll.u32 %v6425, 16
        %v6463 = vrot.slane %v6461, 5
        %v6464 = vsel %vm1043, %v6459, %v6463
        %v6466 = vshrl.u32 %v6379, 16
        %v6468 = vrot.slane %v6466, 4
        %v6469 = vshll.u32 %v6379, 16
        %v6471 = vrot.slane %v6469, 5
        %v6472 = vor.u32 %v6468, %v6471
        %v6473 = vrot.slane %v6472, 4
        %v6475 = vshll.u32 %v6380, 16
        %v6477 = vrot.slane %v6475, 5
        %v6478 = vsel %vm1043, %v6473, %v6477
        %v6479 = vshrl.u32 %v6380, 16
        %v6481 = vrot.slane %v6479, 4
        %v6482 = vor.u32 %v6481, %v6477
        %v6483 = vrot.slane %v6482, 4
        %v6485 = vshll.u32 %v6426, 16
        %v6487 = vrot.slane %v6485, 5
        %v6488 = vsel %vm1043, %v6483, %v6487
        %v6490 = vshrl.u32 %v6381, 16
        %v6492 = vrot.slane %v6490, 4
        %v6493 = vshll.u32 %v6381, 16
        %v6495 = vrot.slane %v6493, 5
        %v6496 = vor.u32 %v6492, %v6495
        %v6497 = vrot.slane %v6496, 4
        %v6499 = vshll.u32 %v6382, 16
        %v6501 = vrot.slane %v6499, 5
        %v6502 = vsel %vm1043, %v6497, %v6501
        %v6503 = vshrl.u32 %v6382, 16
        %v6505 = vrot.slane %v6503, 4
        %v6506 = vor.u32 %v6505, %v6501
        %v6507 = vrot.slane %v6506, 4
        %v6509 = vshll.u32 %v6427, 16
        %v6511 = vrot.slane %v6509, 5
        %v6512 = vsel %vm1043, %v6507, %v6511
        %v6514 = vshrl.u32 %v6383, 16
        %v6516 = vrot.slane %v6514, 4
        %v6517 = vshll.u32 %v6383, 16
        %v6519 = vrot.slane %v6517, 5
        %v6520 = vor.u32 %v6516, %v6519
        %v6521 = vrot.slane %v6520, 4
        %v6523 = vshll.u32 %v6384, 16
        %v6525 = vrot.slane %v6523, 5
        %v6526 = vsel %vm1043, %v6521, %v6525
        %v6527 = vshrl.u32 %v6384, 16
        %v6529 = vrot.slane %v6527, 4
        %v6530 = vor.u32 %v6529, %v6525
        %v6531 = vrot.slane %v6530, 4
        %v6533 = vshll.u32 %v6428, 16
        %v6535 = vrot.slane %v6533, 5
        %v6536 = vsel %vm1043, %v6531, %v6535
        %v6538 = vshrl.u32 %v6385, 16
        %v6540 = vrot.slane %v6538, 4
        %v6541 = vshll.u32 %v6385, 16
        %v6543 = vrot.slane %v6541, 5
        %v6544 = vor.u32 %v6540, %v6543
        %v6545 = vrot.slane %v6544, 4
        %v6547 = vshll.u32 %v6386, 16
        %v6549 = vrot.slane %v6547, 5
        %v6550 = vsel %vm1043, %v6545, %v6549
        %v6551 = vshrl.u32 %v6386, 16
        %v6553 = vrot.slane %v6551, 4
        %v6554 = vor.u32 %v6553, %v6549
        %v6555 = vrot.slane %v6554, 4
        %v6557 = vshll.u32 %v6429, 16
        %v6559 = vrot.slane %v6557, 5
        %v6560 = vsel %vm1043, %v6555, %v6559
        %v6562 = vshrl.u32 %v6387, 16
        %v6564 = vrot.slane %v6562, 4
        %v6565 = vshll.u32 %v6387, 16
        %v6567 = vrot.slane %v6565, 5
        %v6568 = vor.u32 %v6564, %v6567
        %v6569 = vrot.slane %v6568, 4
        %v6571 = vshll.u32 %v6388, 16
        %v6573 = vrot.slane %v6571, 5
        %v6574 = vsel %vm1043, %v6569, %v6573
        %v6575 = vshrl.u32 %v6388, 16
        %v6577 = vrot.slane %v6575, 4
        %v6578 = vor.u32 %v6577, %v6573
        %v6579 = vrot.slane %v6578, 4
        %v6581 = vshll.u32 %v6430, 16
        %v6583 = vrot.slane %v6581, 5
        %v6584 = vsel %vm1043, %v6579, %v6583
        %v6586 = vshrl.u32 %v6389, 16
        %v6588 = vrot.slane %v6586, 4
        %v6589 = vshll.u32 %v6389, 16
        %v6591 = vrot.slane %v6589, 5
        %v6592 = vor.u32 %v6588, %v6591
        %v6593 = vrot.slane %v6592, 4
        %v6595 = vshll.u32 %v6390, 16
        %v6597 = vrot.slane %v6595, 5
        %v6598 = vsel %vm1043, %v6593, %v6597
        %v6599 = vshrl.u32 %v6390, 16
        %v6601 = vrot.slane %v6599, 4
        %v6602 = vor.u32 %v6601, %v6597
        %v6603 = vrot.slane %v6602, 4
        %v6605 = vshll.u32 %v6431, 16
        %v6607 = vrot.slane %v6605, 5
        %v6608 = vsel %vm1043, %v6603, %v6607
        %v6610 = vshrl.u32 %v6391, 16
        %v6612 = vrot.slane %v6610, 4
        %v6613 = vshll.u32 %v6391, 16
        %v6615 = vrot.slane %v6613, 5
        %v6616 = vor.u32 %v6612, %v6615
        %v6617 = vrot.slane %v6616, 4
        %v6619 = vshll.u32 %v6392, 16
        %v6621 = vrot.slane %v6619, 5
        %v6622 = vsel %vm1043, %v6617, %v6621
        %v6623 = vshrl.u32 %v6392, 16
        %v6625 = vrot.slane %v6623, 4
        %v6626 = vor.u32 %v6625, %v6621
        %v6627 = vrot.slane %v6626, 4
        %v6629 = vshll.u32 %v6432, 16
        %v6631 = vrot.slane %v6629, 5
        %v6632 = vsel %vm1043, %v6627, %v6631
        %v6634 = vshrl.u32 %v6393, 16
        %v6636 = vrot.slane %v6634, 4
        %v6637 = vshll.u32 %v6393, 16
        %v6639 = vrot.slane %v6637, 5
        %v6640 = vor.u32 %v6636, %v6639
        %v6641 = vrot.slane %v6640, 4
        %v6643 = vshll.u32 %v6394, 16
        %v6645 = vrot.slane %v6643, 5
        %v6646 = vsel %vm1043, %v6641, %v6645
        %v6647 = vshrl.u32 %v6394, 16
        %v6649 = vrot.slane %v6647, 4
        %v6650 = vor.u32 %v6649, %v6645
        %v6651 = vrot.slane %v6650, 4
        %v6653 = vshll.u32 %v6433, 16
        %v6655 = vrot.slane %v6653, 5
        %v6656 = vsel %vm1043, %v6651, %v6655
        %v6658 = vshrl.u32 %v6395, 16
        %v6660 = vrot.slane %v6658, 4
        %v6661 = vshll.u32 %v6395, 16
        %v6663 = vrot.slane %v6661, 5
        %v6664 = vor.u32 %v6660, %v6663
        %v6665 = vrot.slane %v6664, 4
        %v6667 = vshll.u32 %v6396, 16
        %v6669 = vrot.slane %v6667, 5
        %v6670 = vsel %vm1043, %v6665, %v6669
        %v6671 = vshrl.u32 %v6396, 16
        %v6673 = vrot.slane %v6671, 4
        %v6674 = vor.u32 %v6673, %v6669
        %v6675 = vrot.slane %v6674, 4
        %v6677 = vshll.u32 %v6434, 16
        %v6679 = vrot.slane %v6677, 5
        %v6680 = vsel %vm1043, %v6675, %v6679
        %v6682 = vshrl.u32 %v6397, 16
        %v6684 = vrot.slane %v6682, 4
        %v6685 = vshll.u32 %v6397, 16
        %v6687 = vrot.slane %v6685, 5
        %v6688 = vor.u32 %v6684, %v6687
        %v6689 = vrot.slane %v6688, 4
        %v6691 = vshll.u32 %v6398, 16
        %v6693 = vrot.slane %v6691, 5
        %v6694 = vsel %vm1043, %v6689, %v6693
        %v6695 = vshrl.u32 %v6398, 16
        %v6697 = vrot.slane %v6695, 4
        %v6698 = vor.u32 %v6697, %v6693
        %v6699 = vrot.slane %v6698, 4
        %v6701 = vshll.u32 %v6435, 16
        %v6703 = vrot.slane %v6701, 5
        %v6704 = vsel %vm1043, %v6699, %v6703
        %v6706 = vshrl.u32 %v6399, 16
        %v6708 = vrot.slane %v6706, 4
        %v6709 = vshll.u32 %v6399, 16
        %v6711 = vrot.slane %v6709, 5
        %v6712 = vor.u32 %v6708, %v6711
        %v6713 = vrot.slane %v6712, 4
        %v6715 = vshll.u32 %v6400, 16
        %v6717 = vrot.slane %v6715, 5
        %v6718 = vsel %vm1043, %v6713, %v6717
        %v6719 = vshrl.u32 %v6400, 16
        %v6721 = vrot.slane %v6719, 4
        %v6722 = vor.u32 %v6721, %v6717
        %v6723 = vrot.slane %v6722, 4
        %v6725 = vshll.u32 %v6436, 16
        %v6727 = vrot.slane %v6725, 5
        %v6728 = vsel %vm1043, %v6723, %v6727
        %v6730 = vshrl.u32 %v6401, 16
        %v6732 = vrot.slane %v6730, 4
        %v6733 = vshll.u32 %v6401, 16
        %v6735 = vrot.slane %v6733, 5
        %v6736 = vor.u32 %v6732, %v6735
        %v6737 = vrot.slane %v6736, 4
        %v6739 = vshll.u32 %v6402, 16
        %v6741 = vrot.slane %v6739, 5
        %v6742 = vsel %vm1043, %v6737, %v6741
        %v6743 = vshrl.u32 %v6402, 16
        %v6745 = vrot.slane %v6743, 4
        %v6746 = vor.u32 %v6745, %v6741
        %v6747 = vrot.slane %v6746, 4
        %v6749 = vshll.u32 %v6437, 16
        %v6751 = vrot.slane %v6749, 5
        %v6752 = vsel %vm1043, %v6747, %v6751
        %v6754 = vshrl.u32 %v6403, 16
        %v6756 = vrot.slane %v6754, 4
        %v6757 = vshll.u32 %v6403, 16
        %v6759 = vrot.slane %v6757, 5
        %v6760 = vor.u32 %v6756, %v6759
        %v6761 = vrot.slane %v6760, 4
        %v6763 = vshll.u32 %v6404, 16
        %v6765 = vrot.slane %v6763, 5
        %v6766 = vsel %vm1043, %v6761, %v6765
        %v6767 = vshrl.u32 %v6404, 16
        %v6769 = vrot.slane %v6767, 4
        %v6770 = vor.u32 %v6769, %v6765
        %v6771 = vrot.slane %v6770, 4
        %v6773 = vshll.u32 %v6438, 16
        %v6775 = vrot.slane %v6773, 5
        %v6776 = vsel %vm1043, %v6771, %v6775
        %v6778 = vshrl.u32 %v6405, 16
        %v6780 = vrot.slane %v6778, 4
        %v6781 = vshll.u32 %v6405, 16
        %v6783 = vrot.slane %v6781, 5
        %v6784 = vor.u32 %v6780, %v6783
        %v6785 = vrot.slane %v6784, 4
        %v6787 = vshll.u32 %v6406, 16
        %v6789 = vrot.slane %v6787, 5
        %v6790 = vsel %vm1043, %v6785, %v6789
        %v6791 = vshrl.u32 %v6406, 16
        %v6793 = vrot.slane %v6791, 4
        %v6794 = vor.u32 %v6793, %v6789
        %v6795 = vrot.slane %v6794, 4
        %v6797 = vshll.u32 %v6439, 16
        %v6799 = vrot.slane %v6797, 5
        %v6800 = vsel %vm1043, %v6795, %v6799
        %v6802 = vshrl.u32 %v6407, 16
        %v6804 = vrot.slane %v6802, 4
        %v6805 = vshll.u32 %v6407, 16
        %v6807 = vrot.slane %v6805, 5
        %v6808 = vor.u32 %v6804, %v6807
        %v6809 = vrot.slane %v6808, 4
        %v6811 = vshll.u32 %v6408, 16
        %v6813 = vrot.slane %v6811, 5
        %v6814 = vsel %vm1043, %v6809, %v6813
        %v6815 = vshrl.u32 %v6408, 16
        %v6817 = vrot.slane %v6815, 4
        %v6818 = vor.u32 %v6817, %v6813
        %v6819 = vrot.slane %v6818, 4
        %v6821 = vshll.u32 %v6440, 16
        %v6823 = vrot.slane %v6821, 5
        %v6824 = vsel %vm1043, %v6819, %v6823
        %v6825 = vld [vmem:[#allocation9 + $0x40] sm:$0xf]
        %v6826 = vld [vmem:[#allocation9 + $0x44] sm:$0xf]
        %v6827 = vld [vmem:[#allocation9 + $0x48] sm:$0xf]
        %v6828 = vld [vmem:[#allocation9 + $0x4c] sm:$0xf]
        %v6829 = vld [vmem:[#allocation9 + $0x50] sm:$0xf]
        %v6830 = vld [vmem:[#allocation9 + $0x54] sm:$0xf]
        %v6831 = vld [vmem:[#allocation9 + $0x58] sm:$0xf]
        %v6832 = vld [vmem:[#allocation9 + $0x5c] sm:$0xf]
        %v6833 = vld [vmem:[#allocation9 + $0x60] sm:$0xf]
        %v6834 = vld [vmem:[#allocation9 + $0x64] sm:$0xf]
        %v6835 = vld [vmem:[#allocation9 + $0x68] sm:$0xf]
        %v6836 = vld [vmem:[#allocation9 + $0x6c] sm:$0xf]
        %v6837 = vld [vmem:[#allocation9 + $0x70] sm:$0xf]
        %v6838 = vld [vmem:[#allocation9 + $0x74] sm:$0xf]
        %v6839 = vld [vmem:[#allocation9 + $0x78] sm:$0xf]
        %v6840 = vld [vmem:[#allocation9 + $0x7c] sm:$0xf]
        %v6841 = vunpack.c.l.b16 %v6454
        %v6842 = vunpack.c.l.b16 %v6464
        %v6843 = vunpack.c.l.b16 %v6478
        %v6844 = vunpack.c.l.b16 %v6488
        %v6845 = vunpack.c.l.b16 %v6502
        %v6846 = vunpack.c.l.b16 %v6512
        %v6847 = vunpack.c.l.b16 %v6526
        %v6848 = vunpack.c.l.b16 %v6536
        %v6849 = vunpack.c.l.b16 %v6550
        %v6850 = vunpack.c.l.b16 %v6560
        %v6851 = vunpack.c.l.b16 %v6574
        %v6852 = vunpack.c.l.b16 %v6584
        %v6853 = vunpack.c.l.b16 %v6598
        %v6854 = vunpack.c.l.b16 %v6608
        %v6855 = vunpack.c.l.b16 %v6622
        %v6856 = vunpack.c.l.b16 %v6632
        %v6857 = vunpack.c.l.b16 %v6646
        %v6858 = vunpack.c.l.b16 %v6656
        %v6859 = vunpack.c.l.b16 %v6670
        %v6860 = vunpack.c.l.b16 %v6680
        %v6861 = vunpack.c.l.b16 %v6694
        %v6862 = vunpack.c.l.b16 %v6704
        %v6863 = vunpack.c.l.b16 %v6718
        %v6864 = vunpack.c.l.b16 %v6728
        %v6865 = vunpack.c.l.b16 %v6742
        %v6866 = vunpack.c.l.b16 %v6752
        %v6867 = vunpack.c.l.b16 %v6766
        %v6868 = vunpack.c.l.b16 %v6776
        %v6869 = vunpack.c.l.b16 %v6790
        %v6870 = vunpack.c.l.b16 %v6800
        %v6871 = vunpack.c.l.b16 %v6814
        %v6872 = vunpack.c.l.b16 %v6824
        %v6873 = vpack.c.b16 %v6842, %v6841
        %v6874 = vpack.c.b16 %v6844, %v6843
        %v6875 = vpack.c.b16 %v6846, %v6845
        %v6876 = vpack.c.b16 %v6848, %v6847
        %v6877 = vpack.c.b16 %v6850, %v6849
        %v6878 = vpack.c.b16 %v6852, %v6851
        %v6879 = vpack.c.b16 %v6854, %v6853
        %v6880 = vpack.c.b16 %v6856, %v6855
        %v6881 = vpack.c.b16 %v6858, %v6857
        %v6882 = vpack.c.b16 %v6860, %v6859
        %v6883 = vpack.c.b16 %v6862, %v6861
        %v6884 = vpack.c.b16 %v6864, %v6863
        %v6885 = vpack.c.b16 %v6866, %v6865
        %v6886 = vpack.c.b16 %v6868, %v6867
        %v6887 = vpack.c.b16 %v6870, %v6869
        %v6888 = vpack.c.b16 %v6872, %v6871
        %v6921 = vunpack.c.l.b16 %v6825
        %v6922 = vunpack.c.l.b16 %v6826
        %v6923 = vunpack.c.l.b16 %v6827
        %v6924 = vunpack.c.l.b16 %v6828
        %v6925 = vunpack.c.l.b16 %v6829
        %v6926 = vunpack.c.l.b16 %v6830
        %v6927 = vunpack.c.l.b16 %v6831
        %v6928 = vunpack.c.l.b16 %v6832
        %v6929 = vunpack.c.l.b16 %v6833
        %v6930 = vunpack.c.l.b16 %v6834
        %v6931 = vunpack.c.l.b16 %v6835
        %v6932 = vunpack.c.l.b16 %v6836
        %v6933 = vunpack.c.l.b16 %v6837
        %v6934 = vunpack.c.l.b16 %v6838
        %v6935 = vunpack.c.l.b16 %v6839
        %v6936 = vunpack.c.l.b16 %v6840
        %v6937 = vpack.c.b16 %v6922, %v6921
        %v6938 = vpack.c.b16 %v6924, %v6923
        %v6939 = vpack.c.b16 %v6926, %v6925
        %v6940 = vpack.c.b16 %v6928, %v6927
        %v6941 = vpack.c.b16 %v6930, %v6929
        %v6942 = vpack.c.b16 %v6932, %v6931
        %v6943 = vpack.c.b16 %v6934, %v6933
        %v6944 = vpack.c.b16 %v6936, %v6935
        %6953 = vmatprep.subr.bf16.mxu0 0
        %6954 = vmatpush1.bf16.msra.mxu0 %v6937
        %6955 = vmatprep.subr.bf16.mxu0 0
        %6956 = vmatpush1.bf16.msra.mxu0 %v6938
        %6957 = vmatprep.subr.bf16.mxu0 0
        %6958 = vmatpush1.bf16.msra.mxu0 %v6939
        %6959 = vmatprep.subr.bf16.mxu0 0
        %6960 = vmatpush1.bf16.msra.mxu0 %v6940
        %6961 = vmatprep.subr.bf16.mxu0 0
        %6962 = vmatpush1.bf16.msra.mxu0 %v6941
        %6963 = vmatprep.subr.bf16.mxu0 0
        %6964 = vmatpush1.bf16.msra.mxu0 %v6942
        %6965 = vmatprep.subr.bf16.mxu0 0
        %6966 = vmatpush1.bf16.msra.mxu0 %v6943
        %6967 = vmatprep.subr.bf16.mxu0 0
        %6968 = vmatpush1.bf16.msra.mxu0 %v6944
        %6969 = vmatprep.subr.bf16.mxu0 0
        %6970 = vmatpush1.bf16.msra.mxu0 0
        %6971 = vmatprep.subr.bf16.mxu0 0
        %6972 = vmatpush1.bf16.msra.mxu0 0
        %6973 = vmatprep.subr.bf16.mxu0 0
        %6974 = vmatpush1.bf16.msra.mxu0 0
        %6975 = vmatprep.subr.bf16.mxu0 0
        %6976 = vmatpush1.bf16.msra.mxu0 0
        %6977 = vmatprep.subr.bf16.mxu0 0
        %6978 = vmatpush1.bf16.msra.mxu0 0
        %6979 = vmatprep.subr.bf16.mxu0 0
        %6980 = vmatpush1.bf16.msra.mxu0 0
        %6981 = vmatprep.subr.bf16.mxu0 0
        %6982 = vmatpush1.bf16.msra.mxu0 0
        %6983 = vmatprep.subr.bf16.mxu0 0
        %6984 = vmatpush1.bf16.msra.mxu0 0
        %6985 = vmatprep.mubr.bf16.mxu0 0
        %6986 = vmatmul.mubr.bf16.gmra.mrb[0].mxu0 %v6873
        %v6987 = vpop.f32.mrb[0].mxu0
        %v6988 = vadd.f32 0.0, %v6987
        %v6989 = vpop.f32.mrb[0].mxu0
        %v6990 = vpop.f32.mrb[0].mxu0
        %v6991 = vadd.f32 0.0, %v6990
        %v6992 = vpop.f32.mrb[0].mxu0
        %6993 = vmatprep.mubr.bf16.mxu0 0
        %6994 = vmatmul.mubr.bf16.gmra.mrb[0].mxu0 %v6874
        %v6995 = vpop.f32.mrb[0].mxu0
        %v6996 = vadd.f32 0.0, %v6995
        %v6997 = vpop.f32.mrb[0].mxu0
        %v6998 = vpop.f32.mrb[0].mxu0
        %v6999 = vadd.f32 0.0, %v6998
        %v7000 = vpop.f32.mrb[0].mxu0
        %7001 = vmatprep.mubr.bf16.mxu0 0
        %7002 = vmatmul.mubr.bf16.gmra.mrb[0].mxu0 %v6875
        %v7003 = vpop.f32.mrb[0].mxu0
        %v7004 = vadd.f32 0.0, %v7003
        %v7005 = vpop.f32.mrb[0].mxu0
        %v7006 = vpop.f32.mrb[0].mxu0
        %v7007 = vadd.f32 0.0, %v7006
        %v7008 = vpop.f32.mrb[0].mxu0
        %7009 = vmatprep.mubr.bf16.mxu0 0
        %7010 = vmatmul.mubr.bf16.gmra.mrb[0].mxu0 %v6876
        %v7011 = vpop.f32.mrb[0].mxu0
        %v7012 = vadd.f32 0.0, %v7011
        %v7013 = vpop.f32.mrb[0].mxu0
        %v7014 = vpop.f32.mrb[0].mxu0
        %v7015 = vadd.f32 0.0, %v7014
        %v7016 = vpop.f32.mrb[0].mxu0
        %7017 = vmatprep.mubr.bf16.mxu0 0
        %7018 = vmatmul.mubr.bf16.gmra.mrb[0].mxu0 %v6877
        %v7019 = vpop.f32.mrb[0].mxu0
        %v7020 = vadd.f32 0.0, %v7019
        %v7021 = vpop.f32.mrb[0].mxu0
        %v7022 = vpop.f32.mrb[0].mxu0
        %v7023 = vadd.f32 0.0, %v7022
        %v7024 = vpop.f32.mrb[0].mxu0
        %7025 = vmatprep.mubr.bf16.mxu0 0
        %7026 = vmatmul.mubr.bf16.gmra.mrb[0].mxu0 %v6878
        %v7027 = vpop.f32.mrb[0].mxu0
        %v7028 = vadd.f32 0.0, %v7027
        %v7029 = vpop.f32.mrb[0].mxu0
        %v7030 = vpop.f32.mrb[0].mxu0
        %v7031 = vadd.f32 0.0, %v7030
        %v7032 = vpop.f32.mrb[0].mxu0
        %7033 = vmatprep.mubr.bf16.mxu0 0
        %7034 = vmatmul.mubr.bf16.gmra.mrb[0].mxu0 %v6879
        %v7035 = vpop.f32.mrb[0].mxu0
        %v7036 = vadd.f32 0.0, %v7035
        %v7037 = vpop.f32.mrb[0].mxu0
        %v7038 = vpop.f32.mrb[0].mxu0
        %v7039 = vadd.f32 0.0, %v7038
        %v7040 = vpop.f32.mrb[0].mxu0
        %7041 = vmatprep.mubr.bf16.mxu0 0
        %7042 = vmatmul.mubr.bf16.gmra.mrb[0].mxu0 %v6880
        %v7043 = vpop.f32.mrb[0].mxu0
        %v7044 = vadd.f32 0.0, %v7043
        %v7045 = vpop.f32.mrb[0].mxu0
        %v7046 = vpop.f32.mrb[0].mxu0
        %v7047 = vadd.f32 0.0, %v7046
        %v7048 = vpop.f32.mrb[0].mxu0
        %7049 = vmatprep.mubr.bf16.mxu0 0
        %7050 = vmatmul.mubr.bf16.gmra.mrb[0].mxu0 %v6881
        %v7051 = vpop.f32.mrb[0].mxu0
        %v7052 = vadd.f32 0.0, %v7051
        %v7053 = vpop.f32.mrb[0].mxu0
        %v7054 = vpop.f32.mrb[0].mxu0
        %v7055 = vadd.f32 0.0, %v7054
        %v7056 = vpop.f32.mrb[0].mxu0
        %7057 = vmatprep.mubr.bf16.mxu0 0
        %7058 = vmatmul.mubr.bf16.gmra.mrb[0].mxu0 %v6882
        %v7059 = vpop.f32.mrb[0].mxu0
        %v7060 = vadd.f32 0.0, %v7059
        %v7061 = vpop.f32.mrb[0].mxu0
        %v7062 = vpop.f32.mrb[0].mxu0
        %v7063 = vadd.f32 0.0, %v7062
        %v7064 = vpop.f32.mrb[0].mxu0
        %7065 = vmatprep.mubr.bf16.mxu0 0
        %7066 = vmatmul.mubr.bf16.gmra.mrb[0].mxu0 %v6883
        %v7067 = vpop.f32.mrb[0].mxu0
        %v7068 = vadd.f32 0.0, %v7067
        %v7069 = vpop.f32.mrb[0].mxu0
        %v7070 = vpop.f32.mrb[0].mxu0
        %v7071 = vadd.f32 0.0, %v7070
        %v7072 = vpop.f32.mrb[0].mxu0
        %7073 = vmatprep.mubr.bf16.mxu0 0
        %7074 = vmatmul.mubr.bf16.gmra.mrb[0].mxu0 %v6884
        %v7075 = vpop.f32.mrb[0].mxu0
        %v7076 = vadd.f32 0.0, %v7075
        %v7077 = vpop.f32.mrb[0].mxu0
        %v7078 = vpop.f32.mrb[0].mxu0
        %v7079 = vadd.f32 0.0, %v7078
        %v7080 = vpop.f32.mrb[0].mxu0
        %7081 = vmatprep.mubr.bf16.mxu0 0
        %7082 = vmatmul.mubr.bf16.gmra.mrb[0].mxu0 %v6885
        %v7083 = vpop.f32.mrb[0].mxu0
        %v7084 = vadd.f32 0.0, %v7083
        %v7085 = vpop.f32.mrb[0].mxu0
        %v7086 = vpop.f32.mrb[0].mxu0
        %v7087 = vadd.f32 0.0, %v7086
        %v7088 = vpop.f32.mrb[0].mxu0
        %7089 = vmatprep.mubr.bf16.mxu0 0
        %7090 = vmatmul.mubr.bf16.gmra.mrb[0].mxu0 %v6886
        %v7091 = vpop.f32.mrb[0].mxu0
        %v7092 = vadd.f32 0.0, %v7091
        %v7093 = vpop.f32.mrb[0].mxu0
        %v7094 = vpop.f32.mrb[0].mxu0
        %v7095 = vadd.f32 0.0, %v7094
        %v7096 = vpop.f32.mrb[0].mxu0
        %7097 = vmatprep.mubr.bf16.mxu0 0
        %7098 = vmatmul.mubr.bf16.gmra.mrb[0].mxu0 %v6887
        %v7099 = vpop.f32.mrb[0].mxu0
        %v7100 = vadd.f32 0.0, %v7099
        %v7101 = vpop.f32.mrb[0].mxu0
        %v7102 = vpop.f32.mrb[0].mxu0
        %v7103 = vadd.f32 0.0, %v7102
        %v7104 = vpop.f32.mrb[0].mxu0
        %7105 = vmatprep.mubr.bf16.mxu0 0
        %7106 = vmatmul.mubr.bf16.gmra.mrb[0].mxu0 %v6888
        %v7107 = vpop.f32.mrb[0].mxu0
        %v7108 = vadd.f32 0.0, %v7107
        %v7109 = vpop.f32.mrb[0].mxu0
        %v7110 = vpop.f32.mrb[0].mxu0
        %v7111 = vadd.f32 0.0, %v7110
        %v7112 = vpop.f32.mrb[0].mxu0
        %7113 = vdwg.mxu0
        %v7146 = vunpack.c.l.b16 %v6377
        %v7147 = vunpack.c.l.b16 %v6378
        %v7148 = vunpack.c.l.b16 %v6379
        %v7149 = vunpack.c.l.b16 %v6380
        %v7150 = vunpack.c.l.b16 %v6381
        %v7151 = vunpack.c.l.b16 %v6382
        %v7152 = vunpack.c.l.b16 %v6383
        %v7153 = vunpack.c.l.b16 %v6384
        %v7154 = vunpack.c.l.b16 %v6385
        %v7155 = vunpack.c.l.b16 %v6386
        %v7156 = vunpack.c.l.b16 %v6387
        %v7157 = vunpack.c.l.b16 %v6388
        %v7158 = vunpack.c.l.b16 %v6389
        %v7159 = vunpack.c.l.b16 %v6390
        %v7160 = vunpack.c.l.b16 %v6391
        %v7161 = vunpack.c.l.b16 %v6392
        %v7162 = vunpack.c.l.b16 %v6393
        %v7163 = vunpack.c.l.b16 %v6394
        %v7164 = vunpack.c.l.b16 %v6395
        %v7165 = vunpack.c.l.b16 %v6396
        %v7166 = vunpack.c.l.b16 %v6397
        %v7167 = vunpack.c.l.b16 %v6398
        %v7168 = vunpack.c.l.b16 %v6399
        %v7169 = vunpack.c.l.b16 %v6400
        %v7170 = vunpack.c.l.b16 %v6401
        %v7171 = vunpack.c.l.b16 %v6402
        %v7172 = vunpack.c.l.b16 %v6403
        %v7173 = vunpack.c.l.b16 %v6404
        %v7174 = vunpack.c.l.b16 %v6405
        %v7175 = vunpack.c.l.b16 %v6406
        %v7176 = vunpack.c.l.b16 %v6407
        %v7177 = vunpack.c.l.b16 %v6408
        %v7178 = vpack.c.b16 %v7147, %v7146
        %v7179 = vpack.c.b16 %v7149, %v7148
        %v7180 = vpack.c.b16 %v7151, %v7150
        %v7181 = vpack.c.b16 %v7153, %v7152
        %v7182 = vpack.c.b16 %v7155, %v7154
        %v7183 = vpack.c.b16 %v7157, %v7156
        %v7184 = vpack.c.b16 %v7159, %v7158
        %v7185 = vpack.c.b16 %v7161, %v7160
        %v7186 = vpack.c.b16 %v7163, %v7162
        %v7187 = vpack.c.b16 %v7165, %v7164
        %v7188 = vpack.c.b16 %v7167, %v7166
        %v7189 = vpack.c.b16 %v7169, %v7168
        %v7190 = vpack.c.b16 %v7171, %v7170
        %v7191 = vpack.c.b16 %v7173, %v7172
        %v7192 = vpack.c.b16 %v7175, %v7174
        %v7193 = vpack.c.b16 %v7177, %v7176
        %v7226 = vunpack.c.l.b16 %v6409
        %v7227 = vunpack.c.l.b16 %v6410
        %v7228 = vunpack.c.l.b16 %v6411
        %v7229 = vunpack.c.l.b16 %v6412
        %v7230 = vunpack.c.l.b16 %v6413
        %v7231 = vunpack.c.l.b16 %v6414
        %v7232 = vunpack.c.l.b16 %v6415
        %v7233 = vunpack.c.l.b16 %v6416
        %v7234 = vunpack.c.l.b16 %v6417
        %v7235 = vunpack.c.l.b16 %v6418
        %v7236 = vunpack.c.l.b16 %v6419
        %v7237 = vunpack.c.l.b16 %v6420
        %v7238 = vunpack.c.l.b16 %v6421
        %v7239 = vunpack.c.l.b16 %v6422
        %v7240 = vunpack.c.l.b16 %v6423
        %v7241 = vunpack.c.l.b16 %v6424
        %v7242 = vpack.c.b16 %v7227, %v7226
        %v7243 = vpack.c.b16 %v7229, %v7228
        %v7244 = vpack.c.b16 %v7231, %v7230
        %v7245 = vpack.c.b16 %v7233, %v7232
        %v7246 = vpack.c.b16 %v7235, %v7234
        %v7247 = vpack.c.b16 %v7237, %v7236
        %v7248 = vpack.c.b16 %v7239, %v7238
        %v7249 = vpack.c.b16 %v7241, %v7240
        %7258 = vmatprep.subr.bf16.mxu0 0
        %7259 = vmatpush1.bf16.msra.mxu0 %v7242
        %7260 = vmatprep.subr.bf16.mxu0 0
        %7261 = vmatpush1.bf16.msra.mxu0 %v7243
        %7262 = vmatprep.subr.bf16.mxu0 0
        %7263 = vmatpush1.bf16.msra.mxu0 %v7244
        %7264 = vmatprep.subr.bf16.mxu0 0
        %7265 = vmatpush1.bf16.msra.mxu0 %v7245
        %7266 = vmatprep.subr.bf16.mxu0 0
        %7267 = vmatpush1.bf16.msra.mxu0 %v7246
        %7268 = vmatprep.subr.bf16.mxu0 0
        %7269 = vmatpush1.bf16.msra.mxu0 %v7247
        %7270 = vmatprep.subr.bf16.mxu0 0
        %7271 = vmatpush1.bf16.msra.mxu0 %v7248
        %7272 = vmatprep.subr.bf16.mxu0 0
        %7273 = vmatpush1.bf16.msra.mxu0 %v7249
        %7274 = vmatprep.subr.bf16.mxu0 0
        %7275 = vmatpush1.bf16.msra.mxu0 0
        %7276 = vmatprep.subr.bf16.mxu0 0
        %7277 = vmatpush1.bf16.msra.mxu0 0
        %7278 = vmatprep.subr.bf16.mxu0 0
        %7279 = vmatpush1.bf16.msra.mxu0 0
        %7280 = vmatprep.subr.bf16.mxu0 0
        %7281 = vmatpush1.bf16.msra.mxu0 0
        %7282 = vmatprep.subr.bf16.mxu0 0
        %7283 = vmatpush1.bf16.msra.mxu0 0
        %7284 = vmatprep.subr.bf16.mxu0 0
        %7285 = vmatpush1.bf16.msra.mxu0 0
        %7286 = vmatprep.subr.bf16.mxu0 0
        %7287 = vmatpush1.bf16.msra.mxu0 0
        %7288 = vmatprep.subr.bf16.mxu0 0
        %7289 = vmatpush1.bf16.msra.mxu0 0
        %7290 = vmatprep.mubr.bf16.mxu0 0
        %7291 = vmatmul.mubr.bf16.gmra.mrb[0].mxu0 %v7178
        %v7292 = vpop.f32.mrb[0].mxu0
        %v7293 = vadd.f32 %v6988, %v7292
        %v7294 = vpop.f32.mrb[0].mxu0
        %v7295 = vpop.f32.mrb[0].mxu0
        %v7296 = vadd.f32 %v6991, %v7295
        %v7297 = vpop.f32.mrb[0].mxu0
        %7298 = vmatprep.mubr.bf16.mxu0 0
        %7299 = vmatmul.mubr.bf16.gmra.mrb[0].mxu0 %v7179
        %v7300 = vpop.f32.mrb[0].mxu0
        %v7301 = vadd.f32 %v6996, %v7300
        %v7302 = vpop.f32.mrb[0].mxu0
        %v7303 = vpop.f32.mrb[0].mxu0
        %v7304 = vadd.f32 %v6999, %v7303
        %v7305 = vpop.f32.mrb[0].mxu0
        %7306 = vmatprep.mubr.bf16.mxu0 0
        %7307 = vmatmul.mubr.bf16.gmra.mrb[0].mxu0 %v7180
        %v7308 = vpop.f32.mrb[0].mxu0
        %v7309 = vadd.f32 %v7004, %v7308
        %v7310 = vpop.f32.mrb[0].mxu0
        %v7311 = vpop.f32.mrb[0].mxu0
        %v7312 = vadd.f32 %v7007, %v7311
        %v7313 = vpop.f32.mrb[0].mxu0
        %7314 = vmatprep.mubr.bf16.mxu0 0
        %7315 = vmatmul.mubr.bf16.gmra.mrb[0].mxu0 %v7181
        %v7316 = vpop.f32.mrb[0].mxu0
        %v7317 = vadd.f32 %v7012, %v7316
        %v7318 = vpop.f32.mrb[0].mxu0
        %v7319 = vpop.f32.mrb[0].mxu0
        %v7320 = vadd.f32 %v7015, %v7319
        %v7321 = vpop.f32.mrb[0].mxu0
        %7322 = vmatprep.mubr.bf16.mxu0 0
        %7323 = vmatmul.mubr.bf16.gmra.mrb[0].mxu0 %v7182
        %v7324 = vpop.f32.mrb[0].mxu0
        %v7325 = vadd.f32 %v7020, %v7324
        %v7326 = vpop.f32.mrb[0].mxu0
        %v7327 = vpop.f32.mrb[0].mxu0
        %v7328 = vadd.f32 %v7023, %v7327
        %v7329 = vpop.f32.mrb[0].mxu0
        %7330 = vmatprep.mubr.bf16.mxu0 0
        %7331 = vmatmul.mubr.bf16.gmra.mrb[0].mxu0 %v7183
        %v7332 = vpop.f32.mrb[0].mxu0
        %v7333 = vadd.f32 %v7028, %v7332
        %v7334 = vpop.f32.mrb[0].mxu0
        %v7335 = vpop.f32.mrb[0].mxu0
        %v7336 = vadd.f32 %v7031, %v7335
        %v7337 = vpop.f32.mrb[0].mxu0
        %7338 = vmatprep.mubr.bf16.mxu0 0
        %7339 = vmatmul.mubr.bf16.gmra.mrb[0].mxu0 %v7184
        %v7340 = vpop.f32.mrb[0].mxu0
        %v7341 = vadd.f32 %v7036, %v7340
        %v7342 = vpop.f32.mrb[0].mxu0
        %v7343 = vpop.f32.mrb[0].mxu0
        %v7344 = vadd.f32 %v7039, %v7343
        %v7345 = vpop.f32.mrb[0].mxu0
        %7346 = vmatprep.mubr.bf16.mxu0 0
        %7347 = vmatmul.mubr.bf16.gmra.mrb[0].mxu0 %v7185
        %v7348 = vpop.f32.mrb[0].mxu0
        %v7349 = vadd.f32 %v7044, %v7348
        %v7350 = vpop.f32.mrb[0].mxu0
        %v7351 = vpop.f32.mrb[0].mxu0
        %v7352 = vadd.f32 %v7047, %v7351
        %v7353 = vpop.f32.mrb[0].mxu0
        %7354 = vmatprep.mubr.bf16.mxu0 0
        %7355 = vmatmul.mubr.bf16.gmra.mrb[0].mxu0 %v7186
        %v7356 = vpop.f32.mrb[0].mxu0
        %v7357 = vadd.f32 %v7052, %v7356
        %v7358 = vpop.f32.mrb[0].mxu0
        %v7359 = vpop.f32.mrb[0].mxu0
        %v7360 = vadd.f32 %v7055, %v7359
        %v7361 = vpop.f32.mrb[0].mxu0
        %7362 = vmatprep.mubr.bf16.mxu0 0
        %7363 = vmatmul.mubr.bf16.gmra.mrb[0].mxu0 %v7187
        %v7364 = vpop.f32.mrb[0].mxu0
        %v7365 = vadd.f32 %v7060, %v7364
        %v7366 = vpop.f32.mrb[0].mxu0
        %v7367 = vpop.f32.mrb[0].mxu0
        %v7368 = vadd.f32 %v7063, %v7367
        %v7369 = vpop.f32.mrb[0].mxu0
        %7370 = vmatprep.mubr.bf16.mxu0 0
        %7371 = vmatmul.mubr.bf16.gmra.mrb[0].mxu0 %v7188
        %v7372 = vpop.f32.mrb[0].mxu0
        %v7373 = vadd.f32 %v7068, %v7372
        %v7374 = vpop.f32.mrb[0].mxu0
        %v7375 = vpop.f32.mrb[0].mxu0
        %v7376 = vadd.f32 %v7071, %v7375
        %v7377 = vpop.f32.mrb[0].mxu0
        %7378 = vmatprep.mubr.bf16.mxu0 0
        %7379 = vmatmul.mubr.bf16.gmra.mrb[0].mxu0 %v7189
        %v7380 = vpop.f32.mrb[0].mxu0
        %v7381 = vadd.f32 %v7076, %v7380
        %v7382 = vpop.f32.mrb[0].mxu0
        %v7383 = vpop.f32.mrb[0].mxu0
        %v7384 = vadd.f32 %v7079, %v7383
        %v7385 = vpop.f32.mrb[0].mxu0
        %7386 = vmatprep.mubr.bf16.mxu0 0
        %7387 = vmatmul.mubr.bf16.gmra.mrb[0].mxu0 %v7190
        %v7388 = vpop.f32.mrb[0].mxu0
        %v7389 = vadd.f32 %v7084, %v7388
        %v7390 = vpop.f32.mrb[0].mxu0
        %v7391 = vpop.f32.mrb[0].mxu0
        %v7392 = vadd.f32 %v7087, %v7391
        %v7393 = vpop.f32.mrb[0].mxu0
        %7394 = vmatprep.mubr.bf16.mxu0 0
        %7395 = vmatmul.mubr.bf16.gmra.mrb[0].mxu0 %v7191
        %v7396 = vpop.f32.mrb[0].mxu0
        %v7397 = vadd.f32 %v7092, %v7396
        %v7398 = vpop.f32.mrb[0].mxu0
        %v7399 = vpop.f32.mrb[0].mxu0
        %v7400 = vadd.f32 %v7095, %v7399
        %v7401 = vpop.f32.mrb[0].mxu0
        %7402 = vmatprep.mubr.bf16.mxu0 0
        %7403 = vmatmul.mubr.bf16.gmra.mrb[0].mxu0 %v7192
        %v7404 = vpop.f32.mrb[0].mxu0
        %v7405 = vadd.f32 %v7100, %v7404
        %v7406 = vpop.f32.mrb[0].mxu0
        %v7407 = vpop.f32.mrb[0].mxu0
        %v7408 = vadd.f32 %v7103, %v7407
        %v7409 = vpop.f32.mrb[0].mxu0
        %7410 = vmatprep.mubr.bf16.mxu0 0
        %7411 = vmatmul.mubr.bf16.gmra.mrb[0].mxu0 %v7193
        %v7412 = vpop.f32.mrb[0].mxu0
        %v7413 = vadd.f32 %v7108, %v7412
        %v7414 = vpop.f32.mrb[0].mxu0
        %v7415 = vpop.f32.mrb[0].mxu0
        %v7416 = vadd.f32 %v7111, %v7415
        %v7417 = vpop.f32.mrb[0].mxu0
        %7418 = vdwg.mxu0
        %v7419 = vld [vmem:[#allocation3] sm:$0xe]
        %v7420 = vld [vmem:[#allocation3 + $0xc] sm:$0xe]
        %v7421 = vld [vmem:[#allocation3 + $0x18] sm:$0xe]
        %v7422 = vld [vmem:[#allocation3 + $0x24] sm:$0xe]
        %v7423 = vld [vmem:[#allocation3 + $0x30] sm:$0xe]
        %v7424 = vld [vmem:[#allocation3 + $0x3c] sm:$0xe]
        %v7425 = vld [vmem:[#allocation3 + $0x48] sm:$0xe]
        %v7426 = vld [vmem:[#allocation3 + $0x54] sm:$0xe]
        %v7427 = vld [vmem:[#allocation3 + $0x60] sm:$0xe]
        %v7428 = vld [vmem:[#allocation3 + $0x6c] sm:$0xe]
        %v7429 = vld [vmem:[#allocation3 + $0x78] sm:$0xe]
        %v7430 = vld [vmem:[#allocation3 + $0x84] sm:$0xe]
        %v7431 = vld [vmem:[#allocation3 + $0x90] sm:$0xe]
        %v7432 = vld [vmem:[#allocation3 + $0x9c] sm:$0xe]
        %v7433 = vld [vmem:[#allocation3 + $0xa8] sm:$0xe]
        %v7434 = vld [vmem:[#allocation3 + $0xb4] sm:$0xe]
        %v7467 = vrot.slane %v7419, 5
        %v7468 = vrot.slane %v7467, 4
        %v7469 = vrot.slane %v6378, 5
        %v7470 = vsel %vm2072, %v7468, %v7469
        %v7471 = vrot.slane %v7469, 4
        %v7472 = vrot.slane %v6425, 5
        %v7473 = vsel %vm2072, %v7471, %v7472
        %v7474 = vrot.slane %v7420, 5
        %v7475 = vrot.slane %v7474, 4
        %v7476 = vrot.slane %v6380, 5
        %v7477 = vsel %vm2072, %v7475, %v7476
        %v7478 = vrot.slane %v7476, 4
        %v7479 = vrot.slane %v6426, 5
        %v7480 = vsel %vm2072, %v7478, %v7479
        %v7481 = vrot.slane %v7421, 5
        %v7482 = vrot.slane %v7481, 4
        %v7483 = vrot.slane %v6382, 5
        %v7484 = vsel %vm2072, %v7482, %v7483
        %v7485 = vrot.slane %v7483, 4
        %v7486 = vrot.slane %v6427, 5
        %v7487 = vsel %vm2072, %v7485, %v7486
        %v7488 = vrot.slane %v7422, 5
        %v7489 = vrot.slane %v7488, 4
        %v7490 = vrot.slane %v6384, 5
        %v7491 = vsel %vm2072, %v7489, %v7490
        %v7492 = vrot.slane %v7490, 4
        %v7493 = vrot.slane %v6428, 5
        %v7494 = vsel %vm2072, %v7492, %v7493
        %v7495 = vrot.slane %v7423, 5
        %v7496 = vrot.slane %v7495, 4
        %v7497 = vrot.slane %v6386, 5
        %v7498 = vsel %vm2072, %v7496, %v7497
        %v7499 = vrot.slane %v7497, 4
        %v7500 = vrot.slane %v6429, 5
        %v7501 = vsel %vm2072, %v7499, %v7500
        %v7502 = vrot.slane %v7424, 5
        %v7503 = vrot.slane %v7502, 4
        %v7504 = vrot.slane %v6388, 5
        %v7505 = vsel %vm2072, %v7503, %v7504
        %v7506 = vrot.slane %v7504, 4
        %v7507 = vrot.slane %v6430, 5
        %v7508 = vsel %vm2072, %v7506, %v7507
        %v7509 = vrot.slane %v7425, 5
        %v7510 = vrot.slane %v7509, 4
        %v7511 = vrot.slane %v6390, 5
        %v7512 = vsel %vm2072, %v7510, %v7511
        %v7513 = vrot.slane %v7511, 4
        %v7514 = vrot.slane %v6431, 5
        %v7515 = vsel %vm2072, %v7513, %v7514
        %v7516 = vrot.slane %v7426, 5
        %v7517 = vrot.slane %v7516, 4
        %v7518 = vrot.slane %v6392, 5
        %v7519 = vsel %vm2072, %v7517, %v7518
        %v7520 = vrot.slane %v7518, 4
        %v7521 = vrot.slane %v6432, 5
        %v7522 = vsel %vm2072, %v7520, %v7521
        %v7523 = vrot.slane %v7427, 5
        %v7524 = vrot.slane %v7523, 4
        %v7525 = vrot.slane %v6394, 5
        %v7526 = vsel %vm2072, %v7524, %v7525
        %v7527 = vrot.slane %v7525, 4
        %v7528 = vrot.slane %v6433, 5
        %v7529 = vsel %vm2072, %v7527, %v7528
        %v7530 = vrot.slane %v7428, 5
        %v7531 = vrot.slane %v7530, 4
        %v7532 = vrot.slane %v6396, 5
        %v7533 = vsel %vm2072, %v7531, %v7532
        %v7534 = vrot.slane %v7532, 4
        %v7535 = vrot.slane %v6434, 5
        %v7536 = vsel %vm2072, %v7534, %v7535
        %v7537 = vrot.slane %v7429, 5
        %v7538 = vrot.slane %v7537, 4
        %v7539 = vrot.slane %v6398, 5
        %v7540 = vsel %vm2072, %v7538, %v7539
        %v7541 = vrot.slane %v7539, 4
        %v7542 = vrot.slane %v6435, 5
        %v7543 = vsel %vm2072, %v7541, %v7542
        %v7544 = vrot.slane %v7430, 5
        %v7545 = vrot.slane %v7544, 4
        %v7546 = vrot.slane %v6400, 5
        %v7547 = vsel %vm2072, %v7545, %v7546
        %v7548 = vrot.slane %v7546, 4
        %v7549 = vrot.slane %v6436, 5
        %v7550 = vsel %vm2072, %v7548, %v7549
        %v7551 = vrot.slane %v7431, 5
        %v7552 = vrot.slane %v7551, 4
        %v7553 = vrot.slane %v6402, 5
        %v7554 = vsel %vm2072, %v7552, %v7553
        %v7555 = vrot.slane %v7553, 4
        %v7556 = vrot.slane %v6437, 5
        %v7557 = vsel %vm2072, %v7555, %v7556
        %v7558 = vrot.slane %v7432, 5
        %v7559 = vrot.slane %v7558, 4
        %v7560 = vrot.slane %v6404, 5
        %v7561 = vsel %vm2072, %v7559, %v7560
        %v7562 = vrot.slane %v7560, 4
        %v7563 = vrot.slane %v6438, 5
        %v7564 = vsel %vm2072, %v7562, %v7563
        %v7565 = vrot.slane %v7433, 5
        %v7566 = vrot.slane %v7565, 4
        %v7567 = vrot.slane %v6406, 5
        %v7568 = vsel %vm2072, %v7566, %v7567
        %v7569 = vrot.slane %v7567, 4
        %v7570 = vrot.slane %v6439, 5
        %v7571 = vsel %vm2072, %v7569, %v7570
        %v7572 = vrot.slane %v7434, 5
        %v7573 = vrot.slane %v7572, 4
        %v7574 = vrot.slane %v6408, 5
        %v7575 = vsel %vm2072, %v7573, %v7574
        %v7576 = vrot.slane %v7574, 4
        %v7577 = vrot.slane %v6440, 5
        %v7578 = vsel %vm2072, %v7576, %v7577
        %v7579 = vld [vmem:[#allocation9 + $0x80] sm:$0xf]
        %v7580 = vld [vmem:[#allocation9 + $0x84] sm:$0xf]
        %v7581 = vld [vmem:[#allocation9 + $0x88] sm:$0xf]
        %v7582 = vld [vmem:[#allocation9 + $0x8c] sm:$0xf]
        %v7583 = vld [vmem:[#allocation9 + $0x90] sm:$0xf]
        %v7584 = vld [vmem:[#allocation9 + $0x94] sm:$0xf]
        %v7585 = vld [vmem:[#allocation9 + $0x98] sm:$0xf]
        %v7586 = vld [vmem:[#allocation9 + $0x9c] sm:$0xf]
        %v7587 = vld [vmem:[#allocation9 + $0xa0] sm:$0xf]
        %v7588 = vld [vmem:[#allocation9 + $0xa4] sm:$0xf]
        %v7589 = vld [vmem:[#allocation9 + $0xa8] sm:$0xf]
        %v7590 = vld [vmem:[#allocation9 + $0xac] sm:$0xf]
        %v7591 = vld [vmem:[#allocation9 + $0xb0] sm:$0xf]
        %v7592 = vld [vmem:[#allocation9 + $0xb4] sm:$0xf]
        %v7593 = vld [vmem:[#allocation9 + $0xb8] sm:$0xf]
        %v7594 = vld [vmem:[#allocation9 + $0xbc] sm:$0xf]
        %v7595 = vunpack.c.l.b16 %v7470
        %v7596 = vunpack.c.l.b16 %v7473
        %v7597 = vunpack.c.l.b16 %v7477
        %v7598 = vunpack.c.l.b16 %v7480
        %v7599 = vunpack.c.l.b16 %v7484
        %v7600 = vunpack.c.l.b16 %v7487
        %v7601 = vunpack.c.l.b16 %v7491
        %v7602 = vunpack.c.l.b16 %v7494
        %v7603 = vunpack.c.l.b16 %v7498
        %v7604 = vunpack.c.l.b16 %v7501
        %v7605 = vunpack.c.l.b16 %v7505
        %v7606 = vunpack.c.l.b16 %v7508
        %v7607 = vunpack.c.l.b16 %v7512
        %v7608 = vunpack.c.l.b16 %v7515
        %v7609 = vunpack.c.l.b16 %v7519
        %v7610 = vunpack.c.l.b16 %v7522
        %v7611 = vunpack.c.l.b16 %v7526
        %v7612 = vunpack.c.l.b16 %v7529
        %v7613 = vunpack.c.l.b16 %v7533
        %v7614 = vunpack.c.l.b16 %v7536
        %v7615 = vunpack.c.l.b16 %v7540
        %v7616 = vunpack.c.l.b16 %v7543
        %v7617 = vunpack.c.l.b16 %v7547
        %v7618 = vunpack.c.l.b16 %v7550
        %v7619 = vunpack.c.l.b16 %v7554
        %v7620 = vunpack.c.l.b16 %v7557
        %v7621 = vunpack.c.l.b16 %v7561
        %v7622 = vunpack.c.l.b16 %v7564
        %v7623 = vunpack.c.l.b16 %v7568
        %v7624 = vunpack.c.l.b16 %v7571
        %v7625 = vunpack.c.l.b16 %v7575
        %v7626 = vunpack.c.l.b16 %v7578
        %v7627 = vpack.c.b16 %v7596, %v7595
        %v7628 = vpack.c.b16 %v7598, %v7597
        %v7629 = vpack.c.b16 %v7600, %v7599
        %v7630 = vpack.c.b16 %v7602, %v7601
        %v7631 = vpack.c.b16 %v7604, %v7603
        %v7632 = vpack.c.b16 %v7606, %v7605
        %v7633 = vpack.c.b16 %v7608, %v7607
        %v7634 = vpack.c.b16 %v7610, %v7609
        %v7635 = vpack.c.b16 %v7612, %v7611
        %v7636 = vpack.c.b16 %v7614, %v7613
        %v7637 = vpack.c.b16 %v7616, %v7615
        %v7638 = vpack.c.b16 %v7618, %v7617
        %v7639 = vpack.c.b16 %v7620, %v7619
        %v7640 = vpack.c.b16 %v7622, %v7621
        %v7641 = vpack.c.b16 %v7624, %v7623
        %v7642 = vpack.c.b16 %v7626, %v7625
        %v7675 = vunpack.c.l.b16 %v7579
        %v7676 = vunpack.c.l.b16 %v7580
        %v7677 = vunpack.c.l.b16 %v7581
        %v7678 = vunpack.c.l.b16 %v7582
        %v7679 = vunpack.c.l.b16 %v7583
        %v7680 = vunpack.c.l.b16 %v7584
        %v7681 = vunpack.c.l.b16 %v7585
        %v7682 = vunpack.c.l.b16 %v7586
        %v7683 = vunpack.c.l.b16 %v7587
        %v7684 = vunpack.c.l.b16 %v7588
        %v7685 = vunpack.c.l.b16 %v7589
        %v7686 = vunpack.c.l.b16 %v7590
        %v7687 = vunpack.c.l.b16 %v7591
        %v7688 = vunpack.c.l.b16 %v7592
        %v7689 = vunpack.c.l.b16 %v7593
        %v7690 = vunpack.c.l.b16 %v7594
        %v7691 = vpack.c.b16 %v7676, %v7675
        %v7692 = vpack.c.b16 %v7678, %v7677
        %v7693 = vpack.c.b16 %v7680, %v7679
        %v7694 = vpack.c.b16 %v7682, %v7681
        %v7695 = vpack.c.b16 %v7684, %v7683
        %v7696 = vpack.c.b16 %v7686, %v7685
        %v7697 = vpack.c.b16 %v7688, %v7687
        %v7698 = vpack.c.b16 %v7690, %v7689
        %7707 = vmatprep.subr.bf16.mxu0 0
        %7708 = vmatpush1.bf16.msra.mxu0 %v7691
        %7709 = vmatprep.subr.bf16.mxu0 0
        %7710 = vmatpush1.bf16.msra.mxu0 %v7692
        %7711 = vmatprep.subr.bf16.mxu0 0
        %7712 = vmatpush1.bf16.msra.mxu0 %v7693
        %7713 = vmatprep.subr.bf16.mxu0 0
        %7714 = vmatpush1.bf16.msra.mxu0 %v7694
        %7715 = vmatprep.subr.bf16.mxu0 0
        %7716 = vmatpush1.bf16.msra.mxu0 %v7695
        %7717 = vmatprep.subr.bf16.mxu0 0
        %7718 = vmatpush1.bf16.msra.mxu0 %v7696
        %7719 = vmatprep.subr.bf16.mxu0 0
        %7720 = vmatpush1.bf16.msra.mxu0 %v7697
        %7721 = vmatprep.subr.bf16.mxu0 0
        %7722 = vmatpush1.bf16.msra.mxu0 %v7698
        %7723 = vmatprep.subr.bf16.mxu0 0
        %7724 = vmatpush1.bf16.msra.mxu0 0
        %7725 = vmatprep.subr.bf16.mxu0 0
        %7726 = vmatpush1.bf16.msra.mxu0 0
        %7727 = vmatprep.subr.bf16.mxu0 0
        %7728 = vmatpush1.bf16.msra.mxu0 0
        %7729 = vmatprep.subr.bf16.mxu0 0
        %7730 = vmatpush1.bf16.msra.mxu0 0
        %7731 = vmatprep.subr.bf16.mxu0 0
        %7732 = vmatpush1.bf16.msra.mxu0 0
        %7733 = vmatprep.subr.bf16.mxu0 0
        %7734 = vmatpush1.bf16.msra.mxu0 0
        %7735 = vmatprep.subr.bf16.mxu0 0
        %7736 = vmatpush1.bf16.msra.mxu0 0
        %7737 = vmatprep.subr.bf16.mxu0 0
        %7738 = vmatpush1.bf16.msra.mxu0 0
        %7739 = vmatprep.mubr.bf16.mxu0 0
        %7740 = vmatmul.mubr.bf16.gmra.mrb[0].mxu0 %v7627
        %v7741 = vpop.f32.mrb[0].mxu0
        %v7742 = vadd.f32 0.0, %v7741
        %v7743 = vpop.f32.mrb[0].mxu0
        %v7744 = vpop.f32.mrb[0].mxu0
        %v7745 = vadd.f32 0.0, %v7744
        %v7746 = vpop.f32.mrb[0].mxu0
        %7747 = vmatprep.mubr.bf16.mxu0 0
        %7748 = vmatmul.mubr.bf16.gmra.mrb[0].mxu0 %v7628
        %v7749 = vpop.f32.mrb[0].mxu0
        %v7750 = vadd.f32 0.0, %v7749
        %v7751 = vpop.f32.mrb[0].mxu0
        %v7752 = vpop.f32.mrb[0].mxu0
        %v7753 = vadd.f32 0.0, %v7752
        %v7754 = vpop.f32.mrb[0].mxu0
        %7755 = vmatprep.mubr.bf16.mxu0 0
        %7756 = vmatmul.mubr.bf16.gmra.mrb[0].mxu0 %v7629
        %v7757 = vpop.f32.mrb[0].mxu0
        %v7758 = vadd.f32 0.0, %v7757
        %v7759 = vpop.f32.mrb[0].mxu0
        %v7760 = vpop.f32.mrb[0].mxu0
        %v7761 = vadd.f32 0.0, %v7760
        %v7762 = vpop.f32.mrb[0].mxu0
        %7763 = vmatprep.mubr.bf16.mxu0 0
        %7764 = vmatmul.mubr.bf16.gmra.mrb[0].mxu0 %v7630
        %v7765 = vpop.f32.mrb[0].mxu0
        %v7766 = vadd.f32 0.0, %v7765
        %v7767 = vpop.f32.mrb[0].mxu0
        %v7768 = vpop.f32.mrb[0].mxu0
        %v7769 = vadd.f32 0.0, %v7768
        %v7770 = vpop.f32.mrb[0].mxu0
        %7771 = vmatprep.mubr.bf16.mxu0 0
        %7772 = vmatmul.mubr.bf16.gmra.mrb[0].mxu0 %v7631
        %v7773 = vpop.f32.mrb[0].mxu0
        %v7774 = vadd.f32 0.0, %v7773
        %v7775 = vpop.f32.mrb[0].mxu0
        %v7776 = vpop.f32.mrb[0].mxu0
        %v7777 = vadd.f32 0.0, %v7776
        %v7778 = vpop.f32.mrb[0].mxu0
        %7779 = vmatprep.mubr.bf16.mxu0 0
        %7780 = vmatmul.mubr.bf16.gmra.mrb[0].mxu0 %v7632
        %v7781 = vpop.f32.mrb[0].mxu0
        %v7782 = vadd.f32 0.0, %v7781
        %v7783 = vpop.f32.mrb[0].mxu0
        %v7784 = vpop.f32.mrb[0].mxu0
        %v7785 = vadd.f32 0.0, %v7784
        %v7786 = vpop.f32.mrb[0].mxu0
        %7787 = vmatprep.mubr.bf16.mxu0 0
        %7788 = vmatmul.mubr.bf16.gmra.mrb[0].mxu0 %v7633
        %v7789 = vpop.f32.mrb[0].mxu0
        %v7790 = vadd.f32 0.0, %v7789
        %v7791 = vpop.f32.mrb[0].mxu0
        %v7792 = vpop.f32.mrb[0].mxu0
        %v7793 = vadd.f32 0.0, %v7792
        %v7794 = vpop.f32.mrb[0].mxu0
        %7795 = vmatprep.mubr.bf16.mxu0 0
        %7796 = vmatmul.mubr.bf16.gmra.mrb[0].mxu0 %v7634
        %v7797 = vpop.f32.mrb[0].mxu0
        %v7798 = vadd.f32 0.0, %v7797
        %v7799 = vpop.f32.mrb[0].mxu0
        %v7800 = vpop.f32.mrb[0].mxu0
        %v7801 = vadd.f32 0.0, %v7800
        %v7802 = vpop.f32.mrb[0].mxu0
        %7803 = vmatprep.mubr.bf16.mxu0 0
        %7804 = vmatmul.mubr.bf16.gmra.mrb[0].mxu0 %v7635
        %v7805 = vpop.f32.mrb[0].mxu0
        %v7806 = vadd.f32 0.0, %v7805
        %v7807 = vpop.f32.mrb[0].mxu0
        %v7808 = vpop.f32.mrb[0].mxu0
        %v7809 = vadd.f32 0.0, %v7808
        %v7810 = vpop.f32.mrb[0].mxu0
        %7811 = vmatprep.mubr.bf16.mxu0 0
        %7812 = vmatmul.mubr.bf16.gmra.mrb[0].mxu0 %v7636
        %v7813 = vpop.f32.mrb[0].mxu0
        %v7814 = vadd.f32 0.0, %v7813
        %v7815 = vpop.f32.mrb[0].mxu0
        %v7816 = vpop.f32.mrb[0].mxu0
        %v7817 = vadd.f32 0.0, %v7816
        %v7818 = vpop.f32.mrb[0].mxu0
        %7819 = vmatprep.mubr.bf16.mxu0 0
        %7820 = vmatmul.mubr.bf16.gmra.mrb[0].mxu0 %v7637
        %v7821 = vpop.f32.mrb[0].mxu0
        %v7822 = vadd.f32 0.0, %v7821
        %v7823 = vpop.f32.mrb[0].mxu0
        %v7824 = vpop.f32.mrb[0].mxu0
        %v7825 = vadd.f32 0.0, %v7824
        %v7826 = vpop.f32.mrb[0].mxu0
        %7827 = vmatprep.mubr.bf16.mxu0 0
        %7828 = vmatmul.mubr.bf16.gmra.mrb[0].mxu0 %v7638
        %v7829 = vpop.f32.mrb[0].mxu0
        %v7830 = vadd.f32 0.0, %v7829
        %v7831 = vpop.f32.mrb[0].mxu0
        %v7832 = vpop.f32.mrb[0].mxu0
        %v7833 = vadd.f32 0.0, %v7832
        %v7834 = vpop.f32.mrb[0].mxu0
        %7835 = vmatprep.mubr.bf16.mxu0 0
        %7836 = vmatmul.mubr.bf16.gmra.mrb[0].mxu0 %v7639
        %v7837 = vpop.f32.mrb[0].mxu0
        %v7838 = vadd.f32 0.0, %v7837
        %v7839 = vpop.f32.mrb[0].mxu0
        %v7840 = vpop.f32.mrb[0].mxu0
        %v7841 = vadd.f32 0.0, %v7840
        %v7842 = vpop.f32.mrb[0].mxu0
        %7843 = vmatprep.mubr.bf16.mxu0 0
        %7844 = vmatmul.mubr.bf16.gmra.mrb[0].mxu0 %v7640
        %v7845 = vpop.f32.mrb[0].mxu0
        %v7846 = vadd.f32 0.0, %v7845
        %v7847 = vpop.f32.mrb[0].mxu0
        %v7848 = vpop.f32.mrb[0].mxu0
        %v7849 = vadd.f32 0.0, %v7848
        %v7850 = vpop.f32.mrb[0].mxu0
        %7851 = vmatprep.mubr.bf16.mxu0 0
        %7852 = vmatmul.mubr.bf16.gmra.mrb[0].mxu0 %v7641
        %v7853 = vpop.f32.mrb[0].mxu0
        %v7854 = vadd.f32 0.0, %v7853
        %v7855 = vpop.f32.mrb[0].mxu0
        %v7856 = vpop.f32.mrb[0].mxu0
        %v7857 = vadd.f32 0.0, %v7856
        %v7858 = vpop.f32.mrb[0].mxu0
        %7859 = vmatprep.mubr.bf16.mxu0 0
        %7860 = vmatmul.mubr.bf16.gmra.mrb[0].mxu0 %v7642
        %v7861 = vpop.f32.mrb[0].mxu0
        %v7862 = vadd.f32 0.0, %v7861
        %v7863 = vpop.f32.mrb[0].mxu0
        %v7864 = vpop.f32.mrb[0].mxu0
        %v7865 = vadd.f32 0.0, %v7864
        %v7866 = vpop.f32.mrb[0].mxu0
        %7867 = vdwg.mxu0
        %v7868 = vadd.f32 %v7293, %v7742
        %v7869 = vadd.f32 %v7296, %v7745
        %v7870 = vadd.f32 %v7301, %v7750
        %v7871 = vadd.f32 %v7304, %v7753
        %v7872 = vadd.f32 %v7309, %v7758
        %v7873 = vadd.f32 %v7312, %v7761
        %v7874 = vadd.f32 %v7317, %v7766
        %v7875 = vadd.f32 %v7320, %v7769
        %v7876 = vadd.f32 %v7325, %v7774
        %v7877 = vadd.f32 %v7328, %v7777
        %v7878 = vadd.f32 %v7333, %v7782
        %v7879 = vadd.f32 %v7336, %v7785
        %v7880 = vadd.f32 %v7341, %v7790
        %v7881 = vadd.f32 %v7344, %v7793
        %v7882 = vadd.f32 %v7349, %v7798
        %v7883 = vadd.f32 %v7352, %v7801
        %v7884 = vadd.f32 %v7357, %v7806
        %v7885 = vadd.f32 %v7360, %v7809
        %v7886 = vadd.f32 %v7365, %v7814
        %v7887 = vadd.f32 %v7368, %v7817
        %v7888 = vadd.f32 %v7373, %v7822
        %v7889 = vadd.f32 %v7376, %v7825
        %v7890 = vadd.f32 %v7381, %v7830
        %v7891 = vadd.f32 %v7384, %v7833
        %v7892 = vadd.f32 %v7389, %v7838
        %v7893 = vadd.f32 %v7392, %v7841
        %v7894 = vadd.f32 %v7397, %v7846
        %v7895 = vadd.f32 %v7400, %v7849
        %v7896 = vadd.f32 %v7405, %v7854
        %v7897 = vadd.f32 %v7408, %v7857
        %v7898 = vadd.f32 %v7413, %v7862
        %v7899 = vadd.f32 %v7416, %v7865
        %v7900 = vld [vmem:[%s6264] sm:$0xf]
        %v7901 = vld [vmem:[%s6264 + $0x4] sm:$0xf]
        %v7902 = vld [vmem:[%s6264 + $0xc] sm:$0xf]
        %v7903 = vld [vmem:[%s6264 + $0x10] sm:$0xf]
        %v7904 = vld [vmem:[%s6264 + $0x18] sm:$0xf]
        %v7905 = vld [vmem:[%s6264 + $0x1c] sm:$0xf]
        %v7906 = vld [vmem:[%s6264 + $0x24] sm:$0xf]
        %v7907 = vld [vmem:[%s6264 + $0x28] sm:$0xf]
        %v7908 = vld [vmem:[%s6264 + $0x30] sm:$0xf]
        %v7909 = vld [vmem:[%s6264 + $0x34] sm:$0xf]
        %v7910 = vld [vmem:[%s6264 + $0x3c] sm:$0xf]
        %v7911 = vld [vmem:[%s6264 + $0x40] sm:$0xf]
        %v7912 = vld [vmem:[%s6264 + $0x48] sm:$0xf]
        %v7913 = vld [vmem:[%s6264 + $0x4c] sm:$0xf]
        %v7914 = vld [vmem:[%s6264 + $0x54] sm:$0xf]
        %v7915 = vld [vmem:[%s6264 + $0x58] sm:$0xf]
        %v7916 = vld [vmem:[%s6264 + $0x60] sm:$0xf]
        %v7917 = vld [vmem:[%s6264 + $0x64] sm:$0xf]
        %v7918 = vld [vmem:[%s6264 + $0x6c] sm:$0xf]
        %v7919 = vld [vmem:[%s6264 + $0x70] sm:$0xf]
        %v7920 = vld [vmem:[%s6264 + $0x78] sm:$0xf]
        %v7921 = vld [vmem:[%s6264 + $0x7c] sm:$0xf]
        %v7922 = vld [vmem:[%s6264 + $0x84] sm:$0xf]
        %v7923 = vld [vmem:[%s6264 + $0x88] sm:$0xf]
        %v7924 = vld [vmem:[%s6264 + $0x90] sm:$0xf]
        %v7925 = vld [vmem:[%s6264 + $0x94] sm:$0xf]
        %v7926 = vld [vmem:[%s6264 + $0x9c] sm:$0xf]
        %v7927 = vld [vmem:[%s6264 + $0xa0] sm:$0xf]
        %v7928 = vld [vmem:[%s6264 + $0xa8] sm:$0xf]
        %v7929 = vld [vmem:[%s6264 + $0xac] sm:$0xf]
        %v7930 = vld [vmem:[%s6264 + $0xb4] sm:$0xf]
        %v7931 = vld [vmem:[%s6264 + $0xb8] sm:$0xf]
        %v7932 = vld [vmem:[#allocation9 + $0xc0] sm:$0xf]
        %v7933 = vld [vmem:[#allocation9 + $0xc4] sm:$0xf]
        %v7934 = vld [vmem:[#allocation9 + $0xc8] sm:$0xf]
        %v7935 = vld [vmem:[#allocation9 + $0xcc] sm:$0xf]
        %v7936 = vld [vmem:[#allocation9 + $0xd0] sm:$0xf]
        %v7937 = vld [vmem:[#allocation9 + $0xd4] sm:$0xf]
        %v7938 = vld [vmem:[#allocation9 + $0xd8] sm:$0xf]
        %v7939 = vld [vmem:[#allocation9 + $0xdc] sm:$0xf]
        %v7940 = vld [vmem:[#allocation9 + $0xe0] sm:$0xf]
        %v7941 = vld [vmem:[#allocation9 + $0xe4] sm:$0xf]
        %v7942 = vld [vmem:[#allocation9 + $0xe8] sm:$0xf]
        %v7943 = vld [vmem:[#allocation9 + $0xec] sm:$0xf]
        %v7944 = vld [vmem:[#allocation9 + $0xf0] sm:$0xf]
        %v7945 = vld [vmem:[#allocation9 + $0xf4] sm:$0xf]
        %v7946 = vld [vmem:[#allocation9 + $0xf8] sm:$0xf]
        %v7947 = vld [vmem:[#allocation9 + $0xfc] sm:$0xf]
        %v7980 = vunpack.c.l.b16 %v7900
        %v7981 = vunpack.c.l.b16 %v7901
        %v7982 = vunpack.c.l.b16 %v7902
        %v7983 = vunpack.c.l.b16 %v7903
        %v7984 = vunpack.c.l.b16 %v7904
        %v7985 = vunpack.c.l.b16 %v7905
        %v7986 = vunpack.c.l.b16 %v7906
        %v7987 = vunpack.c.l.b16 %v7907
        %v7988 = vunpack.c.l.b16 %v7908
        %v7989 = vunpack.c.l.b16 %v7909
        %v7990 = vunpack.c.l.b16 %v7910
        %v7991 = vunpack.c.l.b16 %v7911
        %v7992 = vunpack.c.l.b16 %v7912
        %v7993 = vunpack.c.l.b16 %v7913
        %v7994 = vunpack.c.l.b16 %v7914
        %v7995 = vunpack.c.l.b16 %v7915
        %v7996 = vunpack.c.l.b16 %v7916
        %v7997 = vunpack.c.l.b16 %v7917
        %v7998 = vunpack.c.l.b16 %v7918
        %v7999 = vunpack.c.l.b16 %v7919
        %v8000 = vunpack.c.l.b16 %v7920
        %v8001 = vunpack.c.l.b16 %v7921
        %v8002 = vunpack.c.l.b16 %v7922
        %v8003 = vunpack.c.l.b16 %v7923
        %v8004 = vunpack.c.l.b16 %v7924
        %v8005 = vunpack.c.l.b16 %v7925
        %v8006 = vunpack.c.l.b16 %v7926
        %v8007 = vunpack.c.l.b16 %v7927
        %v8008 = vunpack.c.l.b16 %v7928
        %v8009 = vunpack.c.l.b16 %v7929
        %v8010 = vunpack.c.l.b16 %v7930
        %v8011 = vunpack.c.l.b16 %v7931
        %v8012 = vpack.c.b16 %v7981, %v7980
        %v8013 = vpack.c.b16 %v7983, %v7982
        %v8014 = vpack.c.b16 %v7985, %v7984
        %v8015 = vpack.c.b16 %v7987, %v7986
        %v8016 = vpack.c.b16 %v7989, %v7988
        %v8017 = vpack.c.b16 %v7991, %v7990
        %v8018 = vpack.c.b16 %v7993, %v7992
        %v8019 = vpack.c.b16 %v7995, %v7994
        %v8020 = vpack.c.b16 %v7997, %v7996
        %v8021 = vpack.c.b16 %v7999, %v7998
        %v8022 = vpack.c.b16 %v8001, %v8000
        %v8023 = vpack.c.b16 %v8003, %v8002
        %v8024 = vpack.c.b16 %v8005, %v8004
        %v8025 = vpack.c.b16 %v8007, %v8006
        %v8026 = vpack.c.b16 %v8009, %v8008
        %v8027 = vpack.c.b16 %v8011, %v8010
        %v8060 = vunpack.c.l.b16 %v7932
        %v8061 = vunpack.c.l.b16 %v7933
        %v8062 = vunpack.c.l.b16 %v7934
        %v8063 = vunpack.c.l.b16 %v7935
        %v8064 = vunpack.c.l.b16 %v7936
        %v8065 = vunpack.c.l.b16 %v7937
        %v8066 = vunpack.c.l.b16 %v7938
        %v8067 = vunpack.c.l.b16 %v7939
        %v8068 = vunpack.c.l.b16 %v7940
        %v8069 = vunpack.c.l.b16 %v7941
        %v8070 = vunpack.c.l.b16 %v7942
        %v8071 = vunpack.c.l.b16 %v7943
        %v8072 = vunpack.c.l.b16 %v7944
        %v8073 = vunpack.c.l.b16 %v7945
        %v8074 = vunpack.c.l.b16 %v7946
        %v8075 = vunpack.c.l.b16 %v7947
        %v8076 = vpack.c.b16 %v8061, %v8060
        %v8077 = vpack.c.b16 %v8063, %v8062
        %v8078 = vpack.c.b16 %v8065, %v8064
        %v8079 = vpack.c.b16 %v8067, %v8066
        %v8080 = vpack.c.b16 %v8069, %v8068
        %v8081 = vpack.c.b16 %v8071, %v8070
        %v8082 = vpack.c.b16 %v8073, %v8072
        %v8083 = vpack.c.b16 %v8075, %v8074
        %8092 = vmatprep.subr.bf16.mxu0 0
        %8093 = vmatpush1.bf16.msra.mxu0 %v8076
        %8094 = vmatprep.subr.bf16.mxu0 0
        %8095 = vmatpush1.bf16.msra.mxu0 %v8077
        %8096 = vmatprep.subr.bf16.mxu0 0
        %8097 = vmatpush1.bf16.msra.mxu0 %v8078
        %8098 = vmatprep.subr.bf16.mxu0 0
        %8099 = vmatpush1.bf16.msra.mxu0 %v8079
        %8100 = vmatprep.subr.bf16.mxu0 0
        %8101 = vmatpush1.bf16.msra.mxu0 %v8080
        %8102 = vmatprep.subr.bf16.mxu0 0
        %8103 = vmatpush1.bf16.msra.mxu0 %v8081
        %8104 = vmatprep.subr.bf16.mxu0 0
        %8105 = vmatpush1.bf16.msra.mxu0 %v8082
        %8106 = vmatprep.subr.bf16.mxu0 0
        %8107 = vmatpush1.bf16.msra.mxu0 %v8083
        %8108 = vmatprep.subr.bf16.mxu0 0
        %8109 = vmatpush1.bf16.msra.mxu0 0
        %8110 = vmatprep.subr.bf16.mxu0 0
        %8111 = vmatpush1.bf16.msra.mxu0 0
        %8112 = vmatprep.subr.bf16.mxu0 0
        %8113 = vmatpush1.bf16.msra.mxu0 0
        %8114 = vmatprep.subr.bf16.mxu0 0
        %8115 = vmatpush1.bf16.msra.mxu0 0
        %8116 = vmatprep.subr.bf16.mxu0 0
        %8117 = vmatpush1.bf16.msra.mxu0 0
        %8118 = vmatprep.subr.bf16.mxu0 0
        %8119 = vmatpush1.bf16.msra.mxu0 0
        %8120 = vmatprep.subr.bf16.mxu0 0
        %8121 = vmatpush1.bf16.msra.mxu0 0
        %8122 = vmatprep.subr.bf16.mxu0 0
        %8123 = vmatpush1.bf16.msra.mxu0 0
        %8124 = vmatprep.mubr.bf16.mxu0 0
        %8125 = vmatmul.mubr.bf16.gmra.mrb[0].mxu0 %v8012
        %v8126 = vpop.f32.mrb[0].mxu0
        %v8127 = vadd.f32 0.0, %v8126
        %v8128 = vpop.f32.mrb[0].mxu0
        %v8129 = vpop.f32.mrb[0].mxu0
        %v8130 = vadd.f32 0.0, %v8129
        %v8131 = vpop.f32.mrb[0].mxu0
        %8132 = vmatprep.mubr.bf16.mxu0 0
        %8133 = vmatmul.mubr.bf16.gmra.mrb[0].mxu0 %v8013
        %v8134 = vpop.f32.mrb[0].mxu0
        %v8135 = vadd.f32 0.0, %v8134
        %v8136 = vpop.f32.mrb[0].mxu0
        %v8137 = vpop.f32.mrb[0].mxu0
        %v8138 = vadd.f32 0.0, %v8137
        %v8139 = vpop.f32.mrb[0].mxu0
        %8140 = vmatprep.mubr.bf16.mxu0 0
        %8141 = vmatmul.mubr.bf16.gmra.mrb[0].mxu0 %v8014
        %v8142 = vpop.f32.mrb[0].mxu0
        %v8143 = vadd.f32 0.0, %v8142
        %v8144 = vpop.f32.mrb[0].mxu0
        %v8145 = vpop.f32.mrb[0].mxu0
        %v8146 = vadd.f32 0.0, %v8145
        %v8147 = vpop.f32.mrb[0].mxu0
        %8148 = vmatprep.mubr.bf16.mxu0 0
        %8149 = vmatmul.mubr.bf16.gmra.mrb[0].mxu0 %v8015
        %v8150 = vpop.f32.mrb[0].mxu0
        %v8151 = vadd.f32 0.0, %v8150
        %v8152 = vpop.f32.mrb[0].mxu0
        %v8153 = vpop.f32.mrb[0].mxu0
        %v8154 = vadd.f32 0.0, %v8153
        %v8155 = vpop.f32.mrb[0].mxu0
        %8156 = vmatprep.mubr.bf16.mxu0 0
        %8157 = vmatmul.mubr.bf16.gmra.mrb[0].mxu0 %v8016
        %v8158 = vpop.f32.mrb[0].mxu0
        %v8159 = vadd.f32 0.0, %v8158
        %v8160 = vpop.f32.mrb[0].mxu0
        %v8161 = vpop.f32.mrb[0].mxu0
        %v8162 = vadd.f32 0.0, %v8161
        %v8163 = vpop.f32.mrb[0].mxu0
        %8164 = vmatprep.mubr.bf16.mxu0 0
        %8165 = vmatmul.mubr.bf16.gmra.mrb[0].mxu0 %v8017
        %v8166 = vpop.f32.mrb[0].mxu0
        %v8167 = vadd.f32 0.0, %v8166
        %v8168 = vpop.f32.mrb[0].mxu0
        %v8169 = vpop.f32.mrb[0].mxu0
        %v8170 = vadd.f32 0.0, %v8169
        %v8171 = vpop.f32.mrb[0].mxu0
        %8172 = vmatprep.mubr.bf16.mxu0 0
        %8173 = vmatmul.mubr.bf16.gmra.mrb[0].mxu0 %v8018
        %v8174 = vpop.f32.mrb[0].mxu0
        %v8175 = vadd.f32 0.0, %v8174
        %v8176 = vpop.f32.mrb[0].mxu0
        %v8177 = vpop.f32.mrb[0].mxu0
        %v8178 = vadd.f32 0.0, %v8177
        %v8179 = vpop.f32.mrb[0].mxu0
        %8180 = vmatprep.mubr.bf16.mxu0 0
        %8181 = vmatmul.mubr.bf16.gmra.mrb[0].mxu0 %v8019
        %v8182 = vpop.f32.mrb[0].mxu0
        %v8183 = vadd.f32 0.0, %v8182
        %v8184 = vpop.f32.mrb[0].mxu0
        %v8185 = vpop.f32.mrb[0].mxu0
        %v8186 = vadd.f32 0.0, %v8185
        %v8187 = vpop.f32.mrb[0].mxu0
        %8188 = vmatprep.mubr.bf16.mxu0 0
        %8189 = vmatmul.mubr.bf16.gmra.mrb[0].mxu0 %v8020
        %v8190 = vpop.f32.mrb[0].mxu0
        %v8191 = vadd.f32 0.0, %v8190
        %v8192 = vpop.f32.mrb[0].mxu0
        %v8193 = vpop.f32.mrb[0].mxu0
        %v8194 = vadd.f32 0.0, %v8193
        %v8195 = vpop.f32.mrb[0].mxu0
        %8196 = vmatprep.mubr.bf16.mxu0 0
        %8197 = vmatmul.mubr.bf16.gmra.mrb[0].mxu0 %v8021
        %v8198 = vpop.f32.mrb[0].mxu0
        %v8199 = vadd.f32 0.0, %v8198
        %v8200 = vpop.f32.mrb[0].mxu0
        %v8201 = vpop.f32.mrb[0].mxu0
        %v8202 = vadd.f32 0.0, %v8201
        %v8203 = vpop.f32.mrb[0].mxu0
        %8204 = vmatprep.mubr.bf16.mxu0 0
        %8205 = vmatmul.mubr.bf16.gmra.mrb[0].mxu0 %v8022
        %v8206 = vpop.f32.mrb[0].mxu0
        %v8207 = vadd.f32 0.0, %v8206
        %v8208 = vpop.f32.mrb[0].mxu0
        %v8209 = vpop.f32.mrb[0].mxu0
        %v8210 = vadd.f32 0.0, %v8209
        %v8211 = vpop.f32.mrb[0].mxu0
        %8212 = vmatprep.mubr.bf16.mxu0 0
        %8213 = vmatmul.mubr.bf16.gmra.mrb[0].mxu0 %v8023
        %v8214 = vpop.f32.mrb[0].mxu0
        %v8215 = vadd.f32 0.0, %v8214
        %v8216 = vpop.f32.mrb[0].mxu0
        %v8217 = vpop.f32.mrb[0].mxu0
        %v8218 = vadd.f32 0.0, %v8217
        %v8219 = vpop.f32.mrb[0].mxu0
        %8220 = vmatprep.mubr.bf16.mxu0 0
        %8221 = vmatmul.mubr.bf16.gmra.mrb[0].mxu0 %v8024
        %v8222 = vpop.f32.mrb[0].mxu0
        %v8223 = vadd.f32 0.0, %v8222
        %v8224 = vpop.f32.mrb[0].mxu0
        %v8225 = vpop.f32.mrb[0].mxu0
        %v8226 = vadd.f32 0.0, %v8225
        %v8227 = vpop.f32.mrb[0].mxu0
        %8228 = vmatprep.mubr.bf16.mxu0 0
        %8229 = vmatmul.mubr.bf16.gmra.mrb[0].mxu0 %v8025
        %v8230 = vpop.f32.mrb[0].mxu0
        %v8231 = vadd.f32 0.0, %v8230
        %v8232 = vpop.f32.mrb[0].mxu0
        %v8233 = vpop.f32.mrb[0].mxu0
        %v8234 = vadd.f32 0.0, %v8233
        %v8235 = vpop.f32.mrb[0].mxu0
        %8236 = vmatprep.mubr.bf16.mxu0 0
        %8237 = vmatmul.mubr.bf16.gmra.mrb[0].mxu0 %v8026
        %v8238 = vpop.f32.mrb[0].mxu0
        %v8239 = vadd.f32 0.0, %v8238
        %v8240 = vpop.f32.mrb[0].mxu0
        %v8241 = vpop.f32.mrb[0].mxu0
        %v8242 = vadd.f32 0.0, %v8241
        %v8243 = vpop.f32.mrb[0].mxu0
        %8244 = vmatprep.mubr.bf16.mxu0 0
        %8245 = vmatmul.mubr.bf16.gmra.mrb[0].mxu0 %v8027
        %v8246 = vpop.f32.mrb[0].mxu0
        %v8247 = vadd.f32 0.0, %v8246
        %v8248 = vpop.f32.mrb[0].mxu0
        %v8249 = vpop.f32.mrb[0].mxu0
        %v8250 = vadd.f32 0.0, %v8249
        %v8251 = vpop.f32.mrb[0].mxu0
        %8252 = vdwg.mxu0
        %v8253 = vadd.f32 %v7868, %v8127
        %v8254 = vadd.f32 %v7869, %v8130
        %v8255 = vadd.f32 %v7870, %v8135
        %v8256 = vadd.f32 %v7871, %v8138
        %v8257 = vadd.f32 %v7872, %v8143
        %v8258 = vadd.f32 %v7873, %v8146
        %v8259 = vadd.f32 %v7874, %v8151
        %v8260 = vadd.f32 %v7875, %v8154
        %v8261 = vadd.f32 %v7876, %v8159
        %v8262 = vadd.f32 %v7877, %v8162
        %v8263 = vadd.f32 %v7878, %v8167
        %v8264 = vadd.f32 %v7879, %v8170
        %v8265 = vadd.f32 %v7880, %v8175
        %v8266 = vadd.f32 %v7881, %v8178
        %v8267 = vadd.f32 %v7882, %v8183
        %v8268 = vadd.f32 %v7883, %v8186
        %v8269 = vadd.f32 %v7884, %v8191
        %v8270 = vadd.f32 %v7885, %v8194
        %v8271 = vadd.f32 %v7886, %v8199
        %v8272 = vadd.f32 %v7887, %v8202
        %v8273 = vadd.f32 %v7888, %v8207
        %v8274 = vadd.f32 %v7889, %v8210
        %v8275 = vadd.f32 %v7890, %v8215
        %v8276 = vadd.f32 %v7891, %v8218
        %v8277 = vadd.f32 %v7892, %v8223
        %v8278 = vadd.f32 %v7893, %v8226
        %v8279 = vadd.f32 %v7894, %v8231
        %v8280 = vadd.f32 %v7895, %v8234
        %v8281 = vadd.f32 %v7896, %v8239
        %v8282 = vadd.f32 %v7897, %v8242
        %v8283 = vadd.f32 %v7898, %v8247
        %v8284 = vadd.f32 %v7899, %v8250
        %v8285 = vld [vmem:[%s6264] sm:$0xf]
        %v8286 = vld [vmem:[%s6264 + $0x4] sm:$0xf]
        %v8287 = vld [vmem:[%s6264 + $0x8] sm:$0x1]
        %v8288 = vld [vmem:[%s6264 + $0xc] sm:$0xf]
        %v8289 = vld [vmem:[%s6264 + $0x10] sm:$0xf]
        %v8290 = vld [vmem:[%s6264 + $0x14] sm:$0x1]
        %v8291 = vld [vmem:[%s6264 + $0x18] sm:$0xf]
        %v8292 = vld [vmem:[%s6264 + $0x1c] sm:$0xf]
        %v8293 = vld [vmem:[%s6264 + $0x20] sm:$0x1]
        %v8294 = vld [vmem:[%s6264 + $0x24] sm:$0xf]
        %v8295 = vld [vmem:[%s6264 + $0x28] sm:$0xf]
        %v8296 = vld [vmem:[%s6264 + $0x2c] sm:$0x1]
        %v8297 = vld [vmem:[%s6264 + $0x30] sm:$0xf]
        %v8298 = vld [vmem:[%s6264 + $0x34] sm:$0xf]
        %v8299 = vld [vmem:[%s6264 + $0x38] sm:$0x1]
        %v8300 = vld [vmem:[%s6264 + $0x3c] sm:$0xf]
        %v8301 = vld [vmem:[%s6264 + $0x40] sm:$0xf]
        %v8302 = vld [vmem:[%s6264 + $0x44] sm:$0x1]
        %v8303 = vld [vmem:[%s6264 + $0x48] sm:$0xf]
        %v8304 = vld [vmem:[%s6264 + $0x4c] sm:$0xf]
        %v8305 = vld [vmem:[%s6264 + $0x50] sm:$0x1]
        %v8306 = vld [vmem:[%s6264 + $0x54] sm:$0xf]
        %v8307 = vld [vmem:[%s6264 + $0x58] sm:$0xf]
        %v8308 = vld [vmem:[%s6264 + $0x5c] sm:$0x1]
        %v8309 = vld [vmem:[%s6264 + $0x60] sm:$0xf]
        %v8310 = vld [vmem:[%s6264 + $0x64] sm:$0xf]
        %v8311 = vld [vmem:[%s6264 + $0x68] sm:$0x1]
        %v8312 = vld [vmem:[%s6264 + $0x6c] sm:$0xf]
        %v8313 = vld [vmem:[%s6264 + $0x70] sm:$0xf]
        %v8314 = vld [vmem:[%s6264 + $0x74] sm:$0x1]
        %v8315 = vld [vmem:[%s6264 + $0x78] sm:$0xf]
        %v8316 = vld [vmem:[%s6264 + $0x7c] sm:$0xf]
        %v8317 = vld [vmem:[%s6264 + $0x80] sm:$0x1]
        %v8318 = vld [vmem:[%s6264 + $0x84] sm:$0xf]
        %v8319 = vld [vmem:[%s6264 + $0x88] sm:$0xf]
        %v8320 = vld [vmem:[%s6264 + $0x8c] sm:$0x1]
        %v8321 = vld [vmem:[%s6264 + $0x90] sm:$0xf]
        %v8322 = vld [vmem:[%s6264 + $0x94] sm:$0xf]
        %v8323 = vld [vmem:[%s6264 + $0x98] sm:$0x1]
        %v8324 = vld [vmem:[%s6264 + $0x9c] sm:$0xf]
        %v8325 = vld [vmem:[%s6264 + $0xa0] sm:$0xf]
        %v8326 = vld [vmem:[%s6264 + $0xa4] sm:$0x1]
        %v8327 = vld [vmem:[%s6264 + $0xa8] sm:$0xf]
        %v8328 = vld [vmem:[%s6264 + $0xac] sm:$0xf]
        %v8329 = vld [vmem:[%s6264 + $0xb0] sm:$0x1]
        %v8330 = vld [vmem:[%s6264 + $0xb4] sm:$0xf]
        %v8331 = vld [vmem:[%s6264 + $0xb8] sm:$0xf]
        %v8332 = vld [vmem:[%s6264 + $0xbc] sm:$0x1]
        %v8334 = vshrl.u32 %v8285, 16
        %v8336 = vrot.slane %v8334, 4
        %v8337 = vshll.u32 %v8285, 16
        %v8339 = vrot.slane %v8337, 5
        %v8340 = vor.u32 %v8336, %v8339
        %v8341 = vrot.slane %v8340, 4
        %v8343 = vshll.u32 %v8286, 16
        %v8345 = vrot.slane %v8343, 5
        %v8346 = vsel %vm1043, %v8341, %v8345
        %v8347 = vshrl.u32 %v8286, 16
        %v8349 = vrot.slane %v8347, 4
        %v8350 = vor.u32 %v8349, %v8345
        %v8351 = vrot.slane %v8350, 4
        %v8353 = vshll.u32 %v8287, 16
        %v8355 = vrot.slane %v8353, 5
        %v8356 = vsel %vm1043, %v8351, %v8355
        %v8358 = vshrl.u32 %v8288, 16
        %v8360 = vrot.slane %v8358, 4
        %v8361 = vshll.u32 %v8288, 16
        %v8363 = vrot.slane %v8361, 5
        %v8364 = vor.u32 %v8360, %v8363
        %v8365 = vrot.slane %v8364, 4
        %v8367 = vshll.u32 %v8289, 16
        %v8369 = vrot.slane %v8367, 5
        %v8370 = vsel %vm1043, %v8365, %v8369
        %v8371 = vshrl.u32 %v8289, 16
        %v8373 = vrot.slane %v8371, 4
        %v8374 = vor.u32 %v8373, %v8369
        %v8375 = vrot.slane %v8374, 4
        %v8377 = vshll.u32 %v8290, 16
        %v8379 = vrot.slane %v8377, 5
        %v8380 = vsel %vm1043, %v8375, %v8379
        %v8382 = vshrl.u32 %v8291, 16
        %v8384 = vrot.slane %v8382, 4
        %v8385 = vshll.u32 %v8291, 16
        %v8387 = vrot.slane %v8385, 5
        %v8388 = vor.u32 %v8384, %v8387
        %v8389 = vrot.slane %v8388, 4
        %v8391 = vshll.u32 %v8292, 16
        %v8393 = vrot.slane %v8391, 5
        %v8394 = vsel %vm1043, %v8389, %v8393
        %v8395 = vshrl.u32 %v8292, 16
        %v8397 = vrot.slane %v8395, 4
        %v8398 = vor.u32 %v8397, %v8393
        %v8399 = vrot.slane %v8398, 4
        %v8401 = vshll.u32 %v8293, 16
        %v8403 = vrot.slane %v8401, 5
        %v8404 = vsel %vm1043, %v8399, %v8403
        %v8406 = vshrl.u32 %v8294, 16
        %v8408 = vrot.slane %v8406, 4
        %v8409 = vshll.u32 %v8294, 16
        %v8411 = vrot.slane %v8409, 5
        %v8412 = vor.u32 %v8408, %v8411
        %v8413 = vrot.slane %v8412, 4
        %v8415 = vshll.u32 %v8295, 16
        %v8417 = vrot.slane %v8415, 5
        %v8418 = vsel %vm1043, %v8413, %v8417
        %v8419 = vshrl.u32 %v8295, 16
        %v8421 = vrot.slane %v8419, 4
        %v8422 = vor.u32 %v8421, %v8417
        %v8423 = vrot.slane %v8422, 4
        %v8425 = vshll.u32 %v8296, 16
        %v8427 = vrot.slane %v8425, 5
        %v8428 = vsel %vm1043, %v8423, %v8427
        %v8430 = vshrl.u32 %v8297, 16
        %v8432 = vrot.slane %v8430, 4
        %v8433 = vshll.u32 %v8297, 16
        %v8435 = vrot.slane %v8433, 5
        %v8436 = vor.u32 %v8432, %v8435
        %v8437 = vrot.slane %v8436, 4
        %v8439 = vshll.u32 %v8298, 16
        %v8441 = vrot.slane %v8439, 5
        %v8442 = vsel %vm1043, %v8437, %v8441
        %v8443 = vshrl.u32 %v8298, 16
        %v8445 = vrot.slane %v8443, 4
        %v8446 = vor.u32 %v8445, %v8441
        %v8447 = vrot.slane %v8446, 4
        %v8449 = vshll.u32 %v8299, 16
        %v8451 = vrot.slane %v8449, 5
        %v8452 = vsel %vm1043, %v8447, %v8451
        %v8454 = vshrl.u32 %v8300, 16
        %v8456 = vrot.slane %v8454, 4
        %v8457 = vshll.u32 %v8300, 16
        %v8459 = vrot.slane %v8457, 5
        %v8460 = vor.u32 %v8456, %v8459
        %v8461 = vrot.slane %v8460, 4
        %v8463 = vshll.u32 %v8301, 16
        %v8465 = vrot.slane %v8463, 5
        %v8466 = vsel %vm1043, %v8461, %v8465
        %v8467 = vshrl.u32 %v8301, 16
        %v8469 = vrot.slane %v8467, 4
        %v8470 = vor.u32 %v8469, %v8465
        %v8471 = vrot.slane %v8470, 4
        %v8473 = vshll.u32 %v8302, 16
        %v8475 = vrot.slane %v8473, 5
        %v8476 = vsel %vm1043, %v8471, %v8475
        %v8478 = vshrl.u32 %v8303, 16
        %v8480 = vrot.slane %v8478, 4
        %v8481 = vshll.u32 %v8303, 16
        %v8483 = vrot.slane %v8481, 5
        %v8484 = vor.u32 %v8480, %v8483
        %v8485 = vrot.slane %v8484, 4
        %v8487 = vshll.u32 %v8304, 16
        %v8489 = vrot.slane %v8487, 5
        %v8490 = vsel %vm1043, %v8485, %v8489
        %v8491 = vshrl.u32 %v8304, 16
        %v8493 = vrot.slane %v8491, 4
        %v8494 = vor.u32 %v8493, %v8489
        %v8495 = vrot.slane %v8494, 4
        %v8497 = vshll.u32 %v8305, 16
        %v8499 = vrot.slane %v8497, 5
        %v8500 = vsel %vm1043, %v8495, %v8499
        %v8502 = vshrl.u32 %v8306, 16
        %v8504 = vrot.slane %v8502, 4
        %v8505 = vshll.u32 %v8306, 16
        %v8507 = vrot.slane %v8505, 5
        %v8508 = vor.u32 %v8504, %v8507
        %v8509 = vrot.slane %v8508, 4
        %v8511 = vshll.u32 %v8307, 16
        %v8513 = vrot.slane %v8511, 5
        %v8514 = vsel %vm1043, %v8509, %v8513
        %v8515 = vshrl.u32 %v8307, 16
        %v8517 = vrot.slane %v8515, 4
        %v8518 = vor.u32 %v8517, %v8513
        %v8519 = vrot.slane %v8518, 4
        %v8521 = vshll.u32 %v8308, 16
        %v8523 = vrot.slane %v8521, 5
        %v8524 = vsel %vm1043, %v8519, %v8523
        %v8526 = vshrl.u32 %v8309, 16
        %v8528 = vrot.slane %v8526, 4
        %v8529 = vshll.u32 %v8309, 16
        %v8531 = vrot.slane %v8529, 5
        %v8532 = vor.u32 %v8528, %v8531
        %v8533 = vrot.slane %v8532, 4
        %v8535 = vshll.u32 %v8310, 16
        %v8537 = vrot.slane %v8535, 5
        %v8538 = vsel %vm1043, %v8533, %v8537
        %v8539 = vshrl.u32 %v8310, 16
        %v8541 = vrot.slane %v8539, 4
        %v8542 = vor.u32 %v8541, %v8537
        %v8543 = vrot.slane %v8542, 4
        %v8545 = vshll.u32 %v8311, 16
        %v8547 = vrot.slane %v8545, 5
        %v8548 = vsel %vm1043, %v8543, %v8547
        %v8550 = vshrl.u32 %v8312, 16
        %v8552 = vrot.slane %v8550, 4
        %v8553 = vshll.u32 %v8312, 16
        %v8555 = vrot.slane %v8553, 5
        %v8556 = vor.u32 %v8552, %v8555
        %v8557 = vrot.slane %v8556, 4
        %v8559 = vshll.u32 %v8313, 16
        %v8561 = vrot.slane %v8559, 5
        %v8562 = vsel %vm1043, %v8557, %v8561
        %v8563 = vshrl.u32 %v8313, 16
        %v8565 = vrot.slane %v8563, 4
        %v8566 = vor.u32 %v8565, %v8561
        %v8567 = vrot.slane %v8566, 4
        %v8569 = vshll.u32 %v8314, 16
        %v8571 = vrot.slane %v8569, 5
        %v8572 = vsel %vm1043, %v8567, %v8571
        %v8574 = vshrl.u32 %v8315, 16
        %v8576 = vrot.slane %v8574, 4
        %v8577 = vshll.u32 %v8315, 16
        %v8579 = vrot.slane %v8577, 5
        %v8580 = vor.u32 %v8576, %v8579
        %v8581 = vrot.slane %v8580, 4
        %v8583 = vshll.u32 %v8316, 16
        %v8585 = vrot.slane %v8583, 5
        %v8586 = vsel %vm1043, %v8581, %v8585
        %v8587 = vshrl.u32 %v8316, 16
        %v8589 = vrot.slane %v8587, 4
        %v8590 = vor.u32 %v8589, %v8585
        %v8591 = vrot.slane %v8590, 4
        %v8593 = vshll.u32 %v8317, 16
        %v8595 = vrot.slane %v8593, 5
        %v8596 = vsel %vm1043, %v8591, %v8595
        %v8598 = vshrl.u32 %v8318, 16
        %v8600 = vrot.slane %v8598, 4
        %v8601 = vshll.u32 %v8318, 16
        %v8603 = vrot.slane %v8601, 5
        %v8604 = vor.u32 %v8600, %v8603
        %v8605 = vrot.slane %v8604, 4
        %v8607 = vshll.u32 %v8319, 16
        %v8609 = vrot.slane %v8607, 5
        %v8610 = vsel %vm1043, %v8605, %v8609
        %v8611 = vshrl.u32 %v8319, 16
        %v8613 = vrot.slane %v8611, 4
        %v8614 = vor.u32 %v8613, %v8609
        %v8615 = vrot.slane %v8614, 4
        %v8617 = vshll.u32 %v8320, 16
        %v8619 = vrot.slane %v8617, 5
        %v8620 = vsel %vm1043, %v8615, %v8619
        %v8622 = vshrl.u32 %v8321, 16
        %v8624 = vrot.slane %v8622, 4
        %v8625 = vshll.u32 %v8321, 16
        %v8627 = vrot.slane %v8625, 5
        %v8628 = vor.u32 %v8624, %v8627
        %v8629 = vrot.slane %v8628, 4
        %v8631 = vshll.u32 %v8322, 16
        %v8633 = vrot.slane %v8631, 5
        %v8634 = vsel %vm1043, %v8629, %v8633
        %v8635 = vshrl.u32 %v8322, 16
        %v8637 = vrot.slane %v8635, 4
        %v8638 = vor.u32 %v8637, %v8633
        %v8639 = vrot.slane %v8638, 4
        %v8641 = vshll.u32 %v8323, 16
        %v8643 = vrot.slane %v8641, 5
        %v8644 = vsel %vm1043, %v8639, %v8643
        %v8646 = vshrl.u32 %v8324, 16
        %v8648 = vrot.slane %v8646, 4
        %v8649 = vshll.u32 %v8324, 16
        %v8651 = vrot.slane %v8649, 5
        %v8652 = vor.u32 %v8648, %v8651
        %v8653 = vrot.slane %v8652, 4
        %v8655 = vshll.u32 %v8325, 16
        %v8657 = vrot.slane %v8655, 5
        %v8658 = vsel %vm1043, %v8653, %v8657
        %v8659 = vshrl.u32 %v8325, 16
        %v8661 = vrot.slane %v8659, 4
        %v8662 = vor.u32 %v8661, %v8657
        %v8663 = vrot.slane %v8662, 4
        %v8665 = vshll.u32 %v8326, 16
        %v8667 = vrot.slane %v8665, 5
        %v8668 = vsel %vm1043, %v8663, %v8667
        %v8670 = vshrl.u32 %v8327, 16
        %v8672 = vrot.slane %v8670, 4
        %v8673 = vshll.u32 %v8327, 16
        %v8675 = vrot.slane %v8673, 5
        %v8676 = vor.u32 %v8672, %v8675
        %v8677 = vrot.slane %v8676, 4
        %v8679 = vshll.u32 %v8328, 16
        %v8681 = vrot.slane %v8679, 5
        %v8682 = vsel %vm1043, %v8677, %v8681
        %v8683 = vshrl.u32 %v8328, 16
        %v8685 = vrot.slane %v8683, 4
        %v8686 = vor.u32 %v8685, %v8681
        %v8687 = vrot.slane %v8686, 4
        %v8689 = vshll.u32 %v8329, 16
        %v8691 = vrot.slane %v8689, 5
        %v8692 = vsel %vm1043, %v8687, %v8691
        %v8694 = vshrl.u32 %v8330, 16
        %v8696 = vrot.slane %v8694, 4
        %v8697 = vshll.u32 %v8330, 16
        %v8699 = vrot.slane %v8697, 5
        %v8700 = vor.u32 %v8696, %v8699
        %v8701 = vrot.slane %v8700, 4
        %v8703 = vshll.u32 %v8331, 16
        %v8705 = vrot.slane %v8703, 5
        %v8706 = vsel %vm1043, %v8701, %v8705
        %v8707 = vshrl.u32 %v8331, 16
        %v8709 = vrot.slane %v8707, 4
        %v8710 = vor.u32 %v8709, %v8705
        %v8711 = vrot.slane %v8710, 4
        %v8713 = vshll.u32 %v8332, 16
        %v8715 = vrot.slane %v8713, 5
        %v8716 = vsel %vm1043, %v8711, %v8715
        %v8717 = vld [vmem:[#allocation9 + $0x100] sm:$0xf]
        %v8718 = vld [vmem:[#allocation9 + $0x104] sm:$0xf]
        %v8719 = vld [vmem:[#allocation9 + $0x108] sm:$0xf]
        %v8720 = vld [vmem:[#allocation9 + $0x10c] sm:$0xf]
        %v8721 = vld [vmem:[#allocation9 + $0x110] sm:$0xf]
        %v8722 = vld [vmem:[#allocation9 + $0x114] sm:$0xf]
        %v8723 = vld [vmem:[#allocation9 + $0x118] sm:$0xf]
        %v8724 = vld [vmem:[#allocation9 + $0x11c] sm:$0xf]
        %v8725 = vld [vmem:[#allocation9 + $0x120] sm:$0xf]
        %v8726 = vld [vmem:[#allocation9 + $0x124] sm:$0xf]
        %v8727 = vld [vmem:[#allocation9 + $0x128] sm:$0xf]
        %v8728 = vld [vmem:[#allocation9 + $0x12c] sm:$0xf]
        %v8729 = vld [vmem:[#allocation9 + $0x130] sm:$0xf]
        %v8730 = vld [vmem:[#allocation9 + $0x134] sm:$0xf]
        %v8731 = vld [vmem:[#allocation9 + $0x138] sm:$0xf]
        %v8732 = vld [vmem:[#allocation9 + $0x13c] sm:$0xf]
        %v8733 = vunpack.c.l.b16 %v8346
        %v8734 = vunpack.c.l.b16 %v8356
        %v8735 = vunpack.c.l.b16 %v8370
        %v8736 = vunpack.c.l.b16 %v8380
        %v8737 = vunpack.c.l.b16 %v8394
        %v8738 = vunpack.c.l.b16 %v8404
        %v8739 = vunpack.c.l.b16 %v8418
        %v8740 = vunpack.c.l.b16 %v8428
        %v8741 = vunpack.c.l.b16 %v8442
        %v8742 = vunpack.c.l.b16 %v8452
        %v8743 = vunpack.c.l.b16 %v8466
        %v8744 = vunpack.c.l.b16 %v8476
        %v8745 = vunpack.c.l.b16 %v8490
        %v8746 = vunpack.c.l.b16 %v8500
        %v8747 = vunpack.c.l.b16 %v8514
        %v8748 = vunpack.c.l.b16 %v8524
        %v8749 = vunpack.c.l.b16 %v8538
        %v8750 = vunpack.c.l.b16 %v8548
        %v8751 = vunpack.c.l.b16 %v8562
        %v8752 = vunpack.c.l.b16 %v8572
        %v8753 = vunpack.c.l.b16 %v8586
        %v8754 = vunpack.c.l.b16 %v8596
        %v8755 = vunpack.c.l.b16 %v8610
        %v8756 = vunpack.c.l.b16 %v8620
        %v8757 = vunpack.c.l.b16 %v8634
        %v8758 = vunpack.c.l.b16 %v8644
        %v8759 = vunpack.c.l.b16 %v8658
        %v8760 = vunpack.c.l.b16 %v8668
        %v8761 = vunpack.c.l.b16 %v8682
        %v8762 = vunpack.c.l.b16 %v8692
        %v8763 = vunpack.c.l.b16 %v8706
        %v8764 = vunpack.c.l.b16 %v8716
        %v8765 = vpack.c.b16 %v8734, %v8733
        %v8766 = vpack.c.b16 %v8736, %v8735
        %v8767 = vpack.c.b16 %v8738, %v8737
        %v8768 = vpack.c.b16 %v8740, %v8739
        %v8769 = vpack.c.b16 %v8742, %v8741
        %v8770 = vpack.c.b16 %v8744, %v8743
        %v8771 = vpack.c.b16 %v8746, %v8745
        %v8772 = vpack.c.b16 %v8748, %v8747
        %v8773 = vpack.c.b16 %v8750, %v8749
        %v8774 = vpack.c.b16 %v8752, %v8751
        %v8775 = vpack.c.b16 %v8754, %v8753
        %v8776 = vpack.c.b16 %v8756, %v8755
        %v8777 = vpack.c.b16 %v8758, %v8757
        %v8778 = vpack.c.b16 %v8760, %v8759
        %v8779 = vpack.c.b16 %v8762, %v8761
        %v8780 = vpack.c.b16 %v8764, %v8763
        %v8813 = vunpack.c.l.b16 %v8717
        %v8814 = vunpack.c.l.b16 %v8718
        %v8815 = vunpack.c.l.b16 %v8719
        %v8816 = vunpack.c.l.b16 %v8720
        %v8817 = vunpack.c.l.b16 %v8721
        %v8818 = vunpack.c.l.b16 %v8722
        %v8819 = vunpack.c.l.b16 %v8723
        %v8820 = vunpack.c.l.b16 %v8724
        %v8821 = vunpack.c.l.b16 %v8725
        %v8822 = vunpack.c.l.b16 %v8726
        %v8823 = vunpack.c.l.b16 %v8727
        %v8824 = vunpack.c.l.b16 %v8728
        %v8825 = vunpack.c.l.b16 %v8729
        %v8826 = vunpack.c.l.b16 %v8730
        %v8827 = vunpack.c.l.b16 %v8731
        %v8828 = vunpack.c.l.b16 %v8732
        %v8829 = vpack.c.b16 %v8814, %v8813
        %v8830 = vpack.c.b16 %v8816, %v8815
        %v8831 = vpack.c.b16 %v8818, %v8817
        %v8832 = vpack.c.b16 %v8820, %v8819
        %v8833 = vpack.c.b16 %v8822, %v8821
        %v8834 = vpack.c.b16 %v8824, %v8823
        %v8835 = vpack.c.b16 %v8826, %v8825
        %v8836 = vpack.c.b16 %v8828, %v8827
        %8845 = vmatprep.subr.bf16.mxu0 0
        %8846 = vmatpush1.bf16.msra.mxu0 %v8829
        %8847 = vmatprep.subr.bf16.mxu0 0
        %8848 = vmatpush1.bf16.msra.mxu0 %v8830
        %8849 = vmatprep.subr.bf16.mxu0 0
        %8850 = vmatpush1.bf16.msra.mxu0 %v8831
        %8851 = vmatprep.subr.bf16.mxu0 0
        %8852 = vmatpush1.bf16.msra.mxu0 %v8832
        %8853 = vmatprep.subr.bf16.mxu0 0
        %8854 = vmatpush1.bf16.msra.mxu0 %v8833
        %8855 = vmatprep.subr.bf16.mxu0 0
        %8856 = vmatpush1.bf16.msra.mxu0 %v8834
        %8857 = vmatprep.subr.bf16.mxu0 0
        %8858 = vmatpush1.bf16.msra.mxu0 %v8835
        %8859 = vmatprep.subr.bf16.mxu0 0
        %8860 = vmatpush1.bf16.msra.mxu0 %v8836
        %8861 = vmatprep.subr.bf16.mxu0 0
        %8862 = vmatpush1.bf16.msra.mxu0 0
        %8863 = vmatprep.subr.bf16.mxu0 0
        %8864 = vmatpush1.bf16.msra.mxu0 0
        %8865 = vmatprep.subr.bf16.mxu0 0
        %8866 = vmatpush1.bf16.msra.mxu0 0
        %8867 = vmatprep.subr.bf16.mxu0 0
        %8868 = vmatpush1.bf16.msra.mxu0 0
        %8869 = vmatprep.subr.bf16.mxu0 0
        %8870 = vmatpush1.bf16.msra.mxu0 0
        %8871 = vmatprep.subr.bf16.mxu0 0
        %8872 = vmatpush1.bf16.msra.mxu0 0
        %8873 = vmatprep.subr.bf16.mxu0 0
        %8874 = vmatpush1.bf16.msra.mxu0 0
        %8875 = vmatprep.subr.bf16.mxu0 0
        %8876 = vmatpush1.bf16.msra.mxu0 0
        %8877 = vmatprep.mubr.bf16.mxu0 0
        %8878 = vmatmul.mubr.bf16.gmra.mrb[0].mxu0 %v8765
        %v8879 = vpop.f32.mrb[0].mxu0
        %v8880 = vadd.f32 0.0, %v8879
        %v8881 = vpop.f32.mrb[0].mxu0
        %v8882 = vpop.f32.mrb[0].mxu0
        %v8883 = vadd.f32 0.0, %v8882
        %v8884 = vpop.f32.mrb[0].mxu0
        %8885 = vmatprep.mubr.bf16.mxu0 0
        %8886 = vmatmul.mubr.bf16.gmra.mrb[0].mxu0 %v8766
        %v8887 = vpop.f32.mrb[0].mxu0
        %v8888 = vadd.f32 0.0, %v8887
        %v8889 = vpop.f32.mrb[0].mxu0
        %v8890 = vpop.f32.mrb[0].mxu0
        %v8891 = vadd.f32 0.0, %v8890
        %v8892 = vpop.f32.mrb[0].mxu0
        %8893 = vmatprep.mubr.bf16.mxu0 0
        %8894 = vmatmul.mubr.bf16.gmra.mrb[0].mxu0 %v8767
        %v8895 = vpop.f32.mrb[0].mxu0
        %v8896 = vadd.f32 0.0, %v8895
        %v8897 = vpop.f32.mrb[0].mxu0
        %v8898 = vpop.f32.mrb[0].mxu0
        %v8899 = vadd.f32 0.0, %v8898
        %v8900 = vpop.f32.mrb[0].mxu0
        %8901 = vmatprep.mubr.bf16.mxu0 0
        %8902 = vmatmul.mubr.bf16.gmra.mrb[0].mxu0 %v8768
        %v8903 = vpop.f32.mrb[0].mxu0
        %v8904 = vadd.f32 0.0, %v8903
        %v8905 = vpop.f32.mrb[0].mxu0
        %v8906 = vpop.f32.mrb[0].mxu0
        %v8907 = vadd.f32 0.0, %v8906
        %v8908 = vpop.f32.mrb[0].mxu0
        %8909 = vmatprep.mubr.bf16.mxu0 0
        %8910 = vmatmul.mubr.bf16.gmra.mrb[0].mxu0 %v8769
        %v8911 = vpop.f32.mrb[0].mxu0
        %v8912 = vadd.f32 0.0, %v8911
        %v8913 = vpop.f32.mrb[0].mxu0
        %v8914 = vpop.f32.mrb[0].mxu0
        %v8915 = vadd.f32 0.0, %v8914
        %v8916 = vpop.f32.mrb[0].mxu0
        %8917 = vmatprep.mubr.bf16.mxu0 0
        %8918 = vmatmul.mubr.bf16.gmra.mrb[0].mxu0 %v8770
        %v8919 = vpop.f32.mrb[0].mxu0
        %v8920 = vadd.f32 0.0, %v8919
        %v8921 = vpop.f32.mrb[0].mxu0
        %v8922 = vpop.f32.mrb[0].mxu0
        %v8923 = vadd.f32 0.0, %v8922
        %v8924 = vpop.f32.mrb[0].mxu0
        %8925 = vmatprep.mubr.bf16.mxu0 0
        %8926 = vmatmul.mubr.bf16.gmra.mrb[0].mxu0 %v8771
        %v8927 = vpop.f32.mrb[0].mxu0
        %v8928 = vadd.f32 0.0, %v8927
        %v8929 = vpop.f32.mrb[0].mxu0
        %v8930 = vpop.f32.mrb[0].mxu0
        %v8931 = vadd.f32 0.0, %v8930
        %v8932 = vpop.f32.mrb[0].mxu0
        %8933 = vmatprep.mubr.bf16.mxu0 0
        %8934 = vmatmul.mubr.bf16.gmra.mrb[0].mxu0 %v8772
        %v8935 = vpop.f32.mrb[0].mxu0
        %v8936 = vadd.f32 0.0, %v8935
        %v8937 = vpop.f32.mrb[0].mxu0
        %v8938 = vpop.f32.mrb[0].mxu0
        %v8939 = vadd.f32 0.0, %v8938
        %v8940 = vpop.f32.mrb[0].mxu0
        %8941 = vmatprep.mubr.bf16.mxu0 0
        %8942 = vmatmul.mubr.bf16.gmra.mrb[0].mxu0 %v8773
        %v8943 = vpop.f32.mrb[0].mxu0
        %v8944 = vadd.f32 0.0, %v8943
        %v8945 = vpop.f32.mrb[0].mxu0
        %v8946 = vpop.f32.mrb[0].mxu0
        %v8947 = vadd.f32 0.0, %v8946
        %v8948 = vpop.f32.mrb[0].mxu0
        %8949 = vmatprep.mubr.bf16.mxu0 0
        %8950 = vmatmul.mubr.bf16.gmra.mrb[0].mxu0 %v8774
        %v8951 = vpop.f32.mrb[0].mxu0
        %v8952 = vadd.f32 0.0, %v8951
        %v8953 = vpop.f32.mrb[0].mxu0
        %v8954 = vpop.f32.mrb[0].mxu0
        %v8955 = vadd.f32 0.0, %v8954
        %v8956 = vpop.f32.mrb[0].mxu0
        %8957 = vmatprep.mubr.bf16.mxu0 0
        %8958 = vmatmul.mubr.bf16.gmra.mrb[0].mxu0 %v8775
        %v8959 = vpop.f32.mrb[0].mxu0
        %v8960 = vadd.f32 0.0, %v8959
        %v8961 = vpop.f32.mrb[0].mxu0
        %v8962 = vpop.f32.mrb[0].mxu0
        %v8963 = vadd.f32 0.0, %v8962
        %v8964 = vpop.f32.mrb[0].mxu0
        %8965 = vmatprep.mubr.bf16.mxu0 0
        %8966 = vmatmul.mubr.bf16.gmra.mrb[0].mxu0 %v8776
        %v8967 = vpop.f32.mrb[0].mxu0
        %v8968 = vadd.f32 0.0, %v8967
        %v8969 = vpop.f32.mrb[0].mxu0
        %v8970 = vpop.f32.mrb[0].mxu0
        %v8971 = vadd.f32 0.0, %v8970
        %v8972 = vpop.f32.mrb[0].mxu0
        %8973 = vmatprep.mubr.bf16.mxu0 0
        %8974 = vmatmul.mubr.bf16.gmra.mrb[0].mxu0 %v8777
        %v8975 = vpop.f32.mrb[0].mxu0
        %v8976 = vadd.f32 0.0, %v8975
        %v8977 = vpop.f32.mrb[0].mxu0
        %v8978 = vpop.f32.mrb[0].mxu0
        %v8979 = vadd.f32 0.0, %v8978
        %v8980 = vpop.f32.mrb[0].mxu0
        %8981 = vmatprep.mubr.bf16.mxu0 0
        %8982 = vmatmul.mubr.bf16.gmra.mrb[0].mxu0 %v8778
        %v8983 = vpop.f32.mrb[0].mxu0
        %v8984 = vadd.f32 0.0, %v8983
        %v8985 = vpop.f32.mrb[0].mxu0
        %v8986 = vpop.f32.mrb[0].mxu0
        %v8987 = vadd.f32 0.0, %v8986
        %v8988 = vpop.f32.mrb[0].mxu0
        %8989 = vmatprep.mubr.bf16.mxu0 0
        %8990 = vmatmul.mubr.bf16.gmra.mrb[0].mxu0 %v8779
        %v8991 = vpop.f32.mrb[0].mxu0
        %v8992 = vadd.f32 0.0, %v8991
        %v8993 = vpop.f32.mrb[0].mxu0
        %v8994 = vpop.f32.mrb[0].mxu0
        %v8995 = vadd.f32 0.0, %v8994
        %v8996 = vpop.f32.mrb[0].mxu0
        %8997 = vmatprep.mubr.bf16.mxu0 0
        %8998 = vmatmul.mubr.bf16.gmra.mrb[0].mxu0 %v8780
        %v8999 = vpop.f32.mrb[0].mxu0
        %v9000 = vadd.f32 0.0, %v8999
        %v9001 = vpop.f32.mrb[0].mxu0
        %v9002 = vpop.f32.mrb[0].mxu0
        %v9003 = vadd.f32 0.0, %v9002
        %v9004 = vpop.f32.mrb[0].mxu0
        %9005 = vdwg.mxu0
        %v9006 = vadd.f32 %v8253, %v8880
        %v9007 = vadd.f32 %v8254, %v8883
        %v9008 = vadd.f32 %v8255, %v8888
        %v9009 = vadd.f32 %v8256, %v8891
        %v9010 = vadd.f32 %v8257, %v8896
        %v9011 = vadd.f32 %v8258, %v8899
        %v9012 = vadd.f32 %v8259, %v8904
        %v9013 = vadd.f32 %v8260, %v8907
        %v9014 = vadd.f32 %v8261, %v8912
        %v9015 = vadd.f32 %v8262, %v8915
        %v9016 = vadd.f32 %v8263, %v8920
        %v9017 = vadd.f32 %v8264, %v8923
        %v9018 = vadd.f32 %v8265, %v8928
        %v9019 = vadd.f32 %v8266, %v8931
        %v9020 = vadd.f32 %v8267, %v8936
        %v9021 = vadd.f32 %v8268, %v8939
        %v9022 = vadd.f32 %v8269, %v8944
        %v9023 = vadd.f32 %v8270, %v8947
        %v9024 = vadd.f32 %v8271, %v8952
        %v9025 = vadd.f32 %v8272, %v8955
        %v9026 = vadd.f32 %v8273, %v8960
        %v9027 = vadd.f32 %v8274, %v8963
        %v9028 = vadd.f32 %v8275, %v8968
        %v9029 = vadd.f32 %v8276, %v8971
        %v9030 = vadd.f32 %v8277, %v8976
        %v9031 = vadd.f32 %v8278, %v8979
        %v9032 = vadd.f32 %v8279, %v8984
        %v9033 = vadd.f32 %v8280, %v8987
        %v9034 = vadd.f32 %v8281, %v8992
        %v9035 = vadd.f32 %v8282, %v8995
        %v9036 = vadd.f32 %v8283, %v9000
        %v9037 = vadd.f32 %v8284, %v9003
        %v9038 = vld [vmem:[%s6264] sm:$0xe]
        %v9039 = vld [vmem:[%s6264 + $0xc] sm:$0xe]
        %v9040 = vld [vmem:[%s6264 + $0x18] sm:$0xe]
        %v9041 = vld [vmem:[%s6264 + $0x24] sm:$0xe]
        %v9042 = vld [vmem:[%s6264 + $0x30] sm:$0xe]
        %v9043 = vld [vmem:[%s6264 + $0x3c] sm:$0xe]
        %v9044 = vld [vmem:[%s6264 + $0x48] sm:$0xe]
        %v9045 = vld [vmem:[%s6264 + $0x54] sm:$0xe]
        %v9046 = vld [vmem:[%s6264 + $0x60] sm:$0xe]
        %v9047 = vld [vmem:[%s6264 + $0x6c] sm:$0xe]
        %v9048 = vld [vmem:[%s6264 + $0x78] sm:$0xe]
        %v9049 = vld [vmem:[%s6264 + $0x84] sm:$0xe]
        %v9050 = vld [vmem:[%s6264 + $0x90] sm:$0xe]
        %v9051 = vld [vmem:[%s6264 + $0x9c] sm:$0xe]
        %v9052 = vld [vmem:[%s6264 + $0xa8] sm:$0xe]
        %v9053 = vld [vmem:[%s6264 + $0xb4] sm:$0xe]
        %v9102 = vrot.slane %v9038, 5
        %v9103 = vrot.slane %v9102, 4
        %v9104 = vrot.slane %v8286, 5
        %v9105 = vsel %vm2072, %v9103, %v9104
        %v9106 = vrot.slane %v9104, 4
        %v9107 = vrot.slane %v8287, 5
        %v9108 = vsel %vm2072, %v9106, %v9107
        %v9109 = vrot.slane %v9039, 5
        %v9110 = vrot.slane %v9109, 4
        %v9111 = vrot.slane %v8289, 5
        %v9112 = vsel %vm2072, %v9110, %v9111
        %v9113 = vrot.slane %v9111, 4
        %v9114 = vrot.slane %v8290, 5
        %v9115 = vsel %vm2072, %v9113, %v9114
        %v9116 = vrot.slane %v9040, 5
        %v9117 = vrot.slane %v9116, 4
        %v9118 = vrot.slane %v8292, 5
        %v9119 = vsel %vm2072, %v9117, %v9118
        %v9120 = vrot.slane %v9118, 4
        %v9121 = vrot.slane %v8293, 5
        %v9122 = vsel %vm2072, %v9120, %v9121
        %v9123 = vrot.slane %v9041, 5
        %v9124 = vrot.slane %v9123, 4
        %v9125 = vrot.slane %v8295, 5
        %v9126 = vsel %vm2072, %v9124, %v9125
        %v9127 = vrot.slane %v9125, 4
        %v9128 = vrot.slane %v8296, 5
        %v9129 = vsel %vm2072, %v9127, %v9128
        %v9130 = vrot.slane %v9042, 5
        %v9131 = vrot.slane %v9130, 4
        %v9132 = vrot.slane %v8298, 5
        %v9133 = vsel %vm2072, %v9131, %v9132
        %v9134 = vrot.slane %v9132, 4
        %v9135 = vrot.slane %v8299, 5
        %v9136 = vsel %vm2072, %v9134, %v9135
        %v9137 = vrot.slane %v9043, 5
        %v9138 = vrot.slane %v9137, 4
        %v9139 = vrot.slane %v8301, 5
        %v9140 = vsel %vm2072, %v9138, %v9139
        %v9141 = vrot.slane %v9139, 4
        %v9142 = vrot.slane %v8302, 5
        %v9143 = vsel %vm2072, %v9141, %v9142
        %v9144 = vrot.slane %v9044, 5
        %v9145 = vrot.slane %v9144, 4
        %v9146 = vrot.slane %v8304, 5
        %v9147 = vsel %vm2072, %v9145, %v9146
        %v9148 = vrot.slane %v9146, 4
        %v9149 = vrot.slane %v8305, 5
        %v9150 = vsel %vm2072, %v9148, %v9149
        %v9151 = vrot.slane %v9045, 5
        %v9152 = vrot.slane %v9151, 4
        %v9153 = vrot.slane %v8307, 5
        %v9154 = vsel %vm2072, %v9152, %v9153
        %v9155 = vrot.slane %v9153, 4
        %v9156 = vrot.slane %v8308, 5
        %v9157 = vsel %vm2072, %v9155, %v9156
        %v9158 = vrot.slane %v9046, 5
        %v9159 = vrot.slane %v9158, 4
        %v9160 = vrot.slane %v8310, 5
        %v9161 = vsel %vm2072, %v9159, %v9160
        %v9162 = vrot.slane %v9160, 4
        %v9163 = vrot.slane %v8311, 5
        %v9164 = vsel %vm2072, %v9162, %v9163
        %v9165 = vrot.slane %v9047, 5
        %v9166 = vrot.slane %v9165, 4
        %v9167 = vrot.slane %v8313, 5
        %v9168 = vsel %vm2072, %v9166, %v9167
        %v9169 = vrot.slane %v9167, 4
        %v9170 = vrot.slane %v8314, 5
        %v9171 = vsel %vm2072, %v9169, %v9170
        %v9172 = vrot.slane %v9048, 5
        %v9173 = vrot.slane %v9172, 4
        %v9174 = vrot.slane %v8316, 5
        %v9175 = vsel %vm2072, %v9173, %v9174
        %v9176 = vrot.slane %v9174, 4
        %v9177 = vrot.slane %v8317, 5
        %v9178 = vsel %vm2072, %v9176, %v9177
        %v9179 = vrot.slane %v9049, 5
        %v9180 = vrot.slane %v9179, 4
        %v9181 = vrot.slane %v8319, 5
        %v9182 = vsel %vm2072, %v9180, %v9181
        %v9183 = vrot.slane %v9181, 4
        %v9184 = vrot.slane %v8320, 5
        %v9185 = vsel %vm2072, %v9183, %v9184
        %v9186 = vrot.slane %v9050, 5
        %v9187 = vrot.slane %v9186, 4
        %v9188 = vrot.slane %v8322, 5
        %v9189 = vsel %vm2072, %v9187, %v9188
        %v9190 = vrot.slane %v9188, 4
        %v9191 = vrot.slane %v8323, 5
        %v9192 = vsel %vm2072, %v9190, %v9191
        %v9193 = vrot.slane %v9051, 5
        %v9194 = vrot.slane %v9193, 4
        %v9195 = vrot.slane %v8325, 5
        %v9196 = vsel %vm2072, %v9194, %v9195
        %v9197 = vrot.slane %v9195, 4
        %v9198 = vrot.slane %v8326, 5
        %v9199 = vsel %vm2072, %v9197, %v9198
        %v9200 = vrot.slane %v9052, 5
        %v9201 = vrot.slane %v9200, 4
        %v9202 = vrot.slane %v8328, 5
        %v9203 = vsel %vm2072, %v9201, %v9202
        %v9204 = vrot.slane %v9202, 4
        %v9205 = vrot.slane %v8329, 5
        %v9206 = vsel %vm2072, %v9204, %v9205
        %v9207 = vrot.slane %v9053, 5
        %v9208 = vrot.slane %v9207, 4
        %v9209 = vrot.slane %v8331, 5
        %v9210 = vsel %vm2072, %v9208, %v9209
        %v9211 = vrot.slane %v9209, 4
        %v9212 = vrot.slane %v8332, 5
        %v9213 = vsel %vm2072, %v9211, %v9212
        %v9214 = vld [vmem:[#allocation9 + $0x140] sm:$0xf]
        %v9215 = vld [vmem:[#allocation9 + $0x144] sm:$0xf]
        %v9216 = vld [vmem:[#allocation9 + $0x148] sm:$0xf]
        %v9217 = vld [vmem:[#allocation9 + $0x14c] sm:$0xf]
        %v9218 = vld [vmem:[#allocation9 + $0x150] sm:$0xf]
        %v9219 = vld [vmem:[#allocation9 + $0x154] sm:$0xf]
        %v9220 = vld [vmem:[#allocation9 + $0x158] sm:$0xf]
        %v9221 = vld [vmem:[#allocation9 + $0x15c] sm:$0xf]
        %v9222 = vld [vmem:[#allocation9 + $0x160] sm:$0xf]
        %v9223 = vld [vmem:[#allocation9 + $0x164] sm:$0xf]
        %v9224 = vld [vmem:[#allocation9 + $0x168] sm:$0xf]
        %v9225 = vld [vmem:[#allocation9 + $0x16c] sm:$0xf]
        %v9226 = vld [vmem:[#allocation9 + $0x170] sm:$0xf]
        %v9227 = vld [vmem:[#allocation9 + $0x174] sm:$0xf]
        %v9228 = vld [vmem:[#allocation9 + $0x178] sm:$0xf]
        %v9229 = vld [vmem:[#allocation9 + $0x17c] sm:$0xf]
        %v9230 = vunpack.c.l.b16 %v9105
        %v9231 = vunpack.c.l.b16 %v9108
        %v9232 = vunpack.c.l.b16 %v9112
        %v9233 = vunpack.c.l.b16 %v9115
        %v9234 = vunpack.c.l.b16 %v9119
        %v9235 = vunpack.c.l.b16 %v9122
        %v9236 = vunpack.c.l.b16 %v9126
        %v9237 = vunpack.c.l.b16 %v9129
        %v9238 = vunpack.c.l.b16 %v9133
        %v9239 = vunpack.c.l.b16 %v9136
        %v9240 = vunpack.c.l.b16 %v9140
        %v9241 = vunpack.c.l.b16 %v9143
        %v9242 = vunpack.c.l.b16 %v9147
        %v9243 = vunpack.c.l.b16 %v9150
        %v9244 = vunpack.c.l.b16 %v9154
        %v9245 = vunpack.c.l.b16 %v9157
        %v9246 = vunpack.c.l.b16 %v9161
        %v9247 = vunpack.c.l.b16 %v9164
        %v9248 = vunpack.c.l.b16 %v9168
        %v9249 = vunpack.c.l.b16 %v9171
        %v9250 = vunpack.c.l.b16 %v9175
        %v9251 = vunpack.c.l.b16 %v9178
        %v9252 = vunpack.c.l.b16 %v9182
        %v9253 = vunpack.c.l.b16 %v9185
        %v9254 = vunpack.c.l.b16 %v9189
        %v9255 = vunpack.c.l.b16 %v9192
        %v9256 = vunpack.c.l.b16 %v9196
        %v9257 = vunpack.c.l.b16 %v9199
        %v9258 = vunpack.c.l.b16 %v9203
        %v9259 = vunpack.c.l.b16 %v9206
        %v9260 = vunpack.c.l.b16 %v9210
        %v9261 = vunpack.c.l.b16 %v9213
        %v9262 = vpack.c.b16 %v9231, %v9230
        %v9263 = vpack.c.b16 %v9233, %v9232
        %v9264 = vpack.c.b16 %v9235, %v9234
        %v9265 = vpack.c.b16 %v9237, %v9236
        %v9266 = vpack.c.b16 %v9239, %v9238
        %v9267 = vpack.c.b16 %v9241, %v9240
        %v9268 = vpack.c.b16 %v9243, %v9242
        %v9269 = vpack.c.b16 %v9245, %v9244
        %v9270 = vpack.c.b16 %v9247, %v9246
        %v9271 = vpack.c.b16 %v9249, %v9248
        %v9272 = vpack.c.b16 %v9251, %v9250
        %v9273 = vpack.c.b16 %v9253, %v9252
        %v9274 = vpack.c.b16 %v9255, %v9254
        %v9275 = vpack.c.b16 %v9257, %v9256
        %v9276 = vpack.c.b16 %v9259, %v9258
        %v9277 = vpack.c.b16 %v9261, %v9260
        %v9310 = vunpack.c.l.b16 %v9214
        %v9311 = vunpack.c.l.b16 %v9215
        %v9312 = vunpack.c.l.b16 %v9216
        %v9313 = vunpack.c.l.b16 %v9217
        %v9314 = vunpack.c.l.b16 %v9218
        %v9315 = vunpack.c.l.b16 %v9219
        %v9316 = vunpack.c.l.b16 %v9220
        %v9317 = vunpack.c.l.b16 %v9221
        %v9318 = vunpack.c.l.b16 %v9222
        %v9319 = vunpack.c.l.b16 %v9223
        %v9320 = vunpack.c.l.b16 %v9224
        %v9321 = vunpack.c.l.b16 %v9225
        %v9322 = vunpack.c.l.b16 %v9226
        %v9323 = vunpack.c.l.b16 %v9227
        %v9324 = vunpack.c.l.b16 %v9228
        %v9325 = vunpack.c.l.b16 %v9229
        %v9326 = vpack.c.b16 %v9311, %v9310
        %v9327 = vpack.c.b16 %v9313, %v9312
        %v9328 = vpack.c.b16 %v9315, %v9314
        %v9329 = vpack.c.b16 %v9317, %v9316
        %v9330 = vpack.c.b16 %v9319, %v9318
        %v9331 = vpack.c.b16 %v9321, %v9320
        %v9332 = vpack.c.b16 %v9323, %v9322
        %v9333 = vpack.c.b16 %v9325, %v9324
        %9342 = vmatprep.subr.bf16.mxu0 0
        %9343 = vmatpush1.bf16.msra.mxu0 %v9326
        %9344 = vmatprep.subr.bf16.mxu0 0
        %9345 = vmatpush1.bf16.msra.mxu0 %v9327
        %9346 = vmatprep.subr.bf16.mxu0 0
        %9347 = vmatpush1.bf16.msra.mxu0 %v9328
        %9348 = vmatprep.subr.bf16.mxu0 0
        %9349 = vmatpush1.bf16.msra.mxu0 %v9329
        %9350 = vmatprep.subr.bf16.mxu0 0
        %9351 = vmatpush1.bf16.msra.mxu0 %v9330
        %9352 = vmatprep.subr.bf16.mxu0 0
        %9353 = vmatpush1.bf16.msra.mxu0 %v9331
        %9354 = vmatprep.subr.bf16.mxu0 0
        %9355 = vmatpush1.bf16.msra.mxu0 %v9332
        %9356 = vmatprep.subr.bf16.mxu0 0
        %9357 = vmatpush1.bf16.msra.mxu0 %v9333
        %9358 = vmatprep.subr.bf16.mxu0 0
        %9359 = vmatpush1.bf16.msra.mxu0 0
        %9360 = vmatprep.subr.bf16.mxu0 0
        %9361 = vmatpush1.bf16.msra.mxu0 0
        %9362 = vmatprep.subr.bf16.mxu0 0
        %9363 = vmatpush1.bf16.msra.mxu0 0
        %9364 = vmatprep.subr.bf16.mxu0 0
        %9365 = vmatpush1.bf16.msra.mxu0 0
        %9366 = vmatprep.subr.bf16.mxu0 0
        %9367 = vmatpush1.bf16.msra.mxu0 0
        %9368 = vmatprep.subr.bf16.mxu0 0
        %9369 = vmatpush1.bf16.msra.mxu0 0
        %9370 = vmatprep.subr.bf16.mxu0 0
        %9371 = vmatpush1.bf16.msra.mxu0 0
        %9372 = vmatprep.subr.bf16.mxu0 0
        %9373 = vmatpush1.bf16.msra.mxu0 0
        %9374 = vmatprep.mubr.bf16.mxu0 0
        %9375 = vmatmul.mubr.bf16.gmra.mrb[0].mxu0 %v9262
        %v9376 = vpop.f32.mrb[0].mxu0
        %v9377 = vadd.f32 0.0, %v9376
        %v9378 = vpop.f32.mrb[0].mxu0
        %v9379 = vpop.f32.mrb[0].mxu0
        %v9380 = vadd.f32 0.0, %v9379
        %v9381 = vpop.f32.mrb[0].mxu0
        %9382 = vmatprep.mubr.bf16.mxu0 0
        %9383 = vmatmul.mubr.bf16.gmra.mrb[0].mxu0 %v9263
        %v9384 = vpop.f32.mrb[0].mxu0
        %v9385 = vadd.f32 0.0, %v9384
        %v9386 = vpop.f32.mrb[0].mxu0
        %v9387 = vpop.f32.mrb[0].mxu0
        %v9388 = vadd.f32 0.0, %v9387
        %v9389 = vpop.f32.mrb[0].mxu0
        %9390 = vmatprep.mubr.bf16.mxu0 0
        %9391 = vmatmul.mubr.bf16.gmra.mrb[0].mxu0 %v9264
        %v9392 = vpop.f32.mrb[0].mxu0
        %v9393 = vadd.f32 0.0, %v9392
        %v9394 = vpop.f32.mrb[0].mxu0
        %v9395 = vpop.f32.mrb[0].mxu0
        %v9396 = vadd.f32 0.0, %v9395
        %v9397 = vpop.f32.mrb[0].mxu0
        %9398 = vmatprep.mubr.bf16.mxu0 0
        %9399 = vmatmul.mubr.bf16.gmra.mrb[0].mxu0 %v9265
        %v9400 = vpop.f32.mrb[0].mxu0
        %v9401 = vadd.f32 0.0, %v9400
        %v9402 = vpop.f32.mrb[0].mxu0
        %v9403 = vpop.f32.mrb[0].mxu0
        %v9404 = vadd.f32 0.0, %v9403
        %v9405 = vpop.f32.mrb[0].mxu0
        %9406 = vmatprep.mubr.bf16.mxu0 0
        %9407 = vmatmul.mubr.bf16.gmra.mrb[0].mxu0 %v9266
        %v9408 = vpop.f32.mrb[0].mxu0
        %v9409 = vadd.f32 0.0, %v9408
        %v9410 = vpop.f32.mrb[0].mxu0
        %v9411 = vpop.f32.mrb[0].mxu0
        %v9412 = vadd.f32 0.0, %v9411
        %v9413 = vpop.f32.mrb[0].mxu0
        %9414 = vmatprep.mubr.bf16.mxu0 0
        %9415 = vmatmul.mubr.bf16.gmra.mrb[0].mxu0 %v9267
        %v9416 = vpop.f32.mrb[0].mxu0
        %v9417 = vadd.f32 0.0, %v9416
        %v9418 = vpop.f32.mrb[0].mxu0
        %v9419 = vpop.f32.mrb[0].mxu0
        %v9420 = vadd.f32 0.0, %v9419
        %v9421 = vpop.f32.mrb[0].mxu0
        %9422 = vmatprep.mubr.bf16.mxu0 0
        %9423 = vmatmul.mubr.bf16.gmra.mrb[0].mxu0 %v9268
        %v9424 = vpop.f32.mrb[0].mxu0
        %v9425 = vadd.f32 0.0, %v9424
        %v9426 = vpop.f32.mrb[0].mxu0
        %v9427 = vpop.f32.mrb[0].mxu0
        %v9428 = vadd.f32 0.0, %v9427
        %v9429 = vpop.f32.mrb[0].mxu0
        %9430 = vmatprep.mubr.bf16.mxu0 0
        %9431 = vmatmul.mubr.bf16.gmra.mrb[0].mxu0 %v9269
        %v9432 = vpop.f32.mrb[0].mxu0
        %v9433 = vadd.f32 0.0, %v9432
        %v9434 = vpop.f32.mrb[0].mxu0
        %v9435 = vpop.f32.mrb[0].mxu0
        %v9436 = vadd.f32 0.0, %v9435
        %v9437 = vpop.f32.mrb[0].mxu0
        %9438 = vmatprep.mubr.bf16.mxu0 0
        %9439 = vmatmul.mubr.bf16.gmra.mrb[0].mxu0 %v9270
        %v9440 = vpop.f32.mrb[0].mxu0
        %v9441 = vadd.f32 0.0, %v9440
        %v9442 = vpop.f32.mrb[0].mxu0
        %v9443 = vpop.f32.mrb[0].mxu0
        %v9444 = vadd.f32 0.0, %v9443
        %v9445 = vpop.f32.mrb[0].mxu0
        %9446 = vmatprep.mubr.bf16.mxu0 0
        %9447 = vmatmul.mubr.bf16.gmra.mrb[0].mxu0 %v9271
        %v9448 = vpop.f32.mrb[0].mxu0
        %v9449 = vadd.f32 0.0, %v9448
        %v9450 = vpop.f32.mrb[0].mxu0
        %v9451 = vpop.f32.mrb[0].mxu0
        %v9452 = vadd.f32 0.0, %v9451
        %v9453 = vpop.f32.mrb[0].mxu0
        %9454 = vmatprep.mubr.bf16.mxu0 0
        %9455 = vmatmul.mubr.bf16.gmra.mrb[0].mxu0 %v9272
        %v9456 = vpop.f32.mrb[0].mxu0
        %v9457 = vadd.f32 0.0, %v9456
        %v9458 = vpop.f32.mrb[0].mxu0
        %v9459 = vpop.f32.mrb[0].mxu0
        %v9460 = vadd.f32 0.0, %v9459
        %v9461 = vpop.f32.mrb[0].mxu0
        %9462 = vmatprep.mubr.bf16.mxu0 0
        %9463 = vmatmul.mubr.bf16.gmra.mrb[0].mxu0 %v9273
        %v9464 = vpop.f32.mrb[0].mxu0
        %v9465 = vadd.f32 0.0, %v9464
        %v9466 = vpop.f32.mrb[0].mxu0
        %v9467 = vpop.f32.mrb[0].mxu0
        %v9468 = vadd.f32 0.0, %v9467
        %v9469 = vpop.f32.mrb[0].mxu0
        %9470 = vmatprep.mubr.bf16.mxu0 0
        %9471 = vmatmul.mubr.bf16.gmra.mrb[0].mxu0 %v9274
        %v9472 = vpop.f32.mrb[0].mxu0
        %v9473 = vadd.f32 0.0, %v9472
        %v9474 = vpop.f32.mrb[0].mxu0
        %v9475 = vpop.f32.mrb[0].mxu0
        %v9476 = vadd.f32 0.0, %v9475
        %v9477 = vpop.f32.mrb[0].mxu0
        %9478 = vmatprep.mubr.bf16.mxu0 0
        %9479 = vmatmul.mubr.bf16.gmra.mrb[0].mxu0 %v9275
        %v9480 = vpop.f32.mrb[0].mxu0
        %v9481 = vadd.f32 0.0, %v9480
        %v9482 = vpop.f32.mrb[0].mxu0
        %v9483 = vpop.f32.mrb[0].mxu0
        %v9484 = vadd.f32 0.0, %v9483
        %v9485 = vpop.f32.mrb[0].mxu0
        %9486 = vmatprep.mubr.bf16.mxu0 0
        %9487 = vmatmul.mubr.bf16.gmra.mrb[0].mxu0 %v9276
        %v9488 = vpop.f32.mrb[0].mxu0
        %v9489 = vadd.f32 0.0, %v9488
        %v9490 = vpop.f32.mrb[0].mxu0
        %v9491 = vpop.f32.mrb[0].mxu0
        %v9492 = vadd.f32 0.0, %v9491
        %v9493 = vpop.f32.mrb[0].mxu0
        %9494 = vmatprep.mubr.bf16.mxu0 0
        %9495 = vmatmul.mubr.bf16.gmra.mrb[0].mxu0 %v9277
        %v9496 = vpop.f32.mrb[0].mxu0
        %v9497 = vadd.f32 0.0, %v9496
        %v9498 = vpop.f32.mrb[0].mxu0
        %v9499 = vpop.f32.mrb[0].mxu0
        %v9500 = vadd.f32 0.0, %v9499
        %v9501 = vpop.f32.mrb[0].mxu0
        %9502 = vdwg.mxu0
        %v9503 = vadd.f32 %v9006, %v9377
        %v9504 = vadd.f32 %v9007, %v9380
        %v9505 = vadd.f32 %v9008, %v9385
        %v9506 = vadd.f32 %v9009, %v9388
        %v9507 = vadd.f32 %v9010, %v9393
        %v9508 = vadd.f32 %v9011, %v9396
        %v9509 = vadd.f32 %v9012, %v9401
        %v9510 = vadd.f32 %v9013, %v9404
        %v9511 = vadd.f32 %v9014, %v9409
        %v9512 = vadd.f32 %v9015, %v9412
        %v9513 = vadd.f32 %v9016, %v9417
        %v9514 = vadd.f32 %v9017, %v9420
        %v9515 = vadd.f32 %v9018, %v9425
        %v9516 = vadd.f32 %v9019, %v9428
        %v9517 = vadd.f32 %v9020, %v9433
        %v9518 = vadd.f32 %v9021, %v9436
        %v9519 = vadd.f32 %v9022, %v9441
        %v9520 = vadd.f32 %v9023, %v9444
        %v9521 = vadd.f32 %v9024, %v9449
        %v9522 = vadd.f32 %v9025, %v9452
        %v9523 = vadd.f32 %v9026, %v9457
        %v9524 = vadd.f32 %v9027, %v9460
        %v9525 = vadd.f32 %v9028, %v9465
        %v9526 = vadd.f32 %v9029, %v9468
        %v9527 = vadd.f32 %v9030, %v9473
        %v9528 = vadd.f32 %v9031, %v9476
        %v9529 = vadd.f32 %v9032, %v9481
        %v9530 = vadd.f32 %v9033, %v9484
        %v9531 = vadd.f32 %v9034, %v9489
        %v9532 = vadd.f32 %v9035, %v9492
        %v9533 = vadd.f32 %v9036, %v9497
        %v9534 = vadd.f32 %v9037, %v9500
        %s9535 = scalar_lea.vmem [#allocation3], 24
        %v9536 = vld [vmem:[%s9535] sm:$0xf]
        %v9537 = vld [vmem:[%s9535 + $0x4] sm:$0xf]
        %v9538 = vld [vmem:[%s9535 + $0xc] sm:$0xf]
        %v9539 = vld [vmem:[%s9535 + $0x10] sm:$0xf]
        %v9540 = vld [vmem:[%s9535 + $0x18] sm:$0xf]
        %v9541 = vld [vmem:[%s9535 + $0x1c] sm:$0xf]
        %v9542 = vld [vmem:[%s9535 + $0x24] sm:$0xf]
        %v9543 = vld [vmem:[%s9535 + $0x28] sm:$0xf]
        %v9544 = vld [vmem:[%s9535 + $0x30] sm:$0xf]
        %v9545 = vld [vmem:[%s9535 + $0x34] sm:$0xf]
        %v9546 = vld [vmem:[%s9535 + $0x3c] sm:$0xf]
        %v9547 = vld [vmem:[%s9535 + $0x40] sm:$0xf]
        %v9548 = vld [vmem:[%s9535 + $0x48] sm:$0xf]
        %v9549 = vld [vmem:[%s9535 + $0x4c] sm:$0xf]
        %v9550 = vld [vmem:[%s9535 + $0x54] sm:$0xf]
        %v9551 = vld [vmem:[%s9535 + $0x58] sm:$0xf]
        %v9552 = vld [vmem:[%s9535 + $0x60] sm:$0xf]
        %v9553 = vld [vmem:[%s9535 + $0x64] sm:$0xf]
        %v9554 = vld [vmem:[%s9535 + $0x6c] sm:$0xf]
        %v9555 = vld [vmem:[%s9535 + $0x70] sm:$0xf]
        %v9556 = vld [vmem:[%s9535 + $0x78] sm:$0xf]
        %v9557 = vld [vmem:[%s9535 + $0x7c] sm:$0xf]
        %v9558 = vld [vmem:[%s9535 + $0x84] sm:$0xf]
        %v9559 = vld [vmem:[%s9535 + $0x88] sm:$0xf]
        %v9560 = vld [vmem:[%s9535 + $0x90] sm:$0xf]
        %v9561 = vld [vmem:[%s9535 + $0x94] sm:$0xf]
        %v9562 = vld [vmem:[%s9535 + $0x9c] sm:$0xf]
        %v9563 = vld [vmem:[%s9535 + $0xa0] sm:$0xf]
        %v9564 = vld [vmem:[%s9535 + $0xa8] sm:$0xf]
        %v9565 = vld [vmem:[%s9535 + $0xac] sm:$0xf]
        %v9566 = vld [vmem:[%s9535 + $0xb4] sm:$0xf]
        %v9567 = vld [vmem:[%s9535 + $0xb8] sm:$0xf]
        %v9568 = vld [vmem:[#allocation9 + $0x180] sm:$0xf]
        %v9569 = vld [vmem:[#allocation9 + $0x184] sm:$0xf]
        %v9570 = vld [vmem:[#allocation9 + $0x188] sm:$0xf]
        %v9571 = vld [vmem:[#allocation9 + $0x18c] sm:$0xf]
        %v9572 = vld [vmem:[#allocation9 + $0x190] sm:$0xf]
        %v9573 = vld [vmem:[#allocation9 + $0x194] sm:$0xf]
        %v9574 = vld [vmem:[#allocation9 + $0x198] sm:$0xf]
        %v9575 = vld [vmem:[#allocation9 + $0x19c] sm:$0xf]
        %v9576 = vld [vmem:[#allocation9 + $0x1a0] sm:$0xf]
        %v9577 = vld [vmem:[#allocation9 + $0x1a4] sm:$0xf]
        %v9578 = vld [vmem:[#allocation9 + $0x1a8] sm:$0xf]
        %v9579 = vld [vmem:[#allocation9 + $0x1ac] sm:$0xf]
        %v9580 = vld [vmem:[#allocation9 + $0x1b0] sm:$0xf]
        %v9581 = vld [vmem:[#allocation9 + $0x1b4] sm:$0xf]
        %v9582 = vld [vmem:[#allocation9 + $0x1b8] sm:$0xf]
        %v9583 = vld [vmem:[#allocation9 + $0x1bc] sm:$0xf]
        %v9616 = vunpack.c.l.b16 %v9536
        %v9617 = vunpack.c.l.b16 %v9537
        %v9618 = vunpack.c.l.b16 %v9538
        %v9619 = vunpack.c.l.b16 %v9539
        %v9620 = vunpack.c.l.b16 %v9540
        %v9621 = vunpack.c.l.b16 %v9541
        %v9622 = vunpack.c.l.b16 %v9542
        %v9623 = vunpack.c.l.b16 %v9543
        %v9624 = vunpack.c.l.b16 %v9544
        %v9625 = vunpack.c.l.b16 %v9545
        %v9626 = vunpack.c.l.b16 %v9546
        %v9627 = vunpack.c.l.b16 %v9547
        %v9628 = vunpack.c.l.b16 %v9548
        %v9629 = vunpack.c.l.b16 %v9549
        %v9630 = vunpack.c.l.b16 %v9550
        %v9631 = vunpack.c.l.b16 %v9551
        %v9632 = vunpack.c.l.b16 %v9552
        %v9633 = vunpack.c.l.b16 %v9553
        %v9634 = vunpack.c.l.b16 %v9554
        %v9635 = vunpack.c.l.b16 %v9555
        %v9636 = vunpack.c.l.b16 %v9556
        %v9637 = vunpack.c.l.b16 %v9557
        %v9638 = vunpack.c.l.b16 %v9558
        %v9639 = vunpack.c.l.b16 %v9559
        %v9640 = vunpack.c.l.b16 %v9560
        %v9641 = vunpack.c.l.b16 %v9561
        %v9642 = vunpack.c.l.b16 %v9562
        %v9643 = vunpack.c.l.b16 %v9563
        %v9644 = vunpack.c.l.b16 %v9564
        %v9645 = vunpack.c.l.b16 %v9565
        %v9646 = vunpack.c.l.b16 %v9566
        %v9647 = vunpack.c.l.b16 %v9567
        %v9648 = vpack.c.b16 %v9617, %v9616
        %v9649 = vpack.c.b16 %v9619, %v9618
        %v9650 = vpack.c.b16 %v9621, %v9620
        %v9651 = vpack.c.b16 %v9623, %v9622
        %v9652 = vpack.c.b16 %v9625, %v9624
        %v9653 = vpack.c.b16 %v9627, %v9626
        %v9654 = vpack.c.b16 %v9629, %v9628
        %v9655 = vpack.c.b16 %v9631, %v9630
        %v9656 = vpack.c.b16 %v9633, %v9632
        %v9657 = vpack.c.b16 %v9635, %v9634
        %v9658 = vpack.c.b16 %v9637, %v9636
        %v9659 = vpack.c.b16 %v9639, %v9638
        %v9660 = vpack.c.b16 %v9641, %v9640
        %v9661 = vpack.c.b16 %v9643, %v9642
        %v9662 = vpack.c.b16 %v9645, %v9644
        %v9663 = vpack.c.b16 %v9647, %v9646
        %v9696 = vunpack.c.l.b16 %v9568
        %v9697 = vunpack.c.l.b16 %v9569
        %v9698 = vunpack.c.l.b16 %v9570
        %v9699 = vunpack.c.l.b16 %v9571
        %v9700 = vunpack.c.l.b16 %v9572
        %v9701 = vunpack.c.l.b16 %v9573
        %v9702 = vunpack.c.l.b16 %v9574
        %v9703 = vunpack.c.l.b16 %v9575
        %v9704 = vunpack.c.l.b16 %v9576
        %v9705 = vunpack.c.l.b16 %v9577
        %v9706 = vunpack.c.l.b16 %v9578
        %v9707 = vunpack.c.l.b16 %v9579
        %v9708 = vunpack.c.l.b16 %v9580
        %v9709 = vunpack.c.l.b16 %v9581
        %v9710 = vunpack.c.l.b16 %v9582
        %v9711 = vunpack.c.l.b16 %v9583
        %v9712 = vpack.c.b16 %v9697, %v9696
        %v9713 = vpack.c.b16 %v9699, %v9698
        %v9714 = vpack.c.b16 %v9701, %v9700
        %v9715 = vpack.c.b16 %v9703, %v9702
        %v9716 = vpack.c.b16 %v9705, %v9704
        %v9717 = vpack.c.b16 %v9707, %v9706
        %v9718 = vpack.c.b16 %v9709, %v9708
        %v9719 = vpack.c.b16 %v9711, %v9710
        %9728 = vmatprep.subr.bf16.mxu0 0
        %9729 = vmatpush1.bf16.msra.mxu0 %v9712
        %9730 = vmatprep.subr.bf16.mxu0 0
        %9731 = vmatpush1.bf16.msra.mxu0 %v9713
        %9732 = vmatprep.subr.bf16.mxu0 0
        %9733 = vmatpush1.bf16.msra.mxu0 %v9714
        %9734 = vmatprep.subr.bf16.mxu0 0
        %9735 = vmatpush1.bf16.msra.mxu0 %v9715
        %9736 = vmatprep.subr.bf16.mxu0 0
        %9737 = vmatpush1.bf16.msra.mxu0 %v9716
        %9738 = vmatprep.subr.bf16.mxu0 0
        %9739 = vmatpush1.bf16.msra.mxu0 %v9717
        %9740 = vmatprep.subr.bf16.mxu0 0
        %9741 = vmatpush1.bf16.msra.mxu0 %v9718
        %9742 = vmatprep.subr.bf16.mxu0 0
        %9743 = vmatpush1.bf16.msra.mxu0 %v9719
        %9744 = vmatprep.subr.bf16.mxu0 0
        %9745 = vmatpush1.bf16.msra.mxu0 0
        %9746 = vmatprep.subr.bf16.mxu0 0
        %9747 = vmatpush1.bf16.msra.mxu0 0
        %9748 = vmatprep.subr.bf16.mxu0 0
        %9749 = vmatpush1.bf16.msra.mxu0 0
        %9750 = vmatprep.subr.bf16.mxu0 0
        %9751 = vmatpush1.bf16.msra.mxu0 0
        %9752 = vmatprep.subr.bf16.mxu0 0
        %9753 = vmatpush1.bf16.msra.mxu0 0
        %9754 = vmatprep.subr.bf16.mxu0 0
        %9755 = vmatpush1.bf16.msra.mxu0 0
        %9756 = vmatprep.subr.bf16.mxu0 0
        %9757 = vmatpush1.bf16.msra.mxu0 0
        %9758 = vmatprep.subr.bf16.mxu0 0
        %9759 = vmatpush1.bf16.msra.mxu0 0
        %9760 = vmatprep.mubr.bf16.mxu0 0
        %9761 = vmatmul.mubr.bf16.gmra.mrb[0].mxu0 %v9648
        %v9762 = vpop.f32.mrb[0].mxu0
        %v9763 = vadd.f32 0.0, %v9762
        %v9764 = vpop.f32.mrb[0].mxu0
        %v9765 = vpop.f32.mrb[0].mxu0
        %v9766 = vadd.f32 0.0, %v9765
        %v9767 = vpop.f32.mrb[0].mxu0
        %9768 = vmatprep.mubr.bf16.mxu0 0
        %9769 = vmatmul.mubr.bf16.gmra.mrb[0].mxu0 %v9649
        %v9770 = vpop.f32.mrb[0].mxu0
        %v9771 = vadd.f32 0.0, %v9770
        %v9772 = vpop.f32.mrb[0].mxu0
        %v9773 = vpop.f32.mrb[0].mxu0
        %v9774 = vadd.f32 0.0, %v9773
        %v9775 = vpop.f32.mrb[0].mxu0
        %9776 = vmatprep.mubr.bf16.mxu0 0
        %9777 = vmatmul.mubr.bf16.gmra.mrb[0].mxu0 %v9650
        %v9778 = vpop.f32.mrb[0].mxu0
        %v9779 = vadd.f32 0.0, %v9778
        %v9780 = vpop.f32.mrb[0].mxu0
        %v9781 = vpop.f32.mrb[0].mxu0
        %v9782 = vadd.f32 0.0, %v9781
        %v9783 = vpop.f32.mrb[0].mxu0
        %9784 = vmatprep.mubr.bf16.mxu0 0
        %9785 = vmatmul.mubr.bf16.gmra.mrb[0].mxu0 %v9651
        %v9786 = vpop.f32.mrb[0].mxu0
        %v9787 = vadd.f32 0.0, %v9786
        %v9788 = vpop.f32.mrb[0].mxu0
        %v9789 = vpop.f32.mrb[0].mxu0
        %v9790 = vadd.f32 0.0, %v9789
        %v9791 = vpop.f32.mrb[0].mxu0
        %9792 = vmatprep.mubr.bf16.mxu0 0
        %9793 = vmatmul.mubr.bf16.gmra.mrb[0].mxu0 %v9652
        %v9794 = vpop.f32.mrb[0].mxu0
        %v9795 = vadd.f32 0.0, %v9794
        %v9796 = vpop.f32.mrb[0].mxu0
        %v9797 = vpop.f32.mrb[0].mxu0
        %v9798 = vadd.f32 0.0, %v9797
        %v9799 = vpop.f32.mrb[0].mxu0
        %9800 = vmatprep.mubr.bf16.mxu0 0
        %9801 = vmatmul.mubr.bf16.gmra.mrb[0].mxu0 %v9653
        %v9802 = vpop.f32.mrb[0].mxu0
        %v9803 = vadd.f32 0.0, %v9802
        %v9804 = vpop.f32.mrb[0].mxu0
        %v9805 = vpop.f32.mrb[0].mxu0
        %v9806 = vadd.f32 0.0, %v9805
        %v9807 = vpop.f32.mrb[0].mxu0
        %9808 = vmatprep.mubr.bf16.mxu0 0
        %9809 = vmatmul.mubr.bf16.gmra.mrb[0].mxu0 %v9654
        %v9810 = vpop.f32.mrb[0].mxu0
        %v9811 = vadd.f32 0.0, %v9810
        %v9812 = vpop.f32.mrb[0].mxu0
        %v9813 = vpop.f32.mrb[0].mxu0
        %v9814 = vadd.f32 0.0, %v9813
        %v9815 = vpop.f32.mrb[0].mxu0
        %9816 = vmatprep.mubr.bf16.mxu0 0
        %9817 = vmatmul.mubr.bf16.gmra.mrb[0].mxu0 %v9655
        %v9818 = vpop.f32.mrb[0].mxu0
        %v9819 = vadd.f32 0.0, %v9818
        %v9820 = vpop.f32.mrb[0].mxu0
        %v9821 = vpop.f32.mrb[0].mxu0
        %v9822 = vadd.f32 0.0, %v9821
        %v9823 = vpop.f32.mrb[0].mxu0
        %9824 = vmatprep.mubr.bf16.mxu0 0
        %9825 = vmatmul.mubr.bf16.gmra.mrb[0].mxu0 %v9656
        %v9826 = vpop.f32.mrb[0].mxu0
        %v9827 = vadd.f32 0.0, %v9826
        %v9828 = vpop.f32.mrb[0].mxu0
        %v9829 = vpop.f32.mrb[0].mxu0
        %v9830 = vadd.f32 0.0, %v9829
        %v9831 = vpop.f32.mrb[0].mxu0
        %9832 = vmatprep.mubr.bf16.mxu0 0
        %9833 = vmatmul.mubr.bf16.gmra.mrb[0].mxu0 %v9657
        %v9834 = vpop.f32.mrb[0].mxu0
        %v9835 = vadd.f32 0.0, %v9834
        %v9836 = vpop.f32.mrb[0].mxu0
        %v9837 = vpop.f32.mrb[0].mxu0
        %v9838 = vadd.f32 0.0, %v9837
        %v9839 = vpop.f32.mrb[0].mxu0
        %9840 = vmatprep.mubr.bf16.mxu0 0
        %9841 = vmatmul.mubr.bf16.gmra.mrb[0].mxu0 %v9658
        %v9842 = vpop.f32.mrb[0].mxu0
        %v9843 = vadd.f32 0.0, %v9842
        %v9844 = vpop.f32.mrb[0].mxu0
        %v9845 = vpop.f32.mrb[0].mxu0
        %v9846 = vadd.f32 0.0, %v9845
        %v9847 = vpop.f32.mrb[0].mxu0
        %9848 = vmatprep.mubr.bf16.mxu0 0
        %9849 = vmatmul.mubr.bf16.gmra.mrb[0].mxu0 %v9659
        %v9850 = vpop.f32.mrb[0].mxu0
        %v9851 = vadd.f32 0.0, %v9850
        %v9852 = vpop.f32.mrb[0].mxu0
        %v9853 = vpop.f32.mrb[0].mxu0
        %v9854 = vadd.f32 0.0, %v9853
        %v9855 = vpop.f32.mrb[0].mxu0
        %9856 = vmatprep.mubr.bf16.mxu0 0
        %9857 = vmatmul.mubr.bf16.gmra.mrb[0].mxu0 %v9660
        %v9858 = vpop.f32.mrb[0].mxu0
        %v9859 = vadd.f32 0.0, %v9858
        %v9860 = vpop.f32.mrb[0].mxu0
        %v9861 = vpop.f32.mrb[0].mxu0
        %v9862 = vadd.f32 0.0, %v9861
        %v9863 = vpop.f32.mrb[0].mxu0
        %9864 = vmatprep.mubr.bf16.mxu0 0
        %9865 = vmatmul.mubr.bf16.gmra.mrb[0].mxu0 %v9661
        %v9866 = vpop.f32.mrb[0].mxu0
        %v9867 = vadd.f32 0.0, %v9866
        %v9868 = vpop.f32.mrb[0].mxu0
        %v9869 = vpop.f32.mrb[0].mxu0
        %v9870 = vadd.f32 0.0, %v9869
        %v9871 = vpop.f32.mrb[0].mxu0
        %9872 = vmatprep.mubr.bf16.mxu0 0
        %9873 = vmatmul.mubr.bf16.gmra.mrb[0].mxu0 %v9662
        %v9874 = vpop.f32.mrb[0].mxu0
        %v9875 = vadd.f32 0.0, %v9874
        %v9876 = vpop.f32.mrb[0].mxu0
        %v9877 = vpop.f32.mrb[0].mxu0
        %v9878 = vadd.f32 0.0, %v9877
        %v9879 = vpop.f32.mrb[0].mxu0
        %9880 = vmatprep.mubr.bf16.mxu0 0
        %9881 = vmatmul.mubr.bf16.gmra.mrb[0].mxu0 %v9663
        %v9882 = vpop.f32.mrb[0].mxu0
        %v9883 = vadd.f32 0.0, %v9882
        %v9884 = vpop.f32.mrb[0].mxu0
        %v9885 = vpop.f32.mrb[0].mxu0
        %v9886 = vadd.f32 0.0, %v9885
        %v9887 = vpop.f32.mrb[0].mxu0
        %9888 = vdwg.mxu0
        %v9889 = vadd.f32 %v9503, %v9763
        %v9890 = vadd.f32 %v9504, %v9766
        %v9891 = vadd.f32 %v9505, %v9771
        %v9892 = vadd.f32 %v9506, %v9774
        %v9893 = vadd.f32 %v9507, %v9779
        %v9894 = vadd.f32 %v9508, %v9782
        %v9895 = vadd.f32 %v9509, %v9787
        %v9896 = vadd.f32 %v9510, %v9790
        %v9897 = vadd.f32 %v9511, %v9795
        %v9898 = vadd.f32 %v9512, %v9798
        %v9899 = vadd.f32 %v9513, %v9803
        %v9900 = vadd.f32 %v9514, %v9806
        %v9901 = vadd.f32 %v9515, %v9811
        %v9902 = vadd.f32 %v9516, %v9814
        %v9903 = vadd.f32 %v9517, %v9819
        %v9904 = vadd.f32 %v9518, %v9822
        %v9905 = vadd.f32 %v9519, %v9827
        %v9906 = vadd.f32 %v9520, %v9830
        %v9907 = vadd.f32 %v9521, %v9835
        %v9908 = vadd.f32 %v9522, %v9838
        %v9909 = vadd.f32 %v9523, %v9843
        %v9910 = vadd.f32 %v9524, %v9846
        %v9911 = vadd.f32 %v9525, %v9851
        %v9912 = vadd.f32 %v9526, %v9854
        %v9913 = vadd.f32 %v9527, %v9859
        %v9914 = vadd.f32 %v9528, %v9862
        %v9915 = vadd.f32 %v9529, %v9867
        %v9916 = vadd.f32 %v9530, %v9870
        %v9917 = vadd.f32 %v9531, %v9875
        %v9918 = vadd.f32 %v9532, %v9878
        %v9919 = vadd.f32 %v9533, %v9883
        %v9920 = vadd.f32 %v9534, %v9886
        %v9921 = vld [vmem:[%s9535] sm:$0xf]
        %v9922 = vld [vmem:[%s9535 + $0x4] sm:$0xf]
        %v9923 = vld [vmem:[%s9535 + $0x8] sm:$0x1]
        %v9924 = vld [vmem:[%s9535 + $0xc] sm:$0xf]
        %v9925 = vld [vmem:[%s9535 + $0x10] sm:$0xf]
        %v9926 = vld [vmem:[%s9535 + $0x14] sm:$0x1]
        %v9927 = vld [vmem:[%s9535 + $0x18] sm:$0xf]
        %v9928 = vld [vmem:[%s9535 + $0x1c] sm:$0xf]
        %v9929 = vld [vmem:[%s9535 + $0x20] sm:$0x1]
        %v9930 = vld [vmem:[%s9535 + $0x24] sm:$0xf]
        %v9931 = vld [vmem:[%s9535 + $0x28] sm:$0xf]
        %v9932 = vld [vmem:[%s9535 + $0x2c] sm:$0x1]
        %v9933 = vld [vmem:[%s9535 + $0x30] sm:$0xf]
        %v9934 = vld [vmem:[%s9535 + $0x34] sm:$0xf]
        %v9935 = vld [vmem:[%s9535 + $0x38] sm:$0x1]
        %v9936 = vld [vmem:[%s9535 + $0x3c] sm:$0xf]
        %v9937 = vld [vmem:[%s9535 + $0x40] sm:$0xf]
        %v9938 = vld [vmem:[%s9535 + $0x44] sm:$0x1]
        %v9939 = vld [vmem:[%s9535 + $0x48] sm:$0xf]
        %v9940 = vld [vmem:[%s9535 + $0x4c] sm:$0xf]
        %v9941 = vld [vmem:[%s9535 + $0x50] sm:$0x1]
        %v9942 = vld [vmem:[%s9535 + $0x54] sm:$0xf]
        %v9943 = vld [vmem:[%s9535 + $0x58] sm:$0xf]
        %v9944 = vld [vmem:[%s9535 + $0x5c] sm:$0x1]
        %v9945 = vld [vmem:[%s9535 + $0x60] sm:$0xf]
        %v9946 = vld [vmem:[%s9535 + $0x64] sm:$0xf]
        %v9947 = vld [vmem:[%s9535 + $0x68] sm:$0x1]
        %v9948 = vld [vmem:[%s9535 + $0x6c] sm:$0xf]
        %v9949 = vld [vmem:[%s9535 + $0x70] sm:$0xf]
        %v9950 = vld [vmem:[%s9535 + $0x74] sm:$0x1]
        %v9951 = vld [vmem:[%s9535 + $0x78] sm:$0xf]
        %v9952 = vld [vmem:[%s9535 + $0x7c] sm:$0xf]
        %v9953 = vld [vmem:[%s9535 + $0x80] sm:$0x1]
        %v9954 = vld [vmem:[%s9535 + $0x84] sm:$0xf]
        %v9955 = vld [vmem:[%s9535 + $0x88] sm:$0xf]
        %v9956 = vld [vmem:[%s9535 + $0x8c] sm:$0x1]
        %v9957 = vld [vmem:[%s9535 + $0x90] sm:$0xf]
        %v9958 = vld [vmem:[%s9535 + $0x94] sm:$0xf]
        %v9959 = vld [vmem:[%s9535 + $0x98] sm:$0x1]
        %v9960 = vld [vmem:[%s9535 + $0x9c] sm:$0xf]
        %v9961 = vld [vmem:[%s9535 + $0xa0] sm:$0xf]
        %v9962 = vld [vmem:[%s9535 + $0xa4] sm:$0x1]
        %v9963 = vld [vmem:[%s9535 + $0xa8] sm:$0xf]
        %v9964 = vld [vmem:[%s9535 + $0xac] sm:$0xf]
        %v9965 = vld [vmem:[%s9535 + $0xb0] sm:$0x1]
        %v9966 = vld [vmem:[%s9535 + $0xb4] sm:$0xf]
        %v9967 = vld [vmem:[%s9535 + $0xb8] sm:$0xf]
        %v9968 = vld [vmem:[%s9535 + $0xbc] sm:$0x1]
        %v9970 = vshrl.u32 %v9921, 16
        %v9972 = vrot.slane %v9970, 4
        %v9973 = vshll.u32 %v9921, 16
        %v9975 = vrot.slane %v9973, 5
        %v9976 = vor.u32 %v9972, %v9975
        %v9977 = vrot.slane %v9976, 4
        %v9979 = vshll.u32 %v9922, 16
        %v9981 = vrot.slane %v9979, 5
        %v9982 = vsel %vm1043, %v9977, %v9981
        %v9983 = vshrl.u32 %v9922, 16
        %v9985 = vrot.slane %v9983, 4
        %v9986 = vor.u32 %v9985, %v9981
        %v9987 = vrot.slane %v9986, 4
        %v9989 = vshll.u32 %v9923, 16
        %v9991 = vrot.slane %v9989, 5
        %v9992 = vsel %vm1043, %v9987, %v9991
        %v9994 = vshrl.u32 %v9924, 16
        %v9996 = vrot.slane %v9994, 4
        %v9997 = vshll.u32 %v9924, 16
        %v9999 = vrot.slane %v9997, 5
        %v10000 = vor.u32 %v9996, %v9999
        %v10001 = vrot.slane %v10000, 4
        %v10003 = vshll.u32 %v9925, 16
        %v10005 = vrot.slane %v10003, 5
        %v10006 = vsel %vm1043, %v10001, %v10005
        %v10007 = vshrl.u32 %v9925, 16
        %v10009 = vrot.slane %v10007, 4
        %v10010 = vor.u32 %v10009, %v10005
        %v10011 = vrot.slane %v10010, 4
        %v10013 = vshll.u32 %v9926, 16
        %v10015 = vrot.slane %v10013, 5
        %v10016 = vsel %vm1043, %v10011, %v10015
        %v10018 = vshrl.u32 %v9927, 16
        %v10020 = vrot.slane %v10018, 4
        %v10021 = vshll.u32 %v9927, 16
        %v10023 = vrot.slane %v10021, 5
        %v10024 = vor.u32 %v10020, %v10023
        %v10025 = vrot.slane %v10024, 4
        %v10027 = vshll.u32 %v9928, 16
        %v10029 = vrot.slane %v10027, 5
        %v10030 = vsel %vm1043, %v10025, %v10029
        %v10031 = vshrl.u32 %v9928, 16
        %v10033 = vrot.slane %v10031, 4
        %v10034 = vor.u32 %v10033, %v10029
        %v10035 = vrot.slane %v10034, 4
        %v10037 = vshll.u32 %v9929, 16
        %v10039 = vrot.slane %v10037, 5
        %v10040 = vsel %vm1043, %v10035, %v10039
        %v10042 = vshrl.u32 %v9930, 16
        %v10044 = vrot.slane %v10042, 4
        %v10045 = vshll.u32 %v9930, 16
        %v10047 = vrot.slane %v10045, 5
        %v10048 = vor.u32 %v10044, %v10047
        %v10049 = vrot.slane %v10048, 4
        %v10051 = vshll.u32 %v9931, 16
        %v10053 = vrot.slane %v10051, 5
        %v10054 = vsel %vm1043, %v10049, %v10053
        %v10055 = vshrl.u32 %v9931, 16
        %v10057 = vrot.slane %v10055, 4
        %v10058 = vor.u32 %v10057, %v10053
        %v10059 = vrot.slane %v10058, 4
        %v10061 = vshll.u32 %v9932, 16
        %v10063 = vrot.slane %v10061, 5
        %v10064 = vsel %vm1043, %v10059, %v10063
        %v10066 = vshrl.u32 %v9933, 16
        %v10068 = vrot.slane %v10066, 4
        %v10069 = vshll.u32 %v9933, 16
        %v10071 = vrot.slane %v10069, 5
        %v10072 = vor.u32 %v10068, %v10071
        %v10073 = vrot.slane %v10072, 4
        %v10075 = vshll.u32 %v9934, 16
        %v10077 = vrot.slane %v10075, 5
        %v10078 = vsel %vm1043, %v10073, %v10077
        %v10079 = vshrl.u32 %v9934, 16
        %v10081 = vrot.slane %v10079, 4
        %v10082 = vor.u32 %v10081, %v10077
        %v10083 = vrot.slane %v10082, 4
        %v10085 = vshll.u32 %v9935, 16
        %v10087 = vrot.slane %v10085, 5
        %v10088 = vsel %vm1043, %v10083, %v10087
        %v10090 = vshrl.u32 %v9936, 16
        %v10092 = vrot.slane %v10090, 4
        %v10093 = vshll.u32 %v9936, 16
        %v10095 = vrot.slane %v10093, 5
        %v10096 = vor.u32 %v10092, %v10095
        %v10097 = vrot.slane %v10096, 4
        %v10099 = vshll.u32 %v9937, 16
        %v10101 = vrot.slane %v10099, 5
        %v10102 = vsel %vm1043, %v10097, %v10101
        %v10103 = vshrl.u32 %v9937, 16
        %v10105 = vrot.slane %v10103, 4
        %v10106 = vor.u32 %v10105, %v10101
        %v10107 = vrot.slane %v10106, 4
        %v10109 = vshll.u32 %v9938, 16
        %v10111 = vrot.slane %v10109, 5
        %v10112 = vsel %vm1043, %v10107, %v10111
        %v10114 = vshrl.u32 %v9939, 16
        %v10116 = vrot.slane %v10114, 4
        %v10117 = vshll.u32 %v9939, 16
        %v10119 = vrot.slane %v10117, 5
        %v10120 = vor.u32 %v10116, %v10119
        %v10121 = vrot.slane %v10120, 4
        %v10123 = vshll.u32 %v9940, 16
        %v10125 = vrot.slane %v10123, 5
        %v10126 = vsel %vm1043, %v10121, %v10125
        %v10127 = vshrl.u32 %v9940, 16
        %v10129 = vrot.slane %v10127, 4
        %v10130 = vor.u32 %v10129, %v10125
        %v10131 = vrot.slane %v10130, 4
        %v10133 = vshll.u32 %v9941, 16
        %v10135 = vrot.slane %v10133, 5
        %v10136 = vsel %vm1043, %v10131, %v10135
        %v10138 = vshrl.u32 %v9942, 16
        %v10140 = vrot.slane %v10138, 4
        %v10141 = vshll.u32 %v9942, 16
        %v10143 = vrot.slane %v10141, 5
        %v10144 = vor.u32 %v10140, %v10143
        %v10145 = vrot.slane %v10144, 4
        %v10147 = vshll.u32 %v9943, 16
        %v10149 = vrot.slane %v10147, 5
        %v10150 = vsel %vm1043, %v10145, %v10149
        %v10151 = vshrl.u32 %v9943, 16
        %v10153 = vrot.slane %v10151, 4
        %v10154 = vor.u32 %v10153, %v10149
        %v10155 = vrot.slane %v10154, 4
        %v10157 = vshll.u32 %v9944, 16
        %v10159 = vrot.slane %v10157, 5
        %v10160 = vsel %vm1043, %v10155, %v10159
        %v10162 = vshrl.u32 %v9945, 16
        %v10164 = vrot.slane %v10162, 4
        %v10165 = vshll.u32 %v9945, 16
        %v10167 = vrot.slane %v10165, 5
        %v10168 = vor.u32 %v10164, %v10167
        %v10169 = vrot.slane %v10168, 4
        %v10171 = vshll.u32 %v9946, 16
        %v10173 = vrot.slane %v10171, 5
        %v10174 = vsel %vm1043, %v10169, %v10173
        %v10175 = vshrl.u32 %v9946, 16
        %v10177 = vrot.slane %v10175, 4
        %v10178 = vor.u32 %v10177, %v10173
        %v10179 = vrot.slane %v10178, 4
        %v10181 = vshll.u32 %v9947, 16
        %v10183 = vrot.slane %v10181, 5
        %v10184 = vsel %vm1043, %v10179, %v10183
        %v10186 = vshrl.u32 %v9948, 16
        %v10188 = vrot.slane %v10186, 4
        %v10189 = vshll.u32 %v9948, 16
        %v10191 = vrot.slane %v10189, 5
        %v10192 = vor.u32 %v10188, %v10191
        %v10193 = vrot.slane %v10192, 4
        %v10195 = vshll.u32 %v9949, 16
        %v10197 = vrot.slane %v10195, 5
        %v10198 = vsel %vm1043, %v10193, %v10197
        %v10199 = vshrl.u32 %v9949, 16
        %v10201 = vrot.slane %v10199, 4
        %v10202 = vor.u32 %v10201, %v10197
        %v10203 = vrot.slane %v10202, 4
        %v10205 = vshll.u32 %v9950, 16
        %v10207 = vrot.slane %v10205, 5
        %v10208 = vsel %vm1043, %v10203, %v10207
        %v10210 = vshrl.u32 %v9951, 16
        %v10212 = vrot.slane %v10210, 4
        %v10213 = vshll.u32 %v9951, 16
        %v10215 = vrot.slane %v10213, 5
        %v10216 = vor.u32 %v10212, %v10215
        %v10217 = vrot.slane %v10216, 4
        %v10219 = vshll.u32 %v9952, 16
        %v10221 = vrot.slane %v10219, 5
        %v10222 = vsel %vm1043, %v10217, %v10221
        %v10223 = vshrl.u32 %v9952, 16
        %v10225 = vrot.slane %v10223, 4
        %v10226 = vor.u32 %v10225, %v10221
        %v10227 = vrot.slane %v10226, 4
        %v10229 = vshll.u32 %v9953, 16
        %v10231 = vrot.slane %v10229, 5
        %v10232 = vsel %vm1043, %v10227, %v10231
        %v10234 = vshrl.u32 %v9954, 16
        %v10236 = vrot.slane %v10234, 4
        %v10237 = vshll.u32 %v9954, 16
        %v10239 = vrot.slane %v10237, 5
        %v10240 = vor.u32 %v10236, %v10239
        %v10241 = vrot.slane %v10240, 4
        %v10243 = vshll.u32 %v9955, 16
        %v10245 = vrot.slane %v10243, 5
        %v10246 = vsel %vm1043, %v10241, %v10245
        %v10247 = vshrl.u32 %v9955, 16
        %v10249 = vrot.slane %v10247, 4
        %v10250 = vor.u32 %v10249, %v10245
        %v10251 = vrot.slane %v10250, 4
        %v10253 = vshll.u32 %v9956, 16
        %v10255 = vrot.slane %v10253, 5
        %v10256 = vsel %vm1043, %v10251, %v10255
        %v10258 = vshrl.u32 %v9957, 16
        %v10260 = vrot.slane %v10258, 4
        %v10261 = vshll.u32 %v9957, 16
        %v10263 = vrot.slane %v10261, 5
        %v10264 = vor.u32 %v10260, %v10263
        %v10265 = vrot.slane %v10264, 4
        %v10267 = vshll.u32 %v9958, 16
        %v10269 = vrot.slane %v10267, 5
        %v10270 = vsel %vm1043, %v10265, %v10269
        %v10271 = vshrl.u32 %v9958, 16
        %v10273 = vrot.slane %v10271, 4
        %v10274 = vor.u32 %v10273, %v10269
        %v10275 = vrot.slane %v10274, 4
        %v10277 = vshll.u32 %v9959, 16
        %v10279 = vrot.slane %v10277, 5
        %v10280 = vsel %vm1043, %v10275, %v10279
        %v10282 = vshrl.u32 %v9960, 16
        %v10284 = vrot.slane %v10282, 4
        %v10285 = vshll.u32 %v9960, 16
        %v10287 = vrot.slane %v10285, 5
        %v10288 = vor.u32 %v10284, %v10287
        %v10289 = vrot.slane %v10288, 4
        %v10291 = vshll.u32 %v9961, 16
        %v10293 = vrot.slane %v10291, 5
        %v10294 = vsel %vm1043, %v10289, %v10293
        %v10295 = vshrl.u32 %v9961, 16
        %v10297 = vrot.slane %v10295, 4
        %v10298 = vor.u32 %v10297, %v10293
        %v10299 = vrot.slane %v10298, 4
        %v10301 = vshll.u32 %v9962, 16
        %v10303 = vrot.slane %v10301, 5
        %v10304 = vsel %vm1043, %v10299, %v10303
        %v10306 = vshrl.u32 %v9963, 16
        %v10308 = vrot.slane %v10306, 4
        %v10309 = vshll.u32 %v9963, 16
        %v10311 = vrot.slane %v10309, 5
        %v10312 = vor.u32 %v10308, %v10311
        %v10313 = vrot.slane %v10312, 4
        %v10315 = vshll.u32 %v9964, 16
        %v10317 = vrot.slane %v10315, 5
        %v10318 = vsel %vm1043, %v10313, %v10317
        %v10319 = vshrl.u32 %v9964, 16
        %v10321 = vrot.slane %v10319, 4
        %v10322 = vor.u32 %v10321, %v10317
        %v10323 = vrot.slane %v10322, 4
        %v10325 = vshll.u32 %v9965, 16
        %v10327 = vrot.slane %v10325, 5
        %v10328 = vsel %vm1043, %v10323, %v10327
        %v10330 = vshrl.u32 %v9966, 16
        %v10332 = vrot.slane %v10330, 4
        %v10333 = vshll.u32 %v9966, 16
        %v10335 = vrot.slane %v10333, 5
        %v10336 = vor.u32 %v10332, %v10335
        %v10337 = vrot.slane %v10336, 4
        %v10339 = vshll.u32 %v9967, 16
        %v10341 = vrot.slane %v10339, 5
        %v10342 = vsel %vm1043, %v10337, %v10341
        %v10343 = vshrl.u32 %v9967, 16
        %v10345 = vrot.slane %v10343, 4
        %v10346 = vor.u32 %v10345, %v10341
        %v10347 = vrot.slane %v10346, 4
        %v10349 = vshll.u32 %v9968, 16
        %v10351 = vrot.slane %v10349, 5
        %v10352 = vsel %vm1043, %v10347, %v10351
        %v10353 = vld [vmem:[#allocation9 + $0x1c0] sm:$0xf]
        %v10354 = vld [vmem:[#allocation9 + $0x1c4] sm:$0xf]
        %v10355 = vld [vmem:[#allocation9 + $0x1c8] sm:$0xf]
        %v10356 = vld [vmem:[#allocation9 + $0x1cc] sm:$0xf]
        %v10357 = vld [vmem:[#allocation9 + $0x1d0] sm:$0xf]
        %v10358 = vld [vmem:[#allocation9 + $0x1d4] sm:$0xf]
        %v10359 = vld [vmem:[#allocation9 + $0x1d8] sm:$0xf]
        %v10360 = vld [vmem:[#allocation9 + $0x1dc] sm:$0xf]
        %v10361 = vld [vmem:[#allocation9 + $0x1e0] sm:$0xf]
        %v10362 = vld [vmem:[#allocation9 + $0x1e4] sm:$0xf]
        %v10363 = vld [vmem:[#allocation9 + $0x1e8] sm:$0xf]
        %v10364 = vld [vmem:[#allocation9 + $0x1ec] sm:$0xf]
        %v10365 = vld [vmem:[#allocation9 + $0x1f0] sm:$0xf]
        %v10366 = vld [vmem:[#allocation9 + $0x1f4] sm:$0xf]
        %v10367 = vld [vmem:[#allocation9 + $0x1f8] sm:$0xf]
        %v10368 = vld [vmem:[#allocation9 + $0x1fc] sm:$0xf]
        %v10369 = vunpack.c.l.b16 %v9982
        %v10370 = vunpack.c.l.b16 %v9992
        %v10371 = vunpack.c.l.b16 %v10006
        %v10372 = vunpack.c.l.b16 %v10016
        %v10373 = vunpack.c.l.b16 %v10030
        %v10374 = vunpack.c.l.b16 %v10040
        %v10375 = vunpack.c.l.b16 %v10054
        %v10376 = vunpack.c.l.b16 %v10064
        %v10377 = vunpack.c.l.b16 %v10078
        %v10378 = vunpack.c.l.b16 %v10088
        %v10379 = vunpack.c.l.b16 %v10102
        %v10380 = vunpack.c.l.b16 %v10112
        %v10381 = vunpack.c.l.b16 %v10126
        %v10382 = vunpack.c.l.b16 %v10136
        %v10383 = vunpack.c.l.b16 %v10150
        %v10384 = vunpack.c.l.b16 %v10160
        %v10385 = vunpack.c.l.b16 %v10174
        %v10386 = vunpack.c.l.b16 %v10184
        %v10387 = vunpack.c.l.b16 %v10198
        %v10388 = vunpack.c.l.b16 %v10208
        %v10389 = vunpack.c.l.b16 %v10222
        %v10390 = vunpack.c.l.b16 %v10232
        %v10391 = vunpack.c.l.b16 %v10246
        %v10392 = vunpack.c.l.b16 %v10256
        %v10393 = vunpack.c.l.b16 %v10270
        %v10394 = vunpack.c.l.b16 %v10280
        %v10395 = vunpack.c.l.b16 %v10294
        %v10396 = vunpack.c.l.b16 %v10304
        %v10397 = vunpack.c.l.b16 %v10318
        %v10398 = vunpack.c.l.b16 %v10328
        %v10399 = vunpack.c.l.b16 %v10342
        %v10400 = vunpack.c.l.b16 %v10352
        %v10401 = vpack.c.b16 %v10370, %v10369
        %v10402 = vpack.c.b16 %v10372, %v10371
        %v10403 = vpack.c.b16 %v10374, %v10373
        %v10404 = vpack.c.b16 %v10376, %v10375
        %v10405 = vpack.c.b16 %v10378, %v10377
        %v10406 = vpack.c.b16 %v10380, %v10379
        %v10407 = vpack.c.b16 %v10382, %v10381
        %v10408 = vpack.c.b16 %v10384, %v10383
        %v10409 = vpack.c.b16 %v10386, %v10385
        %v10410 = vpack.c.b16 %v10388, %v10387
        %v10411 = vpack.c.b16 %v10390, %v10389
        %v10412 = vpack.c.b16 %v10392, %v10391
        %v10413 = vpack.c.b16 %v10394, %v10393
        %v10414 = vpack.c.b16 %v10396, %v10395
        %v10415 = vpack.c.b16 %v10398, %v10397
        %v10416 = vpack.c.b16 %v10400, %v10399
        %v10449 = vunpack.c.l.b16 %v10353
        %v10450 = vunpack.c.l.b16 %v10354
        %v10451 = vunpack.c.l.b16 %v10355
        %v10452 = vunpack.c.l.b16 %v10356
        %v10453 = vunpack.c.l.b16 %v10357
        %v10454 = vunpack.c.l.b16 %v10358
        %v10455 = vunpack.c.l.b16 %v10359
        %v10456 = vunpack.c.l.b16 %v10360
        %v10457 = vunpack.c.l.b16 %v10361
        %v10458 = vunpack.c.l.b16 %v10362
        %v10459 = vunpack.c.l.b16 %v10363
        %v10460 = vunpack.c.l.b16 %v10364
        %v10461 = vunpack.c.l.b16 %v10365
        %v10462 = vunpack.c.l.b16 %v10366
        %v10463 = vunpack.c.l.b16 %v10367
        %v10464 = vunpack.c.l.b16 %v10368
        %v10465 = vpack.c.b16 %v10450, %v10449
        %v10466 = vpack.c.b16 %v10452, %v10451
        %v10467 = vpack.c.b16 %v10454, %v10453
        %v10468 = vpack.c.b16 %v10456, %v10455
        %v10469 = vpack.c.b16 %v10458, %v10457
        %v10470 = vpack.c.b16 %v10460, %v10459
        %v10471 = vpack.c.b16 %v10462, %v10461
        %v10472 = vpack.c.b16 %v10464, %v10463
        %10481 = vmatprep.subr.bf16.mxu0 0
        %10482 = vmatpush1.bf16.msra.mxu0 %v10465
        %10483 = vmatprep.subr.bf16.mxu0 0
        %10484 = vmatpush1.bf16.msra.mxu0 %v10466
        %10485 = vmatprep.subr.bf16.mxu0 0
        %10486 = vmatpush1.bf16.msra.mxu0 %v10467
        %10487 = vmatprep.subr.bf16.mxu0 0
        %10488 = vmatpush1.bf16.msra.mxu0 %v10468
        %10489 = vmatprep.subr.bf16.mxu0 0
        %10490 = vmatpush1.bf16.msra.mxu0 %v10469
        %10491 = vmatprep.subr.bf16.mxu0 0
        %10492 = vmatpush1.bf16.msra.mxu0 %v10470
        %10493 = vmatprep.subr.bf16.mxu0 0
        %10494 = vmatpush1.bf16.msra.mxu0 %v10471
        %10495 = vmatprep.subr.bf16.mxu0 0
        %10496 = vmatpush1.bf16.msra.mxu0 %v10472
        %10497 = vmatprep.subr.bf16.mxu0 0
        %10498 = vmatpush1.bf16.msra.mxu0 0
        %10499 = vmatprep.subr.bf16.mxu0 0
        %10500 = vmatpush1.bf16.msra.mxu0 0
        %10501 = vmatprep.subr.bf16.mxu0 0
        %10502 = vmatpush1.bf16.msra.mxu0 0
        %10503 = vmatprep.subr.bf16.mxu0 0
        %10504 = vmatpush1.bf16.msra.mxu0 0
        %10505 = vmatprep.subr.bf16.mxu0 0
        %10506 = vmatpush1.bf16.msra.mxu0 0
        %10507 = vmatprep.subr.bf16.mxu0 0
        %10508 = vmatpush1.bf16.msra.mxu0 0
        %10509 = vmatprep.subr.bf16.mxu0 0
        %10510 = vmatpush1.bf16.msra.mxu0 0
        %10511 = vmatprep.subr.bf16.mxu0 0
        %10512 = vmatpush1.bf16.msra.mxu0 0
        %10513 = vmatprep.mubr.bf16.mxu0 0
        %10514 = vmatmul.mubr.bf16.gmra.mrb[0].mxu0 %v10401
        %v10515 = vpop.f32.mrb[0].mxu0
        %v10516 = vadd.f32 0.0, %v10515
        %v10517 = vpop.f32.mrb[0].mxu0
        %v10518 = vpop.f32.mrb[0].mxu0
        %v10519 = vadd.f32 0.0, %v10518
        %v10520 = vpop.f32.mrb[0].mxu0
        %10521 = vmatprep.mubr.bf16.mxu0 0
        %10522 = vmatmul.mubr.bf16.gmra.mrb[0].mxu0 %v10402
        %v10523 = vpop.f32.mrb[0].mxu0
        %v10524 = vadd.f32 0.0, %v10523
        %v10525 = vpop.f32.mrb[0].mxu0
        %v10526 = vpop.f32.mrb[0].mxu0
        %v10527 = vadd.f32 0.0, %v10526
        %v10528 = vpop.f32.mrb[0].mxu0
        %10529 = vmatprep.mubr.bf16.mxu0 0
        %10530 = vmatmul.mubr.bf16.gmra.mrb[0].mxu0 %v10403
        %v10531 = vpop.f32.mrb[0].mxu0
        %v10532 = vadd.f32 0.0, %v10531
        %v10533 = vpop.f32.mrb[0].mxu0
        %v10534 = vpop.f32.mrb[0].mxu0
        %v10535 = vadd.f32 0.0, %v10534
        %v10536 = vpop.f32.mrb[0].mxu0
        %10537 = vmatprep.mubr.bf16.mxu0 0
        %10538 = vmatmul.mubr.bf16.gmra.mrb[0].mxu0 %v10404
        %v10539 = vpop.f32.mrb[0].mxu0
        %v10540 = vadd.f32 0.0, %v10539
        %v10541 = vpop.f32.mrb[0].mxu0
        %v10542 = vpop.f32.mrb[0].mxu0
        %v10543 = vadd.f32 0.0, %v10542
        %v10544 = vpop.f32.mrb[0].mxu0
        %10545 = vmatprep.mubr.bf16.mxu0 0
        %10546 = vmatmul.mubr.bf16.gmra.mrb[0].mxu0 %v10405
        %v10547 = vpop.f32.mrb[0].mxu0
        %v10548 = vadd.f32 0.0, %v10547
        %v10549 = vpop.f32.mrb[0].mxu0
        %v10550 = vpop.f32.mrb[0].mxu0
        %v10551 = vadd.f32 0.0, %v10550
        %v10552 = vpop.f32.mrb[0].mxu0
        %10553 = vmatprep.mubr.bf16.mxu0 0
        %10554 = vmatmul.mubr.bf16.gmra.mrb[0].mxu0 %v10406
        %v10555 = vpop.f32.mrb[0].mxu0
        %v10556 = vadd.f32 0.0, %v10555
        %v10557 = vpop.f32.mrb[0].mxu0
        %v10558 = vpop.f32.mrb[0].mxu0
        %v10559 = vadd.f32 0.0, %v10558
        %v10560 = vpop.f32.mrb[0].mxu0
        %10561 = vmatprep.mubr.bf16.mxu0 0
        %10562 = vmatmul.mubr.bf16.gmra.mrb[0].mxu0 %v10407
        %v10563 = vpop.f32.mrb[0].mxu0
        %v10564 = vadd.f32 0.0, %v10563
        %v10565 = vpop.f32.mrb[0].mxu0
        %v10566 = vpop.f32.mrb[0].mxu0
        %v10567 = vadd.f32 0.0, %v10566
        %v10568 = vpop.f32.mrb[0].mxu0
        %10569 = vmatprep.mubr.bf16.mxu0 0
        %10570 = vmatmul.mubr.bf16.gmra.mrb[0].mxu0 %v10408
        %v10571 = vpop.f32.mrb[0].mxu0
        %v10572 = vadd.f32 0.0, %v10571
        %v10573 = vpop.f32.mrb[0].mxu0
        %v10574 = vpop.f32.mrb[0].mxu0
        %v10575 = vadd.f32 0.0, %v10574
        %v10576 = vpop.f32.mrb[0].mxu0
        %10577 = vmatprep.mubr.bf16.mxu0 0
        %10578 = vmatmul.mubr.bf16.gmra.mrb[0].mxu0 %v10409
        %v10579 = vpop.f32.mrb[0].mxu0
        %v10580 = vadd.f32 0.0, %v10579
        %v10581 = vpop.f32.mrb[0].mxu0
        %v10582 = vpop.f32.mrb[0].mxu0
        %v10583 = vadd.f32 0.0, %v10582
        %v10584 = vpop.f32.mrb[0].mxu0
        %10585 = vmatprep.mubr.bf16.mxu0 0
        %10586 = vmatmul.mubr.bf16.gmra.mrb[0].mxu0 %v10410
        %v10587 = vpop.f32.mrb[0].mxu0
        %v10588 = vadd.f32 0.0, %v10587
        %v10589 = vpop.f32.mrb[0].mxu0
        %v10590 = vpop.f32.mrb[0].mxu0
        %v10591 = vadd.f32 0.0, %v10590
        %v10592 = vpop.f32.mrb[0].mxu0
        %10593 = vmatprep.mubr.bf16.mxu0 0
        %10594 = vmatmul.mubr.bf16.gmra.mrb[0].mxu0 %v10411
        %v10595 = vpop.f32.mrb[0].mxu0
        %v10596 = vadd.f32 0.0, %v10595
        %v10597 = vpop.f32.mrb[0].mxu0
        %v10598 = vpop.f32.mrb[0].mxu0
        %v10599 = vadd.f32 0.0, %v10598
        %v10600 = vpop.f32.mrb[0].mxu0
        %10601 = vmatprep.mubr.bf16.mxu0 0
        %10602 = vmatmul.mubr.bf16.gmra.mrb[0].mxu0 %v10412
        %v10603 = vpop.f32.mrb[0].mxu0
        %v10604 = vadd.f32 0.0, %v10603
        %v10605 = vpop.f32.mrb[0].mxu0
        %v10606 = vpop.f32.mrb[0].mxu0
        %v10607 = vadd.f32 0.0, %v10606
        %v10608 = vpop.f32.mrb[0].mxu0
        %10609 = vmatprep.mubr.bf16.mxu0 0
        %10610 = vmatmul.mubr.bf16.gmra.mrb[0].mxu0 %v10413
        %v10611 = vpop.f32.mrb[0].mxu0
        %v10612 = vadd.f32 0.0, %v10611
        %v10613 = vpop.f32.mrb[0].mxu0
        %v10614 = vpop.f32.mrb[0].mxu0
        %v10615 = vadd.f32 0.0, %v10614
        %v10616 = vpop.f32.mrb[0].mxu0
        %10617 = vmatprep.mubr.bf16.mxu0 0
        %10618 = vmatmul.mubr.bf16.gmra.mrb[0].mxu0 %v10414
        %v10619 = vpop.f32.mrb[0].mxu0
        %v10620 = vadd.f32 0.0, %v10619
        %v10621 = vpop.f32.mrb[0].mxu0
        %v10622 = vpop.f32.mrb[0].mxu0
        %v10623 = vadd.f32 0.0, %v10622
        %v10624 = vpop.f32.mrb[0].mxu0
        %10625 = vmatprep.mubr.bf16.mxu0 0
        %10626 = vmatmul.mubr.bf16.gmra.mrb[0].mxu0 %v10415
        %v10627 = vpop.f32.mrb[0].mxu0
        %v10628 = vadd.f32 0.0, %v10627
        %v10629 = vpop.f32.mrb[0].mxu0
        %v10630 = vpop.f32.mrb[0].mxu0
        %v10631 = vadd.f32 0.0, %v10630
        %v10632 = vpop.f32.mrb[0].mxu0
        %10633 = vmatprep.mubr.bf16.mxu0 0
        %10634 = vmatmul.mubr.bf16.gmra.mrb[0].mxu0 %v10416
        %v10635 = vpop.f32.mrb[0].mxu0
        %v10636 = vadd.f32 0.0, %v10635
        %v10637 = vpop.f32.mrb[0].mxu0
        %v10638 = vpop.f32.mrb[0].mxu0
        %v10639 = vadd.f32 0.0, %v10638
        %v10640 = vpop.f32.mrb[0].mxu0
        %10641 = vdwg.mxu0
        %v10642 = vadd.f32 %v9889, %v10516
        %v10643 = vadd.f32 %v9890, %v10519
        %v10644 = vadd.f32 %v9891, %v10524
        %v10645 = vadd.f32 %v9892, %v10527
        %v10646 = vadd.f32 %v9893, %v10532
        %v10647 = vadd.f32 %v9894, %v10535
        %v10648 = vadd.f32 %v9895, %v10540
        %v10649 = vadd.f32 %v9896, %v10543
        %v10650 = vadd.f32 %v9897, %v10548
        %v10651 = vadd.f32 %v9898, %v10551
        %v10652 = vadd.f32 %v9899, %v10556
        %v10653 = vadd.f32 %v9900, %v10559
        %v10654 = vadd.f32 %v9901, %v10564
        %v10655 = vadd.f32 %v9902, %v10567
        %v10656 = vadd.f32 %v9903, %v10572
        %v10657 = vadd.f32 %v9904, %v10575
        %v10658 = vadd.f32 %v9905, %v10580
        %v10659 = vadd.f32 %v9906, %v10583
        %v10660 = vadd.f32 %v9907, %v10588
        %v10661 = vadd.f32 %v9908, %v10591
        %v10662 = vadd.f32 %v9909, %v10596
        %v10663 = vadd.f32 %v9910, %v10599
        %v10664 = vadd.f32 %v9911, %v10604
        %v10665 = vadd.f32 %v9912, %v10607
        %v10666 = vadd.f32 %v9913, %v10612
        %v10667 = vadd.f32 %v9914, %v10615
        %v10668 = vadd.f32 %v9915, %v10620
        %v10669 = vadd.f32 %v9916, %v10623
        %v10670 = vadd.f32 %v9917, %v10628
        %v10671 = vadd.f32 %v9918, %v10631
        %v10672 = vadd.f32 %v9919, %v10636
        %v10673 = vadd.f32 %v9920, %v10639
        %v10674 = vld [vmem:[%s9535] sm:$0xe]
        %v10675 = vld [vmem:[%s9535 + $0xc] sm:$0xe]
        %v10676 = vld [vmem:[%s9535 + $0x18] sm:$0xe]
        %v10677 = vld [vmem:[%s9535 + $0x24] sm:$0xe]
        %v10678 = vld [vmem:[%s9535 + $0x30] sm:$0xe]
        %v10679 = vld [vmem:[%s9535 + $0x3c] sm:$0xe]
        %v10680 = vld [vmem:[%s9535 + $0x48] sm:$0xe]
        %v10681 = vld [vmem:[%s9535 + $0x54] sm:$0xe]
        %v10682 = vld [vmem:[%s9535 + $0x60] sm:$0xe]
        %v10683 = vld [vmem:[%s9535 + $0x6c] sm:$0xe]
        %v10684 = vld [vmem:[%s9535 + $0x78] sm:$0xe]
        %v10685 = vld [vmem:[%s9535 + $0x84] sm:$0xe]
        %v10686 = vld [vmem:[%s9535 + $0x90] sm:$0xe]
        %v10687 = vld [vmem:[%s9535 + $0x9c] sm:$0xe]
        %v10688 = vld [vmem:[%s9535 + $0xa8] sm:$0xe]
        %v10689 = vld [vmem:[%s9535 + $0xb4] sm:$0xe]
        %v10738 = vrot.slane %v10674, 5
        %v10739 = vrot.slane %v10738, 4
        %v10740 = vrot.slane %v9922, 5
        %v10741 = vsel %vm2072, %v10739, %v10740
        %v10742 = vrot.slane %v10740, 4
        %v10743 = vrot.slane %v9923, 5
        %v10744 = vsel %vm2072, %v10742, %v10743
        %v10745 = vrot.slane %v10675, 5
        %v10746 = vrot.slane %v10745, 4
        %v10747 = vrot.slane %v9925, 5
        %v10748 = vsel %vm2072, %v10746, %v10747
        %v10749 = vrot.slane %v10747, 4
        %v10750 = vrot.slane %v9926, 5
        %v10751 = vsel %vm2072, %v10749, %v10750
        %v10752 = vrot.slane %v10676, 5
        %v10753 = vrot.slane %v10752, 4
        %v10754 = vrot.slane %v9928, 5
        %v10755 = vsel %vm2072, %v10753, %v10754
        %v10756 = vrot.slane %v10754, 4
        %v10757 = vrot.slane %v9929, 5
        %v10758 = vsel %vm2072, %v10756, %v10757
        %v10759 = vrot.slane %v10677, 5
        %v10760 = vrot.slane %v10759, 4
        %v10761 = vrot.slane %v9931, 5
        %v10762 = vsel %vm2072, %v10760, %v10761
        %v10763 = vrot.slane %v10761, 4
        %v10764 = vrot.slane %v9932, 5
        %v10765 = vsel %vm2072, %v10763, %v10764
        %v10766 = vrot.slane %v10678, 5
        %v10767 = vrot.slane %v10766, 4
        %v10768 = vrot.slane %v9934, 5
        %v10769 = vsel %vm2072, %v10767, %v10768
        %v10770 = vrot.slane %v10768, 4
        %v10771 = vrot.slane %v9935, 5
        %v10772 = vsel %vm2072, %v10770, %v10771
        %v10773 = vrot.slane %v10679, 5
        %v10774 = vrot.slane %v10773, 4
        %v10775 = vrot.slane %v9937, 5
        %v10776 = vsel %vm2072, %v10774, %v10775
        %v10777 = vrot.slane %v10775, 4
        %v10778 = vrot.slane %v9938, 5
        %v10779 = vsel %vm2072, %v10777, %v10778
        %v10780 = vrot.slane %v10680, 5
        %v10781 = vrot.slane %v10780, 4
        %v10782 = vrot.slane %v9940, 5
        %v10783 = vsel %vm2072, %v10781, %v10782
        %v10784 = vrot.slane %v10782, 4
        %v10785 = vrot.slane %v9941, 5
        %v10786 = vsel %vm2072, %v10784, %v10785
        %v10787 = vrot.slane %v10681, 5
        %v10788 = vrot.slane %v10787, 4
        %v10789 = vrot.slane %v9943, 5
        %v10790 = vsel %vm2072, %v10788, %v10789
        %v10791 = vrot.slane %v10789, 4
        %v10792 = vrot.slane %v9944, 5
        %v10793 = vsel %vm2072, %v10791, %v10792
        %v10794 = vrot.slane %v10682, 5
        %v10795 = vrot.slane %v10794, 4
        %v10796 = vrot.slane %v9946, 5
        %v10797 = vsel %vm2072, %v10795, %v10796
        %v10798 = vrot.slane %v10796, 4
        %v10799 = vrot.slane %v9947, 5
        %v10800 = vsel %vm2072, %v10798, %v10799
        %v10801 = vrot.slane %v10683, 5
        %v10802 = vrot.slane %v10801, 4
        %v10803 = vrot.slane %v9949, 5
        %v10804 = vsel %vm2072, %v10802, %v10803
        %v10805 = vrot.slane %v10803, 4
        %v10806 = vrot.slane %v9950, 5
        %v10807 = vsel %vm2072, %v10805, %v10806
        %v10808 = vrot.slane %v10684, 5
        %v10809 = vrot.slane %v10808, 4
        %v10810 = vrot.slane %v9952, 5
        %v10811 = vsel %vm2072, %v10809, %v10810
        %v10812 = vrot.slane %v10810, 4
        %v10813 = vrot.slane %v9953, 5
        %v10814 = vsel %vm2072, %v10812, %v10813
        %v10815 = vrot.slane %v10685, 5
        %v10816 = vrot.slane %v10815, 4
        %v10817 = vrot.slane %v9955, 5
        %v10818 = vsel %vm2072, %v10816, %v10817
        %v10819 = vrot.slane %v10817, 4
        %v10820 = vrot.slane %v9956, 5
        %v10821 = vsel %vm2072, %v10819, %v10820
        %v10822 = vrot.slane %v10686, 5
        %v10823 = vrot.slane %v10822, 4
        %v10824 = vrot.slane %v9958, 5
        %v10825 = vsel %vm2072, %v10823, %v10824
        %v10826 = vrot.slane %v10824, 4
        %v10827 = vrot.slane %v9959, 5
        %v10828 = vsel %vm2072, %v10826, %v10827
        %v10829 = vrot.slane %v10687, 5
        %v10830 = vrot.slane %v10829, 4
        %v10831 = vrot.slane %v9961, 5
        %v10832 = vsel %vm2072, %v10830, %v10831
        %v10833 = vrot.slane %v10831, 4
        %v10834 = vrot.slane %v9962, 5
        %v10835 = vsel %vm2072, %v10833, %v10834
        %v10836 = vrot.slane %v10688, 5
        %v10837 = vrot.slane %v10836, 4
        %v10838 = vrot.slane %v9964, 5
        %v10839 = vsel %vm2072, %v10837, %v10838
        %v10840 = vrot.slane %v10838, 4
        %v10841 = vrot.slane %v9965, 5
        %v10842 = vsel %vm2072, %v10840, %v10841
        %v10843 = vrot.slane %v10689, 5
        %v10844 = vrot.slane %v10843, 4
        %v10845 = vrot.slane %v9967, 5
        %v10846 = vsel %vm2072, %v10844, %v10845
        %v10847 = vrot.slane %v10845, 4
        %v10848 = vrot.slane %v9968, 5
        %v10849 = vsel %vm2072, %v10847, %v10848
        %v10850 = vld [vmem:[#allocation9 + $0x200] sm:$0xf]
        %v10851 = vld [vmem:[#allocation9 + $0x204] sm:$0xf]
        %v10852 = vld [vmem:[#allocation9 + $0x208] sm:$0xf]
        %v10853 = vld [vmem:[#allocation9 + $0x20c] sm:$0xf]
        %v10854 = vld [vmem:[#allocation9 + $0x210] sm:$0xf]
        %v10855 = vld [vmem:[#allocation9 + $0x214] sm:$0xf]
        %v10856 = vld [vmem:[#allocation9 + $0x218] sm:$0xf]
        %v10857 = vld [vmem:[#allocation9 + $0x21c] sm:$0xf]
        %v10858 = vld [vmem:[#allocation9 + $0x220] sm:$0xf]
        %v10859 = vld [vmem:[#allocation9 + $0x224] sm:$0xf]
        %v10860 = vld [vmem:[#allocation9 + $0x228] sm:$0xf]
        %v10861 = vld [vmem:[#allocation9 + $0x22c] sm:$0xf]
        %v10862 = vld [vmem:[#allocation9 + $0x230] sm:$0xf]
        %v10863 = vld [vmem:[#allocation9 + $0x234] sm:$0xf]
        %v10864 = vld [vmem:[#allocation9 + $0x238] sm:$0xf]
        %v10865 = vld [vmem:[#allocation9 + $0x23c] sm:$0xf]
        %v10866 = vunpack.c.l.b16 %v10741
        %v10867 = vunpack.c.l.b16 %v10744
        %v10868 = vunpack.c.l.b16 %v10748
        %v10869 = vunpack.c.l.b16 %v10751
        %v10870 = vunpack.c.l.b16 %v10755
        %v10871 = vunpack.c.l.b16 %v10758
        %v10872 = vunpack.c.l.b16 %v10762
        %v10873 = vunpack.c.l.b16 %v10765
        %v10874 = vunpack.c.l.b16 %v10769
        %v10875 = vunpack.c.l.b16 %v10772
        %v10876 = vunpack.c.l.b16 %v10776
        %v10877 = vunpack.c.l.b16 %v10779
        %v10878 = vunpack.c.l.b16 %v10783
        %v10879 = vunpack.c.l.b16 %v10786
        %v10880 = vunpack.c.l.b16 %v10790
        %v10881 = vunpack.c.l.b16 %v10793
        %v10882 = vunpack.c.l.b16 %v10797
        %v10883 = vunpack.c.l.b16 %v10800
        %v10884 = vunpack.c.l.b16 %v10804
        %v10885 = vunpack.c.l.b16 %v10807
        %v10886 = vunpack.c.l.b16 %v10811
        %v10887 = vunpack.c.l.b16 %v10814
        %v10888 = vunpack.c.l.b16 %v10818
        %v10889 = vunpack.c.l.b16 %v10821
        %v10890 = vunpack.c.l.b16 %v10825
        %v10891 = vunpack.c.l.b16 %v10828
        %v10892 = vunpack.c.l.b16 %v10832
        %v10893 = vunpack.c.l.b16 %v10835
        %v10894 = vunpack.c.l.b16 %v10839
        %v10895 = vunpack.c.l.b16 %v10842
        %v10896 = vunpack.c.l.b16 %v10846
        %v10897 = vunpack.c.l.b16 %v10849
        %v10898 = vpack.c.b16 %v10867, %v10866
        %v10899 = vpack.c.b16 %v10869, %v10868
        %v10900 = vpack.c.b16 %v10871, %v10870
        %v10901 = vpack.c.b16 %v10873, %v10872
        %v10902 = vpack.c.b16 %v10875, %v10874
        %v10903 = vpack.c.b16 %v10877, %v10876
        %v10904 = vpack.c.b16 %v10879, %v10878
        %v10905 = vpack.c.b16 %v10881, %v10880
        %v10906 = vpack.c.b16 %v10883, %v10882
        %v10907 = vpack.c.b16 %v10885, %v10884
        %v10908 = vpack.c.b16 %v10887, %v10886
        %v10909 = vpack.c.b16 %v10889, %v10888
        %v10910 = vpack.c.b16 %v10891, %v10890
        %v10911 = vpack.c.b16 %v10893, %v10892
        %v10912 = vpack.c.b16 %v10895, %v10894
        %v10913 = vpack.c.b16 %v10897, %v10896
        %v10946 = vunpack.c.l.b16 %v10850
        %v10947 = vunpack.c.l.b16 %v10851
        %v10948 = vunpack.c.l.b16 %v10852
        %v10949 = vunpack.c.l.b16 %v10853
        %v10950 = vunpack.c.l.b16 %v10854
        %v10951 = vunpack.c.l.b16 %v10855
        %v10952 = vunpack.c.l.b16 %v10856
        %v10953 = vunpack.c.l.b16 %v10857
        %v10954 = vunpack.c.l.b16 %v10858
        %v10955 = vunpack.c.l.b16 %v10859
        %v10956 = vunpack.c.l.b16 %v10860
        %v10957 = vunpack.c.l.b16 %v10861
        %v10958 = vunpack.c.l.b16 %v10862
        %v10959 = vunpack.c.l.b16 %v10863
        %v10960 = vunpack.c.l.b16 %v10864
        %v10961 = vunpack.c.l.b16 %v10865
        %v10962 = vpack.c.b16 %v10947, %v10946
        %v10963 = vpack.c.b16 %v10949, %v10948
        %v10964 = vpack.c.b16 %v10951, %v10950
        %v10965 = vpack.c.b16 %v10953, %v10952
        %v10966 = vpack.c.b16 %v10955, %v10954
        %v10967 = vpack.c.b16 %v10957, %v10956
        %v10968 = vpack.c.b16 %v10959, %v10958
        %v10969 = vpack.c.b16 %v10961, %v10960
        %10978 = vmatprep.subr.bf16.mxu0 0
        %10979 = vmatpush1.bf16.msra.mxu0 %v10962
        %10980 = vmatprep.subr.bf16.mxu0 0
        %10981 = vmatpush1.bf16.msra.mxu0 %v10963
        %10982 = vmatprep.subr.bf16.mxu0 0
        %10983 = vmatpush1.bf16.msra.mxu0 %v10964
        %10984 = vmatprep.subr.bf16.mxu0 0
        %10985 = vmatpush1.bf16.msra.mxu0 %v10965
        %10986 = vmatprep.subr.bf16.mxu0 0
        %10987 = vmatpush1.bf16.msra.mxu0 %v10966
        %10988 = vmatprep.subr.bf16.mxu0 0
        %10989 = vmatpush1.bf16.msra.mxu0 %v10967
        %10990 = vmatprep.subr.bf16.mxu0 0
        %10991 = vmatpush1.bf16.msra.mxu0 %v10968
        %10992 = vmatprep.subr.bf16.mxu0 0
        %10993 = vmatpush1.bf16.msra.mxu0 %v10969
        %10994 = vmatprep.subr.bf16.mxu0 0
        %10995 = vmatpush1.bf16.msra.mxu0 0
        %10996 = vmatprep.subr.bf16.mxu0 0
        %10997 = vmatpush1.bf16.msra.mxu0 0
        %10998 = vmatprep.subr.bf16.mxu0 0
        %10999 = vmatpush1.bf16.msra.mxu0 0
        %11000 = vmatprep.subr.bf16.mxu0 0
        %11001 = vmatpush1.bf16.msra.mxu0 0
        %11002 = vmatprep.subr.bf16.mxu0 0
        %11003 = vmatpush1.bf16.msra.mxu0 0
        %11004 = vmatprep.subr.bf16.mxu0 0
        %11005 = vmatpush1.bf16.msra.mxu0 0
        %11006 = vmatprep.subr.bf16.mxu0 0
        %11007 = vmatpush1.bf16.msra.mxu0 0
        %11008 = vmatprep.subr.bf16.mxu0 0
        %11009 = vmatpush1.bf16.msra.mxu0 0
        %11010 = vmatprep.mubr.bf16.mxu0 0
        %11011 = vmatmul.mubr.bf16.gmra.mrb[0].mxu0 %v10898
        %v11012 = vpop.f32.mrb[0].mxu0
        %v11013 = vadd.f32 0.0, %v11012
        %v11014 = vpop.f32.mrb[0].mxu0
        %v11015 = vpop.f32.mrb[0].mxu0
        %v11016 = vadd.f32 0.0, %v11015
        %v11017 = vpop.f32.mrb[0].mxu0
        %11018 = vmatprep.mubr.bf16.mxu0 0
        %11019 = vmatmul.mubr.bf16.gmra.mrb[0].mxu0 %v10899
        %v11020 = vpop.f32.mrb[0].mxu0
        %v11021 = vadd.f32 0.0, %v11020
        %v11022 = vpop.f32.mrb[0].mxu0
        %v11023 = vpop.f32.mrb[0].mxu0
        %v11024 = vadd.f32 0.0, %v11023
        %v11025 = vpop.f32.mrb[0].mxu0
        %11026 = vmatprep.mubr.bf16.mxu0 0
        %11027 = vmatmul.mubr.bf16.gmra.mrb[0].mxu0 %v10900
        %v11028 = vpop.f32.mrb[0].mxu0
        %v11029 = vadd.f32 0.0, %v11028
        %v11030 = vpop.f32.mrb[0].mxu0
        %v11031 = vpop.f32.mrb[0].mxu0
        %v11032 = vadd.f32 0.0, %v11031
        %v11033 = vpop.f32.mrb[0].mxu0
        %11034 = vmatprep.mubr.bf16.mxu0 0
        %11035 = vmatmul.mubr.bf16.gmra.mrb[0].mxu0 %v10901
        %v11036 = vpop.f32.mrb[0].mxu0
        %v11037 = vadd.f32 0.0, %v11036
        %v11038 = vpop.f32.mrb[0].mxu0
        %v11039 = vpop.f32.mrb[0].mxu0
        %v11040 = vadd.f32 0.0, %v11039
        %v11041 = vpop.f32.mrb[0].mxu0
        %11042 = vmatprep.mubr.bf16.mxu0 0
        %11043 = vmatmul.mubr.bf16.gmra.mrb[0].mxu0 %v10902
        %v11044 = vpop.f32.mrb[0].mxu0
        %v11045 = vadd.f32 0.0, %v11044
        %v11046 = vpop.f32.mrb[0].mxu0
        %v11047 = vpop.f32.mrb[0].mxu0
        %v11048 = vadd.f32 0.0, %v11047
        %v11049 = vpop.f32.mrb[0].mxu0
        %11050 = vmatprep.mubr.bf16.mxu0 0
        %11051 = vmatmul.mubr.bf16.gmra.mrb[0].mxu0 %v10903
        %v11052 = vpop.f32.mrb[0].mxu0
        %v11053 = vadd.f32 0.0, %v11052
        %v11054 = vpop.f32.mrb[0].mxu0
        %v11055 = vpop.f32.mrb[0].mxu0
        %v11056 = vadd.f32 0.0, %v11055
        %v11057 = vpop.f32.mrb[0].mxu0
        %11058 = vmatprep.mubr.bf16.mxu0 0
        %11059 = vmatmul.mubr.bf16.gmra.mrb[0].mxu0 %v10904
        %v11060 = vpop.f32.mrb[0].mxu0
        %v11061 = vadd.f32 0.0, %v11060
        %v11062 = vpop.f32.mrb[0].mxu0
        %v11063 = vpop.f32.mrb[0].mxu0
        %v11064 = vadd.f32 0.0, %v11063
        %v11065 = vpop.f32.mrb[0].mxu0
        %11066 = vmatprep.mubr.bf16.mxu0 0
        %11067 = vmatmul.mubr.bf16.gmra.mrb[0].mxu0 %v10905
        %v11068 = vpop.f32.mrb[0].mxu0
        %v11069 = vadd.f32 0.0, %v11068
        %v11070 = vpop.f32.mrb[0].mxu0
        %v11071 = vpop.f32.mrb[0].mxu0
        %v11072 = vadd.f32 0.0, %v11071
        %v11073 = vpop.f32.mrb[0].mxu0
        %11074 = vmatprep.mubr.bf16.mxu0 0
        %11075 = vmatmul.mubr.bf16.gmra.mrb[0].mxu0 %v10906
        %v11076 = vpop.f32.mrb[0].mxu0
        %v11077 = vadd.f32 0.0, %v11076
        %v11078 = vpop.f32.mrb[0].mxu0
        %v11079 = vpop.f32.mrb[0].mxu0
        %v11080 = vadd.f32 0.0, %v11079
        %v11081 = vpop.f32.mrb[0].mxu0
        %11082 = vmatprep.mubr.bf16.mxu0 0
        %11083 = vmatmul.mubr.bf16.gmra.mrb[0].mxu0 %v10907
        %v11084 = vpop.f32.mrb[0].mxu0
        %v11085 = vadd.f32 0.0, %v11084
        %v11086 = vpop.f32.mrb[0].mxu0
        %v11087 = vpop.f32.mrb[0].mxu0
        %v11088 = vadd.f32 0.0, %v11087
        %v11089 = vpop.f32.mrb[0].mxu0
        %11090 = vmatprep.mubr.bf16.mxu0 0
        %11091 = vmatmul.mubr.bf16.gmra.mrb[0].mxu0 %v10908
        %v11092 = vpop.f32.mrb[0].mxu0
        %v11093 = vadd.f32 0.0, %v11092
        %v11094 = vpop.f32.mrb[0].mxu0
        %v11095 = vpop.f32.mrb[0].mxu0
        %v11096 = vadd.f32 0.0, %v11095
        %v11097 = vpop.f32.mrb[0].mxu0
        %11098 = vmatprep.mubr.bf16.mxu0 0
        %11099 = vmatmul.mubr.bf16.gmra.mrb[0].mxu0 %v10909
        %v11100 = vpop.f32.mrb[0].mxu0
        %v11101 = vadd.f32 0.0, %v11100
        %v11102 = vpop.f32.mrb[0].mxu0
        %v11103 = vpop.f32.mrb[0].mxu0
        %v11104 = vadd.f32 0.0, %v11103
        %v11105 = vpop.f32.mrb[0].mxu0
        %11106 = vmatprep.mubr.bf16.mxu0 0
        %11107 = vmatmul.mubr.bf16.gmra.mrb[0].mxu0 %v10910
        %v11108 = vpop.f32.mrb[0].mxu0
        %v11109 = vadd.f32 0.0, %v11108
        %v11110 = vpop.f32.mrb[0].mxu0
        %v11111 = vpop.f32.mrb[0].mxu0
        %v11112 = vadd.f32 0.0, %v11111
        %v11113 = vpop.f32.mrb[0].mxu0
        %11114 = vmatprep.mubr.bf16.mxu0 0
        %11115 = vmatmul.mubr.bf16.gmra.mrb[0].mxu0 %v10911
        %v11116 = vpop.f32.mrb[0].mxu0
        %v11117 = vadd.f32 0.0, %v11116
        %v11118 = vpop.f32.mrb[0].mxu0
        %v11119 = vpop.f32.mrb[0].mxu0
        %v11120 = vadd.f32 0.0, %v11119
        %v11121 = vpop.f32.mrb[0].mxu0
        %11122 = vmatprep.mubr.bf16.mxu0 0
        %11123 = vmatmul.mubr.bf16.gmra.mrb[0].mxu0 %v10912
        %v11124 = vpop.f32.mrb[0].mxu0
        %v11125 = vadd.f32 0.0, %v11124
        %v11126 = vpop.f32.mrb[0].mxu0
        %v11127 = vpop.f32.mrb[0].mxu0
        %v11128 = vadd.f32 0.0, %v11127
        %v11129 = vpop.f32.mrb[0].mxu0
        %11130 = vmatprep.mubr.bf16.mxu0 0
        %11131 = vmatmul.mubr.bf16.gmra.mrb[0].mxu0 %v10913
        %v11132 = vpop.f32.mrb[0].mxu0
        %v11133 = vadd.f32 0.0, %v11132
        %v11134 = vpop.f32.mrb[0].mxu0
        %v11135 = vpop.f32.mrb[0].mxu0
        %v11136 = vadd.f32 0.0, %v11135
        %v11137 = vpop.f32.mrb[0].mxu0
        %11138 = vdwg.mxu0
        %v11139 = vadd.f32 %v10642, %v11013
        %v11140 = vadd.f32 %v10643, %v11016
        %v11141 = vadd.f32 %v10644, %v11021
        %v11142 = vadd.f32 %v10645, %v11024
        %v11143 = vadd.f32 %v10646, %v11029
        %v11144 = vadd.f32 %v10647, %v11032
        %v11145 = vadd.f32 %v10648, %v11037
        %v11146 = vadd.f32 %v10649, %v11040
        %v11147 = vadd.f32 %v10650, %v11045
        %v11148 = vadd.f32 %v10651, %v11048
        %v11149 = vadd.f32 %v10652, %v11053
        %v11150 = vadd.f32 %v10653, %v11056
        %v11151 = vadd.f32 %v10654, %v11061
        %v11152 = vadd.f32 %v10655, %v11064
        %v11153 = vadd.f32 %v10656, %v11069
        %v11154 = vadd.f32 %v10657, %v11072
        %v11155 = vadd.f32 %v10658, %v11077
        %v11156 = vadd.f32 %v10659, %v11080
        %v11157 = vadd.f32 %v10660, %v11085
        %v11158 = vadd.f32 %v10661, %v11088
        %v11159 = vadd.f32 %v10662, %v11093
        %v11160 = vadd.f32 %v10663, %v11096
        %v11161 = vadd.f32 %v10664, %v11101
        %v11162 = vadd.f32 %v10665, %v11104
        %v11163 = vadd.f32 %v10666, %v11109
        %v11164 = vadd.f32 %v10667, %v11112
        %v11165 = vadd.f32 %v10668, %v11117
        %v11166 = vadd.f32 %v10669, %v11120
        %v11167 = vadd.f32 %v10670, %v11125
        %v11168 = vadd.f32 %v10671, %v11128
        %v11169 = vadd.f32 %v10672, %v11133
        %v11170 = vadd.f32 %v10673, %v11136
        %v11171 = vld [vmem:[%s4] sm:$0x1]
        %v11173 = vlaneseq
        %v11174 = vshrl.u32 %v11173, 7
        %v11175 = vsub.s32 0, %v11174
        %v11176 = vrot.slane %v11171, %v11175
        %v11178 = vadd.f32 %v11139, %v11176
        %v11179 = vadd.f32 %v11140, %v11176
        %v11180 = vadd.f32 %v11141, %v11176
        %v11181 = vadd.f32 %v11142, %v11176
        %v11182 = vadd.f32 %v11143, %v11176
        %v11183 = vadd.f32 %v11144, %v11176
        %v11184 = vadd.f32 %v11145, %v11176
        %v11185 = vadd.f32 %v11146, %v11176
        %v11186 = vadd.f32 %v11147, %v11176
        %v11187 = vadd.f32 %v11148, %v11176
        %v11188 = vadd.f32 %v11149, %v11176
        %v11189 = vadd.f32 %v11150, %v11176
        %v11190 = vadd.f32 %v11151, %v11176
        %v11191 = vadd.f32 %v11152, %v11176
        %v11192 = vadd.f32 %v11153, %v11176
        %v11193 = vadd.f32 %v11154, %v11176
        %v11194 = vadd.f32 %v11155, %v11176
        %v11195 = vadd.f32 %v11156, %v11176
        %v11196 = vadd.f32 %v11157, %v11176
        %v11197 = vadd.f32 %v11158, %v11176
        %v11198 = vadd.f32 %v11159, %v11176
        %v11199 = vadd.f32 %v11160, %v11176
        %v11200 = vadd.f32 %v11161, %v11176
        %v11201 = vadd.f32 %v11162, %v11176
        %v11202 = vadd.f32 %v11163, %v11176
        %v11203 = vadd.f32 %v11164, %v11176
        %v11204 = vadd.f32 %v11165, %v11176
        %v11205 = vadd.f32 %v11166, %v11176
        %v11206 = vadd.f32 %v11167, %v11176
        %v11207 = vadd.f32 %v11168, %v11176
        %v11208 = vadd.f32 %v11169, %v11176
        %v11209 = vadd.f32 %v11170, %v11176
        %v11210 = vld [vmem:[%s862] sm:$0xf]
        %v11211 = vld [vmem:[%s862 + $0x4] sm:$0xf]
        %v11212 = vld [vmem:[%s862 + $0x8] sm:$0x1]
        %v11213 = vld [vmem:[%s862 + $0xc] sm:$0xf]
        %v11214 = vld [vmem:[%s862 + $0x10] sm:$0xf]
        %v11215 = vld [vmem:[%s862 + $0x14] sm:$0x1]
        %v11216 = vld [vmem:[%s862 + $0x18] sm:$0xf]
        %v11217 = vld [vmem:[%s862 + $0x1c] sm:$0xf]
        %v11218 = vld [vmem:[%s862 + $0x20] sm:$0x1]
        %v11219 = vld [vmem:[%s862 + $0x24] sm:$0xf]
        %v11220 = vld [vmem:[%s862 + $0x28] sm:$0xf]
        %v11221 = vld [vmem:[%s862 + $0x2c] sm:$0x1]
        %v11222 = vld [vmem:[%s862 + $0x30] sm:$0xf]
        %v11223 = vld [vmem:[%s862 + $0x34] sm:$0xf]
        %v11224 = vld [vmem:[%s862 + $0x38] sm:$0x1]
        %v11225 = vld [vmem:[%s862 + $0x3c] sm:$0xf]
        %v11226 = vld [vmem:[%s862 + $0x40] sm:$0xf]
        %v11227 = vld [vmem:[%s862 + $0x44] sm:$0x1]
        %v11228 = vld [vmem:[%s862 + $0x48] sm:$0xf]
        %v11229 = vld [vmem:[%s862 + $0x4c] sm:$0xf]
        %v11230 = vld [vmem:[%s862 + $0x50] sm:$0x1]
        %v11231 = vld [vmem:[%s862 + $0x54] sm:$0xf]
        %v11232 = vld [vmem:[%s862 + $0x58] sm:$0xf]
        %v11233 = vld [vmem:[%s862 + $0x5c] sm:$0x1]
        %v11234 = vld [vmem:[%s862 + $0x60] sm:$0xf]
        %v11235 = vld [vmem:[%s862 + $0x64] sm:$0xf]
        %v11236 = vld [vmem:[%s862 + $0x68] sm:$0x1]
        %v11237 = vld [vmem:[%s862 + $0x6c] sm:$0xf]
        %v11238 = vld [vmem:[%s862 + $0x70] sm:$0xf]
        %v11239 = vld [vmem:[%s862 + $0x74] sm:$0x1]
        %v11240 = vld [vmem:[%s862 + $0x78] sm:$0xf]
        %v11241 = vld [vmem:[%s862 + $0x7c] sm:$0xf]
        %v11242 = vld [vmem:[%s862 + $0x80] sm:$0x1]
        %v11243 = vld [vmem:[%s862 + $0x84] sm:$0xf]
        %v11244 = vld [vmem:[%s862 + $0x88] sm:$0xf]
        %v11245 = vld [vmem:[%s862 + $0x8c] sm:$0x1]
        %v11246 = vld [vmem:[%s862 + $0x90] sm:$0xf]
        %v11247 = vld [vmem:[%s862 + $0x94] sm:$0xf]
        %v11248 = vld [vmem:[%s862 + $0x98] sm:$0x1]
        %v11249 = vld [vmem:[%s862 + $0x9c] sm:$0xf]
        %v11250 = vld [vmem:[%s862 + $0xa0] sm:$0xf]
        %v11251 = vld [vmem:[%s862 + $0xa4] sm:$0x1]
        %v11252 = vld [vmem:[%s862 + $0xa8] sm:$0xf]
        %v11253 = vld [vmem:[%s862 + $0xac] sm:$0xf]
        %v11254 = vld [vmem:[%s862 + $0xb0] sm:$0x1]
        %v11255 = vld [vmem:[%s862 + $0xb4] sm:$0xf]
        %v11256 = vld [vmem:[%s862 + $0xb8] sm:$0xf]
        %v11257 = vld [vmem:[%s862 + $0xbc] sm:$0x1]
        %v11259 = vshrl.u32 %v11210, 16
        %v11261 = vrot.slane %v11259, 4
        %v11262 = vshll.u32 %v11210, 16
        %v11264 = vrot.slane %v11262, 5
        %v11265 = vor.u32 %v11261, %v11264
        %v11266 = vrot.slane %v11265, 4
        %v11268 = vshll.u32 %v11211, 16
        %v11270 = vrot.slane %v11268, 5
        %v11271 = vsel %vm1043, %v11266, %v11270
        %v11272 = vshrl.u32 %v11211, 16
        %v11274 = vrot.slane %v11272, 4
        %v11275 = vor.u32 %v11274, %v11270
        %v11276 = vrot.slane %v11275, 4
        %v11278 = vshll.u32 %v11212, 16
        %v11280 = vrot.slane %v11278, 5
        %v11281 = vsel %vm1043, %v11276, %v11280
        %v11283 = vshrl.u32 %v11213, 16
        %v11285 = vrot.slane %v11283, 4
        %v11286 = vshll.u32 %v11213, 16
        %v11288 = vrot.slane %v11286, 5
        %v11289 = vor.u32 %v11285, %v11288
        %v11290 = vrot.slane %v11289, 4
        %v11292 = vshll.u32 %v11214, 16
        %v11294 = vrot.slane %v11292, 5
        %v11295 = vsel %vm1043, %v11290, %v11294
        %v11296 = vshrl.u32 %v11214, 16
        %v11298 = vrot.slane %v11296, 4
        %v11299 = vor.u32 %v11298, %v11294
        %v11300 = vrot.slane %v11299, 4
        %v11302 = vshll.u32 %v11215, 16
        %v11304 = vrot.slane %v11302, 5
        %v11305 = vsel %vm1043, %v11300, %v11304
        %v11307 = vshrl.u32 %v11216, 16
        %v11309 = vrot.slane %v11307, 4
        %v11310 = vshll.u32 %v11216, 16
        %v11312 = vrot.slane %v11310, 5
        %v11313 = vor.u32 %v11309, %v11312
        %v11314 = vrot.slane %v11313, 4
        %v11316 = vshll.u32 %v11217, 16
        %v11318 = vrot.slane %v11316, 5
        %v11319 = vsel %vm1043, %v11314, %v11318
        %v11320 = vshrl.u32 %v11217, 16
        %v11322 = vrot.slane %v11320, 4
        %v11323 = vor.u32 %v11322, %v11318
        %v11324 = vrot.slane %v11323, 4
        %v11326 = vshll.u32 %v11218, 16
        %v11328 = vrot.slane %v11326, 5
        %v11329 = vsel %vm1043, %v11324, %v11328
        %v11331 = vshrl.u32 %v11219, 16
        %v11333 = vrot.slane %v11331, 4
        %v11334 = vshll.u32 %v11219, 16
        %v11336 = vrot.slane %v11334, 5
        %v11337 = vor.u32 %v11333, %v11336
        %v11338 = vrot.slane %v11337, 4
        %v11340 = vshll.u32 %v11220, 16
        %v11342 = vrot.slane %v11340, 5
        %v11343 = vsel %vm1043, %v11338, %v11342
        %v11344 = vshrl.u32 %v11220, 16
        %v11346 = vrot.slane %v11344, 4
        %v11347 = vor.u32 %v11346, %v11342
        %v11348 = vrot.slane %v11347, 4
        %v11350 = vshll.u32 %v11221, 16
        %v11352 = vrot.slane %v11350, 5
        %v11353 = vsel %vm1043, %v11348, %v11352
        %v11355 = vshrl.u32 %v11222, 16
        %v11357 = vrot.slane %v11355, 4
        %v11358 = vshll.u32 %v11222, 16
        %v11360 = vrot.slane %v11358, 5
        %v11361 = vor.u32 %v11357, %v11360
        %v11362 = vrot.slane %v11361, 4
        %v11364 = vshll.u32 %v11223, 16
        %v11366 = vrot.slane %v11364, 5
        %v11367 = vsel %vm1043, %v11362, %v11366
        %v11368 = vshrl.u32 %v11223, 16
        %v11370 = vrot.slane %v11368, 4
        %v11371 = vor.u32 %v11370, %v11366
        %v11372 = vrot.slane %v11371, 4
        %v11374 = vshll.u32 %v11224, 16
        %v11376 = vrot.slane %v11374, 5
        %v11377 = vsel %vm1043, %v11372, %v11376
        %v11379 = vshrl.u32 %v11225, 16
        %v11381 = vrot.slane %v11379, 4
        %v11382 = vshll.u32 %v11225, 16
        %v11384 = vrot.slane %v11382, 5
        %v11385 = vor.u32 %v11381, %v11384
        %v11386 = vrot.slane %v11385, 4
        %v11388 = vshll.u32 %v11226, 16
        %v11390 = vrot.slane %v11388, 5
        %v11391 = vsel %vm1043, %v11386, %v11390
        %v11392 = vshrl.u32 %v11226, 16
        %v11394 = vrot.slane %v11392, 4
        %v11395 = vor.u32 %v11394, %v11390
        %v11396 = vrot.slane %v11395, 4
        %v11398 = vshll.u32 %v11227, 16
        %v11400 = vrot.slane %v11398, 5
        %v11401 = vsel %vm1043, %v11396, %v11400
        %v11403 = vshrl.u32 %v11228, 16
        %v11405 = vrot.slane %v11403, 4
        %v11406 = vshll.u32 %v11228, 16
        %v11408 = vrot.slane %v11406, 5
        %v11409 = vor.u32 %v11405, %v11408
        %v11410 = vrot.slane %v11409, 4
        %v11412 = vshll.u32 %v11229, 16
        %v11414 = vrot.slane %v11412, 5
        %v11415 = vsel %vm1043, %v11410, %v11414
        %v11416 = vshrl.u32 %v11229, 16
        %v11418 = vrot.slane %v11416, 4
        %v11419 = vor.u32 %v11418, %v11414
        %v11420 = vrot.slane %v11419, 4
        %v11422 = vshll.u32 %v11230, 16
        %v11424 = vrot.slane %v11422, 5
        %v11425 = vsel %vm1043, %v11420, %v11424
        %v11427 = vshrl.u32 %v11231, 16
        %v11429 = vrot.slane %v11427, 4
        %v11430 = vshll.u32 %v11231, 16
        %v11432 = vrot.slane %v11430, 5
        %v11433 = vor.u32 %v11429, %v11432
        %v11434 = vrot.slane %v11433, 4
        %v11436 = vshll.u32 %v11232, 16
        %v11438 = vrot.slane %v11436, 5
        %v11439 = vsel %vm1043, %v11434, %v11438
        %v11440 = vshrl.u32 %v11232, 16
        %v11442 = vrot.slane %v11440, 4
        %v11443 = vor.u32 %v11442, %v11438
        %v11444 = vrot.slane %v11443, 4
        %v11446 = vshll.u32 %v11233, 16
        %v11448 = vrot.slane %v11446, 5
        %v11449 = vsel %vm1043, %v11444, %v11448
        %v11451 = vshrl.u32 %v11234, 16
        %v11453 = vrot.slane %v11451, 4
        %v11454 = vshll.u32 %v11234, 16
        %v11456 = vrot.slane %v11454, 5
        %v11457 = vor.u32 %v11453, %v11456
        %v11458 = vrot.slane %v11457, 4
        %v11460 = vshll.u32 %v11235, 16
        %v11462 = vrot.slane %v11460, 5
        %v11463 = vsel %vm1043, %v11458, %v11462
        %v11464 = vshrl.u32 %v11235, 16
        %v11466 = vrot.slane %v11464, 4
        %v11467 = vor.u32 %v11466, %v11462
        %v11468 = vrot.slane %v11467, 4
        %v11470 = vshll.u32 %v11236, 16
        %v11472 = vrot.slane %v11470, 5
        %v11473 = vsel %vm1043, %v11468, %v11472
        %v11475 = vshrl.u32 %v11237, 16
        %v11477 = vrot.slane %v11475, 4
        %v11478 = vshll.u32 %v11237, 16
        %v11480 = vrot.slane %v11478, 5
        %v11481 = vor.u32 %v11477, %v11480
        %v11482 = vrot.slane %v11481, 4
        %v11484 = vshll.u32 %v11238, 16
        %v11486 = vrot.slane %v11484, 5
        %v11487 = vsel %vm1043, %v11482, %v11486
        %v11488 = vshrl.u32 %v11238, 16
        %v11490 = vrot.slane %v11488, 4
        %v11491 = vor.u32 %v11490, %v11486
        %v11492 = vrot.slane %v11491, 4
        %v11494 = vshll.u32 %v11239, 16
        %v11496 = vrot.slane %v11494, 5
        %v11497 = vsel %vm1043, %v11492, %v11496
        %v11499 = vshrl.u32 %v11240, 16
        %v11501 = vrot.slane %v11499, 4
        %v11502 = vshll.u32 %v11240, 16
        %v11504 = vrot.slane %v11502, 5
        %v11505 = vor.u32 %v11501, %v11504
        %v11506 = vrot.slane %v11505, 4
        %v11508 = vshll.u32 %v11241, 16
        %v11510 = vrot.slane %v11508, 5
        %v11511 = vsel %vm1043, %v11506, %v11510
        %v11512 = vshrl.u32 %v11241, 16
        %v11514 = vrot.slane %v11512, 4
        %v11515 = vor.u32 %v11514, %v11510
        %v11516 = vrot.slane %v11515, 4
        %v11518 = vshll.u32 %v11242, 16
        %v11520 = vrot.slane %v11518, 5
        %v11521 = vsel %vm1043, %v11516, %v11520
        %v11523 = vshrl.u32 %v11243, 16
        %v11525 = vrot.slane %v11523, 4
        %v11526 = vshll.u32 %v11243, 16
        %v11528 = vrot.slane %v11526, 5
        %v11529 = vor.u32 %v11525, %v11528
        %v11530 = vrot.slane %v11529, 4
        %v11532 = vshll.u32 %v11244, 16
        %v11534 = vrot.slane %v11532, 5
        %v11535 = vsel %vm1043, %v11530, %v11534
        %v11536 = vshrl.u32 %v11244, 16
        %v11538 = vrot.slane %v11536, 4
        %v11539 = vor.u32 %v11538, %v11534
        %v11540 = vrot.slane %v11539, 4
        %v11542 = vshll.u32 %v11245, 16
        %v11544 = vrot.slane %v11542, 5
        %v11545 = vsel %vm1043, %v11540, %v11544
        %v11547 = vshrl.u32 %v11246, 16
        %v11549 = vrot.slane %v11547, 4
        %v11550 = vshll.u32 %v11246, 16
        %v11552 = vrot.slane %v11550, 5
        %v11553 = vor.u32 %v11549, %v11552
        %v11554 = vrot.slane %v11553, 4
        %v11556 = vshll.u32 %v11247, 16
        %v11558 = vrot.slane %v11556, 5
        %v11559 = vsel %vm1043, %v11554, %v11558
        %v11560 = vshrl.u32 %v11247, 16
        %v11562 = vrot.slane %v11560, 4
        %v11563 = vor.u32 %v11562, %v11558
        %v11564 = vrot.slane %v11563, 4
        %v11566 = vshll.u32 %v11248, 16
        %v11568 = vrot.slane %v11566, 5
        %v11569 = vsel %vm1043, %v11564, %v11568
        %v11571 = vshrl.u32 %v11249, 16
        %v11573 = vrot.slane %v11571, 4
        %v11574 = vshll.u32 %v11249, 16
        %v11576 = vrot.slane %v11574, 5
        %v11577 = vor.u32 %v11573, %v11576
        %v11578 = vrot.slane %v11577, 4
        %v11580 = vshll.u32 %v11250, 16
        %v11582 = vrot.slane %v11580, 5
        %v11583 = vsel %vm1043, %v11578, %v11582
        %v11584 = vshrl.u32 %v11250, 16
        %v11586 = vrot.slane %v11584, 4
        %v11587 = vor.u32 %v11586, %v11582
        %v11588 = vrot.slane %v11587, 4
        %v11590 = vshll.u32 %v11251, 16
        %v11592 = vrot.slane %v11590, 5
        %v11593 = vsel %vm1043, %v11588, %v11592
        %v11595 = vshrl.u32 %v11252, 16
        %v11597 = vrot.slane %v11595, 4
        %v11598 = vshll.u32 %v11252, 16
        %v11600 = vrot.slane %v11598, 5
        %v11601 = vor.u32 %v11597, %v11600
        %v11602 = vrot.slane %v11601, 4
        %v11604 = vshll.u32 %v11253, 16
        %v11606 = vrot.slane %v11604, 5
        %v11607 = vsel %vm1043, %v11602, %v11606
        %v11608 = vshrl.u32 %v11253, 16
        %v11610 = vrot.slane %v11608, 4
        %v11611 = vor.u32 %v11610, %v11606
        %v11612 = vrot.slane %v11611, 4
        %v11614 = vshll.u32 %v11254, 16
        %v11616 = vrot.slane %v11614, 5
        %v11617 = vsel %vm1043, %v11612, %v11616
        %v11619 = vshrl.u32 %v11255, 16
        %v11621 = vrot.slane %v11619, 4
        %v11622 = vshll.u32 %v11255, 16
        %v11624 = vrot.slane %v11622, 5
        %v11625 = vor.u32 %v11621, %v11624
        %v11626 = vrot.slane %v11625, 4
        %v11628 = vshll.u32 %v11256, 16
        %v11630 = vrot.slane %v11628, 5
        %v11631 = vsel %vm1043, %v11626, %v11630
        %v11632 = vshrl.u32 %v11256, 16
        %v11634 = vrot.slane %v11632, 4
        %v11635 = vor.u32 %v11634, %v11630
        %v11636 = vrot.slane %v11635, 4
        %v11638 = vshll.u32 %v11257, 16
        %v11640 = vrot.slane %v11638, 5
        %v11641 = vsel %vm1043, %v11636, %v11640
        %v11674 = vunpack.c.l.bf16 %v11271
        %v11675 = vunpack.c.l.bf16 %v11281
        %v11676 = vunpack.c.l.bf16 %v11295
        %v11677 = vunpack.c.l.bf16 %v11305
        %v11678 = vunpack.c.l.bf16 %v11319
        %v11679 = vunpack.c.l.bf16 %v11329
        %v11680 = vunpack.c.l.bf16 %v11343
        %v11681 = vunpack.c.l.bf16 %v11353
        %v11682 = vunpack.c.l.bf16 %v11367
        %v11683 = vunpack.c.l.bf16 %v11377
        %v11684 = vunpack.c.l.bf16 %v11391
        %v11685 = vunpack.c.l.bf16 %v11401
        %v11686 = vunpack.c.l.bf16 %v11415
        %v11687 = vunpack.c.l.bf16 %v11425
        %v11688 = vunpack.c.l.bf16 %v11439
        %v11689 = vunpack.c.l.bf16 %v11449
        %v11690 = vunpack.c.l.bf16 %v11463
        %v11691 = vunpack.c.l.bf16 %v11473
        %v11692 = vunpack.c.l.bf16 %v11487
        %v11693 = vunpack.c.l.bf16 %v11497
        %v11694 = vunpack.c.l.bf16 %v11511
        %v11695 = vunpack.c.l.bf16 %v11521
        %v11696 = vunpack.c.l.bf16 %v11535
        %v11697 = vunpack.c.l.bf16 %v11545
        %v11698 = vunpack.c.l.bf16 %v11559
        %v11699 = vunpack.c.l.bf16 %v11569
        %v11700 = vunpack.c.l.bf16 %v11583
        %v11701 = vunpack.c.l.bf16 %v11593
        %v11702 = vunpack.c.l.bf16 %v11607
        %v11703 = vunpack.c.l.bf16 %v11617
        %v11704 = vunpack.c.l.bf16 %v11631
        %v11705 = vunpack.c.l.bf16 %v11641
        %v11706 = vadd.f32 %v11178, %v11674
        %v11707 = vadd.f32 %v11179, %v11675
        %v11708 = vadd.f32 %v11180, %v11676
        %v11709 = vadd.f32 %v11181, %v11677
        %v11710 = vadd.f32 %v11182, %v11678
        %v11711 = vadd.f32 %v11183, %v11679
        %v11712 = vadd.f32 %v11184, %v11680
        %v11713 = vadd.f32 %v11185, %v11681
        %v11714 = vadd.f32 %v11186, %v11682
        %v11715 = vadd.f32 %v11187, %v11683
        %v11716 = vadd.f32 %v11188, %v11684
        %v11717 = vadd.f32 %v11189, %v11685
        %v11718 = vadd.f32 %v11190, %v11686
        %v11719 = vadd.f32 %v11191, %v11687
        %v11720 = vadd.f32 %v11192, %v11688
        %v11721 = vadd.f32 %v11193, %v11689
        %v11722 = vadd.f32 %v11194, %v11690
        %v11723 = vadd.f32 %v11195, %v11691
        %v11724 = vadd.f32 %v11196, %v11692
        %v11725 = vadd.f32 %v11197, %v11693
        %v11726 = vadd.f32 %v11198, %v11694
        %v11727 = vadd.f32 %v11199, %v11695
        %v11728 = vadd.f32 %v11200, %v11696
        %v11729 = vadd.f32 %v11201, %v11697
        %v11730 = vadd.f32 %v11202, %v11698
        %v11731 = vadd.f32 %v11203, %v11699
        %v11732 = vadd.f32 %v11204, %v11700
        %v11733 = vadd.f32 %v11205, %v11701
        %v11734 = vadd.f32 %v11206, %v11702
        %v11735 = vadd.f32 %v11207, %v11703
        %v11736 = vadd.f32 %v11208, %v11704
        %v11737 = vadd.f32 %v11209, %v11705
        %v11738 = vmax.f32 %v11706, 0.0
        %v11739 = vmax.f32 %v11707, 0.0
        %v11740 = vmax.f32 %v11708, 0.0
        %v11741 = vmax.f32 %v11709, 0.0
        %v11742 = vmax.f32 %v11710, 0.0
        %v11743 = vmax.f32 %v11711, 0.0
        %v11744 = vmax.f32 %v11712, 0.0
        %v11745 = vmax.f32 %v11713, 0.0
        %v11746 = vmax.f32 %v11714, 0.0
        %v11747 = vmax.f32 %v11715, 0.0
        %v11748 = vmax.f32 %v11716, 0.0
        %v11749 = vmax.f32 %v11717, 0.0
        %v11750 = vmax.f32 %v11718, 0.0
        %v11751 = vmax.f32 %v11719, 0.0
        %v11752 = vmax.f32 %v11720, 0.0
        %v11753 = vmax.f32 %v11721, 0.0
        %v11754 = vmax.f32 %v11722, 0.0
        %v11755 = vmax.f32 %v11723, 0.0
        %v11756 = vmax.f32 %v11724, 0.0
        %v11757 = vmax.f32 %v11725, 0.0
        %v11758 = vmax.f32 %v11726, 0.0
        %v11759 = vmax.f32 %v11727, 0.0
        %v11760 = vmax.f32 %v11728, 0.0
        %v11761 = vmax.f32 %v11729, 0.0
        %v11762 = vmax.f32 %v11730, 0.0
        %v11763 = vmax.f32 %v11731, 0.0
        %v11764 = vmax.f32 %v11732, 0.0
        %v11765 = vmax.f32 %v11733, 0.0
        %v11766 = vmax.f32 %v11734, 0.0
        %v11767 = vmax.f32 %v11735, 0.0
        %v11768 = vmax.f32 %v11736, 0.0
        %v11769 = vmax.f32 %v11737, 0.0
        %v11770 = vpack.c.bf16 %v11739, %v11738
        %v11771 = vpack.c.bf16 %v11741, %v11740
        %v11772 = vpack.c.bf16 %v11743, %v11742
        %v11773 = vpack.c.bf16 %v11745, %v11744
        %v11774 = vpack.c.bf16 %v11747, %v11746
        %v11775 = vpack.c.bf16 %v11749, %v11748
        %v11776 = vpack.c.bf16 %v11751, %v11750
        %v11777 = vpack.c.bf16 %v11753, %v11752
        %v11778 = vpack.c.bf16 %v11755, %v11754
        %v11779 = vpack.c.bf16 %v11757, %v11756
        %v11780 = vpack.c.bf16 %v11759, %v11758
        %v11781 = vpack.c.bf16 %v11761, %v11760
        %v11782 = vpack.c.bf16 %v11763, %v11762
        %v11783 = vpack.c.bf16 %v11765, %v11764
        %v11784 = vpack.c.bf16 %v11767, %v11766
        %v11785 = vpack.c.bf16 %v11769, %v11768
        %v11802 = vunpack.c.l.b16 %v11770
        %v11803 = vunpack.c.h.b16 %v11770
        %v11804 = vunpack.c.l.b16 %v11771
        %v11805 = vunpack.c.h.b16 %v11771
        %v11806 = vunpack.c.l.b16 %v11772
        %v11807 = vunpack.c.h.b16 %v11772
        %v11808 = vunpack.c.l.b16 %v11773
        %v11809 = vunpack.c.h.b16 %v11773
        %v11810 = vunpack.c.l.b16 %v11774
        %v11811 = vunpack.c.h.b16 %v11774
        %v11812 = vunpack.c.l.b16 %v11775
        %v11813 = vunpack.c.h.b16 %v11775
        %v11814 = vunpack.c.l.b16 %v11776
        %v11815 = vunpack.c.h.b16 %v11776
        %v11816 = vunpack.c.l.b16 %v11777
        %v11817 = vunpack.c.h.b16 %v11777
        %v11818 = vunpack.c.l.b16 %v11778
        %v11819 = vunpack.c.h.b16 %v11778
        %v11820 = vunpack.c.l.b16 %v11779
        %v11821 = vunpack.c.h.b16 %v11779
        %v11822 = vunpack.c.l.b16 %v11780
        %v11823 = vunpack.c.h.b16 %v11780
        %v11824 = vunpack.c.l.b16 %v11781
        %v11825 = vunpack.c.h.b16 %v11781
        %v11826 = vunpack.c.l.b16 %v11782
        %v11827 = vunpack.c.h.b16 %v11782
        %v11828 = vunpack.c.l.b16 %v11783
        %v11829 = vunpack.c.h.b16 %v11783
        %v11830 = vunpack.c.l.b16 %v11784
        %v11831 = vunpack.c.h.b16 %v11784
        %v11832 = vunpack.c.l.b16 %v11785
        %v11833 = vunpack.c.h.b16 %v11785
        %v11834 = vpack.c.b16 %v11802, %v11802
        %v11835 = vpack.c.b16 %v11803, %v11803
        %v11836 = vpack.c.b16 %v11804, %v11804
        %v11837 = vpack.c.b16 %v11805, %v11805
        %v11838 = vpack.c.b16 %v11806, %v11806
        %v11839 = vpack.c.b16 %v11807, %v11807
        %v11840 = vpack.c.b16 %v11808, %v11808
        %v11841 = vpack.c.b16 %v11809, %v11809
        %v11842 = vpack.c.b16 %v11810, %v11810
        %v11843 = vpack.c.b16 %v11811, %v11811
        %v11844 = vpack.c.b16 %v11812, %v11812
        %v11845 = vpack.c.b16 %v11813, %v11813
        %v11846 = vpack.c.b16 %v11814, %v11814
        %v11847 = vpack.c.b16 %v11815, %v11815
        %v11848 = vpack.c.b16 %v11816, %v11816
        %v11849 = vpack.c.b16 %v11817, %v11817
        %v11850 = vpack.c.b16 %v11818, %v11818
        %v11851 = vpack.c.b16 %v11819, %v11819
        %v11852 = vpack.c.b16 %v11820, %v11820
        %v11853 = vpack.c.b16 %v11821, %v11821
        %v11854 = vpack.c.b16 %v11822, %v11822
        %v11855 = vpack.c.b16 %v11823, %v11823
        %v11856 = vpack.c.b16 %v11824, %v11824
        %v11857 = vpack.c.b16 %v11825, %v11825
        %v11858 = vpack.c.b16 %v11826, %v11826
        %v11859 = vpack.c.b16 %v11827, %v11827
        %v11860 = vpack.c.b16 %v11828, %v11828
        %v11861 = vpack.c.b16 %v11829, %v11829
        %v11862 = vpack.c.b16 %v11830, %v11830
        %v11863 = vpack.c.b16 %v11831, %v11831
        %v11864 = vpack.c.b16 %v11832, %v11832
        %v11865 = vpack.c.b16 %v11833, %v11833
        %11898 = vst [vmem:[%s271] sm:$0xf] %v11834
        %11899 = vst [vmem:[%s271 + $0x4] sm:$0xf] %v11835
        %11900 = vst [vmem:[%s271 + $0x8] sm:$0xf] %v11836
        %11901 = vst [vmem:[%s271 + $0xc] sm:$0xf] %v11837
        %11902 = vst [vmem:[%s271 + $0x10] sm:$0xf] %v11838
        %11903 = vst [vmem:[%s271 + $0x14] sm:$0xf] %v11839
        %11904 = vst [vmem:[%s271 + $0x18] sm:$0xf] %v11840
        %11905 = vst [vmem:[%s271 + $0x1c] sm:$0xf] %v11841
        %11906 = vst [vmem:[%s271 + $0x20] sm:$0xf] %v11842
        %11907 = vst [vmem:[%s271 + $0x24] sm:$0xf] %v11843
        %11908 = vst [vmem:[%s271 + $0x28] sm:$0xf] %v11844
        %11909 = vst [vmem:[%s271 + $0x2c] sm:$0xf] %v11845
        %11910 = vst [vmem:[%s271 + $0x30] sm:$0xf] %v11846
        %11911 = vst [vmem:[%s271 + $0x34] sm:$0xf] %v11847
        %11912 = vst [vmem:[%s271 + $0x38] sm:$0xf] %v11848
        %11913 = vst [vmem:[%s271 + $0x3c] sm:$0xf] %v11849
        %11914 = vst [vmem:[%s271 + $0x40] sm:$0xf] %v11850
        %11915 = vst [vmem:[%s271 + $0x44] sm:$0xf] %v11851
        %11916 = vst [vmem:[%s271 + $0x48] sm:$0xf] %v11852
        %11917 = vst [vmem:[%s271 + $0x4c] sm:$0xf] %v11853
        %11918 = vst [vmem:[%s271 + $0x50] sm:$0xf] %v11854
        %11919 = vst [vmem:[%s271 + $0x54] sm:$0xf] %v11855
        %11920 = vst [vmem:[%s271 + $0x58] sm:$0xf] %v11856
        %11921 = vst [vmem:[%s271 + $0x5c] sm:$0xf] %v11857
        %11922 = vst [vmem:[%s271 + $0x60] sm:$0xf] %v11858
        %11923 = vst [vmem:[%s271 + $0x64] sm:$0xf] %v11859
        %11924 = vst [vmem:[%s271 + $0x68] sm:$0xf] %v11860
        %11925 = vst [vmem:[%s271 + $0x6c] sm:$0xf] %v11861
        %11926 = vst [vmem:[%s271 + $0x70] sm:$0xf] %v11862
        %11927 = vst [vmem:[%s271 + $0x74] sm:$0xf] %v11863
        %11928 = vst [vmem:[%s271 + $0x78] sm:$0xf] %v11864
        %11929 = vst [vmem:[%s271 + $0x7c] sm:$0xf] %v11865
        %s11930 = sand.u32 %s141, 1
        %s11931 = scalar_lea.sflag [#allocation6], %s11930
        %s11932 = sand.u32 %s141, 1
        %s11933 = smul.addr %s11932, 128
        %s11934 = scalar_lea.vmem [#allocation10], %s11933
        // Predicated region
        $region53: #{tpu_custom_call.1} parent=39 // pred_check
          %p11935 = pneg %p151
        $region54: #{tpu_custom_call.1} parent=39 // pred_check_branch
          %11937 = sbr.rel (%p11935) target = $region56
        $region55: #{tpu_custom_call.1} parent=39 // pred_region
          %s11939 = ssub.s32 2048, 2048
          %11940 = vsyncadd %s11931, %s11939
          %s11941 = smul.addr %s23, 32
          %s11942 = smul.addr %s11941, 64
          %s11943 = scalar_lea.hbm %s5, %s11942
          %s11944 = sshll.u32 %s11934, 4
          %s11945 = int_to_ptr.vmem [resolvable:$true] %s11944
          %11950 = dma.vmem_to_hbm [thread:$0]  %s11945, 2048, %s11943, %s11931, 64, 64, 4
        $region56: #{tpu_custom_call.1} parent=39 // pred_fallthru
          _
      $region40: #{tpu_custom_call.1} parent=5 // pred_fallthru
        _
      %p11951 = scmp.le.s32.totalorder 2, %s18
      // Predicated region
      $region57: #{tpu_custom_call.1} parent=5 // pred_check
        %p11952 = pneg %p11951
      $region58: #{tpu_custom_call.1} parent=5 // pred_check_branch
        %11954 = sbr.rel (%p11952) target = $region60
      $region59: #{tpu_custom_call.1} parent=5 // pred_region
        %s11955 = ssub.s32 %s18, 2
        // Predicated region
        $region61: #{tpu_custom_call.1} parent=59 // pred_check
          %p11956 = pneg %p157
        $region62: #{tpu_custom_call.1} parent=59 // pred_check_branch
          %11958 = sbr.rel (%p11956) target = $region64
        $region63: #{tpu_custom_call.1} parent=59 // pred_region
          %s11959 = sand.u32 %s142, 1
          %s11960 = scalar_lea.sflag [#allocation6], %s11959
          %s11961 = sand.u32 %s142, 1
          %s11962 = smul.addr %s11961, 128
          %s11963 = scalar_lea.vmem [#allocation10], %s11962
          %11964 = dma.done %s11960, 2048
        $region64: #{tpu_custom_call.1} parent=59 // pred_fallthru
          _
      $region60: #{tpu_custom_call.1} parent=5 // pred_fallthru
        _
    $region6: #{tpu_custom_call.1} parent=1 // loop_footer
      %s22 = sadd.s32 1, %s18
    $region7: #{tpu_custom_call.1} parent=1 // loop_footer_branch
      %17 = sbr.rel target = $region3
    $region8: #{tpu_custom_call.1} parent=1 // loop_exit
      _
    %11965 = vsyncpa [#allocation5], 1
    %s11966 = scalar_lea.sflag [#allocation5], 1
    %11967 = vsyncpa %s11966, 1
    %11968 = vsyncpa [#allocation8], 1
    %11969 = vsyncpa [#allocation6], 1
    %s11970 = scalar_lea.sflag [#allocation6], 1
    %11971 = vsyncpa %s11970, 1

</llo_original>
